<compile_context>
chip_gen: v7x
topology: tpu7x:2x2x1
jax: 0.10.0
libtpu: 0.0.40
codegen_flags: <defaults>
</compile_context>

<pallas_src>
import numpy as np
import jax
import jax.numpy as jnp
from jax.experimental import pallas as pl
from jax.experimental.pallas import tpu as pltpu

_HIGHEST = jax.lax.Precision.HIGHEST
_NEG_BIG = -1e30          # "minus infinity" for padded logit lanes
_OUT_LANES = 128          # lane-dense output / logits width


def _round_up(n, m):
    return ((n + m - 1) // m) * m


def _adaptive_bins(length, n_bins):
    # PyTorch AdaptiveAvgPool1d bin boundaries: [floor(i*L/n), ceil((i+1)*L/n))
    return [((i * length) // n_bins, ((i + 1) * length + n_bins - 1) // n_bins)
            for i in range(n_bins)]


def _make_cnn_kernel(P, n_bins):
    """Kernel body for one batch element (grid axis = batch, 'parallel')."""

    def mm(a, b_ref):
        return jnp.dot(a, b_ref[...], precision=_HIGHEST,
                       preferred_element_type=jnp.float32)

    def conv_relu(h_cat, w_ref, b_ref):
        # one fused K = 3*Cin MXU matmul per conv layer
        return jnp.maximum(mm(h_cat, w_ref) + b_ref[...], 0.0)

    def taps(h, s):
        # lanes = [h[r-s], h[r], h[r+s]]; rolls are XLU; wrap-around only ever
        # reads rows the masks already zeroed, so it acts as the conv zero-padding.
        return jnp.concatenate(
            [pltpu.roll(h, shift=s, axis=0), h, pltpu.roll(h, shift=P - s, axis=0)],
            axis=-1)

    def maxpool3(c, s):
        # m[r] = max(c[r], c[r+s], c[r+2s]); valid outputs live at rows r = 2*s*l.
        return jnp.maximum(jnp.maximum(c, pltpu.roll(c, shift=P - s, axis=0)),
                           pltpu.roll(c, shift=P - 2 * s, axis=0))

    def kernel(xc_ref, m1_ref, m2_ref, at_ref,
               w1_ref, b1_ref, w2_ref, b2_ref, w3_ref, b3_ref,
               wf1_ref, bf1_ref, wf2_ref, bf2_ref, out_ref):
        # conv1+ReLU: taps were pre-concatenated on the host -> one MXU matmul.
        c1 = conv_relu(xc_ref[0], w1_ref, b1_ref)            # [P, 16]
        # maxpool1(3,2): results stay in place at rows 2*l; mask zeroes the rest.
        h1 = maxpool3(c1, 1) * m1_ref[...]                   # [P, 16]
        # conv2 on the stride-2 rows (rolls by +-2 give the 3-tap neighbourhood).
        c2 = conv_relu(taps(h1, 2), w2_ref, b2_ref)          # [P, 32]
        # maxpool2(3,2): valid outputs at rows 4*l.
        h2 = maxpool3(c2, 2) * m2_ref[...]                   # [P, 32]
        # conv3 on the stride-4 rows.
        c3 = conv_relu(taps(h2, 4), w3_ref, b3_ref)          # [P, 64]

        # AdaptiveAvgPool1d(n_bins): the host-built averaging matrix also performs
        # the stride-4 row selection and zeroes out all garbage rows.
        pooled = mm(at_ref[...], c3)                         # [n_bins, 64]
        # flatten bin-major (fc1 rows were permuted on the host to match).
        feat = jnp.concatenate([pooled[i:i + 1, :] for i in range(n_bins)],
                               axis=-1)                      # [1, n_bins*64]

        f1 = jnp.maximum(mm(feat, wf1_ref) + bf1_ref[...], 0.0)   # [1, 256]
        # TODO(synk): nn.Dropout(p=0.3) is an identity in the inference forward.
        logits = mm(f1, wf2_ref) + bf2_ref[...]              # [1, 128]; pad lanes = -1e30
        zmax = jnp.max(logits, axis=-1, keepdims=True)       # LogSoftmax(dim=1)
        z = logits - zmax
        lp = z - jnp.log(jnp.sum(jnp.exp(z), axis=-1, keepdims=True))
        out_ref[0] = jnp.broadcast_to(lp, (8, _OUT_LANES))   # dense (8,128) store

    return kernel


def prepare_params(tp):
    """Convert PyTorch-layout parameters to the kernel layout (done once, host side)."""
    def conv_w(w):   # [Cout, Cin, 3] -> [3*Cin, Cout], row index = k*Cin + c
        w = np.asarray(w, np.float32)
        return jnp.asarray(np.transpose(w, (2, 1, 0)).reshape(-1, w.shape[0]))

    def row(b):
        return jnp.asarray(np.asarray(b, np.float32).reshape(1, -1))

    c3_out = tp['conv3_w'].shape[0]
    n_bins = tp['fc1_w'].shape[1] // c3_out
    # torch flattens [B, C, n_bins] channel-major (j = c*n_bins + p); the kernel
    # builds features bin-major (j' = p*C + c) -> permute fc1 rows once here.
    wf1 = np.asarray(tp['fc1_w'], np.float32).T
    wf1 = wf1.reshape(c3_out, n_bins, -1).transpose(1, 0, 2).reshape(c3_out * n_bins, -1)

    return dict(
        w1=conv_w(tp['conv1_w']), b1=row(tp['conv1_b']),
        w2=conv_w(tp['conv2_w']), b2=row(tp['conv2_b']),
        w3=conv_w(tp['conv3_w']), b3=row(tp['conv3_b']),
        wfc1=jnp.asarray(wf1), bfc1=row(tp['fc1_b']),
        wfc2=jnp.asarray(np.asarray(tp['fc2_w'], np.float32).T), bfc2=row(tp['fc2_b']),
    )


def cnn_forward(x, params):
    """x: [B, C_in, L] float32 (NCL as in PyTorch). Returns [B, n_cls] log-probs."""
    B, c_in, L = x.shape
    assert L >= 7, "need L >= 7 for the two MaxPool1d(3, stride=2) stages"
    L1 = (L - 3) // 2 + 1
    L2 = (L1 - 3) // 2 + 1
    P = _round_up(L + 1, 8)            # rows/chunk; P >= L+1 >= 2*L1+2 >= 4*L2+4
    c3_out = params['w3'].shape[1]
    n_bins = params['wfc1'].shape[0] // c3_out
    n_cls = params['wfc2'].shape[1]
    n_hid = params['wfc2'].shape[0]
    assert n_cls <= _OUT_LANES

    # ---- host-side layout prep (one transpose + pad + tap-concat, total) ----
    xt = jnp.transpose(x, (0, 2, 1)).astype(jnp.float32)           # [B, L, Cin]
    xp = jnp.pad(xt, ((0, 0), (1, P + 1 - L), (0, 0)))             # [B, P+2, Cin]
    x_cat = jnp.concatenate([xp[:, 0:P], xp[:, 1:P + 1], xp[:, 2:P + 2]],
                            axis=-1)                               # [B, P, 3*Cin]

    # Masks zeroing the non-valid rows of the in-place strided layout (so the
    # roll wrap-around / out-of-range taps behave as conv zero padding).
    r = np.arange(P)
    mask1 = jnp.asarray(((r % 2 == 0) & (r // 2 < L1)).astype(np.float32).reshape(P, 1))
    mask2 = jnp.asarray(((r % 4 == 0) & (r // 4 < L2)).astype(np.float32).reshape(P, 1))
    # Adaptive-average-pool matrix (also selects only the valid stride-4 rows).
    a_t = np.zeros((n_bins, P), np.float32)
    for i, (s, e) in enumerate(_adaptive_bins(L2, n_bins)):
        a_t[i, 4 * np.arange(s, e)] = 1.0 / (e - s)
    a_t = jnp.asarray(a_t)

    # Lane-dense fc2: zero-padded weights to 128 output lanes; bias -1e30 on pad
    # lanes makes them vanish from the in-kernel log-softmax.
    wf2p = jnp.zeros((n_hid, _OUT_LANES), jnp.float32).at[:, :n_cls].set(params['wfc2'])
    bf2p = jnp.full((1, _OUT_LANES), _NEG_BIG, jnp.float32).at[:, :n_cls].set(params['bfc2'])

    weights = (params['w1'], params['b1'], params['w2'], params['b2'],
               params['w3'], params['b3'], params['wfc1'], params['bfc1'],
               wf2p, bf2p)
    full2 = lambda arr: pl.BlockSpec(arr.shape, lambda b: (0, 0))  # resident operand

    out = pl.pallas_call(
        _make_cnn_kernel(P, n_bins),
        grid=(B,),
        out_shape=jax.ShapeDtypeStruct((B, 8, _OUT_LANES), jnp.float32),
        in_specs=[pl.BlockSpec((1, P, 3 * c_in), lambda b: (b, 0, 0)),
                  full2(mask1), full2(mask2), full2(a_t)]
                 + [full2(w) for w in weights],
        out_specs=pl.BlockSpec((1, 8, _OUT_LANES), lambda b: (b, 0, 0)),
        compiler_params=pltpu.CompilerParams(dimension_semantics=("parallel",)),
    )(x_cat, mask1, mask2, a_t, *weights)
    return out[:, 0, :n_cls]


def reference_forward_np(x, tp):
    """Independent NumPy (float64) re-implementation of the PyTorch CNN forward."""
    def conv1d(h, w, b):                       # h: [B, C, L], w: [O, C, 3], pad=1
        Bb, C, Ll = h.shape
        hp = np.pad(h, ((0, 0), (0, 0), (1, 1)))
        out = np.zeros((Bb, w.shape[0], Ll))
        for k in range(3):
            out += np.einsum('bcl,oc->bol', hp[:, :, k:k + Ll], w[:, :, k])
        return out + b[None, :, None]

    def maxpool3s2(h):
        Lo = (h.shape[2] - 3) // 2 + 1
        return np.stack([h[:, :, 2 * l:2 * l + 3].max(axis=2) for l in range(Lo)],
                        axis=2)

    def adaptive_avg(h, n_bins):
        Ll = h.shape[2]
        cols = []
        for i in range(n_bins):
            s = (i * Ll) // n_bins
            e = ((i + 1) * Ll + n_bins - 1) // n_bins
            cols.append(h[:, :, s:e].mean(axis=2))
        return np.stack(cols, axis=2)

    h = np.maximum(conv1d(x, tp['conv1_w'], tp['conv1_b']), 0.0)
    h = maxpool3s2(h)
    h = np.maximum(conv1d(h, tp['conv2_w'], tp['conv2_b']), 0.0)
    h = maxpool3s2(h)
    h = np.maximum(conv1d(h, tp['conv3_w'], tp['conv3_b']), 0.0)
    h = adaptive_avg(h, 8)
    h = h.reshape(h.shape[0], -1)              # torch.flatten(start_dim=1)
    h = np.maximum(h @ tp['fc1_w'].T + tp['fc1_b'], 0.0)
    logits = h @ tp['fc2_w'].T + tp['fc2_b']   # dropout: inference no-op
    z = logits - logits.max(axis=1, keepdims=True)
    return z - np.log(np.exp(z).sum(axis=1, keepdims=True))


if __name__ == "__main__":
    B, C_IN, L = 2, 4, 64

    key = jax.random.PRNGKey(0)
    ks = jax.random.split(key, 11)

    def winit(k, shape, fan_in):
        return jax.random.normal(k, shape, jnp.float32) / np.sqrt(fan_in)

    torch_params = dict(
        conv1_w=winit(ks[0], (16, C_IN, 3), 3 * C_IN),
        conv1_b=winit(ks[1], (16,), 3 * C_IN),
        conv2_w=winit(ks[2], (32, 16, 3), 3 * 16),
        conv2_b=winit(ks[3], (32,), 3 * 16),
        conv3_w=winit(ks[4], (64, 32, 3), 3 * 32),
        conv3_b=winit(ks[5], (64,), 3 * 32),
        fc1_w=winit(ks[6], (256, 512), 512),
        fc1_b=winit(ks[7], (256,), 512),
        fc2_w=winit(ks[8], (2, 256), 256),
        fc2_b=winit(ks[9], (2,), 256),
    )
    x = jax.random.normal(ks[10], (B, C_IN, L), jnp.float32)

    params = prepare_params(torch_params)
    fwd = jax.jit(cnn_forward)
    out = fwd(x, params)
    jax.block_until_ready(out)
    out_np = np.asarray(out, dtype=np.float64)

    ref = reference_forward_np(
        np.asarray(x, dtype=np.float64),
        {k: np.asarray(v, dtype=np.float64) for k, v in torch_params.items()})

    assert out_np.shape == (B, 2)
    assert np.all(np.isfinite(out_np))
    # log-probs must be normalized (computed in f32 inside the kernel)
    np.testing.assert_allclose(np.exp(out_np).sum(axis=1), 1.0, atol=1e-4)
    # all dots use precision=HIGHEST -> tight tolerance catches any structural bug
    np.testing.assert_allclose(out_np, ref, rtol=0.0, atol=3e-3)
    print("KERNEL_OK")
</pallas_src>

<mosaic_0001>
module attributes {stable_mosaic.version = 11 : i64} {
  func.func @kernel(%arg0: i32, %arg1: memref<1x72x12xf32, #tpu.memory_space<vmem>>, %arg2: memref<72x1xf32, #tpu.memory_space<vmem>>, %arg3: memref<72x1xf32, #tpu.memory_space<vmem>>, %arg4: memref<8x72xf32, #tpu.memory_space<vmem>>, %arg5: memref<12x16xf32, #tpu.memory_space<vmem>>, %arg6: memref<1x16xf32, #tpu.memory_space<vmem>>, %arg7: memref<48x32xf32, #tpu.memory_space<vmem>>, %arg8: memref<1x32xf32, #tpu.memory_space<vmem>>, %arg9: memref<96x64xf32, #tpu.memory_space<vmem>>, %arg10: memref<1x64xf32, #tpu.memory_space<vmem>>, %arg11: memref<512x256xf32, #tpu.memory_space<vmem>>, %arg12: memref<1x256xf32, #tpu.memory_space<vmem>>, %arg13: memref<256x128xf32, #tpu.memory_space<vmem>>, %arg14: memref<1x128xf32, #tpu.memory_space<vmem>>, %arg15: memref<1x8x128xf32, #tpu.memory_space<vmem>>) attributes {dimension_semantics = [#tpu.dimension_semantics<parallel>], iteration_bounds = array<i64: 2>, scalar_prefetch = 0 : i64, scratch_operands = 0 : i64, tpu.core_type = #tpu.core_type<tc>, window_params = [{transform_indices = @transform_0, window_bounds = array<i64: 1, 72, 12>}, {pipeline_mode = #tpu.pipeline_mode<synchronous>, transform_indices = @transform_1, window_bounds = array<i64: 72, 1>}, {pipeline_mode = #tpu.pipeline_mode<synchronous>, transform_indices = @transform_2, window_bounds = array<i64: 72, 1>}, {pipeline_mode = #tpu.pipeline_mode<synchronous>, transform_indices = @transform_3, window_bounds = array<i64: 8, 72>}, {pipeline_mode = #tpu.pipeline_mode<synchronous>, transform_indices = @transform_4, window_bounds = array<i64: 12, 16>}, {pipeline_mode = #tpu.pipeline_mode<synchronous>, transform_indices = @transform_5, window_bounds = array<i64: 1, 16>}, {pipeline_mode = #tpu.pipeline_mode<synchronous>, transform_indices = @transform_6, window_bounds = array<i64: 48, 32>}, {pipeline_mode = #tpu.pipeline_mode<synchronous>, transform_indices = @transform_7, window_bounds = array<i64: 1, 32>}, {pipeline_mode = #tpu.pipeline_mode<synchronous>, transform_indices = @transform_8, window_bounds = array<i64: 96, 64>}, {pipeline_mode = #tpu.pipeline_mode<synchronous>, transform_indices = @transform_9, window_bounds = array<i64: 1, 64>}, {pipeline_mode = #tpu.pipeline_mode<synchronous>, transform_indices = @transform_10, window_bounds = array<i64: 512, 256>}, {pipeline_mode = #tpu.pipeline_mode<synchronous>, transform_indices = @transform_11, window_bounds = array<i64: 1, 256>}, {pipeline_mode = #tpu.pipeline_mode<synchronous>, transform_indices = @transform_12, window_bounds = array<i64: 256, 128>}, {pipeline_mode = #tpu.pipeline_mode<synchronous>, transform_indices = @transform_13, window_bounds = array<i64: 1, 128>}, {transform_indices = @transform_14, window_bounds = array<i64: 1, 8, 128>}]} {
    %c0 = arith.constant 0 : index
    %c0_0 = arith.constant 0 : index
    %c0_1 = arith.constant 0 : index
    %0 = vector.load %arg1[%c0, %c0_0, %c0_1] : memref<1x72x12xf32, #tpu.memory_space<vmem>>, vector<1x72x12xf32>
    %1 = vector.shape_cast %0 : vector<1x72x12xf32> to vector<72x12xf32>
    %c0_2 = arith.constant 0 : index
    %c0_3 = arith.constant 0 : index
    %2 = vector.load %arg5[%c0_2, %c0_3] : memref<12x16xf32, #tpu.memory_space<vmem>>, vector<12x16xf32>
    %cst = arith.constant dense<0.000000e+00> : vector<72x16xf32>
    %3 = tpu.matmul %1, %2, %cst {dimension_numbers = #tpu.dot_dimension_numbers<[1], [0], [0], [1], [0, 0, 1, 1], [], []>, precision = #tpu.contract_precision<fp32>} : vector<72x12xf32>, vector<12x16xf32>, vector<72x16xf32> -> vector<72x16xf32>
    %c0_4 = arith.constant 0 : index
    %c0_5 = arith.constant 0 : index
    %4 = vector.load %arg6[%c0_4, %c0_5] : memref<1x16xf32, #tpu.memory_space<vmem>>, vector<1x16xf32>
    %5 = vector.broadcast %4 : vector<1x16xf32> to vector<72x16xf32>
    %6 = arith.addf %3, %5 : vector<72x16xf32>
    %cst_6 = arith.constant 0.000000e+00 : f32
    %7 = vector.broadcast %cst_6 : f32 to vector<72x16xf32>
    %8 = arith.maximumf %6, %7 : vector<72x16xf32>
    %c71_i32 = arith.constant 71 : i32
    %9 = tpu.dynamic_rotate %8 by %c71_i32 dim 0 : vector<72x16xf32>, i32 -> vector<72x16xf32>
    %10 = arith.maximumf %8, %9 : vector<72x16xf32>
    %c70_i32 = arith.constant 70 : i32
    %11 = tpu.dynamic_rotate %8 by %c70_i32 dim 0 : vector<72x16xf32>, i32 -> vector<72x16xf32>
    %12 = arith.maximumf %10, %11 : vector<72x16xf32>
    %c0_7 = arith.constant 0 : index
    %c0_8 = arith.constant 0 : index
    %13 = vector.load %arg2[%c0_7, %c0_8] : memref<72x1xf32, #tpu.memory_space<vmem>>, vector<72x1xf32>
    %14 = vector.broadcast %13 : vector<72x1xf32> to vector<72x16xf32>
    %15 = arith.mulf %12, %14 : vector<72x16xf32>
    %c2_i32 = arith.constant 2 : i32
    %16 = tpu.dynamic_rotate %15 by %c2_i32 dim 0 : vector<72x16xf32>, i32 -> vector<72x16xf32>
    %c70_i32_9 = arith.constant 70 : i32
    %17 = tpu.dynamic_rotate %15 by %c70_i32_9 dim 0 : vector<72x16xf32>, i32 -> vector<72x16xf32>
    %18 = tpu.concatenate %16, %15, %17 in 1 : vector<72x16xf32>, vector<72x16xf32>, vector<72x16xf32> -> vector<72x48xf32>
    %c0_10 = arith.constant 0 : index
    %c0_11 = arith.constant 0 : index
    %19 = vector.load %arg7[%c0_10, %c0_11] : memref<48x32xf32, #tpu.memory_space<vmem>>, vector<48x32xf32>
    %cst_12 = arith.constant dense<0.000000e+00> : vector<72x32xf32>
    %20 = tpu.matmul %18, %19, %cst_12 {dimension_numbers = #tpu.dot_dimension_numbers<[1], [0], [0], [1], [0, 0, 1, 1], [], []>, precision = #tpu.contract_precision<fp32>} : vector<72x48xf32>, vector<48x32xf32>, vector<72x32xf32> -> vector<72x32xf32>
    %c0_13 = arith.constant 0 : index
    %c0_14 = arith.constant 0 : index
    %21 = vector.load %arg8[%c0_13, %c0_14] : memref<1x32xf32, #tpu.memory_space<vmem>>, vector<1x32xf32>
    %22 = vector.broadcast %21 : vector<1x32xf32> to vector<72x32xf32>
    %23 = arith.addf %20, %22 : vector<72x32xf32>
    %cst_15 = arith.constant 0.000000e+00 : f32
    %24 = vector.broadcast %cst_15 : f32 to vector<72x32xf32>
    %25 = arith.maximumf %23, %24 : vector<72x32xf32>
    %c70_i32_16 = arith.constant 70 : i32
    %26 = tpu.dynamic_rotate %25 by %c70_i32_16 dim 0 : vector<72x32xf32>, i32 -> vector<72x32xf32>
    %27 = arith.maximumf %25, %26 : vector<72x32xf32>
    %c68_i32 = arith.constant 68 : i32
    %28 = tpu.dynamic_rotate %25 by %c68_i32 dim 0 : vector<72x32xf32>, i32 -> vector<72x32xf32>
    %29 = arith.maximumf %27, %28 : vector<72x32xf32>
    %c0_17 = arith.constant 0 : index
    %c0_18 = arith.constant 0 : index
    %30 = vector.load %arg3[%c0_17, %c0_18] : memref<72x1xf32, #tpu.memory_space<vmem>>, vector<72x1xf32>
    %31 = vector.broadcast %30 : vector<72x1xf32> to vector<72x32xf32>
    %32 = arith.mulf %29, %31 : vector<72x32xf32>
    %c4_i32 = arith.constant 4 : i32
    %33 = tpu.dynamic_rotate %32 by %c4_i32 dim 0 : vector<72x32xf32>, i32 -> vector<72x32xf32>
    %c68_i32_19 = arith.constant 68 : i32
    %34 = tpu.dynamic_rotate %32 by %c68_i32_19 dim 0 : vector<72x32xf32>, i32 -> vector<72x32xf32>
    %35 = tpu.concatenate %33, %32, %34 in 1 : vector<72x32xf32>, vector<72x32xf32>, vector<72x32xf32> -> vector<72x96xf32>
    %c0_20 = arith.constant 0 : index
    %c0_21 = arith.constant 0 : index
    %36 = vector.load %arg9[%c0_20, %c0_21] : memref<96x64xf32, #tpu.memory_space<vmem>>, vector<96x64xf32>
    %cst_22 = arith.constant dense<0.000000e+00> : vector<72x64xf32>
    %37 = tpu.matmul %35, %36, %cst_22 {dimension_numbers = #tpu.dot_dimension_numbers<[1], [0], [0], [1], [0, 0, 1, 1], [], []>, precision = #tpu.contract_precision<fp32>} : vector<72x96xf32>, vector<96x64xf32>, vector<72x64xf32> -> vector<72x64xf32>
    %c0_23 = arith.constant 0 : index
    %c0_24 = arith.constant 0 : index
    %38 = vector.load %arg10[%c0_23, %c0_24] : memref<1x64xf32, #tpu.memory_space<vmem>>, vector<1x64xf32>
    %39 = vector.broadcast %38 : vector<1x64xf32> to vector<72x64xf32>
    %40 = arith.addf %37, %39 : vector<72x64xf32>
    %cst_25 = arith.constant 0.000000e+00 : f32
    %41 = vector.broadcast %cst_25 : f32 to vector<72x64xf32>
    %42 = arith.maximumf %40, %41 : vector<72x64xf32>
    %c0_26 = arith.constant 0 : index
    %c0_27 = arith.constant 0 : index
    %43 = vector.load %arg4[%c0_26, %c0_27] : memref<8x72xf32, #tpu.memory_space<vmem>>, vector<8x72xf32>
    %cst_28 = arith.constant dense<0.000000e+00> : vector<8x64xf32>
    %44 = tpu.matmul %43, %42, %cst_28 {dimension_numbers = #tpu.dot_dimension_numbers<[1], [0], [0], [1], [0, 0, 1, 1], [], []>, precision = #tpu.contract_precision<fp32>} : vector<8x72xf32>, vector<72x64xf32>, vector<8x64xf32> -> vector<8x64xf32>
    %45 = vector.extract_strided_slice %44 {offsets = [0, 0], sizes = [1, 64], strides = [1, 1]} : vector<8x64xf32> to vector<1x64xf32>
    %46 = vector.extract_strided_slice %44 {offsets = [1, 0], sizes = [1, 64], strides = [1, 1]} : vector<8x64xf32> to vector<1x64xf32>
    %47 = vector.extract_strided_slice %44 {offsets = [2, 0], sizes = [1, 64], strides = [1, 1]} : vector<8x64xf32> to vector<1x64xf32>
    %48 = vector.extract_strided_slice %44 {offsets = [3, 0], sizes = [1, 64], strides = [1, 1]} : vector<8x64xf32> to vector<1x64xf32>
    %49 = vector.extract_strided_slice %44 {offsets = [4, 0], sizes = [1, 64], strides = [1, 1]} : vector<8x64xf32> to vector<1x64xf32>
    %50 = vector.extract_strided_slice %44 {offsets = [5, 0], sizes = [1, 64], strides = [1, 1]} : vector<8x64xf32> to vector<1x64xf32>
    %51 = vector.extract_strided_slice %44 {offsets = [6, 0], sizes = [1, 64], strides = [1, 1]} : vector<8x64xf32> to vector<1x64xf32>
    %52 = vector.extract_strided_slice %44 {offsets = [7, 0], sizes = [1, 64], strides = [1, 1]} : vector<8x64xf32> to vector<1x64xf32>
    %53 = tpu.concatenate %45, %46, %47, %48, %49, %50, %51, %52 in 1 : vector<1x64xf32>, vector<1x64xf32>, vector<1x64xf32>, vector<1x64xf32>, vector<1x64xf32>, vector<1x64xf32>, vector<1x64xf32>, vector<1x64xf32> -> vector<1x512xf32>
    %c0_29 = arith.constant 0 : index
    %c0_30 = arith.constant 0 : index
    %54 = vector.load %arg11[%c0_29, %c0_30] : memref<512x256xf32, #tpu.memory_space<vmem>>, vector<512x256xf32>
    %cst_31 = arith.constant dense<0.000000e+00> : vector<1x256xf32>
    %55 = tpu.matmul %53, %54, %cst_31 {dimension_numbers = #tpu.dot_dimension_numbers<[1], [0], [0], [1], [0, 0, 1, 1], [], []>, precision = #tpu.contract_precision<fp32>} : vector<1x512xf32>, vector<512x256xf32>, vector<1x256xf32> -> vector<1x256xf32>
    %c0_32 = arith.constant 0 : index
    %c0_33 = arith.constant 0 : index
    %56 = vector.load %arg12[%c0_32, %c0_33] : memref<1x256xf32, #tpu.memory_space<vmem>>, vector<1x256xf32>
    %57 = arith.addf %55, %56 : vector<1x256xf32>
    %cst_34 = arith.constant 0.000000e+00 : f32
    %58 = vector.broadcast %cst_34 : f32 to vector<1x256xf32>
    %59 = arith.maximumf %57, %58 : vector<1x256xf32>
    %c0_35 = arith.constant 0 : index
    %c0_36 = arith.constant 0 : index
    %60 = vector.load %arg13[%c0_35, %c0_36] : memref<256x128xf32, #tpu.memory_space<vmem>>, vector<256x128xf32>
    %cst_37 = arith.constant dense<0.000000e+00> : vector<1x128xf32>
    %61 = tpu.matmul %59, %60, %cst_37 {dimension_numbers = #tpu.dot_dimension_numbers<[1], [0], [0], [1], [0, 0, 1, 1], [], []>, precision = #tpu.contract_precision<fp32>} : vector<1x256xf32>, vector<256x128xf32>, vector<1x128xf32> -> vector<1x128xf32>
    %c0_38 = arith.constant 0 : index
    %c0_39 = arith.constant 0 : index
    %62 = vector.load %arg14[%c0_38, %c0_39] : memref<1x128xf32, #tpu.memory_space<vmem>>, vector<1x128xf32>
    %63 = arith.addf %61, %62 : vector<1x128xf32>
    %cst_40 = arith.constant dense<0xFF800000> : vector<1xf32>
    %64 = vector.multi_reduction <maximumf>, %63, %cst_40 [1] : vector<1x128xf32> to vector<1xf32>
    %65 = vector.shape_cast %64 : vector<1xf32> to vector<1x1xf32>
    %66 = vector.broadcast %65 : vector<1x1xf32> to vector<1x128xf32>
    %67 = arith.subf %63, %66 : vector<1x128xf32>
    %68 = math.exp %67 : vector<1x128xf32>
    %cst_41 = arith.constant dense<0.000000e+00> : vector<1xf32>
    %69 = vector.multi_reduction <add>, %68, %cst_41 [1] : vector<1x128xf32> to vector<1xf32>
    %70 = vector.shape_cast %69 : vector<1xf32> to vector<1x1xf32>
    %71 = math.log %70 : vector<1x1xf32>
    %72 = vector.broadcast %71 : vector<1x1xf32> to vector<1x128xf32>
    %73 = arith.subf %67, %72 : vector<1x128xf32>
    %74 = vector.shape_cast %73 : vector<1x128xf32> to vector<1x128xf32>
    %75 = vector.broadcast %74 : vector<1x128xf32> to vector<8x128xf32>
    %c0_42 = arith.constant 0 : index
    %c0_43 = arith.constant 0 : index
    %c0_44 = arith.constant 0 : index
    %76 = vector.load %arg15[%c0_42, %c0_43, %c0_44] : memref<1x8x128xf32, #tpu.memory_space<vmem>>, vector<1x8x128xf32>
    %77 = vector.shape_cast %76 : vector<1x8x128xf32> to vector<8x128xf32>
    %78 = vector.shape_cast %75 : vector<8x128xf32> to vector<1x8x128xf32>
    tpu.vector_store %arg15[%c0_42, %c0_43, %c0_44], %78 {strides = array<i32>} : memref<1x8x128xf32, #tpu.memory_space<vmem>>, vector<1x8x128xf32>,
    return
  }
  func.func @transform_0(%arg0: i32) -> (i32, i32, i32) {
    %c0_i32 = arith.constant 0 : i32
    %c0_i32_0 = arith.constant 0 : i32
    %c0_i32_1 = arith.constant 0 : i32
    return %arg0, %c0_i32, %c0_i32_0 : i32, i32, i32
  }
  func.func @transform_1(%arg0: i32) -> (i32, i32) {
    %c0_i32 = arith.constant 0 : i32
    %c0_i32_0 = arith.constant 0 : i32
    %c0_i32_1 = arith.constant 0 : i32
    return %c0_i32, %c0_i32_0 : i32, i32
  }
  func.func @transform_2(%arg0: i32) -> (i32, i32) {
    %c0_i32 = arith.constant 0 : i32
    %c0_i32_0 = arith.constant 0 : i32
    %c0_i32_1 = arith.constant 0 : i32
    return %c0_i32, %c0_i32_0 : i32, i32
  }
  func.func @transform_3(%arg0: i32) -> (i32, i32) {
    %c0_i32 = arith.constant 0 : i32
    %c0_i32_0 = arith.constant 0 : i32
    %c0_i32_1 = arith.constant 0 : i32
    return %c0_i32, %c0_i32_0 : i32, i32
  }
  func.func @transform_4(%arg0: i32) -> (i32, i32) {
    %c0_i32 = arith.constant 0 : i32
    %c0_i32_0 = arith.constant 0 : i32
    %c0_i32_1 = arith.constant 0 : i32
    return %c0_i32, %c0_i32_0 : i32, i32
  }
  func.func @transform_5(%arg0: i32) -> (i32, i32) {
    %c0_i32 = arith.constant 0 : i32
    %c0_i32_0 = arith.constant 0 : i32
    %c0_i32_1 = arith.constant 0 : i32
    return %c0_i32, %c0_i32_0 : i32, i32
  }
  func.func @transform_6(%arg0: i32) -> (i32, i32) {
    %c0_i32 = arith.constant 0 : i32
    %c0_i32_0 = arith.constant 0 : i32
    %c0_i32_1 = arith.constant 0 : i32
    return %c0_i32, %c0_i32_0 : i32, i32
  }
  func.func @transform_7(%arg0: i32) -> (i32, i32) {
    %c0_i32 = arith.constant 0 : i32
    %c0_i32_0 = arith.constant 0 : i32
    %c0_i32_1 = arith.constant 0 : i32
    return %c0_i32, %c0_i32_0 : i32, i32
  }
  func.func @transform_8(%arg0: i32) -> (i32, i32) {
    %c0_i32 = arith.constant 0 : i32
    %c0_i32_0 = arith.constant 0 : i32
    %c0_i32_1 = arith.constant 0 : i32
    return %c0_i32, %c0_i32_0 : i32, i32
  }
  func.func @transform_9(%arg0: i32) -> (i32, i32) {
    %c0_i32 = arith.constant 0 : i32
    %c0_i32_0 = arith.constant 0 : i32
    %c0_i32_1 = arith.constant 0 : i32
    return %c0_i32, %c0_i32_0 : i32, i32
  }
  func.func @transform_10(%arg0: i32) -> (i32, i32) {
    %c0_i32 = arith.constant 0 : i32
    %c0_i32_0 = arith.constant 0 : i32
    %c0_i32_1 = arith.constant 0 : i32
    return %c0_i32, %c0_i32_0 : i32, i32
  }
  func.func @transform_11(%arg0: i32) -> (i32, i32) {
    %c0_i32 = arith.constant 0 : i32
    %c0_i32_0 = arith.constant 0 : i32
    %c0_i32_1 = arith.constant 0 : i32
    return %c0_i32, %c0_i32_0 : i32, i32
  }
  func.func @transform_12(%arg0: i32) -> (i32, i32) {
    %c0_i32 = arith.constant 0 : i32
    %c0_i32_0 = arith.constant 0 : i32
    %c0_i32_1 = arith.constant 0 : i32
    return %c0_i32, %c0_i32_0 : i32, i32
  }
  func.func @transform_13(%arg0: i32) -> (i32, i32) {
    %c0_i32 = arith.constant 0 : i32
    %c0_i32_0 = arith.constant 0 : i32
    %c0_i32_1 = arith.constant 0 : i32
    return %c0_i32, %c0_i32_0 : i32, i32
  }
  func.func @transform_14(%arg0: i32) -> (i32, i32, i32) {
    %c0_i32 = arith.constant 0 : i32
    %c0_i32_0 = arith.constant 0 : i32
    %c0_i32_1 = arith.constant 0 : i32
    return %arg0, %c0_i32, %c0_i32_0 : i32, i32, i32
  }
}

</mosaic_0001>

<llo_original>
// kernel: cnn_forward.1
$region0: #{cnn_forward.1}
  #allocation0 [shape = 'u32[]', space=smem, size = 0x4, offset = 0x4, fixed_abs, tag = 'smem constant byte address 0x4 - core index']
  #allocation1 [shape = 'u32[144,128]{1,0:T(1,128)}', space=vmem, size = 0x12000, scoped, tag = 'internal scratch']
  %s0 = inlined_call_operand.vmem [shape: f32[2,72,12], index: 0, kind: input, shape index: {}]
  %s1 = inlined_call_operand.vmem [shape: f32[72,1], index: 1, kind: input, shape index: {}]
  %s2 = inlined_call_operand.vmem [shape: f32[72,1], index: 2, kind: input, shape index: {}]
  %s3 = inlined_call_operand.vmem [shape: f32[8,72], index: 3, kind: input, shape index: {}]
  %s4 = inlined_call_operand.vmem [shape: f32[12,16], index: 4, kind: input, shape index: {}]
  %s5 = inlined_call_operand.vmem [shape: f32[1,16], index: 5, kind: input, shape index: {}]
  %s6 = inlined_call_operand.vmem [shape: f32[48,32], index: 6, kind: input, shape index: {}]
  %s7 = inlined_call_operand.vmem [shape: f32[1,32], index: 7, kind: input, shape index: {}]
  %s8 = inlined_call_operand.vmem [shape: f32[96,64], index: 8, kind: input, shape index: {}]
  %s9 = inlined_call_operand.vmem [shape: f32[1,64], index: 9, kind: input, shape index: {}]
  %s10 = inlined_call_operand.vmem [shape: f32[512,256], index: 10, kind: input, shape index: {}]
  %s11 = inlined_call_operand.vmem [shape: f32[1,256], index: 11, kind: input, shape index: {}]
  %s12 = inlined_call_operand.vmem [shape: f32[256,128], index: 12, kind: input, shape index: {}]
  %s13 = inlined_call_operand.vmem [shape: f32[1,128], index: 13, kind: input, shape index: {}]
  %s14 = inlined_call_operand.vmem [shape: f32[2,8,128], index: 14, kind: output, shape index: {}]
  %s15 = sld [smem:[#allocation0]]
  $region89: #{cnn_forward.1} parent=0
    _
  %s17 = ssub.s32 1, %s15
  %s18 = scalar_select 0, %s17, %s15
  loop: start=0, step=1, limit=4
  $region2: #{cnn_forward.1} parent=0 // loop_pre_header
    _
  $region3: #{cnn_forward.1} parent=0 // loop_header
    %s20 = sphi 0, %s24
    %p21 = scmp.ge.s32.totalorder %s20, 4
    %s30 = sphi 0, %s32
    %s33 = sphi 0, %s30
    %s34 = sphi 0, %s33
    %s50 = sphi 0, %s34
    %s54 = sphi 0, %s54
    %s56 = sphi 0, %s54
    %s57 = sphi 0, %s56
    %s71 = sphi 0, %s57
    %s75 = sphi 0, %s75
    %s77 = sphi 0, %s75
    %s78 = sphi 0, %s77
    %s92 = sphi 0, %s78
    %s96 = sphi 0, %s96
    %s98 = sphi 0, %s96
    %s99 = sphi 0, %s98
    %s113 = sphi 0, %s99
    %s117 = sphi 0, %s117
    %s119 = sphi 0, %s117
    %s120 = sphi 0, %s119
    %s134 = sphi 0, %s120
    %s138 = sphi 0, %s138
    %s140 = sphi 0, %s138
    %s141 = sphi 0, %s140
    %s155 = sphi 0, %s141
    %s159 = sphi 0, %s159
    %s161 = sphi 0, %s159
    %s162 = sphi 0, %s161
    %s176 = sphi 0, %s162
    %s180 = sphi 0, %s180
    %s182 = sphi 0, %s180
    %s183 = sphi 0, %s182
    %s197 = sphi 0, %s183
    %s201 = sphi 0, %s201
    %s203 = sphi 0, %s201
    %s204 = sphi 0, %s203
    %s218 = sphi 0, %s204
    %s222 = sphi 0, %s222
    %s224 = sphi 0, %s222
    %s225 = sphi 0, %s224
    %s239 = sphi 0, %s225
    %s243 = sphi 0, %s243
    %s245 = sphi 0, %s243
    %s246 = sphi 0, %s245
    %s260 = sphi 0, %s246
    %s264 = sphi 0, %s264
    %s266 = sphi 0, %s264
    %s267 = sphi 0, %s266
    %s281 = sphi 0, %s267
    %s285 = sphi 0, %s285
    %s287 = sphi 0, %s285
    %s288 = sphi 0, %s287
    %s302 = sphi 0, %s288
    %s306 = sphi 0, %s306
    %s308 = sphi 0, %s306
    %s309 = sphi 0, %s308
    %s323 = sphi 0, %s309
    %s329 = sphi 0, %s331
    %s332 = sphi 0, %s329
    %s333 = sphi 0, %s332
    %s349 = sphi 0, %s333
  $region4: #{cnn_forward.1} parent=0 // loop_header_branch
    %23 = sbr.rel (%p21) target = $region8
  $region5: #{cnn_forward.1} parent=0 // loop_body
    %s25 = ssub.s32 %s20, 1
    %s26 = ssub.s32 %s20, 2
    %s27 = sadd.s32 %s20, 1
    %s28 = ssub.s32 %s20, %s27
    %p29 = scmp.eq.s32.totalorder %s28, 0
    %s31 = sadd.s32 %s30, 1
    %s32 = scalar_select %p29, %s30, %s31
    %p35 = pneg %p29
    %p36 = scmp.eq.s32.totalorder %s20, 1
    %p37 = por %p35, %p36
    %p38 = scmp.ne.s32.totalorder %s30, %s33
    %p39 = scmp.eq.s32.totalorder %s20, 0
    %p40 = por %p38, %p39
    %p41 = scmp.ne.s32.totalorder %s30, %s33
    %p42 = scmp.eq.s32.totalorder %s25, 1
    %p43 = por %p41, %p42
    %p44 = scmp.ne.s32.totalorder %s33, %s34
    %p45 = scmp.eq.s32.totalorder %s25, 0
    %p46 = por %p44, %p45
    %p47 = scmp.ne.s32.totalorder %s33, %s34
    %p48 = scmp.eq.s32.totalorder %s26, 1
    %p49 = por %p47, %p48
    %p51 = scmp.ne.s32.totalorder %s34, %s50
    %p52 = scmp.eq.s32.totalorder %s26, 0
    %p53 = por %p51, %p52
    %s55 = sadd.s32 %s54, 1
    %p58 = scmp.eq.s32.totalorder %s20, 1
    %p59 = scmp.ne.s32.totalorder %s54, %s56
    %p60 = scmp.eq.s32.totalorder %s20, 0
    %p61 = por %p59, %p60
    %p62 = scmp.ne.s32.totalorder %s54, %s56
    %p63 = scmp.eq.s32.totalorder %s25, 1
    %p64 = por %p62, %p63
    %p65 = scmp.ne.s32.totalorder %s56, %s57
    %p66 = scmp.eq.s32.totalorder %s25, 0
    %p67 = por %p65, %p66
    %p68 = scmp.ne.s32.totalorder %s56, %s57
    %p69 = scmp.eq.s32.totalorder %s26, 1
    %p70 = por %p68, %p69
    %p72 = scmp.ne.s32.totalorder %s57, %s71
    %p73 = scmp.eq.s32.totalorder %s26, 0
    %p74 = por %p72, %p73
    %s76 = sadd.s32 %s75, 1
    %p79 = scmp.eq.s32.totalorder %s20, 1
    %p80 = scmp.ne.s32.totalorder %s75, %s77
    %p81 = scmp.eq.s32.totalorder %s20, 0
    %p82 = por %p80, %p81
    %p83 = scmp.ne.s32.totalorder %s75, %s77
    %p84 = scmp.eq.s32.totalorder %s25, 1
    %p85 = por %p83, %p84
    %p86 = scmp.ne.s32.totalorder %s77, %s78
    %p87 = scmp.eq.s32.totalorder %s25, 0
    %p88 = por %p86, %p87
    %p89 = scmp.ne.s32.totalorder %s77, %s78
    %p90 = scmp.eq.s32.totalorder %s26, 1
    %p91 = por %p89, %p90
    %p93 = scmp.ne.s32.totalorder %s78, %s92
    %p94 = scmp.eq.s32.totalorder %s26, 0
    %p95 = por %p93, %p94
    %s97 = sadd.s32 %s96, 1
    %p100 = scmp.eq.s32.totalorder %s20, 1
    %p101 = scmp.ne.s32.totalorder %s96, %s98
    %p102 = scmp.eq.s32.totalorder %s20, 0
    %p103 = por %p101, %p102
    %p104 = scmp.ne.s32.totalorder %s96, %s98
    %p105 = scmp.eq.s32.totalorder %s25, 1
    %p106 = por %p104, %p105
    %p107 = scmp.ne.s32.totalorder %s98, %s99
    %p108 = scmp.eq.s32.totalorder %s25, 0
    %p109 = por %p107, %p108
    %p110 = scmp.ne.s32.totalorder %s98, %s99
    %p111 = scmp.eq.s32.totalorder %s26, 1
    %p112 = por %p110, %p111
    %p114 = scmp.ne.s32.totalorder %s99, %s113
    %p115 = scmp.eq.s32.totalorder %s26, 0
    %p116 = por %p114, %p115
    %s118 = sadd.s32 %s117, 1
    %p121 = scmp.eq.s32.totalorder %s20, 1
    %p122 = scmp.ne.s32.totalorder %s117, %s119
    %p123 = scmp.eq.s32.totalorder %s20, 0
    %p124 = por %p122, %p123
    %p125 = scmp.ne.s32.totalorder %s117, %s119
    %p126 = scmp.eq.s32.totalorder %s25, 1
    %p127 = por %p125, %p126
    %p128 = scmp.ne.s32.totalorder %s119, %s120
    %p129 = scmp.eq.s32.totalorder %s25, 0
    %p130 = por %p128, %p129
    %p131 = scmp.ne.s32.totalorder %s119, %s120
    %p132 = scmp.eq.s32.totalorder %s26, 1
    %p133 = por %p131, %p132
    %p135 = scmp.ne.s32.totalorder %s120, %s134
    %p136 = scmp.eq.s32.totalorder %s26, 0
    %p137 = por %p135, %p136
    %s139 = sadd.s32 %s138, 1
    %p142 = scmp.eq.s32.totalorder %s20, 1
    %p143 = scmp.ne.s32.totalorder %s138, %s140
    %p144 = scmp.eq.s32.totalorder %s20, 0
    %p145 = por %p143, %p144
    %p146 = scmp.ne.s32.totalorder %s138, %s140
    %p147 = scmp.eq.s32.totalorder %s25, 1
    %p148 = por %p146, %p147
    %p149 = scmp.ne.s32.totalorder %s140, %s141
    %p150 = scmp.eq.s32.totalorder %s25, 0
    %p151 = por %p149, %p150
    %p152 = scmp.ne.s32.totalorder %s140, %s141
    %p153 = scmp.eq.s32.totalorder %s26, 1
    %p154 = por %p152, %p153
    %p156 = scmp.ne.s32.totalorder %s141, %s155
    %p157 = scmp.eq.s32.totalorder %s26, 0
    %p158 = por %p156, %p157
    %s160 = sadd.s32 %s159, 1
    %p163 = scmp.eq.s32.totalorder %s20, 1
    %p164 = scmp.ne.s32.totalorder %s159, %s161
    %p165 = scmp.eq.s32.totalorder %s20, 0
    %p166 = por %p164, %p165
    %p167 = scmp.ne.s32.totalorder %s159, %s161
    %p168 = scmp.eq.s32.totalorder %s25, 1
    %p169 = por %p167, %p168
    %p170 = scmp.ne.s32.totalorder %s161, %s162
    %p171 = scmp.eq.s32.totalorder %s25, 0
    %p172 = por %p170, %p171
    %p173 = scmp.ne.s32.totalorder %s161, %s162
    %p174 = scmp.eq.s32.totalorder %s26, 1
    %p175 = por %p173, %p174
    %p177 = scmp.ne.s32.totalorder %s162, %s176
    %p178 = scmp.eq.s32.totalorder %s26, 0
    %p179 = por %p177, %p178
    %s181 = sadd.s32 %s180, 1
    %p184 = scmp.eq.s32.totalorder %s20, 1
    %p185 = scmp.ne.s32.totalorder %s180, %s182
    %p186 = scmp.eq.s32.totalorder %s20, 0
    %p187 = por %p185, %p186
    %p188 = scmp.ne.s32.totalorder %s180, %s182
    %p189 = scmp.eq.s32.totalorder %s25, 1
    %p190 = por %p188, %p189
    %p191 = scmp.ne.s32.totalorder %s182, %s183
    %p192 = scmp.eq.s32.totalorder %s25, 0
    %p193 = por %p191, %p192
    %p194 = scmp.ne.s32.totalorder %s182, %s183
    %p195 = scmp.eq.s32.totalorder %s26, 1
    %p196 = por %p194, %p195
    %p198 = scmp.ne.s32.totalorder %s183, %s197
    %p199 = scmp.eq.s32.totalorder %s26, 0
    %p200 = por %p198, %p199
    %s202 = sadd.s32 %s201, 1
    %p205 = scmp.eq.s32.totalorder %s20, 1
    %p206 = scmp.ne.s32.totalorder %s201, %s203
    %p207 = scmp.eq.s32.totalorder %s20, 0
    %p208 = por %p206, %p207
    %p209 = scmp.ne.s32.totalorder %s201, %s203
    %p210 = scmp.eq.s32.totalorder %s25, 1
    %p211 = por %p209, %p210
    %p212 = scmp.ne.s32.totalorder %s203, %s204
    %p213 = scmp.eq.s32.totalorder %s25, 0
    %p214 = por %p212, %p213
    %p215 = scmp.ne.s32.totalorder %s203, %s204
    %p216 = scmp.eq.s32.totalorder %s26, 1
    %p217 = por %p215, %p216
    %p219 = scmp.ne.s32.totalorder %s204, %s218
    %p220 = scmp.eq.s32.totalorder %s26, 0
    %p221 = por %p219, %p220
    %s223 = sadd.s32 %s222, 1
    %p226 = scmp.eq.s32.totalorder %s20, 1
    %p227 = scmp.ne.s32.totalorder %s222, %s224
    %p228 = scmp.eq.s32.totalorder %s20, 0
    %p229 = por %p227, %p228
    %p230 = scmp.ne.s32.totalorder %s222, %s224
    %p231 = scmp.eq.s32.totalorder %s25, 1
    %p232 = por %p230, %p231
    %p233 = scmp.ne.s32.totalorder %s224, %s225
    %p234 = scmp.eq.s32.totalorder %s25, 0
    %p235 = por %p233, %p234
    %p236 = scmp.ne.s32.totalorder %s224, %s225
    %p237 = scmp.eq.s32.totalorder %s26, 1
    %p238 = por %p236, %p237
    %p240 = scmp.ne.s32.totalorder %s225, %s239
    %p241 = scmp.eq.s32.totalorder %s26, 0
    %p242 = por %p240, %p241
    %s244 = sadd.s32 %s243, 1
    %p247 = scmp.eq.s32.totalorder %s20, 1
    %p248 = scmp.ne.s32.totalorder %s243, %s245
    %p249 = scmp.eq.s32.totalorder %s20, 0
    %p250 = por %p248, %p249
    %p251 = scmp.ne.s32.totalorder %s243, %s245
    %p252 = scmp.eq.s32.totalorder %s25, 1
    %p253 = por %p251, %p252
    %p254 = scmp.ne.s32.totalorder %s245, %s246
    %p255 = scmp.eq.s32.totalorder %s25, 0
    %p256 = por %p254, %p255
    %p257 = scmp.ne.s32.totalorder %s245, %s246
    %p258 = scmp.eq.s32.totalorder %s26, 1
    %p259 = por %p257, %p258
    %p261 = scmp.ne.s32.totalorder %s246, %s260
    %p262 = scmp.eq.s32.totalorder %s26, 0
    %p263 = por %p261, %p262
    %s265 = sadd.s32 %s264, 1
    %p268 = scmp.eq.s32.totalorder %s20, 1
    %p269 = scmp.ne.s32.totalorder %s264, %s266
    %p270 = scmp.eq.s32.totalorder %s20, 0
    %p271 = por %p269, %p270
    %p272 = scmp.ne.s32.totalorder %s264, %s266
    %p273 = scmp.eq.s32.totalorder %s25, 1
    %p274 = por %p272, %p273
    %p275 = scmp.ne.s32.totalorder %s266, %s267
    %p276 = scmp.eq.s32.totalorder %s25, 0
    %p277 = por %p275, %p276
    %p278 = scmp.ne.s32.totalorder %s266, %s267
    %p279 = scmp.eq.s32.totalorder %s26, 1
    %p280 = por %p278, %p279
    %p282 = scmp.ne.s32.totalorder %s267, %s281
    %p283 = scmp.eq.s32.totalorder %s26, 0
    %p284 = por %p282, %p283
    %s286 = sadd.s32 %s285, 1
    %p289 = scmp.eq.s32.totalorder %s20, 1
    %p290 = scmp.ne.s32.totalorder %s285, %s287
    %p291 = scmp.eq.s32.totalorder %s20, 0
    %p292 = por %p290, %p291
    %p293 = scmp.ne.s32.totalorder %s285, %s287
    %p294 = scmp.eq.s32.totalorder %s25, 1
    %p295 = por %p293, %p294
    %p296 = scmp.ne.s32.totalorder %s287, %s288
    %p297 = scmp.eq.s32.totalorder %s25, 0
    %p298 = por %p296, %p297
    %p299 = scmp.ne.s32.totalorder %s287, %s288
    %p300 = scmp.eq.s32.totalorder %s26, 1
    %p301 = por %p299, %p300
    %p303 = scmp.ne.s32.totalorder %s288, %s302
    %p304 = scmp.eq.s32.totalorder %s26, 0
    %p305 = por %p303, %p304
    %s307 = sadd.s32 %s306, 1
    %p310 = scmp.eq.s32.totalorder %s20, 1
    %p311 = scmp.ne.s32.totalorder %s306, %s308
    %p312 = scmp.eq.s32.totalorder %s20, 0
    %p313 = por %p311, %p312
    %p314 = scmp.ne.s32.totalorder %s306, %s308
    %p315 = scmp.eq.s32.totalorder %s25, 1
    %p316 = por %p314, %p315
    %p317 = scmp.ne.s32.totalorder %s308, %s309
    %p318 = scmp.eq.s32.totalorder %s25, 0
    %p319 = por %p317, %p318
    %p320 = scmp.ne.s32.totalorder %s308, %s309
    %p321 = scmp.eq.s32.totalorder %s26, 1
    %p322 = por %p320, %p321
    %p324 = scmp.ne.s32.totalorder %s309, %s323
    %p325 = scmp.eq.s32.totalorder %s26, 0
    %p326 = por %p324, %p325
    %s327 = ssub.s32 %s20, %s27
    %p328 = scmp.eq.s32.totalorder %s327, 0
    %s330 = sadd.s32 %s329, 1
    %s331 = scalar_select %p328, %s329, %s330
    %p334 = pneg %p328
    %p335 = scmp.eq.s32.totalorder %s20, 1
    %p336 = por %p334, %p335
    %p337 = scmp.ne.s32.totalorder %s329, %s332
    %p338 = scmp.eq.s32.totalorder %s20, 0
    %p339 = por %p337, %p338
    %p340 = scmp.ne.s32.totalorder %s329, %s332
    %p341 = scmp.eq.s32.totalorder %s25, 1
    %p342 = por %p340, %p341
    %p343 = scmp.ne.s32.totalorder %s332, %s333
    %p344 = scmp.eq.s32.totalorder %s25, 0
    %p345 = por %p343, %p344
    %p346 = scmp.ne.s32.totalorder %s332, %s333
    %p347 = scmp.eq.s32.totalorder %s26, 1
    %p348 = por %p346, %p347
    %p350 = scmp.ne.s32.totalorder %s333, %s349
    %p351 = scmp.eq.s32.totalorder %s26, 0
    %p352 = por %p350, %p351
    %p353 = scmp.le.s32.totalorder 1, %s20
    %p354 = scmp.lt.s32.totalorder %s20, 3
    %p355 = pnand %p353, %p354
    %p356 = pneg %p355
    // Predicated region
    $region9: #{cnn_forward.1} parent=5 // pred_check
      _
    $region10: #{cnn_forward.1} parent=5 // pred_check_branch
      %358 = sbr.rel (%p355) target = $region12
    $region11: #{cnn_forward.1} parent=5 // pred_region
      %s359 = ssub.s32 %s20, 1
      // Predicated region
      $region13: #{cnn_forward.1} parent=11 // pred_check
        %p360 = pneg %p67
      $region14: #{cnn_forward.1} parent=11 // pred_check_branch
        %362 = sbr.rel (%p360) target = $region16
      $region15: #{cnn_forward.1} parent=11 // pred_region
        _
      $region16: #{cnn_forward.1} parent=11 // pred_fallthru
        _
      // Predicated region
      $region17: #{cnn_forward.1} parent=11 // pred_check
        %p363 = pneg %p88
      $region18: #{cnn_forward.1} parent=11 // pred_check_branch
        %365 = sbr.rel (%p363) target = $region20
      $region19: #{cnn_forward.1} parent=11 // pred_region
        _
      $region20: #{cnn_forward.1} parent=11 // pred_fallthru
        _
      // Predicated region
      $region21: #{cnn_forward.1} parent=11 // pred_check
        %p366 = pneg %p109
      $region22: #{cnn_forward.1} parent=11 // pred_check_branch
        %368 = sbr.rel (%p366) target = $region24
      $region23: #{cnn_forward.1} parent=11 // pred_region
        _
      $region24: #{cnn_forward.1} parent=11 // pred_fallthru
        _
      // Predicated region
      $region25: #{cnn_forward.1} parent=11 // pred_check
        %p369 = pneg %p130
      $region26: #{cnn_forward.1} parent=11 // pred_check_branch
        %371 = sbr.rel (%p369) target = $region28
      $region27: #{cnn_forward.1} parent=11 // pred_region
        _
      $region28: #{cnn_forward.1} parent=11 // pred_fallthru
        _
      // Predicated region
      $region29: #{cnn_forward.1} parent=11 // pred_check
        %p372 = pneg %p151
      $region30: #{cnn_forward.1} parent=11 // pred_check_branch
        %374 = sbr.rel (%p372) target = $region32
      $region31: #{cnn_forward.1} parent=11 // pred_region
        _
      $region32: #{cnn_forward.1} parent=11 // pred_fallthru
        _
      // Predicated region
      $region33: #{cnn_forward.1} parent=11 // pred_check
        %p375 = pneg %p172
      $region34: #{cnn_forward.1} parent=11 // pred_check_branch
        %377 = sbr.rel (%p375) target = $region36
      $region35: #{cnn_forward.1} parent=11 // pred_region
        _
      $region36: #{cnn_forward.1} parent=11 // pred_fallthru
        _
      // Predicated region
      $region37: #{cnn_forward.1} parent=11 // pred_check
        %p378 = pneg %p193
      $region38: #{cnn_forward.1} parent=11 // pred_check_branch
        %380 = sbr.rel (%p378) target = $region40
      $region39: #{cnn_forward.1} parent=11 // pred_region
        _
      $region40: #{cnn_forward.1} parent=11 // pred_fallthru
        _
      // Predicated region
      $region41: #{cnn_forward.1} parent=11 // pred_check
        %p381 = pneg %p214
      $region42: #{cnn_forward.1} parent=11 // pred_check_branch
        %383 = sbr.rel (%p381) target = $region44
      $region43: #{cnn_forward.1} parent=11 // pred_region
        _
      $region44: #{cnn_forward.1} parent=11 // pred_fallthru
        _
      // Predicated region
      $region45: #{cnn_forward.1} parent=11 // pred_check
        %p384 = pneg %p235
      $region46: #{cnn_forward.1} parent=11 // pred_check_branch
        %386 = sbr.rel (%p384) target = $region48
      $region47: #{cnn_forward.1} parent=11 // pred_region
        _
      $region48: #{cnn_forward.1} parent=11 // pred_fallthru
        _
      // Predicated region
      $region49: #{cnn_forward.1} parent=11 // pred_check
        %p387 = pneg %p256
      $region50: #{cnn_forward.1} parent=11 // pred_check_branch
        %389 = sbr.rel (%p387) target = $region52
      $region51: #{cnn_forward.1} parent=11 // pred_region
        _
      $region52: #{cnn_forward.1} parent=11 // pred_fallthru
        _
      // Predicated region
      $region53: #{cnn_forward.1} parent=11 // pred_check
        %p390 = pneg %p277
      $region54: #{cnn_forward.1} parent=11 // pred_check_branch
        %392 = sbr.rel (%p390) target = $region56
      $region55: #{cnn_forward.1} parent=11 // pred_region
        _
      $region56: #{cnn_forward.1} parent=11 // pred_fallthru
        _
      // Predicated region
      $region57: #{cnn_forward.1} parent=11 // pred_check
        %p393 = pneg %p298
      $region58: #{cnn_forward.1} parent=11 // pred_check_branch
        %395 = sbr.rel (%p393) target = $region60
      $region59: #{cnn_forward.1} parent=11 // pred_region
        _
      $region60: #{cnn_forward.1} parent=11 // pred_fallthru
        _
      // Predicated region
      $region61: #{cnn_forward.1} parent=11 // pred_check
        %p396 = pneg %p319
      $region62: #{cnn_forward.1} parent=11 // pred_check_branch
        %398 = sbr.rel (%p396) target = $region64
      $region63: #{cnn_forward.1} parent=11 // pred_region
        _
      $region64: #{cnn_forward.1} parent=11 // pred_fallthru
        _
    $region12: #{cnn_forward.1} parent=5 // pred_fallthru
      _
    %p399 = scmp.lt.s32.totalorder %s20, 2
    // Predicated region
    $region65: #{cnn_forward.1} parent=5 // pred_check
      %p400 = pneg %p399
    $region66: #{cnn_forward.1} parent=5 // pred_check_branch
      %402 = sbr.rel (%p400) target = $region68
    $region67: #{cnn_forward.1} parent=5 // pred_region
      // Predicated region
      $region69: #{cnn_forward.1} parent=67 // pred_check
        %p403 = pneg %p40
      $region70: #{cnn_forward.1} parent=67 // pred_check_branch
        %405 = sbr.rel (%p403) target = $region72
      $region71: #{cnn_forward.1} parent=67 // pred_region
        %p406 = scmp.lt.s32.totalorder %s20, 1
        %s407 = scalar_select %p406, %s20, 1
        %s408 = smul.addr %s407, 9
        %s409 = smul.addr %s408, 8
        %s410 = scalar_lea.vmem %s0, %s409
      $region72: #{cnn_forward.1} parent=67 // pred_fallthru
        _
    $region68: #{cnn_forward.1} parent=5 // pred_fallthru
      _
    %p411 = scmp.le.s32.totalorder 1, %s20
    %p412 = scmp.lt.s32.totalorder %s20, 3
    %p413 = pnand %p411, %p412
    %p414 = pneg %p413
    // Predicated region
    $region73: #{cnn_forward.1} parent=5 // pred_check
      _
    $region74: #{cnn_forward.1} parent=5 // pred_check_branch
      %416 = sbr.rel (%p413) target = $region76
    $region75: #{cnn_forward.1} parent=5 // pred_region
      %s417 = ssub.s32 %s20, 1
      %p418 = scmp.lt.s32.totalorder %s25, 1
      %s419 = scalar_select %p418, %s25, 1
      %s420 = smul.addr %s419, 9
      %s421 = smul.addr %s420, 8
      %s422 = scalar_lea.vmem %s0, %s421
      %p423 = pneg %p46
      %p424 = pneg %p43
      %p425 = pneg %p67
      %p426 = pneg %p64
      %p427 = pneg %p88
      %p428 = pneg %p85
      %p429 = pneg %p109
      %p430 = pneg %p106
      %p431 = pneg %p130
      %p432 = pneg %p127
      %p433 = pneg %p151
      %p434 = pneg %p148
      %p435 = pneg %p172
      %p436 = pneg %p169
      %p437 = pneg %p193
      %p438 = pneg %p190
      %p439 = pneg %p214
      %p440 = pneg %p211
      %p441 = pneg %p235
      %p442 = pneg %p232
      %p443 = pneg %p256
      %p444 = pneg %p253
      %p445 = pneg %p277
      %p446 = pneg %p274
      %p447 = pneg %p298
      %p448 = pneg %p295
      %p449 = pneg %p319
      %p450 = pneg %p316
      %p451 = pneg %p345
      %p452 = pneg %p342
      %p453 = scmp.lt.s32.totalorder %s25, 1
      %s454 = scalar_select %p453, %s25, 1
      %s455 = smul.addr %s454, 8
      %s456 = scalar_lea.vmem %s14, %s455
      %p457 = scmp.lt.s32.totalorder %s25, 1
      %s458 = scalar_select %p457, %s25, 1
      %s459 = smul.addr %s458, 9
      %s460 = smul.addr %s459, 8
      %s461 = scalar_lea.vmem %s0, %s460
      %p462 = scmp.lt.s32.totalorder %s25, 1
      %s463 = scalar_select %p462, %s25, 1
      %s464 = smul.addr %s463, 8
      %s465 = scalar_lea.vmem %s14, %s464
      %v466 = vld [vmem:[%s461] sm:$0xff]
      %v467 = vld [vmem:[%s461 + $0x8] sm:$0xff]
      %v468 = vld [vmem:[%s461 + $0x10] sm:$0xff]
      %v469 = vld [vmem:[%s461 + $0x18] sm:$0xff]
      %v470 = vld [vmem:[%s461 + $0x20] sm:$0xff]
      %v471 = vld [vmem:[%s461 + $0x28] sm:$0xff]
      %v472 = vld [vmem:[%s461 + $0x30] sm:$0xff]
      %v473 = vld [vmem:[%s461 + $0x38] sm:$0xff]
      %v474 = vld [vmem:[%s461 + $0x40] sm:$0xff]
      %v475 = vld [vmem:[%s4] sm:$0xff]
      %v476 = vld [vmem:[%s4 + $0x8] sm:$0xf]
      %v477 = vld [vmem:[%s5] sm:$0x1]
      %v479 = vlaneseq
      %v480 = vshrl.u32 %v479, 7
      %v481 = vsub.s32 0, %v480
      %v482 = vrot.slane %v477, %v481
      %vm484 = vcmask 97280
      %v486 = vsel %vm484, %v466, 0
      %v489 = vsel %vm484, %v467, 0
      %v492 = vsel %vm484, %v468, 0
      %v495 = vsel %vm484, %v469, 0
      %v498 = vsel %vm484, %v470, 0
      %v501 = vsel %vm484, %v471, 0
      %v504 = vsel %vm484, %v472, 0
      %v507 = vsel %vm484, %v473, 0
      %v510 = vsel %vm484, %v474, 0
      %vm512 = vcmask 1043456
      %v514 = vsel %vm512, %v476, 0
      %516 = vmatprep.subr.mxu0 0.0
      %v517 = vand.u32 %v475, 4294901760
      %518 = vmatpush1.msra.mxu0 %v517
      %519 = vmatprep.subr.mxu0 0.0
      %v520 = vand.u32 %v514, 4294901760
      %521 = vmatpush1.msra.mxu0 %v520
      %522 = vmatprep.subr.mxu0 0.0
      %523 = vmatpush1.msra.mxu0 0.0
      %524 = vmatprep.subr.mxu0 0.0
      %525 = vmatpush1.msra.mxu0 0.0
      %526 = vmatprep.subr.mxu0 0.0
      %527 = vmatpush1.msra.mxu0 0.0
      %528 = vmatprep.subr.mxu0 0.0
      %529 = vmatpush1.msra.mxu0 0.0
      %530 = vmatprep.subr.mxu0 0.0
      %531 = vmatpush1.msra.mxu0 0.0
      %532 = vmatprep.subr.mxu0 0.0
      %533 = vmatpush1.msra.mxu0 0.0
      %534 = vmatprep.subr.mxu0 0.0
      %535 = vmatpush1.msra.mxu0 0.0
      %536 = vmatprep.subr.mxu0 0.0
      %537 = vmatpush1.msra.mxu0 0.0
      %538 = vmatprep.subr.mxu0 0.0
      %539 = vmatpush1.msra.mxu0 0.0
      %540 = vmatprep.subr.mxu0 0.0
      %541 = vmatpush1.msra.mxu0 0.0
      %542 = vmatprep.subr.mxu0 0.0
      %543 = vmatpush1.msra.mxu0 0.0
      %544 = vmatprep.subr.mxu0 0.0
      %545 = vmatpush1.msra.mxu0 0.0
      %546 = vmatprep.subr.mxu0 0.0
      %547 = vmatpush1.msra.mxu0 0.0
      %548 = vmatprep.subr.mxu0 0.0
      %549 = vmatpush1.msra.mxu0 0.0
      %550 = vmatprep.subr.mxu0 0.0
      %551 = vmatpush1.msra.mxu0 0.0
      %552 = vmatprep.subr.mxu0 0.0
      %553 = vmatpush1.msra.mxu0 0.0
      %554 = vmatprep.subr.mxu0 0.0
      %555 = vmatpush1.msra.mxu0 0.0
      %556 = vmatprep.subr.mxu0 0.0
      %557 = vmatpush1.msra.mxu0 0.0
      %558 = vmatprep.subr.mxu0 0.0
      %559 = vmatpush1.msra.mxu0 0.0
      %560 = vmatprep.subr.mxu0 0.0
      %561 = vmatpush1.msra.mxu0 0.0
      %562 = vmatprep.subr.mxu0 0.0
      %563 = vmatpush1.msra.mxu0 0.0
      %564 = vmatprep.subr.mxu0 0.0
      %565 = vmatpush1.msra.mxu0 0.0
      %566 = vmatprep.subr.mxu0 0.0
      %567 = vmatpush1.msra.mxu0 0.0
      %568 = vmatprep.subr.mxu0 0.0
      %569 = vmatpush1.msra.mxu0 0.0
      %570 = vmatprep.subr.mxu0 0.0
      %571 = vmatpush1.msra.mxu0 0.0
      %572 = vmatprep.subr.mxu0 0.0
      %573 = vmatpush1.msra.mxu0 0.0
      %574 = vmatprep.subr.mxu0 0.0
      %575 = vmatpush1.msra.mxu0 0.0
      %576 = vmatprep.subr.mxu0 0.0
      %577 = vmatpush1.msra.mxu0 0.0
      %578 = vmatprep.subr.mxu0 0.0
      %579 = vmatpush1.msra.mxu0 0.0
      %580 = vmatprep.subr.mxu0 0.0
      %581 = vmatpush1.msra.mxu0 0.0
      %582 = vmatprep.mubr.f32.mxu0 0.0
      %v583 = vand.u32 %v486, 4294901760
      %v584 = vsub.f32 %v486, %v583
      %v585 = vand.u32 %v584, 4294901760
      %v586 = vsub.f32 %v584, %v585
      %v587 = vand.u32 %v586, 4294901760
      %588 = vmatmul.mubr.f32.gmra.mrb[0].mxu0 %v587
      %v589 = vpop.f32.mrb[0].mxu0
      %v590 = vadd.f32 %v482, %v589
      %v591 = vpop.f32.mrb[0].mxu0
      %592 = vmatprep.mubr.f32.mxu0 0.0
      %v593 = vand.u32 %v489, 4294901760
      %v594 = vsub.f32 %v489, %v593
      %v595 = vand.u32 %v594, 4294901760
      %v596 = vsub.f32 %v594, %v595
      %v597 = vand.u32 %v596, 4294901760
      %598 = vmatmul.mubr.f32.gmra.mrb[0].mxu0 %v597
      %v599 = vpop.f32.mrb[0].mxu0
      %v600 = vadd.f32 %v482, %v599
      %v601 = vpop.f32.mrb[0].mxu0
      %602 = vmatprep.mubr.f32.mxu0 0.0
      %v603 = vand.u32 %v492, 4294901760
      %v604 = vsub.f32 %v492, %v603
      %v605 = vand.u32 %v604, 4294901760
      %v606 = vsub.f32 %v604, %v605
      %v607 = vand.u32 %v606, 4294901760
      %608 = vmatmul.mubr.f32.gmra.mrb[0].mxu0 %v607
      %v609 = vpop.f32.mrb[0].mxu0
      %v610 = vadd.f32 %v482, %v609
      %v611 = vpop.f32.mrb[0].mxu0
      %612 = vmatprep.mubr.f32.mxu0 0.0
      %v613 = vand.u32 %v495, 4294901760
      %v614 = vsub.f32 %v495, %v613
      %v615 = vand.u32 %v614, 4294901760
      %v616 = vsub.f32 %v614, %v615
      %v617 = vand.u32 %v616, 4294901760
      %618 = vmatmul.mubr.f32.gmra.mrb[0].mxu0 %v617
      %v619 = vpop.f32.mrb[0].mxu0
      %v620 = vadd.f32 %v482, %v619
      %v621 = vpop.f32.mrb[0].mxu0
      %622 = vmatprep.mubr.f32.mxu0 0.0
      %v623 = vand.u32 %v498, 4294901760
      %v624 = vsub.f32 %v498, %v623
      %v625 = vand.u32 %v624, 4294901760
      %v626 = vsub.f32 %v624, %v625
      %v627 = vand.u32 %v626, 4294901760
      %628 = vmatmul.mubr.f32.gmra.mrb[0].mxu0 %v627
      %v629 = vpop.f32.mrb[0].mxu0
      %v630 = vadd.f32 %v482, %v629
      %v631 = vpop.f32.mrb[0].mxu0
      %632 = vmatprep.mubr.f32.mxu0 0.0
      %v633 = vand.u32 %v501, 4294901760
      %v634 = vsub.f32 %v501, %v633
      %v635 = vand.u32 %v634, 4294901760
      %v636 = vsub.f32 %v634, %v635
      %v637 = vand.u32 %v636, 4294901760
      %638 = vmatmul.mubr.f32.gmra.mrb[0].mxu0 %v637
      %v639 = vpop.f32.mrb[0].mxu0
      %v640 = vadd.f32 %v482, %v639
      %v641 = vpop.f32.mrb[0].mxu0
      %642 = vmatprep.mubr.f32.mxu0 0.0
      %v643 = vand.u32 %v504, 4294901760
      %v644 = vsub.f32 %v504, %v643
      %v645 = vand.u32 %v644, 4294901760
      %v646 = vsub.f32 %v644, %v645
      %v647 = vand.u32 %v646, 4294901760
      %648 = vmatmul.mubr.f32.gmra.mrb[0].mxu0 %v647
      %v649 = vpop.f32.mrb[0].mxu0
      %v650 = vadd.f32 %v482, %v649
      %v651 = vpop.f32.mrb[0].mxu0
      %652 = vmatprep.mubr.f32.mxu0 0.0
      %v653 = vand.u32 %v507, 4294901760
      %v654 = vsub.f32 %v507, %v653
      %v655 = vand.u32 %v654, 4294901760
      %v656 = vsub.f32 %v654, %v655
      %v657 = vand.u32 %v656, 4294901760
      %658 = vmatmul.mubr.f32.gmra.mrb[0].mxu0 %v657
      %v659 = vpop.f32.mrb[0].mxu0
      %v660 = vadd.f32 %v482, %v659
      %v661 = vpop.f32.mrb[0].mxu0
      %662 = vmatprep.mubr.f32.mxu0 0.0
      %v663 = vand.u32 %v510, 4294901760
      %v664 = vsub.f32 %v510, %v663
      %v665 = vand.u32 %v664, 4294901760
      %v666 = vsub.f32 %v664, %v665
      %v667 = vand.u32 %v666, 4294901760
      %668 = vmatmul.mubr.f32.gmra.mrb[0].mxu0 %v667
      %v669 = vpop.f32.mrb[0].mxu0
      %v670 = vadd.f32 %v482, %v669
      %v671 = vpop.f32.mrb[0].mxu0
      %672 = vdwg.mxu0
      %673 = vmatprep.subr.mxu0 0.0
      %v674 = vand.u32 %v475, 4294901760
      %v675 = vsub.f32 %v475, %v674
      %v676 = vand.u32 %v675, 4294901760
      %v677 = vsub.f32 %v675, %v676
      %v678 = vand.u32 %v677, 4294901760
      %679 = vmatpush1.msra.mxu0 %v678
      %680 = vmatprep.subr.mxu0 0.0
      %v681 = vand.u32 %v514, 4294901760
      %v682 = vsub.f32 %v514, %v681
      %v683 = vand.u32 %v682, 4294901760
      %v684 = vsub.f32 %v682, %v683
      %v685 = vand.u32 %v684, 4294901760
      %686 = vmatpush1.msra.mxu0 %v685
      %687 = vmatprep.subr.mxu0 0.0
      %688 = vmatpush1.msra.mxu0 0.0
      %689 = vmatprep.subr.mxu0 0.0
      %690 = vmatpush1.msra.mxu0 0.0
      %691 = vmatprep.subr.mxu0 0.0
      %692 = vmatpush1.msra.mxu0 0.0
      %693 = vmatprep.subr.mxu0 0.0
      %694 = vmatpush1.msra.mxu0 0.0
      %695 = vmatprep.subr.mxu0 0.0
      %696 = vmatpush1.msra.mxu0 0.0
      %697 = vmatprep.subr.mxu0 0.0
      %698 = vmatpush1.msra.mxu0 0.0
      %699 = vmatprep.subr.mxu0 0.0
      %700 = vmatpush1.msra.mxu0 0.0
      %701 = vmatprep.subr.mxu0 0.0
      %702 = vmatpush1.msra.mxu0 0.0
      %703 = vmatprep.subr.mxu0 0.0
      %704 = vmatpush1.msra.mxu0 0.0
      %705 = vmatprep.subr.mxu0 0.0
      %706 = vmatpush1.msra.mxu0 0.0
      %707 = vmatprep.subr.mxu0 0.0
      %708 = vmatpush1.msra.mxu0 0.0
      %709 = vmatprep.subr.mxu0 0.0
      %710 = vmatpush1.msra.mxu0 0.0
      %711 = vmatprep.subr.mxu0 0.0
      %712 = vmatpush1.msra.mxu0 0.0
      %713 = vmatprep.subr.mxu0 0.0
      %714 = vmatpush1.msra.mxu0 0.0
      %715 = vmatprep.subr.mxu0 0.0
      %716 = vmatpush1.msra.mxu0 0.0
      %717 = vmatprep.subr.mxu0 0.0
      %718 = vmatpush1.msra.mxu0 0.0
      %719 = vmatprep.subr.mxu0 0.0
      %720 = vmatpush1.msra.mxu0 0.0
      %721 = vmatprep.subr.mxu0 0.0
      %722 = vmatpush1.msra.mxu0 0.0
      %723 = vmatprep.subr.mxu0 0.0
      %724 = vmatpush1.msra.mxu0 0.0
      %725 = vmatprep.subr.mxu0 0.0
      %726 = vmatpush1.msra.mxu0 0.0
      %727 = vmatprep.subr.mxu0 0.0
      %728 = vmatpush1.msra.mxu0 0.0
      %729 = vmatprep.subr.mxu0 0.0
      %730 = vmatpush1.msra.mxu0 0.0
      %731 = vmatprep.subr.mxu0 0.0
      %732 = vmatpush1.msra.mxu0 0.0
      %733 = vmatprep.subr.mxu0 0.0
      %734 = vmatpush1.msra.mxu0 0.0
      %735 = vmatprep.subr.mxu0 0.0
      %736 = vmatpush1.msra.mxu0 0.0
      %737 = vmatprep.subr.mxu0 0.0
      %738 = vmatpush1.msra.mxu0 0.0
      %739 = vmatprep.subr.mxu0 0.0
      %740 = vmatpush1.msra.mxu0 0.0
      %741 = vmatprep.subr.mxu0 0.0
      %742 = vmatpush1.msra.mxu0 0.0
      %743 = vmatprep.subr.mxu0 0.0
      %744 = vmatpush1.msra.mxu0 0.0
      %745 = vmatprep.subr.mxu0 0.0
      %746 = vmatpush1.msra.mxu0 0.0
      %747 = vmatprep.mubr.f32.mxu0 0.0
      %v748 = vand.u32 %v486, 4294901760
      %749 = vmatmul.mubr.f32.gmra.mrb[0].mxu0 %v748
      %v750 = vpop.f32.mrb[0].mxu0
      %v751 = vadd.f32 %v590, %v750
      %v752 = vpop.f32.mrb[0].mxu0
      %753 = vmatprep.mubr.f32.mxu0 0.0
      %v754 = vand.u32 %v489, 4294901760
      %755 = vmatmul.mubr.f32.gmra.mrb[0].mxu0 %v754
      %v756 = vpop.f32.mrb[0].mxu0
      %v757 = vadd.f32 %v600, %v756
      %v758 = vpop.f32.mrb[0].mxu0
      %759 = vmatprep.mubr.f32.mxu0 0.0
      %v760 = vand.u32 %v492, 4294901760
      %761 = vmatmul.mubr.f32.gmra.mrb[0].mxu0 %v760
      %v762 = vpop.f32.mrb[0].mxu0
      %v763 = vadd.f32 %v610, %v762
      %v764 = vpop.f32.mrb[0].mxu0
      %765 = vmatprep.mubr.f32.mxu0 0.0
      %v766 = vand.u32 %v495, 4294901760
      %767 = vmatmul.mubr.f32.gmra.mrb[0].mxu0 %v766
      %v768 = vpop.f32.mrb[0].mxu0
      %v769 = vadd.f32 %v620, %v768
      %v770 = vpop.f32.mrb[0].mxu0
      %771 = vmatprep.mubr.f32.mxu0 0.0
      %v772 = vand.u32 %v498, 4294901760
      %773 = vmatmul.mubr.f32.gmra.mrb[0].mxu0 %v772
      %v774 = vpop.f32.mrb[0].mxu0
      %v775 = vadd.f32 %v630, %v774
      %v776 = vpop.f32.mrb[0].mxu0
      %777 = vmatprep.mubr.f32.mxu0 0.0
      %v778 = vand.u32 %v501, 4294901760
      %779 = vmatmul.mubr.f32.gmra.mrb[0].mxu0 %v778
      %v780 = vpop.f32.mrb[0].mxu0
      %v781 = vadd.f32 %v640, %v780
      %v782 = vpop.f32.mrb[0].mxu0
      %783 = vmatprep.mubr.f32.mxu0 0.0
      %v784 = vand.u32 %v504, 4294901760
      %785 = vmatmul.mubr.f32.gmra.mrb[0].mxu0 %v784
      %v786 = vpop.f32.mrb[0].mxu0
      %v787 = vadd.f32 %v650, %v786
      %v788 = vpop.f32.mrb[0].mxu0
      %789 = vmatprep.mubr.f32.mxu0 0.0
      %v790 = vand.u32 %v507, 4294901760
      %791 = vmatmul.mubr.f32.gmra.mrb[0].mxu0 %v790
      %v792 = vpop.f32.mrb[0].mxu0
      %v793 = vadd.f32 %v660, %v792
      %v794 = vpop.f32.mrb[0].mxu0
      %795 = vmatprep.mubr.f32.mxu0 0.0
      %v796 = vand.u32 %v510, 4294901760
      %797 = vmatmul.mubr.f32.gmra.mrb[0].mxu0 %v796
      %v798 = vpop.f32.mrb[0].mxu0
      %v799 = vadd.f32 %v670, %v798
      %v800 = vpop.f32.mrb[0].mxu0
      %801 = vdwg.mxu0
      %802 = vmatprep.subr.mxu0 0.0
      %v803 = vand.u32 %v475, 4294901760
      %v804 = vsub.f32 %v475, %v803
      %805 = vmatpush1.msra.mxu0 %v804
      %806 = vmatprep.subr.mxu0 0.0
      %v807 = vand.u32 %v514, 4294901760
      %v808 = vsub.f32 %v514, %v807
      %809 = vmatpush1.msra.mxu0 %v808
      %810 = vmatprep.subr.mxu0 0.0
      %811 = vmatpush1.msra.mxu0 0.0
      %812 = vmatprep.subr.mxu0 0.0
      %813 = vmatpush1.msra.mxu0 0.0
      %814 = vmatprep.subr.mxu0 0.0
      %815 = vmatpush1.msra.mxu0 0.0
      %816 = vmatprep.subr.mxu0 0.0
      %817 = vmatpush1.msra.mxu0 0.0
      %818 = vmatprep.subr.mxu0 0.0
      %819 = vmatpush1.msra.mxu0 0.0
      %820 = vmatprep.subr.mxu0 0.0
      %821 = vmatpush1.msra.mxu0 0.0
      %822 = vmatprep.subr.mxu0 0.0
      %823 = vmatpush1.msra.mxu0 0.0
      %824 = vmatprep.subr.mxu0 0.0
      %825 = vmatpush1.msra.mxu0 0.0
      %826 = vmatprep.subr.mxu0 0.0
      %827 = vmatpush1.msra.mxu0 0.0
      %828 = vmatprep.subr.mxu0 0.0
      %829 = vmatpush1.msra.mxu0 0.0
      %830 = vmatprep.subr.mxu0 0.0
      %831 = vmatpush1.msra.mxu0 0.0
      %832 = vmatprep.subr.mxu0 0.0
      %833 = vmatpush1.msra.mxu0 0.0
      %834 = vmatprep.subr.mxu0 0.0
      %835 = vmatpush1.msra.mxu0 0.0
      %836 = vmatprep.subr.mxu0 0.0
      %837 = vmatpush1.msra.mxu0 0.0
      %838 = vmatprep.subr.mxu0 0.0
      %839 = vmatpush1.msra.mxu0 0.0
      %840 = vmatprep.subr.mxu0 0.0
      %841 = vmatpush1.msra.mxu0 0.0
      %842 = vmatprep.subr.mxu0 0.0
      %843 = vmatpush1.msra.mxu0 0.0
      %844 = vmatprep.subr.mxu0 0.0
      %845 = vmatpush1.msra.mxu0 0.0
      %846 = vmatprep.subr.mxu0 0.0
      %847 = vmatpush1.msra.mxu0 0.0
      %848 = vmatprep.subr.mxu0 0.0
      %849 = vmatpush1.msra.mxu0 0.0
      %850 = vmatprep.subr.mxu0 0.0
      %851 = vmatpush1.msra.mxu0 0.0
      %852 = vmatprep.subr.mxu0 0.0
      %853 = vmatpush1.msra.mxu0 0.0
      %854 = vmatprep.subr.mxu0 0.0
      %855 = vmatpush1.msra.mxu0 0.0
      %856 = vmatprep.subr.mxu0 0.0
      %857 = vmatpush1.msra.mxu0 0.0
      %858 = vmatprep.subr.mxu0 0.0
      %859 = vmatpush1.msra.mxu0 0.0
      %860 = vmatprep.subr.mxu0 0.0
      %861 = vmatpush1.msra.mxu0 0.0
      %862 = vmatprep.subr.mxu0 0.0
      %863 = vmatpush1.msra.mxu0 0.0
      %864 = vmatprep.subr.mxu0 0.0
      %865 = vmatpush1.msra.mxu0 0.0
      %866 = vmatprep.subr.mxu0 0.0
      %867 = vmatpush1.msra.mxu0 0.0
      %868 = vmatprep.subr.mxu0 0.0
      %869 = vmatpush1.msra.mxu0 0.0
      %870 = vmatprep.mubr.f32.mxu0 0.0
      %v871 = vand.u32 %v486, 4294901760
      %v872 = vsub.f32 %v486, %v871
      %873 = vmatmul.mubr.f32.gmra.mrb[0].mxu0 %v872
      %v874 = vpop.f32.mrb[0].mxu0
      %v875 = vadd.f32 %v751, %v874
      %v876 = vpop.f32.mrb[0].mxu0
      %877 = vmatprep.mubr.f32.mxu0 0.0
      %v878 = vand.u32 %v489, 4294901760
      %v879 = vsub.f32 %v489, %v878
      %880 = vmatmul.mubr.f32.gmra.mrb[0].mxu0 %v879
      %v881 = vpop.f32.mrb[0].mxu0
      %v882 = vadd.f32 %v757, %v881
      %v883 = vpop.f32.mrb[0].mxu0
      %884 = vmatprep.mubr.f32.mxu0 0.0
      %v885 = vand.u32 %v492, 4294901760
      %v886 = vsub.f32 %v492, %v885
      %887 = vmatmul.mubr.f32.gmra.mrb[0].mxu0 %v886
      %v888 = vpop.f32.mrb[0].mxu0
      %v889 = vadd.f32 %v763, %v888
      %v890 = vpop.f32.mrb[0].mxu0
      %891 = vmatprep.mubr.f32.mxu0 0.0
      %v892 = vand.u32 %v495, 4294901760
      %v893 = vsub.f32 %v495, %v892
      %894 = vmatmul.mubr.f32.gmra.mrb[0].mxu0 %v893
      %v895 = vpop.f32.mrb[0].mxu0
      %v896 = vadd.f32 %v769, %v895
      %v897 = vpop.f32.mrb[0].mxu0
      %898 = vmatprep.mubr.f32.mxu0 0.0
      %v899 = vand.u32 %v498, 4294901760
      %v900 = vsub.f32 %v498, %v899
      %901 = vmatmul.mubr.f32.gmra.mrb[0].mxu0 %v900
      %v902 = vpop.f32.mrb[0].mxu0
      %v903 = vadd.f32 %v775, %v902
      %v904 = vpop.f32.mrb[0].mxu0
      %905 = vmatprep.mubr.f32.mxu0 0.0
      %v906 = vand.u32 %v501, 4294901760
      %v907 = vsub.f32 %v501, %v906
      %908 = vmatmul.mubr.f32.gmra.mrb[0].mxu0 %v907
      %v909 = vpop.f32.mrb[0].mxu0
      %v910 = vadd.f32 %v781, %v909
      %v911 = vpop.f32.mrb[0].mxu0
      %912 = vmatprep.mubr.f32.mxu0 0.0
      %v913 = vand.u32 %v504, 4294901760
      %v914 = vsub.f32 %v504, %v913
      %915 = vmatmul.mubr.f32.gmra.mrb[0].mxu0 %v914
      %v916 = vpop.f32.mrb[0].mxu0
      %v917 = vadd.f32 %v787, %v916
      %v918 = vpop.f32.mrb[0].mxu0
      %919 = vmatprep.mubr.f32.mxu0 0.0
      %v920 = vand.u32 %v507, 4294901760
      %v921 = vsub.f32 %v507, %v920
      %922 = vmatmul.mubr.f32.gmra.mrb[0].mxu0 %v921
      %v923 = vpop.f32.mrb[0].mxu0
      %v924 = vadd.f32 %v793, %v923
      %v925 = vpop.f32.mrb[0].mxu0
      %926 = vmatprep.mubr.f32.mxu0 0.0
      %v927 = vand.u32 %v510, 4294901760
      %v928 = vsub.f32 %v510, %v927
      %929 = vmatmul.mubr.f32.gmra.mrb[0].mxu0 %v928
      %v930 = vpop.f32.mrb[0].mxu0
      %v931 = vadd.f32 %v799, %v930
      %v932 = vpop.f32.mrb[0].mxu0
      %933 = vdwg.mxu0
      %934 = vmatprep.subr.mxu0 0.0
      %v935 = vand.u32 %v475, 4294901760
      %936 = vmatpush1.msra.mxu0 %v935
      %937 = vmatprep.subr.mxu0 0.0
      %v938 = vand.u32 %v514, 4294901760
      %939 = vmatpush1.msra.mxu0 %v938
      %940 = vmatprep.subr.mxu0 0.0
      %941 = vmatpush1.msra.mxu0 0.0
      %942 = vmatprep.subr.mxu0 0.0
      %943 = vmatpush1.msra.mxu0 0.0
      %944 = vmatprep.subr.mxu0 0.0
      %945 = vmatpush1.msra.mxu0 0.0
      %946 = vmatprep.subr.mxu0 0.0
      %947 = vmatpush1.msra.mxu0 0.0
      %948 = vmatprep.subr.mxu0 0.0
      %949 = vmatpush1.msra.mxu0 0.0
      %950 = vmatprep.subr.mxu0 0.0
      %951 = vmatpush1.msra.mxu0 0.0
      %952 = vmatprep.subr.mxu0 0.0
      %953 = vmatpush1.msra.mxu0 0.0
      %954 = vmatprep.subr.mxu0 0.0
      %955 = vmatpush1.msra.mxu0 0.0
      %956 = vmatprep.subr.mxu0 0.0
      %957 = vmatpush1.msra.mxu0 0.0
      %958 = vmatprep.subr.mxu0 0.0
      %959 = vmatpush1.msra.mxu0 0.0
      %960 = vmatprep.subr.mxu0 0.0
      %961 = vmatpush1.msra.mxu0 0.0
      %962 = vmatprep.subr.mxu0 0.0
      %963 = vmatpush1.msra.mxu0 0.0
      %964 = vmatprep.subr.mxu0 0.0
      %965 = vmatpush1.msra.mxu0 0.0
      %966 = vmatprep.subr.mxu0 0.0
      %967 = vmatpush1.msra.mxu0 0.0
      %968 = vmatprep.subr.mxu0 0.0
      %969 = vmatpush1.msra.mxu0 0.0
      %970 = vmatprep.subr.mxu0 0.0
      %971 = vmatpush1.msra.mxu0 0.0
      %972 = vmatprep.subr.mxu0 0.0
      %973 = vmatpush1.msra.mxu0 0.0
      %974 = vmatprep.subr.mxu0 0.0
      %975 = vmatpush1.msra.mxu0 0.0
      %976 = vmatprep.subr.mxu0 0.0
      %977 = vmatpush1.msra.mxu0 0.0
      %978 = vmatprep.subr.mxu0 0.0
      %979 = vmatpush1.msra.mxu0 0.0
      %980 = vmatprep.subr.mxu0 0.0
      %981 = vmatpush1.msra.mxu0 0.0
      %982 = vmatprep.subr.mxu0 0.0
      %983 = vmatpush1.msra.mxu0 0.0
      %984 = vmatprep.subr.mxu0 0.0
      %985 = vmatpush1.msra.mxu0 0.0
      %986 = vmatprep.subr.mxu0 0.0
      %987 = vmatpush1.msra.mxu0 0.0
      %988 = vmatprep.subr.mxu0 0.0
      %989 = vmatpush1.msra.mxu0 0.0
      %990 = vmatprep.subr.mxu0 0.0
      %991 = vmatpush1.msra.mxu0 0.0
      %992 = vmatprep.subr.mxu0 0.0
      %993 = vmatpush1.msra.mxu0 0.0
      %994 = vmatprep.subr.mxu0 0.0
      %995 = vmatpush1.msra.mxu0 0.0
      %996 = vmatprep.subr.mxu0 0.0
      %997 = vmatpush1.msra.mxu0 0.0
      %998 = vmatprep.subr.mxu0 0.0
      %999 = vmatpush1.msra.mxu0 0.0
      %1000 = vmatprep.mubr.f32.mxu0 0.0
      %v1001 = vand.u32 %v486, 4294901760
      %v1002 = vsub.f32 %v486, %v1001
      %v1003 = vand.u32 %v1002, 4294901760
      %1004 = vmatmul.mubr.f32.gmra.mrb[0].mxu0 %v1003
      %v1005 = vpop.f32.mrb[0].mxu0
      %v1006 = vadd.f32 %v875, %v1005
      %v1007 = vpop.f32.mrb[0].mxu0
      %1008 = vmatprep.mubr.f32.mxu0 0.0
      %v1009 = vand.u32 %v489, 4294901760
      %v1010 = vsub.f32 %v489, %v1009
      %v1011 = vand.u32 %v1010, 4294901760
      %1012 = vmatmul.mubr.f32.gmra.mrb[0].mxu0 %v1011
      %v1013 = vpop.f32.mrb[0].mxu0
      %v1014 = vadd.f32 %v882, %v1013
      %v1015 = vpop.f32.mrb[0].mxu0
      %1016 = vmatprep.mubr.f32.mxu0 0.0
      %v1017 = vand.u32 %v492, 4294901760
      %v1018 = vsub.f32 %v492, %v1017
      %v1019 = vand.u32 %v1018, 4294901760
      %1020 = vmatmul.mubr.f32.gmra.mrb[0].mxu0 %v1019
      %v1021 = vpop.f32.mrb[0].mxu0
      %v1022 = vadd.f32 %v889, %v1021
      %v1023 = vpop.f32.mrb[0].mxu0
      %1024 = vmatprep.mubr.f32.mxu0 0.0
      %v1025 = vand.u32 %v495, 4294901760
      %v1026 = vsub.f32 %v495, %v1025
      %v1027 = vand.u32 %v1026, 4294901760
      %1028 = vmatmul.mubr.f32.gmra.mrb[0].mxu0 %v1027
      %v1029 = vpop.f32.mrb[0].mxu0
      %v1030 = vadd.f32 %v896, %v1029
      %v1031 = vpop.f32.mrb[0].mxu0
      %1032 = vmatprep.mubr.f32.mxu0 0.0
      %v1033 = vand.u32 %v498, 4294901760
      %v1034 = vsub.f32 %v498, %v1033
      %v1035 = vand.u32 %v1034, 4294901760
      %1036 = vmatmul.mubr.f32.gmra.mrb[0].mxu0 %v1035
      %v1037 = vpop.f32.mrb[0].mxu0
      %v1038 = vadd.f32 %v903, %v1037
      %v1039 = vpop.f32.mrb[0].mxu0
      %1040 = vmatprep.mubr.f32.mxu0 0.0
      %v1041 = vand.u32 %v501, 4294901760
      %v1042 = vsub.f32 %v501, %v1041
      %v1043 = vand.u32 %v1042, 4294901760
      %1044 = vmatmul.mubr.f32.gmra.mrb[0].mxu0 %v1043
      %v1045 = vpop.f32.mrb[0].mxu0
      %v1046 = vadd.f32 %v910, %v1045
      %v1047 = vpop.f32.mrb[0].mxu0
      %1048 = vmatprep.mubr.f32.mxu0 0.0
      %v1049 = vand.u32 %v504, 4294901760
      %v1050 = vsub.f32 %v504, %v1049
      %v1051 = vand.u32 %v1050, 4294901760
      %1052 = vmatmul.mubr.f32.gmra.mrb[0].mxu0 %v1051
      %v1053 = vpop.f32.mrb[0].mxu0
      %v1054 = vadd.f32 %v917, %v1053
      %v1055 = vpop.f32.mrb[0].mxu0
      %1056 = vmatprep.mubr.f32.mxu0 0.0
      %v1057 = vand.u32 %v507, 4294901760
      %v1058 = vsub.f32 %v507, %v1057
      %v1059 = vand.u32 %v1058, 4294901760
      %1060 = vmatmul.mubr.f32.gmra.mrb[0].mxu0 %v1059
      %v1061 = vpop.f32.mrb[0].mxu0
      %v1062 = vadd.f32 %v924, %v1061
      %v1063 = vpop.f32.mrb[0].mxu0
      %1064 = vmatprep.mubr.f32.mxu0 0.0
      %v1065 = vand.u32 %v510, 4294901760
      %v1066 = vsub.f32 %v510, %v1065
      %v1067 = vand.u32 %v1066, 4294901760
      %1068 = vmatmul.mubr.f32.gmra.mrb[0].mxu0 %v1067
      %v1069 = vpop.f32.mrb[0].mxu0
      %v1070 = vadd.f32 %v931, %v1069
      %v1071 = vpop.f32.mrb[0].mxu0
      %1072 = vdwg.mxu0
      %1073 = vmatprep.subr.mxu0 0.0
      %v1074 = vand.u32 %v475, 4294901760
      %v1075 = vsub.f32 %v475, %v1074
      %v1076 = vand.u32 %v1075, 4294901760
      %1077 = vmatpush1.msra.mxu0 %v1076
      %1078 = vmatprep.subr.mxu0 0.0
      %v1079 = vand.u32 %v514, 4294901760
      %v1080 = vsub.f32 %v514, %v1079
      %v1081 = vand.u32 %v1080, 4294901760
      %1082 = vmatpush1.msra.mxu0 %v1081
      %1083 = vmatprep.subr.mxu0 0.0
      %1084 = vmatpush1.msra.mxu0 0.0
      %1085 = vmatprep.subr.mxu0 0.0
      %1086 = vmatpush1.msra.mxu0 0.0
      %1087 = vmatprep.subr.mxu0 0.0
      %1088 = vmatpush1.msra.mxu0 0.0
      %1089 = vmatprep.subr.mxu0 0.0
      %1090 = vmatpush1.msra.mxu0 0.0
      %1091 = vmatprep.subr.mxu0 0.0
      %1092 = vmatpush1.msra.mxu0 0.0
      %1093 = vmatprep.subr.mxu0 0.0
      %1094 = vmatpush1.msra.mxu0 0.0
      %1095 = vmatprep.subr.mxu0 0.0
      %1096 = vmatpush1.msra.mxu0 0.0
      %1097 = vmatprep.subr.mxu0 0.0
      %1098 = vmatpush1.msra.mxu0 0.0
      %1099 = vmatprep.subr.mxu0 0.0
      %1100 = vmatpush1.msra.mxu0 0.0
      %1101 = vmatprep.subr.mxu0 0.0
      %1102 = vmatpush1.msra.mxu0 0.0
      %1103 = vmatprep.subr.mxu0 0.0
      %1104 = vmatpush1.msra.mxu0 0.0
      %1105 = vmatprep.subr.mxu0 0.0
      %1106 = vmatpush1.msra.mxu0 0.0
      %1107 = vmatprep.subr.mxu0 0.0
      %1108 = vmatpush1.msra.mxu0 0.0
      %1109 = vmatprep.subr.mxu0 0.0
      %1110 = vmatpush1.msra.mxu0 0.0
      %1111 = vmatprep.subr.mxu0 0.0
      %1112 = vmatpush1.msra.mxu0 0.0
      %1113 = vmatprep.subr.mxu0 0.0
      %1114 = vmatpush1.msra.mxu0 0.0
      %1115 = vmatprep.subr.mxu0 0.0
      %1116 = vmatpush1.msra.mxu0 0.0
      %1117 = vmatprep.subr.mxu0 0.0
      %1118 = vmatpush1.msra.mxu0 0.0
      %1119 = vmatprep.subr.mxu0 0.0
      %1120 = vmatpush1.msra.mxu0 0.0
      %1121 = vmatprep.subr.mxu0 0.0
      %1122 = vmatpush1.msra.mxu0 0.0
      %1123 = vmatprep.subr.mxu0 0.0
      %1124 = vmatpush1.msra.mxu0 0.0
      %1125 = vmatprep.subr.mxu0 0.0
      %1126 = vmatpush1.msra.mxu0 0.0
      %1127 = vmatprep.subr.mxu0 0.0
      %1128 = vmatpush1.msra.mxu0 0.0
      %1129 = vmatprep.subr.mxu0 0.0
      %1130 = vmatpush1.msra.mxu0 0.0
      %1131 = vmatprep.subr.mxu0 0.0
      %1132 = vmatpush1.msra.mxu0 0.0
      %1133 = vmatprep.subr.mxu0 0.0
      %1134 = vmatpush1.msra.mxu0 0.0
      %1135 = vmatprep.subr.mxu0 0.0
      %1136 = vmatpush1.msra.mxu0 0.0
      %1137 = vmatprep.subr.mxu0 0.0
      %1138 = vmatpush1.msra.mxu0 0.0
      %1139 = vmatprep.subr.mxu0 0.0
      %1140 = vmatpush1.msra.mxu0 0.0
      %1141 = vmatprep.subr.mxu0 0.0
      %1142 = vmatpush1.msra.mxu0 0.0
      %1143 = vmatprep.mubr.f32.mxu0 0.0
      %v1144 = vand.u32 %v486, 4294901760
      %1145 = vmatmul.mubr.f32.gmra.mrb[0].mxu0 %v1144
      %v1146 = vpop.f32.mrb[0].mxu0
      %v1147 = vadd.f32 %v1006, %v1146
      %v1148 = vpop.f32.mrb[0].mxu0
      %1149 = vmatprep.mubr.f32.mxu0 0.0
      %v1150 = vand.u32 %v489, 4294901760
      %1151 = vmatmul.mubr.f32.gmra.mrb[0].mxu0 %v1150
      %v1152 = vpop.f32.mrb[0].mxu0
      %v1153 = vadd.f32 %v1014, %v1152
      %v1154 = vpop.f32.mrb[0].mxu0
      %1155 = vmatprep.mubr.f32.mxu0 0.0
      %v1156 = vand.u32 %v492, 4294901760
      %1157 = vmatmul.mubr.f32.gmra.mrb[0].mxu0 %v1156
      %v1158 = vpop.f32.mrb[0].mxu0
      %v1159 = vadd.f32 %v1022, %v1158
      %v1160 = vpop.f32.mrb[0].mxu0
      %1161 = vmatprep.mubr.f32.mxu0 0.0
      %v1162 = vand.u32 %v495, 4294901760
      %1163 = vmatmul.mubr.f32.gmra.mrb[0].mxu0 %v1162
      %v1164 = vpop.f32.mrb[0].mxu0
      %v1165 = vadd.f32 %v1030, %v1164
      %v1166 = vpop.f32.mrb[0].mxu0
      %1167 = vmatprep.mubr.f32.mxu0 0.0
      %v1168 = vand.u32 %v498, 4294901760
      %1169 = vmatmul.mubr.f32.gmra.mrb[0].mxu0 %v1168
      %v1170 = vpop.f32.mrb[0].mxu0
      %v1171 = vadd.f32 %v1038, %v1170
      %v1172 = vpop.f32.mrb[0].mxu0
      %1173 = vmatprep.mubr.f32.mxu0 0.0
      %v1174 = vand.u32 %v501, 4294901760
      %1175 = vmatmul.mubr.f32.gmra.mrb[0].mxu0 %v1174
      %v1176 = vpop.f32.mrb[0].mxu0
      %v1177 = vadd.f32 %v1046, %v1176
      %v1178 = vpop.f32.mrb[0].mxu0
      %1179 = vmatprep.mubr.f32.mxu0 0.0
      %v1180 = vand.u32 %v504, 4294901760
      %1181 = vmatmul.mubr.f32.gmra.mrb[0].mxu0 %v1180
      %v1182 = vpop.f32.mrb[0].mxu0
      %v1183 = vadd.f32 %v1054, %v1182
      %v1184 = vpop.f32.mrb[0].mxu0
      %1185 = vmatprep.mubr.f32.mxu0 0.0
      %v1186 = vand.u32 %v507, 4294901760
      %1187 = vmatmul.mubr.f32.gmra.mrb[0].mxu0 %v1186
      %v1188 = vpop.f32.mrb[0].mxu0
      %v1189 = vadd.f32 %v1062, %v1188
      %v1190 = vpop.f32.mrb[0].mxu0
      %1191 = vmatprep.mubr.f32.mxu0 0.0
      %v1192 = vand.u32 %v510, 4294901760
      %1193 = vmatmul.mubr.f32.gmra.mrb[0].mxu0 %v1192
      %v1194 = vpop.f32.mrb[0].mxu0
      %v1195 = vadd.f32 %v1070, %v1194
      %v1196 = vpop.f32.mrb[0].mxu0
      %1197 = vdwg.mxu0
      %1198 = vmatprep.subr.mxu0 0.0
      %v1199 = vand.u32 %v475, 4294901760
      %1200 = vmatpush1.msra.mxu0 %v1199
      %1201 = vmatprep.subr.mxu0 0.0
      %v1202 = vand.u32 %v514, 4294901760
      %1203 = vmatpush1.msra.mxu0 %v1202
      %1204 = vmatprep.subr.mxu0 0.0
      %1205 = vmatpush1.msra.mxu0 0.0
      %1206 = vmatprep.subr.mxu0 0.0
      %1207 = vmatpush1.msra.mxu0 0.0
      %1208 = vmatprep.subr.mxu0 0.0
      %1209 = vmatpush1.msra.mxu0 0.0
      %1210 = vmatprep.subr.mxu0 0.0
      %1211 = vmatpush1.msra.mxu0 0.0
      %1212 = vmatprep.subr.mxu0 0.0
      %1213 = vmatpush1.msra.mxu0 0.0
      %1214 = vmatprep.subr.mxu0 0.0
      %1215 = vmatpush1.msra.mxu0 0.0
      %1216 = vmatprep.subr.mxu0 0.0
      %1217 = vmatpush1.msra.mxu0 0.0
      %1218 = vmatprep.subr.mxu0 0.0
      %1219 = vmatpush1.msra.mxu0 0.0
      %1220 = vmatprep.subr.mxu0 0.0
      %1221 = vmatpush1.msra.mxu0 0.0
      %1222 = vmatprep.subr.mxu0 0.0
      %1223 = vmatpush1.msra.mxu0 0.0
      %1224 = vmatprep.subr.mxu0 0.0
      %1225 = vmatpush1.msra.mxu0 0.0
      %1226 = vmatprep.subr.mxu0 0.0
      %1227 = vmatpush1.msra.mxu0 0.0
      %1228 = vmatprep.subr.mxu0 0.0
      %1229 = vmatpush1.msra.mxu0 0.0
      %1230 = vmatprep.subr.mxu0 0.0
      %1231 = vmatpush1.msra.mxu0 0.0
      %1232 = vmatprep.subr.mxu0 0.0
      %1233 = vmatpush1.msra.mxu0 0.0
      %1234 = vmatprep.subr.mxu0 0.0
      %1235 = vmatpush1.msra.mxu0 0.0
      %1236 = vmatprep.subr.mxu0 0.0
      %1237 = vmatpush1.msra.mxu0 0.0
      %1238 = vmatprep.subr.mxu0 0.0
      %1239 = vmatpush1.msra.mxu0 0.0
      %1240 = vmatprep.subr.mxu0 0.0
      %1241 = vmatpush1.msra.mxu0 0.0
      %1242 = vmatprep.subr.mxu0 0.0
      %1243 = vmatpush1.msra.mxu0 0.0
      %1244 = vmatprep.subr.mxu0 0.0
      %1245 = vmatpush1.msra.mxu0 0.0
      %1246 = vmatprep.subr.mxu0 0.0
      %1247 = vmatpush1.msra.mxu0 0.0
      %1248 = vmatprep.subr.mxu0 0.0
      %1249 = vmatpush1.msra.mxu0 0.0
      %1250 = vmatprep.subr.mxu0 0.0
      %1251 = vmatpush1.msra.mxu0 0.0
      %1252 = vmatprep.subr.mxu0 0.0
      %1253 = vmatpush1.msra.mxu0 0.0
      %1254 = vmatprep.subr.mxu0 0.0
      %1255 = vmatpush1.msra.mxu0 0.0
      %1256 = vmatprep.subr.mxu0 0.0
      %1257 = vmatpush1.msra.mxu0 0.0
      %1258 = vmatprep.subr.mxu0 0.0
      %1259 = vmatpush1.msra.mxu0 0.0
      %1260 = vmatprep.subr.mxu0 0.0
      %1261 = vmatpush1.msra.mxu0 0.0
      %1262 = vmatprep.subr.mxu0 0.0
      %1263 = vmatpush1.msra.mxu0 0.0
      %1264 = vmatprep.mubr.f32.mxu0 0.0
      %v1265 = vand.u32 %v486, 4294901760
      %1266 = vmatmul.mubr.f32.gmra.mrb[0].mxu0 %v1265
      %v1267 = vpop.f32.mrb[0].mxu0
      %v1268 = vadd.f32 %v1147, %v1267
      %v1269 = vpop.f32.mrb[0].mxu0
      %1270 = vmatprep.mubr.f32.mxu0 0.0
      %v1271 = vand.u32 %v489, 4294901760
      %1272 = vmatmul.mubr.f32.gmra.mrb[0].mxu0 %v1271
      %v1273 = vpop.f32.mrb[0].mxu0
      %v1274 = vadd.f32 %v1153, %v1273
      %v1275 = vpop.f32.mrb[0].mxu0
      %1276 = vmatprep.mubr.f32.mxu0 0.0
      %v1277 = vand.u32 %v492, 4294901760
      %1278 = vmatmul.mubr.f32.gmra.mrb[0].mxu0 %v1277
      %v1279 = vpop.f32.mrb[0].mxu0
      %v1280 = vadd.f32 %v1159, %v1279
      %v1281 = vpop.f32.mrb[0].mxu0
      %1282 = vmatprep.mubr.f32.mxu0 0.0
      %v1283 = vand.u32 %v495, 4294901760
      %1284 = vmatmul.mubr.f32.gmra.mrb[0].mxu0 %v1283
      %v1285 = vpop.f32.mrb[0].mxu0
      %v1286 = vadd.f32 %v1165, %v1285
      %v1287 = vpop.f32.mrb[0].mxu0
      %1288 = vmatprep.mubr.f32.mxu0 0.0
      %v1289 = vand.u32 %v498, 4294901760
      %1290 = vmatmul.mubr.f32.gmra.mrb[0].mxu0 %v1289
      %v1291 = vpop.f32.mrb[0].mxu0
      %v1292 = vadd.f32 %v1171, %v1291
      %v1293 = vpop.f32.mrb[0].mxu0
      %1294 = vmatprep.mubr.f32.mxu0 0.0
      %v1295 = vand.u32 %v501, 4294901760
      %1296 = vmatmul.mubr.f32.gmra.mrb[0].mxu0 %v1295
      %v1297 = vpop.f32.mrb[0].mxu0
      %v1298 = vadd.f32 %v1177, %v1297
      %v1299 = vpop.f32.mrb[0].mxu0
      %1300 = vmatprep.mubr.f32.mxu0 0.0
      %v1301 = vand.u32 %v504, 4294901760
      %1302 = vmatmul.mubr.f32.gmra.mrb[0].mxu0 %v1301
      %v1303 = vpop.f32.mrb[0].mxu0
      %v1304 = vadd.f32 %v1183, %v1303
      %v1305 = vpop.f32.mrb[0].mxu0
      %1306 = vmatprep.mubr.f32.mxu0 0.0
      %v1307 = vand.u32 %v507, 4294901760
      %1308 = vmatmul.mubr.f32.gmra.mrb[0].mxu0 %v1307
      %v1309 = vpop.f32.mrb[0].mxu0
      %v1310 = vadd.f32 %v1189, %v1309
      %v1311 = vpop.f32.mrb[0].mxu0
      %1312 = vmatprep.mubr.f32.mxu0 0.0
      %v1313 = vand.u32 %v510, 4294901760
      %1314 = vmatmul.mubr.f32.gmra.mrb[0].mxu0 %v1313
      %v1315 = vpop.f32.mrb[0].mxu0
      %v1316 = vadd.f32 %v1195, %v1315
      %v1317 = vpop.f32.mrb[0].mxu0
      %1318 = vdwg.mxu0
      %v1319 = vmax.f32 %v1268, 0.0
      %v1320 = vmax.f32 %v1274, 0.0
      %v1321 = vmax.f32 %v1280, 0.0
      %v1322 = vmax.f32 %v1286, 0.0
      %v1323 = vmax.f32 %v1292, 0.0
      %v1324 = vmax.f32 %v1298, 0.0
      %v1325 = vmax.f32 %v1304, 0.0
      %v1326 = vmax.f32 %v1310, 0.0
      %v1327 = vmax.f32 %v1316, 0.0
      %v1328 = vrot.slane %v1319, 1
      %v1329 = vrot.slane %v1320, 1
      %v1330 = vrot.slane %v1321, 1
      %v1331 = vrot.slane %v1322, 1
      %v1332 = vrot.slane %v1323, 1
      %v1333 = vrot.slane %v1324, 1
      %v1334 = vrot.slane %v1325, 1
      %v1335 = vrot.slane %v1326, 1
      %v1336 = vrot.slane %v1327, 1
      %v1337 = vlaneseq
      %v1338 = vshrl.u32 %v1337, 7
      %vm1339 = vcmp.lt.s32.totalorder %v1338, 7
      %v1340 = vsel %vm1339, %v1335, %v1336
      %v1341 = vsel %vm1339, %v1334, %v1335
      %v1342 = vsel %vm1339, %v1333, %v1334
      %v1343 = vsel %vm1339, %v1332, %v1333
      %v1344 = vsel %vm1339, %v1331, %v1332
      %v1345 = vsel %vm1339, %v1330, %v1331
      %v1346 = vsel %vm1339, %v1329, %v1330
      %v1347 = vsel %vm1339, %v1328, %v1329
      %v1348 = vsel %vm1339, %v1336, %v1328
      %v1349 = vmax.f32 %v1319, %v1347
      %v1350 = vmax.f32 %v1320, %v1346
      %v1351 = vmax.f32 %v1321, %v1345
      %v1352 = vmax.f32 %v1322, %v1344
      %v1353 = vmax.f32 %v1323, %v1343
      %v1354 = vmax.f32 %v1324, %v1342
      %v1355 = vmax.f32 %v1325, %v1341
      %v1356 = vmax.f32 %v1326, %v1340
      %v1357 = vmax.f32 %v1327, %v1348
      %v1358 = vrot.slane %v1319, 2
      %v1359 = vrot.slane %v1320, 2
      %v1360 = vrot.slane %v1321, 2
      %v1361 = vrot.slane %v1322, 2
      %v1362 = vrot.slane %v1323, 2
      %v1363 = vrot.slane %v1324, 2
      %v1364 = vrot.slane %v1325, 2
      %v1365 = vrot.slane %v1326, 2
      %v1366 = vrot.slane %v1327, 2
      %vm1367 = vcmp.lt.s32.totalorder %v1338, 6
      %v1368 = vsel %vm1367, %v1365, %v1366
      %v1369 = vsel %vm1367, %v1364, %v1365
      %v1370 = vsel %vm1367, %v1363, %v1364
      %v1371 = vsel %vm1367, %v1362, %v1363
      %v1372 = vsel %vm1367, %v1361, %v1362
      %v1373 = vsel %vm1367, %v1360, %v1361
      %v1374 = vsel %vm1367, %v1359, %v1360
      %v1375 = vsel %vm1367, %v1358, %v1359
      %v1376 = vsel %vm1367, %v1366, %v1358
      %v1377 = vmax.f32 %v1349, %v1375
      %v1378 = vmax.f32 %v1350, %v1374
      %v1379 = vmax.f32 %v1351, %v1373
      %v1380 = vmax.f32 %v1352, %v1372
      %v1381 = vmax.f32 %v1353, %v1371
      %v1382 = vmax.f32 %v1354, %v1370
      %v1383 = vmax.f32 %v1355, %v1369
      %v1384 = vmax.f32 %v1356, %v1368
      %v1385 = vmax.f32 %v1357, %v1376
      %v1386 = vld [vmem:[%s1] sm:$0xff]
      %v1387 = vld [vmem:[%s1 + $0x8] sm:$0xff]
      %v1388 = vld [vmem:[%s1 + $0x10] sm:$0xff]
      %v1389 = vld [vmem:[%s1 + $0x18] sm:$0xff]
      %v1390 = vld [vmem:[%s1 + $0x20] sm:$0xff]
      %v1391 = vld [vmem:[%s1 + $0x28] sm:$0xff]
      %v1392 = vld [vmem:[%s1 + $0x30] sm:$0xff]
      %v1393 = vld [vmem:[%s1 + $0x38] sm:$0xff]
      %v1394 = vld [vmem:[%s1 + $0x40] sm:$0xff]
      %1396 = vset.pattern.permute.xlu0 0
      %1397 = vperm.xlu0 %1396, %v1386
      %v1398 = vpop.permute.xlu0 %1397
      %1401 = vset.pattern.permute.xlu0 0
      %1402 = vperm.xlu0 %1401, %v1387
      %v1403 = vpop.permute.xlu0 %1402
      %1406 = vset.pattern.permute.xlu0 0
      %1407 = vperm.xlu0 %1406, %v1388
      %v1408 = vpop.permute.xlu0 %1407
      %1411 = vset.pattern.permute.xlu0 0
      %1412 = vperm.xlu0 %1411, %v1389
      %v1413 = vpop.permute.xlu0 %1412
      %1416 = vset.pattern.permute.xlu0 0
      %1417 = vperm.xlu0 %1416, %v1390
      %v1418 = vpop.permute.xlu0 %1417
      %1421 = vset.pattern.permute.xlu0 0
      %1422 = vperm.xlu0 %1421, %v1391
      %v1423 = vpop.permute.xlu0 %1422
      %1426 = vset.pattern.permute.xlu0 0
      %1427 = vperm.xlu0 %1426, %v1392
      %v1428 = vpop.permute.xlu0 %1427
      %1431 = vset.pattern.permute.xlu0 0
      %1432 = vperm.xlu0 %1431, %v1393
      %v1433 = vpop.permute.xlu0 %1432
      %1436 = vset.pattern.permute.xlu0 0
      %1437 = vperm.xlu0 %1436, %v1394
      %v1438 = vpop.permute.xlu0 %1437
      %v1440 = vmul.f32 %v1377, %v1398
      %v1441 = vmul.f32 %v1378, %v1403
      %v1442 = vmul.f32 %v1379, %v1408
      %v1443 = vmul.f32 %v1380, %v1413
      %v1444 = vmul.f32 %v1381, %v1418
      %v1445 = vmul.f32 %v1382, %v1423
      %v1446 = vmul.f32 %v1383, %v1428
      %v1447 = vmul.f32 %v1384, %v1433
      %v1448 = vmul.f32 %v1385, %v1438
      %v1449 = vrot.slane %v1440, 6
      %v1450 = vrot.slane %v1441, 6
      %v1451 = vrot.slane %v1442, 6
      %v1452 = vrot.slane %v1443, 6
      %v1453 = vrot.slane %v1444, 6
      %v1454 = vrot.slane %v1445, 6
      %v1455 = vrot.slane %v1446, 6
      %v1456 = vrot.slane %v1447, 6
      %v1457 = vrot.slane %v1448, 6
      %vm1458 = vcmp.lt.s32.totalorder %v1338, 2
      %v1459 = vsel %vm1458, %v1456, %v1457
      %v1460 = vsel %vm1458, %v1455, %v1456
      %v1461 = vsel %vm1458, %v1454, %v1455
      %v1462 = vsel %vm1458, %v1453, %v1454
      %v1463 = vsel %vm1458, %v1452, %v1453
      %v1464 = vsel %vm1458, %v1451, %v1452
      %v1465 = vsel %vm1458, %v1450, %v1451
      %v1466 = vsel %vm1458, %v1449, %v1450
      %v1467 = vsel %vm1458, %v1457, %v1449
      %v1468 = vrot.slane %v1440, 2
      %v1469 = vrot.slane %v1441, 2
      %v1470 = vrot.slane %v1442, 2
      %v1471 = vrot.slane %v1443, 2
      %v1472 = vrot.slane %v1444, 2
      %v1473 = vrot.slane %v1445, 2
      %v1474 = vrot.slane %v1446, 2
      %v1475 = vrot.slane %v1447, 2
      %v1476 = vrot.slane %v1448, 2
      %v1477 = vsel %vm1367, %v1475, %v1476
      %v1478 = vsel %vm1367, %v1474, %v1475
      %v1479 = vsel %vm1367, %v1473, %v1474
      %v1480 = vsel %vm1367, %v1472, %v1473
      %v1481 = vsel %vm1367, %v1471, %v1472
      %v1482 = vsel %vm1367, %v1470, %v1471
      %v1483 = vsel %vm1367, %v1469, %v1470
      %v1484 = vsel %vm1367, %v1468, %v1469
      %v1485 = vsel %vm1367, %v1476, %v1468
      %1495 = vrot.lane.b32.xlu0 %v1440, 16
      %v1496 = vpop.permute.xlu0 %1495
      %1497 = vrot.lane.b32.xlu0 %v1441, 16
      %v1498 = vpop.permute.xlu0 %1497
      %1499 = vrot.lane.b32.xlu0 %v1442, 16
      %v1500 = vpop.permute.xlu0 %1499
      %1501 = vrot.lane.b32.xlu0 %v1443, 16
      %v1502 = vpop.permute.xlu0 %1501
      %1503 = vrot.lane.b32.xlu0 %v1444, 16
      %v1504 = vpop.permute.xlu0 %1503
      %1505 = vrot.lane.b32.xlu0 %v1445, 16
      %v1506 = vpop.permute.xlu0 %1505
      %1507 = vrot.lane.b32.xlu0 %v1446, 16
      %v1508 = vpop.permute.xlu0 %1507
      %1509 = vrot.lane.b32.xlu0 %v1447, 16
      %v1510 = vpop.permute.xlu0 %1509
      %1511 = vrot.lane.b32.xlu0 %v1448, 16
      %v1512 = vpop.permute.xlu0 %1511
      %1531 = vrot.lane.b32.xlu0 %v1484, 32
      %v1532 = vpop.permute.xlu0 %1531
      %1533 = vrot.lane.b32.xlu0 %v1483, 32
      %v1534 = vpop.permute.xlu0 %1533
      %1535 = vrot.lane.b32.xlu0 %v1482, 32
      %v1536 = vpop.permute.xlu0 %1535
      %1537 = vrot.lane.b32.xlu0 %v1481, 32
      %v1538 = vpop.permute.xlu0 %1537
      %1539 = vrot.lane.b32.xlu0 %v1480, 32
      %v1540 = vpop.permute.xlu0 %1539
      %1541 = vrot.lane.b32.xlu0 %v1479, 32
      %v1542 = vpop.permute.xlu0 %1541
      %1543 = vrot.lane.b32.xlu0 %v1478, 32
      %v1544 = vpop.permute.xlu0 %1543
      %1545 = vrot.lane.b32.xlu0 %v1477, 32
      %v1546 = vpop.permute.xlu0 %1545
      %1547 = vrot.lane.b32.xlu0 %v1485, 32
      %v1548 = vpop.permute.xlu0 %1547
      %vm1558 = vcmask 130048
      %v1559 = vsel %vm1558, %v1467, %v1496
      %v1560 = vsel %vm1558, %v1466, %v1498
      %v1561 = vsel %vm1558, %v1465, %v1500
      %v1562 = vsel %vm1558, %v1464, %v1502
      %v1563 = vsel %vm1558, %v1463, %v1504
      %v1564 = vsel %vm1558, %v1462, %v1506
      %v1565 = vsel %vm1558, %v1461, %v1508
      %v1566 = vsel %vm1558, %v1460, %v1510
      %v1567 = vsel %vm1558, %v1459, %v1512
      %vm1568 = vcmask 261120
      %v1569 = vsel %vm1568, %v1559, %v1532
      %v1570 = vsel %vm1568, %v1560, %v1534
      %v1571 = vsel %vm1568, %v1561, %v1536
      %v1572 = vsel %vm1568, %v1562, %v1538
      %v1573 = vsel %vm1568, %v1563, %v1540
      %v1574 = vsel %vm1568, %v1564, %v1542
      %v1575 = vsel %vm1568, %v1565, %v1544
      %v1576 = vsel %vm1568, %v1566, %v1546
      %v1577 = vsel %vm1568, %v1567, %v1548
      %v1578 = vld [vmem:[%s6] sm:$0xff]
      %v1579 = vld [vmem:[%s6 + $0x8] sm:$0xff]
      %v1580 = vld [vmem:[%s6 + $0x10] sm:$0xff]
      %v1581 = vld [vmem:[%s6 + $0x18] sm:$0xff]
      %v1582 = vld [vmem:[%s6 + $0x20] sm:$0xff]
      %v1583 = vld [vmem:[%s6 + $0x28] sm:$0xff]
      %v1584 = vld [vmem:[%s7] sm:$0x1]
      %v1586 = vlaneseq
      %v1587 = vshrl.u32 %v1586, 7
      %v1588 = vsub.s32 0, %v1587
      %v1589 = vrot.slane %v1584, %v1588
      %vm1591 = vcmask 392192
      %v1593 = vsel %vm1591, %v1569, 0
      %v1596 = vsel %vm1591, %v1570, 0
      %v1599 = vsel %vm1591, %v1571, 0
      %v1602 = vsel %vm1591, %v1572, 0
      %v1605 = vsel %vm1591, %v1573, 0
      %v1608 = vsel %vm1591, %v1574, 0
      %v1611 = vsel %vm1591, %v1575, 0
      %v1614 = vsel %vm1591, %v1576, 0
      %v1617 = vsel %vm1591, %v1577, 0
      %1619 = vmatprep.subr.mxu0 0.0
      %v1620 = vand.u32 %v1578, 4294901760
      %1621 = vmatpush1.msra.mxu0 %v1620
      %1622 = vmatprep.subr.mxu0 0.0
      %v1623 = vand.u32 %v1579, 4294901760
      %1624 = vmatpush1.msra.mxu0 %v1623
      %1625 = vmatprep.subr.mxu0 0.0
      %v1626 = vand.u32 %v1580, 4294901760
      %1627 = vmatpush1.msra.mxu0 %v1626
      %1628 = vmatprep.subr.mxu0 0.0
      %v1629 = vand.u32 %v1581, 4294901760
      %1630 = vmatpush1.msra.mxu0 %v1629
      %1631 = vmatprep.subr.mxu0 0.0
      %v1632 = vand.u32 %v1582, 4294901760
      %1633 = vmatpush1.msra.mxu0 %v1632
      %1634 = vmatprep.subr.mxu0 0.0
      %v1635 = vand.u32 %v1583, 4294901760
      %1636 = vmatpush1.msra.mxu0 %v1635
      %1637 = vmatprep.subr.mxu0 0.0
      %1638 = vmatpush1.msra.mxu0 0.0
      %1639 = vmatprep.subr.mxu0 0.0
      %1640 = vmatpush1.msra.mxu0 0.0
      %1641 = vmatprep.subr.mxu0 0.0
      %1642 = vmatpush1.msra.mxu0 0.0
      %1643 = vmatprep.subr.mxu0 0.0
      %1644 = vmatpush1.msra.mxu0 0.0
      %1645 = vmatprep.subr.mxu0 0.0
      %1646 = vmatpush1.msra.mxu0 0.0
      %1647 = vmatprep.subr.mxu0 0.0
      %1648 = vmatpush1.msra.mxu0 0.0
      %1649 = vmatprep.subr.mxu0 0.0
      %1650 = vmatpush1.msra.mxu0 0.0
      %1651 = vmatprep.subr.mxu0 0.0
      %1652 = vmatpush1.msra.mxu0 0.0
      %1653 = vmatprep.subr.mxu0 0.0
      %1654 = vmatpush1.msra.mxu0 0.0
      %1655 = vmatprep.subr.mxu0 0.0
      %1656 = vmatpush1.msra.mxu0 0.0
      %1657 = vmatprep.subr.mxu0 0.0
      %1658 = vmatpush1.msra.mxu0 0.0
      %1659 = vmatprep.subr.mxu0 0.0
      %1660 = vmatpush1.msra.mxu0 0.0
      %1661 = vmatprep.subr.mxu0 0.0
      %1662 = vmatpush1.msra.mxu0 0.0
      %1663 = vmatprep.subr.mxu0 0.0
      %1664 = vmatpush1.msra.mxu0 0.0
      %1665 = vmatprep.subr.mxu0 0.0
      %1666 = vmatpush1.msra.mxu0 0.0
      %1667 = vmatprep.subr.mxu0 0.0
      %1668 = vmatpush1.msra.mxu0 0.0
      %1669 = vmatprep.subr.mxu0 0.0
      %1670 = vmatpush1.msra.mxu0 0.0
      %1671 = vmatprep.subr.mxu0 0.0
      %1672 = vmatpush1.msra.mxu0 0.0
      %1673 = vmatprep.subr.mxu0 0.0
      %1674 = vmatpush1.msra.mxu0 0.0
      %1675 = vmatprep.subr.mxu0 0.0
      %1676 = vmatpush1.msra.mxu0 0.0
      %1677 = vmatprep.subr.mxu0 0.0
      %1678 = vmatpush1.msra.mxu0 0.0
      %1679 = vmatprep.subr.mxu0 0.0
      %1680 = vmatpush1.msra.mxu0 0.0
      %1681 = vmatprep.subr.mxu0 0.0
      %1682 = vmatpush1.msra.mxu0 0.0
      %1683 = vmatprep.subr.mxu0 0.0
      %1684 = vmatpush1.msra.mxu0 0.0
      %1685 = vmatprep.subr.mxu0 0.0
      %1686 = vmatpush1.msra.mxu0 0.0
      %1687 = vmatprep.subr.mxu0 0.0
      %1688 = vmatpush1.msra.mxu0 0.0
      %1689 = vmatprep.mubr.f32.mxu0 0.0
      %v1690 = vand.u32 %v1593, 4294901760
      %v1691 = vsub.f32 %v1593, %v1690
      %v1692 = vand.u32 %v1691, 4294901760
      %v1693 = vsub.f32 %v1691, %v1692
      %v1694 = vand.u32 %v1693, 4294901760
      %1695 = vmatmul.mubr.f32.gmra.mrb[0].mxu0 %v1694
      %v1696 = vpop.f32.mrb[0].mxu0
      %v1697 = vadd.f32 %v1589, %v1696
      %v1698 = vpop.f32.mrb[0].mxu0
      %1699 = vmatprep.mubr.f32.mxu0 0.0
      %v1700 = vand.u32 %v1596, 4294901760
      %v1701 = vsub.f32 %v1596, %v1700
      %v1702 = vand.u32 %v1701, 4294901760
      %v1703 = vsub.f32 %v1701, %v1702
      %v1704 = vand.u32 %v1703, 4294901760
      %1705 = vmatmul.mubr.f32.gmra.mrb[0].mxu0 %v1704
      %v1706 = vpop.f32.mrb[0].mxu0
      %v1707 = vadd.f32 %v1589, %v1706
      %v1708 = vpop.f32.mrb[0].mxu0
      %1709 = vmatprep.mubr.f32.mxu0 0.0
      %v1710 = vand.u32 %v1599, 4294901760
      %v1711 = vsub.f32 %v1599, %v1710
      %v1712 = vand.u32 %v1711, 4294901760
      %v1713 = vsub.f32 %v1711, %v1712
      %v1714 = vand.u32 %v1713, 4294901760
      %1715 = vmatmul.mubr.f32.gmra.mrb[0].mxu0 %v1714
      %v1716 = vpop.f32.mrb[0].mxu0
      %v1717 = vadd.f32 %v1589, %v1716
      %v1718 = vpop.f32.mrb[0].mxu0
      %1719 = vmatprep.mubr.f32.mxu0 0.0
      %v1720 = vand.u32 %v1602, 4294901760
      %v1721 = vsub.f32 %v1602, %v1720
      %v1722 = vand.u32 %v1721, 4294901760
      %v1723 = vsub.f32 %v1721, %v1722
      %v1724 = vand.u32 %v1723, 4294901760
      %1725 = vmatmul.mubr.f32.gmra.mrb[0].mxu0 %v1724
      %v1726 = vpop.f32.mrb[0].mxu0
      %v1727 = vadd.f32 %v1589, %v1726
      %v1728 = vpop.f32.mrb[0].mxu0
      %1729 = vmatprep.mubr.f32.mxu0 0.0
      %v1730 = vand.u32 %v1605, 4294901760
      %v1731 = vsub.f32 %v1605, %v1730
      %v1732 = vand.u32 %v1731, 4294901760
      %v1733 = vsub.f32 %v1731, %v1732
      %v1734 = vand.u32 %v1733, 4294901760
      %1735 = vmatmul.mubr.f32.gmra.mrb[0].mxu0 %v1734
      %v1736 = vpop.f32.mrb[0].mxu0
      %v1737 = vadd.f32 %v1589, %v1736
      %v1738 = vpop.f32.mrb[0].mxu0
      %1739 = vmatprep.mubr.f32.mxu0 0.0
      %v1740 = vand.u32 %v1608, 4294901760
      %v1741 = vsub.f32 %v1608, %v1740
      %v1742 = vand.u32 %v1741, 4294901760
      %v1743 = vsub.f32 %v1741, %v1742
      %v1744 = vand.u32 %v1743, 4294901760
      %1745 = vmatmul.mubr.f32.gmra.mrb[0].mxu0 %v1744
      %v1746 = vpop.f32.mrb[0].mxu0
      %v1747 = vadd.f32 %v1589, %v1746
      %v1748 = vpop.f32.mrb[0].mxu0
      %1749 = vmatprep.mubr.f32.mxu0 0.0
      %v1750 = vand.u32 %v1611, 4294901760
      %v1751 = vsub.f32 %v1611, %v1750
      %v1752 = vand.u32 %v1751, 4294901760
      %v1753 = vsub.f32 %v1751, %v1752
      %v1754 = vand.u32 %v1753, 4294901760
      %1755 = vmatmul.mubr.f32.gmra.mrb[0].mxu0 %v1754
      %v1756 = vpop.f32.mrb[0].mxu0
      %v1757 = vadd.f32 %v1589, %v1756
      %v1758 = vpop.f32.mrb[0].mxu0
      %1759 = vmatprep.mubr.f32.mxu0 0.0
      %v1760 = vand.u32 %v1614, 4294901760
      %v1761 = vsub.f32 %v1614, %v1760
      %v1762 = vand.u32 %v1761, 4294901760
      %v1763 = vsub.f32 %v1761, %v1762
      %v1764 = vand.u32 %v1763, 4294901760
      %1765 = vmatmul.mubr.f32.gmra.mrb[0].mxu0 %v1764
      %v1766 = vpop.f32.mrb[0].mxu0
      %v1767 = vadd.f32 %v1589, %v1766
      %v1768 = vpop.f32.mrb[0].mxu0
      %1769 = vmatprep.mubr.f32.mxu0 0.0
      %v1770 = vand.u32 %v1617, 4294901760
      %v1771 = vsub.f32 %v1617, %v1770
      %v1772 = vand.u32 %v1771, 4294901760
      %v1773 = vsub.f32 %v1771, %v1772
      %v1774 = vand.u32 %v1773, 4294901760
      %1775 = vmatmul.mubr.f32.gmra.mrb[0].mxu0 %v1774
      %v1776 = vpop.f32.mrb[0].mxu0
      %v1777 = vadd.f32 %v1589, %v1776
      %v1778 = vpop.f32.mrb[0].mxu0
      %1779 = vdwg.mxu0
      %1780 = vmatprep.subr.mxu0 0.0
      %v1781 = vand.u32 %v1578, 4294901760
      %v1782 = vsub.f32 %v1578, %v1781
      %v1783 = vand.u32 %v1782, 4294901760
      %v1784 = vsub.f32 %v1782, %v1783
      %v1785 = vand.u32 %v1784, 4294901760
      %1786 = vmatpush1.msra.mxu0 %v1785
      %1787 = vmatprep.subr.mxu0 0.0
      %v1788 = vand.u32 %v1579, 4294901760
      %v1789 = vsub.f32 %v1579, %v1788
      %v1790 = vand.u32 %v1789, 4294901760
      %v1791 = vsub.f32 %v1789, %v1790
      %v1792 = vand.u32 %v1791, 4294901760
      %1793 = vmatpush1.msra.mxu0 %v1792
      %1794 = vmatprep.subr.mxu0 0.0
      %v1795 = vand.u32 %v1580, 4294901760
      %v1796 = vsub.f32 %v1580, %v1795
      %v1797 = vand.u32 %v1796, 4294901760
      %v1798 = vsub.f32 %v1796, %v1797
      %v1799 = vand.u32 %v1798, 4294901760
      %1800 = vmatpush1.msra.mxu0 %v1799
      %1801 = vmatprep.subr.mxu0 0.0
      %v1802 = vand.u32 %v1581, 4294901760
      %v1803 = vsub.f32 %v1581, %v1802
      %v1804 = vand.u32 %v1803, 4294901760
      %v1805 = vsub.f32 %v1803, %v1804
      %v1806 = vand.u32 %v1805, 4294901760
      %1807 = vmatpush1.msra.mxu0 %v1806
      %1808 = vmatprep.subr.mxu0 0.0
      %v1809 = vand.u32 %v1582, 4294901760
      %v1810 = vsub.f32 %v1582, %v1809
      %v1811 = vand.u32 %v1810, 4294901760
      %v1812 = vsub.f32 %v1810, %v1811
      %v1813 = vand.u32 %v1812, 4294901760
      %1814 = vmatpush1.msra.mxu0 %v1813
      %1815 = vmatprep.subr.mxu0 0.0
      %v1816 = vand.u32 %v1583, 4294901760
      %v1817 = vsub.f32 %v1583, %v1816
      %v1818 = vand.u32 %v1817, 4294901760
      %v1819 = vsub.f32 %v1817, %v1818
      %v1820 = vand.u32 %v1819, 4294901760
      %1821 = vmatpush1.msra.mxu0 %v1820
      %1822 = vmatprep.subr.mxu0 0.0
      %1823 = vmatpush1.msra.mxu0 0.0
      %1824 = vmatprep.subr.mxu0 0.0
      %1825 = vmatpush1.msra.mxu0 0.0
      %1826 = vmatprep.subr.mxu0 0.0
      %1827 = vmatpush1.msra.mxu0 0.0
      %1828 = vmatprep.subr.mxu0 0.0
      %1829 = vmatpush1.msra.mxu0 0.0
      %1830 = vmatprep.subr.mxu0 0.0
      %1831 = vmatpush1.msra.mxu0 0.0
      %1832 = vmatprep.subr.mxu0 0.0
      %1833 = vmatpush1.msra.mxu0 0.0
      %1834 = vmatprep.subr.mxu0 0.0
      %1835 = vmatpush1.msra.mxu0 0.0
      %1836 = vmatprep.subr.mxu0 0.0
      %1837 = vmatpush1.msra.mxu0 0.0
      %1838 = vmatprep.subr.mxu0 0.0
      %1839 = vmatpush1.msra.mxu0 0.0
      %1840 = vmatprep.subr.mxu0 0.0
      %1841 = vmatpush1.msra.mxu0 0.0
      %1842 = vmatprep.subr.mxu0 0.0
      %1843 = vmatpush1.msra.mxu0 0.0
      %1844 = vmatprep.subr.mxu0 0.0
      %1845 = vmatpush1.msra.mxu0 0.0
      %1846 = vmatprep.subr.mxu0 0.0
      %1847 = vmatpush1.msra.mxu0 0.0
      %1848 = vmatprep.subr.mxu0 0.0
      %1849 = vmatpush1.msra.mxu0 0.0
      %1850 = vmatprep.subr.mxu0 0.0
      %1851 = vmatpush1.msra.mxu0 0.0
      %1852 = vmatprep.subr.mxu0 0.0
      %1853 = vmatpush1.msra.mxu0 0.0
      %1854 = vmatprep.subr.mxu0 0.0
      %1855 = vmatpush1.msra.mxu0 0.0
      %1856 = vmatprep.subr.mxu0 0.0
      %1857 = vmatpush1.msra.mxu0 0.0
      %1858 = vmatprep.subr.mxu0 0.0
      %1859 = vmatpush1.msra.mxu0 0.0
      %1860 = vmatprep.subr.mxu0 0.0
      %1861 = vmatpush1.msra.mxu0 0.0
      %1862 = vmatprep.subr.mxu0 0.0
      %1863 = vmatpush1.msra.mxu0 0.0
      %1864 = vmatprep.subr.mxu0 0.0
      %1865 = vmatpush1.msra.mxu0 0.0
      %1866 = vmatprep.subr.mxu0 0.0
      %1867 = vmatpush1.msra.mxu0 0.0
      %1868 = vmatprep.subr.mxu0 0.0
      %1869 = vmatpush1.msra.mxu0 0.0
      %1870 = vmatprep.subr.mxu0 0.0
      %1871 = vmatpush1.msra.mxu0 0.0
      %1872 = vmatprep.subr.mxu0 0.0
      %1873 = vmatpush1.msra.mxu0 0.0
      %1874 = vmatprep.mubr.f32.mxu0 0.0
      %v1875 = vand.u32 %v1593, 4294901760
      %1876 = vmatmul.mubr.f32.gmra.mrb[0].mxu0 %v1875
      %v1877 = vpop.f32.mrb[0].mxu0
      %v1878 = vadd.f32 %v1697, %v1877
      %v1879 = vpop.f32.mrb[0].mxu0
      %1880 = vmatprep.mubr.f32.mxu0 0.0
      %v1881 = vand.u32 %v1596, 4294901760
      %1882 = vmatmul.mubr.f32.gmra.mrb[0].mxu0 %v1881
      %v1883 = vpop.f32.mrb[0].mxu0
      %v1884 = vadd.f32 %v1707, %v1883
      %v1885 = vpop.f32.mrb[0].mxu0
      %1886 = vmatprep.mubr.f32.mxu0 0.0
      %v1887 = vand.u32 %v1599, 4294901760
      %1888 = vmatmul.mubr.f32.gmra.mrb[0].mxu0 %v1887
      %v1889 = vpop.f32.mrb[0].mxu0
      %v1890 = vadd.f32 %v1717, %v1889
      %v1891 = vpop.f32.mrb[0].mxu0
      %1892 = vmatprep.mubr.f32.mxu0 0.0
      %v1893 = vand.u32 %v1602, 4294901760
      %1894 = vmatmul.mubr.f32.gmra.mrb[0].mxu0 %v1893
      %v1895 = vpop.f32.mrb[0].mxu0
      %v1896 = vadd.f32 %v1727, %v1895
      %v1897 = vpop.f32.mrb[0].mxu0
      %1898 = vmatprep.mubr.f32.mxu0 0.0
      %v1899 = vand.u32 %v1605, 4294901760
      %1900 = vmatmul.mubr.f32.gmra.mrb[0].mxu0 %v1899
      %v1901 = vpop.f32.mrb[0].mxu0
      %v1902 = vadd.f32 %v1737, %v1901
      %v1903 = vpop.f32.mrb[0].mxu0
      %1904 = vmatprep.mubr.f32.mxu0 0.0
      %v1905 = vand.u32 %v1608, 4294901760
      %1906 = vmatmul.mubr.f32.gmra.mrb[0].mxu0 %v1905
      %v1907 = vpop.f32.mrb[0].mxu0
      %v1908 = vadd.f32 %v1747, %v1907
      %v1909 = vpop.f32.mrb[0].mxu0
      %1910 = vmatprep.mubr.f32.mxu0 0.0
      %v1911 = vand.u32 %v1611, 4294901760
      %1912 = vmatmul.mubr.f32.gmra.mrb[0].mxu0 %v1911
      %v1913 = vpop.f32.mrb[0].mxu0
      %v1914 = vadd.f32 %v1757, %v1913
      %v1915 = vpop.f32.mrb[0].mxu0
      %1916 = vmatprep.mubr.f32.mxu0 0.0
      %v1917 = vand.u32 %v1614, 4294901760
      %1918 = vmatmul.mubr.f32.gmra.mrb[0].mxu0 %v1917
      %v1919 = vpop.f32.mrb[0].mxu0
      %v1920 = vadd.f32 %v1767, %v1919
      %v1921 = vpop.f32.mrb[0].mxu0
      %1922 = vmatprep.mubr.f32.mxu0 0.0
      %v1923 = vand.u32 %v1617, 4294901760
      %1924 = vmatmul.mubr.f32.gmra.mrb[0].mxu0 %v1923
      %v1925 = vpop.f32.mrb[0].mxu0
      %v1926 = vadd.f32 %v1777, %v1925
      %v1927 = vpop.f32.mrb[0].mxu0
      %1928 = vdwg.mxu0
      %1929 = vmatprep.subr.mxu0 0.0
      %v1930 = vand.u32 %v1578, 4294901760
      %v1931 = vsub.f32 %v1578, %v1930
      %1932 = vmatpush1.msra.mxu0 %v1931
      %1933 = vmatprep.subr.mxu0 0.0
      %v1934 = vand.u32 %v1579, 4294901760
      %v1935 = vsub.f32 %v1579, %v1934
      %1936 = vmatpush1.msra.mxu0 %v1935
      %1937 = vmatprep.subr.mxu0 0.0
      %v1938 = vand.u32 %v1580, 4294901760
      %v1939 = vsub.f32 %v1580, %v1938
      %1940 = vmatpush1.msra.mxu0 %v1939
      %1941 = vmatprep.subr.mxu0 0.0
      %v1942 = vand.u32 %v1581, 4294901760
      %v1943 = vsub.f32 %v1581, %v1942
      %1944 = vmatpush1.msra.mxu0 %v1943
      %1945 = vmatprep.subr.mxu0 0.0
      %v1946 = vand.u32 %v1582, 4294901760
      %v1947 = vsub.f32 %v1582, %v1946
      %1948 = vmatpush1.msra.mxu0 %v1947
      %1949 = vmatprep.subr.mxu0 0.0
      %v1950 = vand.u32 %v1583, 4294901760
      %v1951 = vsub.f32 %v1583, %v1950
      %1952 = vmatpush1.msra.mxu0 %v1951
      %1953 = vmatprep.subr.mxu0 0.0
      %1954 = vmatpush1.msra.mxu0 0.0
      %1955 = vmatprep.subr.mxu0 0.0
      %1956 = vmatpush1.msra.mxu0 0.0
      %1957 = vmatprep.subr.mxu0 0.0
      %1958 = vmatpush1.msra.mxu0 0.0
      %1959 = vmatprep.subr.mxu0 0.0
      %1960 = vmatpush1.msra.mxu0 0.0
      %1961 = vmatprep.subr.mxu0 0.0
      %1962 = vmatpush1.msra.mxu0 0.0
      %1963 = vmatprep.subr.mxu0 0.0
      %1964 = vmatpush1.msra.mxu0 0.0
      %1965 = vmatprep.subr.mxu0 0.0
      %1966 = vmatpush1.msra.mxu0 0.0
      %1967 = vmatprep.subr.mxu0 0.0
      %1968 = vmatpush1.msra.mxu0 0.0
      %1969 = vmatprep.subr.mxu0 0.0
      %1970 = vmatpush1.msra.mxu0 0.0
      %1971 = vmatprep.subr.mxu0 0.0
      %1972 = vmatpush1.msra.mxu0 0.0
      %1973 = vmatprep.subr.mxu0 0.0
      %1974 = vmatpush1.msra.mxu0 0.0
      %1975 = vmatprep.subr.mxu0 0.0
      %1976 = vmatpush1.msra.mxu0 0.0
      %1977 = vmatprep.subr.mxu0 0.0
      %1978 = vmatpush1.msra.mxu0 0.0
      %1979 = vmatprep.subr.mxu0 0.0
      %1980 = vmatpush1.msra.mxu0 0.0
      %1981 = vmatprep.subr.mxu0 0.0
      %1982 = vmatpush1.msra.mxu0 0.0
      %1983 = vmatprep.subr.mxu0 0.0
      %1984 = vmatpush1.msra.mxu0 0.0
      %1985 = vmatprep.subr.mxu0 0.0
      %1986 = vmatpush1.msra.mxu0 0.0
      %1987 = vmatprep.subr.mxu0 0.0
      %1988 = vmatpush1.msra.mxu0 0.0
      %1989 = vmatprep.subr.mxu0 0.0
      %1990 = vmatpush1.msra.mxu0 0.0
      %1991 = vmatprep.subr.mxu0 0.0
      %1992 = vmatpush1.msra.mxu0 0.0
      %1993 = vmatprep.subr.mxu0 0.0
      %1994 = vmatpush1.msra.mxu0 0.0
      %1995 = vmatprep.subr.mxu0 0.0
      %1996 = vmatpush1.msra.mxu0 0.0
      %1997 = vmatprep.subr.mxu0 0.0
      %1998 = vmatpush1.msra.mxu0 0.0
      %1999 = vmatprep.subr.mxu0 0.0
      %2000 = vmatpush1.msra.mxu0 0.0
      %2001 = vmatprep.subr.mxu0 0.0
      %2002 = vmatpush1.msra.mxu0 0.0
      %2003 = vmatprep.subr.mxu0 0.0
      %2004 = vmatpush1.msra.mxu0 0.0
      %2005 = vmatprep.mubr.f32.mxu0 0.0
      %v2006 = vand.u32 %v1593, 4294901760
      %v2007 = vsub.f32 %v1593, %v2006
      %2008 = vmatmul.mubr.f32.gmra.mrb[0].mxu0 %v2007
      %v2009 = vpop.f32.mrb[0].mxu0
      %v2010 = vadd.f32 %v1878, %v2009
      %v2011 = vpop.f32.mrb[0].mxu0
      %2012 = vmatprep.mubr.f32.mxu0 0.0
      %v2013 = vand.u32 %v1596, 4294901760
      %v2014 = vsub.f32 %v1596, %v2013
      %2015 = vmatmul.mubr.f32.gmra.mrb[0].mxu0 %v2014
      %v2016 = vpop.f32.mrb[0].mxu0
      %v2017 = vadd.f32 %v1884, %v2016
      %v2018 = vpop.f32.mrb[0].mxu0
      %2019 = vmatprep.mubr.f32.mxu0 0.0
      %v2020 = vand.u32 %v1599, 4294901760
      %v2021 = vsub.f32 %v1599, %v2020
      %2022 = vmatmul.mubr.f32.gmra.mrb[0].mxu0 %v2021
      %v2023 = vpop.f32.mrb[0].mxu0
      %v2024 = vadd.f32 %v1890, %v2023
      %v2025 = vpop.f32.mrb[0].mxu0
      %2026 = vmatprep.mubr.f32.mxu0 0.0
      %v2027 = vand.u32 %v1602, 4294901760
      %v2028 = vsub.f32 %v1602, %v2027
      %2029 = vmatmul.mubr.f32.gmra.mrb[0].mxu0 %v2028
      %v2030 = vpop.f32.mrb[0].mxu0
      %v2031 = vadd.f32 %v1896, %v2030
      %v2032 = vpop.f32.mrb[0].mxu0
      %2033 = vmatprep.mubr.f32.mxu0 0.0
      %v2034 = vand.u32 %v1605, 4294901760
      %v2035 = vsub.f32 %v1605, %v2034
      %2036 = vmatmul.mubr.f32.gmra.mrb[0].mxu0 %v2035
      %v2037 = vpop.f32.mrb[0].mxu0
      %v2038 = vadd.f32 %v1902, %v2037
      %v2039 = vpop.f32.mrb[0].mxu0
      %2040 = vmatprep.mubr.f32.mxu0 0.0
      %v2041 = vand.u32 %v1608, 4294901760
      %v2042 = vsub.f32 %v1608, %v2041
      %2043 = vmatmul.mubr.f32.gmra.mrb[0].mxu0 %v2042
      %v2044 = vpop.f32.mrb[0].mxu0
      %v2045 = vadd.f32 %v1908, %v2044
      %v2046 = vpop.f32.mrb[0].mxu0
      %2047 = vmatprep.mubr.f32.mxu0 0.0
      %v2048 = vand.u32 %v1611, 4294901760
      %v2049 = vsub.f32 %v1611, %v2048
      %2050 = vmatmul.mubr.f32.gmra.mrb[0].mxu0 %v2049
      %v2051 = vpop.f32.mrb[0].mxu0
      %v2052 = vadd.f32 %v1914, %v2051
      %v2053 = vpop.f32.mrb[0].mxu0
      %2054 = vmatprep.mubr.f32.mxu0 0.0
      %v2055 = vand.u32 %v1614, 4294901760
      %v2056 = vsub.f32 %v1614, %v2055
      %2057 = vmatmul.mubr.f32.gmra.mrb[0].mxu0 %v2056
      %v2058 = vpop.f32.mrb[0].mxu0
      %v2059 = vadd.f32 %v1920, %v2058
      %v2060 = vpop.f32.mrb[0].mxu0
      %2061 = vmatprep.mubr.f32.mxu0 0.0
      %v2062 = vand.u32 %v1617, 4294901760
      %v2063 = vsub.f32 %v1617, %v2062
      %2064 = vmatmul.mubr.f32.gmra.mrb[0].mxu0 %v2063
      %v2065 = vpop.f32.mrb[0].mxu0
      %v2066 = vadd.f32 %v1926, %v2065
      %v2067 = vpop.f32.mrb[0].mxu0
      %2068 = vdwg.mxu0
      %2069 = vmatprep.subr.mxu0 0.0
      %v2070 = vand.u32 %v1578, 4294901760
      %2071 = vmatpush1.msra.mxu0 %v2070
      %2072 = vmatprep.subr.mxu0 0.0
      %v2073 = vand.u32 %v1579, 4294901760
      %2074 = vmatpush1.msra.mxu0 %v2073
      %2075 = vmatprep.subr.mxu0 0.0
      %v2076 = vand.u32 %v1580, 4294901760
      %2077 = vmatpush1.msra.mxu0 %v2076
      %2078 = vmatprep.subr.mxu0 0.0
      %v2079 = vand.u32 %v1581, 4294901760
      %2080 = vmatpush1.msra.mxu0 %v2079
      %2081 = vmatprep.subr.mxu0 0.0
      %v2082 = vand.u32 %v1582, 4294901760
      %2083 = vmatpush1.msra.mxu0 %v2082
      %2084 = vmatprep.subr.mxu0 0.0
      %v2085 = vand.u32 %v1583, 4294901760
      %2086 = vmatpush1.msra.mxu0 %v2085
      %2087 = vmatprep.subr.mxu0 0.0
      %2088 = vmatpush1.msra.mxu0 0.0
      %2089 = vmatprep.subr.mxu0 0.0
      %2090 = vmatpush1.msra.mxu0 0.0
      %2091 = vmatprep.subr.mxu0 0.0
      %2092 = vmatpush1.msra.mxu0 0.0
      %2093 = vmatprep.subr.mxu0 0.0
      %2094 = vmatpush1.msra.mxu0 0.0
      %2095 = vmatprep.subr.mxu0 0.0
      %2096 = vmatpush1.msra.mxu0 0.0
      %2097 = vmatprep.subr.mxu0 0.0
      %2098 = vmatpush1.msra.mxu0 0.0
      %2099 = vmatprep.subr.mxu0 0.0
      %2100 = vmatpush1.msra.mxu0 0.0
      %2101 = vmatprep.subr.mxu0 0.0
      %2102 = vmatpush1.msra.mxu0 0.0
      %2103 = vmatprep.subr.mxu0 0.0
      %2104 = vmatpush1.msra.mxu0 0.0
      %2105 = vmatprep.subr.mxu0 0.0
      %2106 = vmatpush1.msra.mxu0 0.0
      %2107 = vmatprep.subr.mxu0 0.0
      %2108 = vmatpush1.msra.mxu0 0.0
      %2109 = vmatprep.subr.mxu0 0.0
      %2110 = vmatpush1.msra.mxu0 0.0
      %2111 = vmatprep.subr.mxu0 0.0
      %2112 = vmatpush1.msra.mxu0 0.0
      %2113 = vmatprep.subr.mxu0 0.0
      %2114 = vmatpush1.msra.mxu0 0.0
      %2115 = vmatprep.subr.mxu0 0.0
      %2116 = vmatpush1.msra.mxu0 0.0
      %2117 = vmatprep.subr.mxu0 0.0
      %2118 = vmatpush1.msra.mxu0 0.0
      %2119 = vmatprep.subr.mxu0 0.0
      %2120 = vmatpush1.msra.mxu0 0.0
      %2121 = vmatprep.subr.mxu0 0.0
      %2122 = vmatpush1.msra.mxu0 0.0
      %2123 = vmatprep.subr.mxu0 0.0
      %2124 = vmatpush1.msra.mxu0 0.0
      %2125 = vmatprep.subr.mxu0 0.0
      %2126 = vmatpush1.msra.mxu0 0.0
      %2127 = vmatprep.subr.mxu0 0.0
      %2128 = vmatpush1.msra.mxu0 0.0
      %2129 = vmatprep.subr.mxu0 0.0
      %2130 = vmatpush1.msra.mxu0 0.0
      %2131 = vmatprep.subr.mxu0 0.0
      %2132 = vmatpush1.msra.mxu0 0.0
      %2133 = vmatprep.subr.mxu0 0.0
      %2134 = vmatpush1.msra.mxu0 0.0
      %2135 = vmatprep.subr.mxu0 0.0
      %2136 = vmatpush1.msra.mxu0 0.0
      %2137 = vmatprep.subr.mxu0 0.0
      %2138 = vmatpush1.msra.mxu0 0.0
      %2139 = vmatprep.mubr.f32.mxu0 0.0
      %v2140 = vand.u32 %v1593, 4294901760
      %v2141 = vsub.f32 %v1593, %v2140
      %v2142 = vand.u32 %v2141, 4294901760
      %2143 = vmatmul.mubr.f32.gmra.mrb[0].mxu0 %v2142
      %v2144 = vpop.f32.mrb[0].mxu0
      %v2145 = vadd.f32 %v2010, %v2144
      %v2146 = vpop.f32.mrb[0].mxu0
      %2147 = vmatprep.mubr.f32.mxu0 0.0
      %v2148 = vand.u32 %v1596, 4294901760
      %v2149 = vsub.f32 %v1596, %v2148
      %v2150 = vand.u32 %v2149, 4294901760
      %2151 = vmatmul.mubr.f32.gmra.mrb[0].mxu0 %v2150
      %v2152 = vpop.f32.mrb[0].mxu0
      %v2153 = vadd.f32 %v2017, %v2152
      %v2154 = vpop.f32.mrb[0].mxu0
      %2155 = vmatprep.mubr.f32.mxu0 0.0
      %v2156 = vand.u32 %v1599, 4294901760
      %v2157 = vsub.f32 %v1599, %v2156
      %v2158 = vand.u32 %v2157, 4294901760
      %2159 = vmatmul.mubr.f32.gmra.mrb[0].mxu0 %v2158
      %v2160 = vpop.f32.mrb[0].mxu0
      %v2161 = vadd.f32 %v2024, %v2160
      %v2162 = vpop.f32.mrb[0].mxu0
      %2163 = vmatprep.mubr.f32.mxu0 0.0
      %v2164 = vand.u32 %v1602, 4294901760
      %v2165 = vsub.f32 %v1602, %v2164
      %v2166 = vand.u32 %v2165, 4294901760
      %2167 = vmatmul.mubr.f32.gmra.mrb[0].mxu0 %v2166
      %v2168 = vpop.f32.mrb[0].mxu0
      %v2169 = vadd.f32 %v2031, %v2168
      %v2170 = vpop.f32.mrb[0].mxu0
      %2171 = vmatprep.mubr.f32.mxu0 0.0
      %v2172 = vand.u32 %v1605, 4294901760
      %v2173 = vsub.f32 %v1605, %v2172
      %v2174 = vand.u32 %v2173, 4294901760
      %2175 = vmatmul.mubr.f32.gmra.mrb[0].mxu0 %v2174
      %v2176 = vpop.f32.mrb[0].mxu0
      %v2177 = vadd.f32 %v2038, %v2176
      %v2178 = vpop.f32.mrb[0].mxu0
      %2179 = vmatprep.mubr.f32.mxu0 0.0
      %v2180 = vand.u32 %v1608, 4294901760
      %v2181 = vsub.f32 %v1608, %v2180
      %v2182 = vand.u32 %v2181, 4294901760
      %2183 = vmatmul.mubr.f32.gmra.mrb[0].mxu0 %v2182
      %v2184 = vpop.f32.mrb[0].mxu0
      %v2185 = vadd.f32 %v2045, %v2184
      %v2186 = vpop.f32.mrb[0].mxu0
      %2187 = vmatprep.mubr.f32.mxu0 0.0
      %v2188 = vand.u32 %v1611, 4294901760
      %v2189 = vsub.f32 %v1611, %v2188
      %v2190 = vand.u32 %v2189, 4294901760
      %2191 = vmatmul.mubr.f32.gmra.mrb[0].mxu0 %v2190
      %v2192 = vpop.f32.mrb[0].mxu0
      %v2193 = vadd.f32 %v2052, %v2192
      %v2194 = vpop.f32.mrb[0].mxu0
      %2195 = vmatprep.mubr.f32.mxu0 0.0
      %v2196 = vand.u32 %v1614, 4294901760
      %v2197 = vsub.f32 %v1614, %v2196
      %v2198 = vand.u32 %v2197, 4294901760
      %2199 = vmatmul.mubr.f32.gmra.mrb[0].mxu0 %v2198
      %v2200 = vpop.f32.mrb[0].mxu0
      %v2201 = vadd.f32 %v2059, %v2200
      %v2202 = vpop.f32.mrb[0].mxu0
      %2203 = vmatprep.mubr.f32.mxu0 0.0
      %v2204 = vand.u32 %v1617, 4294901760
      %v2205 = vsub.f32 %v1617, %v2204
      %v2206 = vand.u32 %v2205, 4294901760
      %2207 = vmatmul.mubr.f32.gmra.mrb[0].mxu0 %v2206
      %v2208 = vpop.f32.mrb[0].mxu0
      %v2209 = vadd.f32 %v2066, %v2208
      %v2210 = vpop.f32.mrb[0].mxu0
      %2211 = vdwg.mxu0
      %2212 = vmatprep.subr.mxu0 0.0
      %v2213 = vand.u32 %v1578, 4294901760
      %v2214 = vsub.f32 %v1578, %v2213
      %v2215 = vand.u32 %v2214, 4294901760
      %2216 = vmatpush1.msra.mxu0 %v2215
      %2217 = vmatprep.subr.mxu0 0.0
      %v2218 = vand.u32 %v1579, 4294901760
      %v2219 = vsub.f32 %v1579, %v2218
      %v2220 = vand.u32 %v2219, 4294901760
      %2221 = vmatpush1.msra.mxu0 %v2220
      %2222 = vmatprep.subr.mxu0 0.0
      %v2223 = vand.u32 %v1580, 4294901760
      %v2224 = vsub.f32 %v1580, %v2223
      %v2225 = vand.u32 %v2224, 4294901760
      %2226 = vmatpush1.msra.mxu0 %v2225
      %2227 = vmatprep.subr.mxu0 0.0
      %v2228 = vand.u32 %v1581, 4294901760
      %v2229 = vsub.f32 %v1581, %v2228
      %v2230 = vand.u32 %v2229, 4294901760
      %2231 = vmatpush1.msra.mxu0 %v2230
      %2232 = vmatprep.subr.mxu0 0.0
      %v2233 = vand.u32 %v1582, 4294901760
      %v2234 = vsub.f32 %v1582, %v2233
      %v2235 = vand.u32 %v2234, 4294901760
      %2236 = vmatpush1.msra.mxu0 %v2235
      %2237 = vmatprep.subr.mxu0 0.0
      %v2238 = vand.u32 %v1583, 4294901760
      %v2239 = vsub.f32 %v1583, %v2238
      %v2240 = vand.u32 %v2239, 4294901760
      %2241 = vmatpush1.msra.mxu0 %v2240
      %2242 = vmatprep.subr.mxu0 0.0
      %2243 = vmatpush1.msra.mxu0 0.0
      %2244 = vmatprep.subr.mxu0 0.0
      %2245 = vmatpush1.msra.mxu0 0.0
      %2246 = vmatprep.subr.mxu0 0.0
      %2247 = vmatpush1.msra.mxu0 0.0
      %2248 = vmatprep.subr.mxu0 0.0
      %2249 = vmatpush1.msra.mxu0 0.0
      %2250 = vmatprep.subr.mxu0 0.0
      %2251 = vmatpush1.msra.mxu0 0.0
      %2252 = vmatprep.subr.mxu0 0.0
      %2253 = vmatpush1.msra.mxu0 0.0
      %2254 = vmatprep.subr.mxu0 0.0
      %2255 = vmatpush1.msra.mxu0 0.0
      %2256 = vmatprep.subr.mxu0 0.0
      %2257 = vmatpush1.msra.mxu0 0.0
      %2258 = vmatprep.subr.mxu0 0.0
      %2259 = vmatpush1.msra.mxu0 0.0
      %2260 = vmatprep.subr.mxu0 0.0
      %2261 = vmatpush1.msra.mxu0 0.0
      %2262 = vmatprep.subr.mxu0 0.0
      %2263 = vmatpush1.msra.mxu0 0.0
      %2264 = vmatprep.subr.mxu0 0.0
      %2265 = vmatpush1.msra.mxu0 0.0
      %2266 = vmatprep.subr.mxu0 0.0
      %2267 = vmatpush1.msra.mxu0 0.0
      %2268 = vmatprep.subr.mxu0 0.0
      %2269 = vmatpush1.msra.mxu0 0.0
      %2270 = vmatprep.subr.mxu0 0.0
      %2271 = vmatpush1.msra.mxu0 0.0
      %2272 = vmatprep.subr.mxu0 0.0
      %2273 = vmatpush1.msra.mxu0 0.0
      %2274 = vmatprep.subr.mxu0 0.0
      %2275 = vmatpush1.msra.mxu0 0.0
      %2276 = vmatprep.subr.mxu0 0.0
      %2277 = vmatpush1.msra.mxu0 0.0
      %2278 = vmatprep.subr.mxu0 0.0
      %2279 = vmatpush1.msra.mxu0 0.0
      %2280 = vmatprep.subr.mxu0 0.0
      %2281 = vmatpush1.msra.mxu0 0.0
      %2282 = vmatprep.subr.mxu0 0.0
      %2283 = vmatpush1.msra.mxu0 0.0
      %2284 = vmatprep.subr.mxu0 0.0
      %2285 = vmatpush1.msra.mxu0 0.0
      %2286 = vmatprep.subr.mxu0 0.0
      %2287 = vmatpush1.msra.mxu0 0.0
      %2288 = vmatprep.subr.mxu0 0.0
      %2289 = vmatpush1.msra.mxu0 0.0
      %2290 = vmatprep.subr.mxu0 0.0
      %2291 = vmatpush1.msra.mxu0 0.0
      %2292 = vmatprep.subr.mxu0 0.0
      %2293 = vmatpush1.msra.mxu0 0.0
      %2294 = vmatprep.mubr.f32.mxu0 0.0
      %v2295 = vand.u32 %v1593, 4294901760
      %2296 = vmatmul.mubr.f32.gmra.mrb[0].mxu0 %v2295
      %v2297 = vpop.f32.mrb[0].mxu0
      %v2298 = vadd.f32 %v2145, %v2297
      %v2299 = vpop.f32.mrb[0].mxu0
      %2300 = vmatprep.mubr.f32.mxu0 0.0
      %v2301 = vand.u32 %v1596, 4294901760
      %2302 = vmatmul.mubr.f32.gmra.mrb[0].mxu0 %v2301
      %v2303 = vpop.f32.mrb[0].mxu0
      %v2304 = vadd.f32 %v2153, %v2303
      %v2305 = vpop.f32.mrb[0].mxu0
      %2306 = vmatprep.mubr.f32.mxu0 0.0
      %v2307 = vand.u32 %v1599, 4294901760
      %2308 = vmatmul.mubr.f32.gmra.mrb[0].mxu0 %v2307
      %v2309 = vpop.f32.mrb[0].mxu0
      %v2310 = vadd.f32 %v2161, %v2309
      %v2311 = vpop.f32.mrb[0].mxu0
      %2312 = vmatprep.mubr.f32.mxu0 0.0
      %v2313 = vand.u32 %v1602, 4294901760
      %2314 = vmatmul.mubr.f32.gmra.mrb[0].mxu0 %v2313
      %v2315 = vpop.f32.mrb[0].mxu0
      %v2316 = vadd.f32 %v2169, %v2315
      %v2317 = vpop.f32.mrb[0].mxu0
      %2318 = vmatprep.mubr.f32.mxu0 0.0
      %v2319 = vand.u32 %v1605, 4294901760
      %2320 = vmatmul.mubr.f32.gmra.mrb[0].mxu0 %v2319
      %v2321 = vpop.f32.mrb[0].mxu0
      %v2322 = vadd.f32 %v2177, %v2321
      %v2323 = vpop.f32.mrb[0].mxu0
      %2324 = vmatprep.mubr.f32.mxu0 0.0
      %v2325 = vand.u32 %v1608, 4294901760
      %2326 = vmatmul.mubr.f32.gmra.mrb[0].mxu0 %v2325
      %v2327 = vpop.f32.mrb[0].mxu0
      %v2328 = vadd.f32 %v2185, %v2327
      %v2329 = vpop.f32.mrb[0].mxu0
      %2330 = vmatprep.mubr.f32.mxu0 0.0
      %v2331 = vand.u32 %v1611, 4294901760
      %2332 = vmatmul.mubr.f32.gmra.mrb[0].mxu0 %v2331
      %v2333 = vpop.f32.mrb[0].mxu0
      %v2334 = vadd.f32 %v2193, %v2333
      %v2335 = vpop.f32.mrb[0].mxu0
      %2336 = vmatprep.mubr.f32.mxu0 0.0
      %v2337 = vand.u32 %v1614, 4294901760
      %2338 = vmatmul.mubr.f32.gmra.mrb[0].mxu0 %v2337
      %v2339 = vpop.f32.mrb[0].mxu0
      %v2340 = vadd.f32 %v2201, %v2339
      %v2341 = vpop.f32.mrb[0].mxu0
      %2342 = vmatprep.mubr.f32.mxu0 0.0
      %v2343 = vand.u32 %v1617, 4294901760
      %2344 = vmatmul.mubr.f32.gmra.mrb[0].mxu0 %v2343
      %v2345 = vpop.f32.mrb[0].mxu0
      %v2346 = vadd.f32 %v2209, %v2345
      %v2347 = vpop.f32.mrb[0].mxu0
      %2348 = vdwg.mxu0
      %2349 = vmatprep.subr.mxu0 0.0
      %v2350 = vand.u32 %v1578, 4294901760
      %2351 = vmatpush1.msra.mxu0 %v2350
      %2352 = vmatprep.subr.mxu0 0.0
      %v2353 = vand.u32 %v1579, 4294901760
      %2354 = vmatpush1.msra.mxu0 %v2353
      %2355 = vmatprep.subr.mxu0 0.0
      %v2356 = vand.u32 %v1580, 4294901760
      %2357 = vmatpush1.msra.mxu0 %v2356
      %2358 = vmatprep.subr.mxu0 0.0
      %v2359 = vand.u32 %v1581, 4294901760
      %2360 = vmatpush1.msra.mxu0 %v2359
      %2361 = vmatprep.subr.mxu0 0.0
      %v2362 = vand.u32 %v1582, 4294901760
      %2363 = vmatpush1.msra.mxu0 %v2362
      %2364 = vmatprep.subr.mxu0 0.0
      %v2365 = vand.u32 %v1583, 4294901760
      %2366 = vmatpush1.msra.mxu0 %v2365
      %2367 = vmatprep.subr.mxu0 0.0
      %2368 = vmatpush1.msra.mxu0 0.0
      %2369 = vmatprep.subr.mxu0 0.0
      %2370 = vmatpush1.msra.mxu0 0.0
      %2371 = vmatprep.subr.mxu0 0.0
      %2372 = vmatpush1.msra.mxu0 0.0
      %2373 = vmatprep.subr.mxu0 0.0
      %2374 = vmatpush1.msra.mxu0 0.0
      %2375 = vmatprep.subr.mxu0 0.0
      %2376 = vmatpush1.msra.mxu0 0.0
      %2377 = vmatprep.subr.mxu0 0.0
      %2378 = vmatpush1.msra.mxu0 0.0
      %2379 = vmatprep.subr.mxu0 0.0
      %2380 = vmatpush1.msra.mxu0 0.0
      %2381 = vmatprep.subr.mxu0 0.0
      %2382 = vmatpush1.msra.mxu0 0.0
      %2383 = vmatprep.subr.mxu0 0.0
      %2384 = vmatpush1.msra.mxu0 0.0
      %2385 = vmatprep.subr.mxu0 0.0
      %2386 = vmatpush1.msra.mxu0 0.0
      %2387 = vmatprep.subr.mxu0 0.0
      %2388 = vmatpush1.msra.mxu0 0.0
      %2389 = vmatprep.subr.mxu0 0.0
      %2390 = vmatpush1.msra.mxu0 0.0
      %2391 = vmatprep.subr.mxu0 0.0
      %2392 = vmatpush1.msra.mxu0 0.0
      %2393 = vmatprep.subr.mxu0 0.0
      %2394 = vmatpush1.msra.mxu0 0.0
      %2395 = vmatprep.subr.mxu0 0.0
      %2396 = vmatpush1.msra.mxu0 0.0
      %2397 = vmatprep.subr.mxu0 0.0
      %2398 = vmatpush1.msra.mxu0 0.0
      %2399 = vmatprep.subr.mxu0 0.0
      %2400 = vmatpush1.msra.mxu0 0.0
      %2401 = vmatprep.subr.mxu0 0.0
      %2402 = vmatpush1.msra.mxu0 0.0
      %2403 = vmatprep.subr.mxu0 0.0
      %2404 = vmatpush1.msra.mxu0 0.0
      %2405 = vmatprep.subr.mxu0 0.0
      %2406 = vmatpush1.msra.mxu0 0.0
      %2407 = vmatprep.subr.mxu0 0.0
      %2408 = vmatpush1.msra.mxu0 0.0
      %2409 = vmatprep.subr.mxu0 0.0
      %2410 = vmatpush1.msra.mxu0 0.0
      %2411 = vmatprep.subr.mxu0 0.0
      %2412 = vmatpush1.msra.mxu0 0.0
      %2413 = vmatprep.subr.mxu0 0.0
      %2414 = vmatpush1.msra.mxu0 0.0
      %2415 = vmatprep.subr.mxu0 0.0
      %2416 = vmatpush1.msra.mxu0 0.0
      %2417 = vmatprep.subr.mxu0 0.0
      %2418 = vmatpush1.msra.mxu0 0.0
      %2419 = vmatprep.mubr.f32.mxu0 0.0
      %v2420 = vand.u32 %v1593, 4294901760
      %2421 = vmatmul.mubr.f32.gmra.mrb[0].mxu0 %v2420
      %v2422 = vpop.f32.mrb[0].mxu0
      %v2423 = vadd.f32 %v2298, %v2422
      %v2424 = vpop.f32.mrb[0].mxu0
      %2425 = vmatprep.mubr.f32.mxu0 0.0
      %v2426 = vand.u32 %v1596, 4294901760
      %2427 = vmatmul.mubr.f32.gmra.mrb[0].mxu0 %v2426
      %v2428 = vpop.f32.mrb[0].mxu0
      %v2429 = vadd.f32 %v2304, %v2428
      %v2430 = vpop.f32.mrb[0].mxu0
      %2431 = vmatprep.mubr.f32.mxu0 0.0
      %v2432 = vand.u32 %v1599, 4294901760
      %2433 = vmatmul.mubr.f32.gmra.mrb[0].mxu0 %v2432
      %v2434 = vpop.f32.mrb[0].mxu0
      %v2435 = vadd.f32 %v2310, %v2434
      %v2436 = vpop.f32.mrb[0].mxu0
      %2437 = vmatprep.mubr.f32.mxu0 0.0
      %v2438 = vand.u32 %v1602, 4294901760
      %2439 = vmatmul.mubr.f32.gmra.mrb[0].mxu0 %v2438
      %v2440 = vpop.f32.mrb[0].mxu0
      %v2441 = vadd.f32 %v2316, %v2440
      %v2442 = vpop.f32.mrb[0].mxu0
      %2443 = vmatprep.mubr.f32.mxu0 0.0
      %v2444 = vand.u32 %v1605, 4294901760
      %2445 = vmatmul.mubr.f32.gmra.mrb[0].mxu0 %v2444
      %v2446 = vpop.f32.mrb[0].mxu0
      %v2447 = vadd.f32 %v2322, %v2446
      %v2448 = vpop.f32.mrb[0].mxu0
      %2449 = vmatprep.mubr.f32.mxu0 0.0
      %v2450 = vand.u32 %v1608, 4294901760
      %2451 = vmatmul.mubr.f32.gmra.mrb[0].mxu0 %v2450
      %v2452 = vpop.f32.mrb[0].mxu0
      %v2453 = vadd.f32 %v2328, %v2452
      %v2454 = vpop.f32.mrb[0].mxu0
      %2455 = vmatprep.mubr.f32.mxu0 0.0
      %v2456 = vand.u32 %v1611, 4294901760
      %2457 = vmatmul.mubr.f32.gmra.mrb[0].mxu0 %v2456
      %v2458 = vpop.f32.mrb[0].mxu0
      %v2459 = vadd.f32 %v2334, %v2458
      %v2460 = vpop.f32.mrb[0].mxu0
      %2461 = vmatprep.mubr.f32.mxu0 0.0
      %v2462 = vand.u32 %v1614, 4294901760
      %2463 = vmatmul.mubr.f32.gmra.mrb[0].mxu0 %v2462
      %v2464 = vpop.f32.mrb[0].mxu0
      %v2465 = vadd.f32 %v2340, %v2464
      %v2466 = vpop.f32.mrb[0].mxu0
      %2467 = vmatprep.mubr.f32.mxu0 0.0
      %v2468 = vand.u32 %v1617, 4294901760
      %2469 = vmatmul.mubr.f32.gmra.mrb[0].mxu0 %v2468
      %v2470 = vpop.f32.mrb[0].mxu0
      %v2471 = vadd.f32 %v2346, %v2470
      %v2472 = vpop.f32.mrb[0].mxu0
      %2473 = vdwg.mxu0
      %v2474 = vmax.f32 %v2423, 0.0
      %v2475 = vmax.f32 %v2429, 0.0
      %v2476 = vmax.f32 %v2435, 0.0
      %v2477 = vmax.f32 %v2441, 0.0
      %v2478 = vmax.f32 %v2447, 0.0
      %v2479 = vmax.f32 %v2453, 0.0
      %v2480 = vmax.f32 %v2459, 0.0
      %v2481 = vmax.f32 %v2465, 0.0
      %v2482 = vmax.f32 %v2471, 0.0
      %v2483 = vrot.slane %v2474, 2
      %v2484 = vrot.slane %v2475, 2
      %v2485 = vrot.slane %v2476, 2
      %v2486 = vrot.slane %v2477, 2
      %v2487 = vrot.slane %v2478, 2
      %v2488 = vrot.slane %v2479, 2
      %v2489 = vrot.slane %v2480, 2
      %v2490 = vrot.slane %v2481, 2
      %v2491 = vrot.slane %v2482, 2
      %v2492 = vsel %vm1367, %v2490, %v2491
      %v2493 = vsel %vm1367, %v2489, %v2490
      %v2494 = vsel %vm1367, %v2488, %v2489
      %v2495 = vsel %vm1367, %v2487, %v2488
      %v2496 = vsel %vm1367, %v2486, %v2487
      %v2497 = vsel %vm1367, %v2485, %v2486
      %v2498 = vsel %vm1367, %v2484, %v2485
      %v2499 = vsel %vm1367, %v2483, %v2484
      %v2500 = vsel %vm1367, %v2491, %v2483
      %v2501 = vmax.f32 %v2474, %v2499
      %v2502 = vmax.f32 %v2475, %v2498
      %v2503 = vmax.f32 %v2476, %v2497
      %v2504 = vmax.f32 %v2477, %v2496
      %v2505 = vmax.f32 %v2478, %v2495
      %v2506 = vmax.f32 %v2479, %v2494
      %v2507 = vmax.f32 %v2480, %v2493
      %v2508 = vmax.f32 %v2481, %v2492
      %v2509 = vmax.f32 %v2482, %v2500
      %v2510 = vrot.slane %v2474, 4
      %v2511 = vrot.slane %v2475, 4
      %v2512 = vrot.slane %v2476, 4
      %v2513 = vrot.slane %v2477, 4
      %v2514 = vrot.slane %v2478, 4
      %v2515 = vrot.slane %v2479, 4
      %v2516 = vrot.slane %v2480, 4
      %v2517 = vrot.slane %v2481, 4
      %v2518 = vrot.slane %v2482, 4
      %vm2519 = vcmp.lt.s32.totalorder %v1338, 4
      %v2520 = vsel %vm2519, %v2517, %v2518
      %v2521 = vsel %vm2519, %v2516, %v2517
      %v2522 = vsel %vm2519, %v2515, %v2516
      %v2523 = vsel %vm2519, %v2514, %v2515
      %v2524 = vsel %vm2519, %v2513, %v2514
      %v2525 = vsel %vm2519, %v2512, %v2513
      %v2526 = vsel %vm2519, %v2511, %v2512
      %v2527 = vsel %vm2519, %v2510, %v2511
      %v2528 = vsel %vm2519, %v2518, %v2510
      %v2529 = vmax.f32 %v2501, %v2527
      %v2530 = vmax.f32 %v2502, %v2526
      %v2531 = vmax.f32 %v2503, %v2525
      %v2532 = vmax.f32 %v2504, %v2524
      %v2533 = vmax.f32 %v2505, %v2523
      %v2534 = vmax.f32 %v2506, %v2522
      %v2535 = vmax.f32 %v2507, %v2521
      %v2536 = vmax.f32 %v2508, %v2520
      %v2537 = vmax.f32 %v2509, %v2528
      %v2538 = vld [vmem:[%s2] sm:$0xff]
      %v2539 = vld [vmem:[%s2 + $0x8] sm:$0xff]
      %v2540 = vld [vmem:[%s2 + $0x10] sm:$0xff]
      %v2541 = vld [vmem:[%s2 + $0x18] sm:$0xff]
      %v2542 = vld [vmem:[%s2 + $0x20] sm:$0xff]
      %v2543 = vld [vmem:[%s2 + $0x28] sm:$0xff]
      %v2544 = vld [vmem:[%s2 + $0x30] sm:$0xff]
      %v2545 = vld [vmem:[%s2 + $0x38] sm:$0xff]
      %v2546 = vld [vmem:[%s2 + $0x40] sm:$0xff]
      %2548 = vset.pattern.permute.xlu0 0
      %2549 = vperm.xlu0 %2548, %v2538
      %v2550 = vpop.permute.xlu0 %2549
      %2553 = vset.pattern.permute.xlu0 0
      %2554 = vperm.xlu0 %2553, %v2539
      %v2555 = vpop.permute.xlu0 %2554
      %2558 = vset.pattern.permute.xlu0 0
      %2559 = vperm.xlu0 %2558, %v2540
      %v2560 = vpop.permute.xlu0 %2559
      %2563 = vset.pattern.permute.xlu0 0
      %2564 = vperm.xlu0 %2563, %v2541
      %v2565 = vpop.permute.xlu0 %2564
      %2568 = vset.pattern.permute.xlu0 0
      %2569 = vperm.xlu0 %2568, %v2542
      %v2570 = vpop.permute.xlu0 %2569
      %2573 = vset.pattern.permute.xlu0 0
      %2574 = vperm.xlu0 %2573, %v2543
      %v2575 = vpop.permute.xlu0 %2574
      %2578 = vset.pattern.permute.xlu0 0
      %2579 = vperm.xlu0 %2578, %v2544
      %v2580 = vpop.permute.xlu0 %2579
      %2583 = vset.pattern.permute.xlu0 0
      %2584 = vperm.xlu0 %2583, %v2545
      %v2585 = vpop.permute.xlu0 %2584
      %2588 = vset.pattern.permute.xlu0 0
      %2589 = vperm.xlu0 %2588, %v2546
      %v2590 = vpop.permute.xlu0 %2589
      %v2592 = vmul.f32 %v2529, %v2550
      %v2593 = vmul.f32 %v2530, %v2555
      %v2594 = vmul.f32 %v2531, %v2560
      %v2595 = vmul.f32 %v2532, %v2565
      %v2596 = vmul.f32 %v2533, %v2570
      %v2597 = vmul.f32 %v2534, %v2575
      %v2598 = vmul.f32 %v2535, %v2580
      %v2599 = vmul.f32 %v2536, %v2585
      %v2600 = vmul.f32 %v2537, %v2590
      %v2601 = vrot.slane %v2592, 4
      %v2602 = vrot.slane %v2593, 4
      %v2603 = vrot.slane %v2594, 4
      %v2604 = vrot.slane %v2595, 4
      %v2605 = vrot.slane %v2596, 4
      %v2606 = vrot.slane %v2597, 4
      %v2607 = vrot.slane %v2598, 4
      %v2608 = vrot.slane %v2599, 4
      %v2609 = vrot.slane %v2600, 4
      %v2610 = vsel %vm2519, %v2608, %v2609
      %v2611 = vsel %vm2519, %v2607, %v2608
      %v2612 = vsel %vm2519, %v2606, %v2607
      %v2613 = vsel %vm2519, %v2605, %v2606
      %v2614 = vsel %vm2519, %v2604, %v2605
      %v2615 = vsel %vm2519, %v2603, %v2604
      %v2616 = vsel %vm2519, %v2602, %v2603
      %v2617 = vsel %vm2519, %v2601, %v2602
      %v2618 = vsel %vm2519, %v2609, %v2601
      %2628 = vrot.lane.b32.xlu0 %v2592, 32
      %v2629 = vpop.permute.xlu0 %2628
      %2630 = vrot.lane.b32.xlu0 %v2593, 32
      %v2631 = vpop.permute.xlu0 %2630
      %2632 = vrot.lane.b32.xlu0 %v2594, 32
      %v2633 = vpop.permute.xlu0 %2632
      %2634 = vrot.lane.b32.xlu0 %v2595, 32
      %v2635 = vpop.permute.xlu0 %2634
      %2636 = vrot.lane.b32.xlu0 %v2596, 32
      %v2637 = vpop.permute.xlu0 %2636
      %2638 = vrot.lane.b32.xlu0 %v2597, 32
      %v2639 = vpop.permute.xlu0 %2638
      %2640 = vrot.lane.b32.xlu0 %v2598, 32
      %v2641 = vpop.permute.xlu0 %2640
      %2642 = vrot.lane.b32.xlu0 %v2599, 32
      %v2643 = vpop.permute.xlu0 %2642
      %2644 = vrot.lane.b32.xlu0 %v2600, 32
      %v2645 = vpop.permute.xlu0 %2644
      %2664 = vrot.lane.b32.xlu0 %v2617, 64
      %v2665 = vpop.permute.xlu0 %2664
      %2666 = vrot.lane.b32.xlu0 %v2616, 64
      %v2667 = vpop.permute.xlu0 %2666
      %2668 = vrot.lane.b32.xlu0 %v2615, 64
      %v2669 = vpop.permute.xlu0 %2668
      %2670 = vrot.lane.b32.xlu0 %v2614, 64
      %v2671 = vpop.permute.xlu0 %2670
      %2672 = vrot.lane.b32.xlu0 %v2613, 64
      %v2673 = vpop.permute.xlu0 %2672
      %2674 = vrot.lane.b32.xlu0 %v2612, 64
      %v2675 = vpop.permute.xlu0 %2674
      %2676 = vrot.lane.b32.xlu0 %v2611, 64
      %v2677 = vpop.permute.xlu0 %2676
      %2678 = vrot.lane.b32.xlu0 %v2610, 64
      %v2679 = vpop.permute.xlu0 %2678
      %2680 = vrot.lane.b32.xlu0 %v2618, 64
      %v2681 = vpop.permute.xlu0 %2680
      %v2691 = vsel %vm1568, %v2618, %v2629
      %v2692 = vsel %vm1568, %v2617, %v2631
      %v2693 = vsel %vm1568, %v2616, %v2633
      %v2694 = vsel %vm1568, %v2615, %v2635
      %v2695 = vsel %vm1568, %v2614, %v2637
      %v2696 = vsel %vm1568, %v2613, %v2639
      %v2697 = vsel %vm1568, %v2612, %v2641
      %v2698 = vsel %vm1568, %v2611, %v2643
      %v2699 = vsel %vm1568, %v2610, %v2645
      %vm2700 = vcmask 523264
      %v2701 = vsel %vm2700, %v2691, %v2665
      %v2702 = vsel %vm2700, %v2692, %v2667
      %v2703 = vsel %vm2700, %v2693, %v2669
      %v2704 = vsel %vm2700, %v2694, %v2671
      %v2705 = vsel %vm2700, %v2695, %v2673
      %v2706 = vsel %vm2700, %v2696, %v2675
      %v2707 = vsel %vm2700, %v2697, %v2677
      %v2708 = vsel %vm2700, %v2698, %v2679
      %v2709 = vsel %vm2700, %v2699, %v2681
      %v2710 = vld [vmem:[%s8] sm:$0xff]
      %v2711 = vld [vmem:[%s8 + $0x8] sm:$0xff]
      %v2712 = vld [vmem:[%s8 + $0x10] sm:$0xff]
      %v2713 = vld [vmem:[%s8 + $0x18] sm:$0xff]
      %v2714 = vld [vmem:[%s8 + $0x20] sm:$0xff]
      %v2715 = vld [vmem:[%s8 + $0x28] sm:$0xff]
      %v2716 = vld [vmem:[%s8 + $0x30] sm:$0xff]
      %v2717 = vld [vmem:[%s8 + $0x38] sm:$0xff]
      %v2718 = vld [vmem:[%s8 + $0x40] sm:$0xff]
      %v2719 = vld [vmem:[%s8 + $0x48] sm:$0xff]
      %v2720 = vld [vmem:[%s8 + $0x50] sm:$0xff]
      %v2721 = vld [vmem:[%s8 + $0x58] sm:$0xff]
      %v2722 = vld [vmem:[%s9] sm:$0x1]
      %v2724 = vlaneseq
      %v2725 = vshrl.u32 %v2724, 7
      %v2726 = vsub.s32 0, %v2725
      %v2727 = vrot.slane %v2722, %v2726
      %vm2729 = vcmask 785408
      %v2731 = vsel %vm2729, %v2701, 0
      %v2734 = vsel %vm2729, %v2702, 0
      %v2737 = vsel %vm2729, %v2703, 0
      %v2740 = vsel %vm2729, %v2704, 0
      %v2743 = vsel %vm2729, %v2705, 0
      %v2746 = vsel %vm2729, %v2706, 0
      %v2749 = vsel %vm2729, %v2707, 0
      %v2752 = vsel %vm2729, %v2708, 0
      %v2755 = vsel %vm2729, %v2709, 0
      %2757 = vmatprep.subr.mxu0 0.0
      %v2758 = vand.u32 %v2710, 4294901760
      %2759 = vmatpush1.msra.mxu0 %v2758
      %2760 = vmatprep.subr.mxu0 0.0
      %v2761 = vand.u32 %v2711, 4294901760
      %2762 = vmatpush1.msra.mxu0 %v2761
      %2763 = vmatprep.subr.mxu0 0.0
      %v2764 = vand.u32 %v2712, 4294901760
      %2765 = vmatpush1.msra.mxu0 %v2764
      %2766 = vmatprep.subr.mxu0 0.0
      %v2767 = vand.u32 %v2713, 4294901760
      %2768 = vmatpush1.msra.mxu0 %v2767
      %2769 = vmatprep.subr.mxu0 0.0
      %v2770 = vand.u32 %v2714, 4294901760
      %2771 = vmatpush1.msra.mxu0 %v2770
      %2772 = vmatprep.subr.mxu0 0.0
      %v2773 = vand.u32 %v2715, 4294901760
      %2774 = vmatpush1.msra.mxu0 %v2773
      %2775 = vmatprep.subr.mxu0 0.0
      %v2776 = vand.u32 %v2716, 4294901760
      %2777 = vmatpush1.msra.mxu0 %v2776
      %2778 = vmatprep.subr.mxu0 0.0
      %v2779 = vand.u32 %v2717, 4294901760
      %2780 = vmatpush1.msra.mxu0 %v2779
      %2781 = vmatprep.subr.mxu0 0.0
      %v2782 = vand.u32 %v2718, 4294901760
      %2783 = vmatpush1.msra.mxu0 %v2782
      %2784 = vmatprep.subr.mxu0 0.0
      %v2785 = vand.u32 %v2719, 4294901760
      %2786 = vmatpush1.msra.mxu0 %v2785
      %2787 = vmatprep.subr.mxu0 0.0
      %v2788 = vand.u32 %v2720, 4294901760
      %2789 = vmatpush1.msra.mxu0 %v2788
      %2790 = vmatprep.subr.mxu0 0.0
      %v2791 = vand.u32 %v2721, 4294901760
      %2792 = vmatpush1.msra.mxu0 %v2791
      %2793 = vmatprep.subr.mxu0 0.0
      %2794 = vmatpush1.msra.mxu0 0.0
      %2795 = vmatprep.subr.mxu0 0.0
      %2796 = vmatpush1.msra.mxu0 0.0
      %2797 = vmatprep.subr.mxu0 0.0
      %2798 = vmatpush1.msra.mxu0 0.0
      %2799 = vmatprep.subr.mxu0 0.0
      %2800 = vmatpush1.msra.mxu0 0.0
      %2801 = vmatprep.subr.mxu0 0.0
      %2802 = vmatpush1.msra.mxu0 0.0
      %2803 = vmatprep.subr.mxu0 0.0
      %2804 = vmatpush1.msra.mxu0 0.0
      %2805 = vmatprep.subr.mxu0 0.0
      %2806 = vmatpush1.msra.mxu0 0.0
      %2807 = vmatprep.subr.mxu0 0.0
      %2808 = vmatpush1.msra.mxu0 0.0
      %2809 = vmatprep.subr.mxu0 0.0
      %2810 = vmatpush1.msra.mxu0 0.0
      %2811 = vmatprep.subr.mxu0 0.0
      %2812 = vmatpush1.msra.mxu0 0.0
      %2813 = vmatprep.subr.mxu0 0.0
      %2814 = vmatpush1.msra.mxu0 0.0
      %2815 = vmatprep.subr.mxu0 0.0
      %2816 = vmatpush1.msra.mxu0 0.0
      %2817 = vmatprep.subr.mxu0 0.0
      %2818 = vmatpush1.msra.mxu0 0.0
      %2819 = vmatprep.subr.mxu0 0.0
      %2820 = vmatpush1.msra.mxu0 0.0
      %2821 = vmatprep.subr.mxu0 0.0
      %2822 = vmatpush1.msra.mxu0 0.0
      %2823 = vmatprep.subr.mxu0 0.0
      %2824 = vmatpush1.msra.mxu0 0.0
      %2825 = vmatprep.subr.mxu0 0.0
      %2826 = vmatpush1.msra.mxu0 0.0
      %2827 = vmatprep.subr.mxu0 0.0
      %2828 = vmatpush1.msra.mxu0 0.0
      %2829 = vmatprep.subr.mxu0 0.0
      %2830 = vmatpush1.msra.mxu0 0.0
      %2831 = vmatprep.subr.mxu0 0.0
      %2832 = vmatpush1.msra.mxu0 0.0
      %2833 = vmatprep.mubr.f32.mxu0 0.0
      %v2834 = vand.u32 %v2731, 4294901760
      %v2835 = vsub.f32 %v2731, %v2834
      %v2836 = vand.u32 %v2835, 4294901760
      %v2837 = vsub.f32 %v2835, %v2836
      %v2838 = vand.u32 %v2837, 4294901760
      %2839 = vmatmul.mubr.f32.gmra.mrb[0].mxu0 %v2838
      %v2840 = vpop.f32.mrb[0].mxu0
      %v2841 = vadd.f32 %v2727, %v2840
      %v2842 = vpop.f32.mrb[0].mxu0
      %2843 = vmatprep.mubr.f32.mxu0 0.0
      %v2844 = vand.u32 %v2734, 4294901760
      %v2845 = vsub.f32 %v2734, %v2844
      %v2846 = vand.u32 %v2845, 4294901760
      %v2847 = vsub.f32 %v2845, %v2846
      %v2848 = vand.u32 %v2847, 4294901760
      %2849 = vmatmul.mubr.f32.gmra.mrb[0].mxu0 %v2848
      %v2850 = vpop.f32.mrb[0].mxu0
      %v2851 = vadd.f32 %v2727, %v2850
      %v2852 = vpop.f32.mrb[0].mxu0
      %2853 = vmatprep.mubr.f32.mxu0 0.0
      %v2854 = vand.u32 %v2737, 4294901760
      %v2855 = vsub.f32 %v2737, %v2854
      %v2856 = vand.u32 %v2855, 4294901760
      %v2857 = vsub.f32 %v2855, %v2856
      %v2858 = vand.u32 %v2857, 4294901760
      %2859 = vmatmul.mubr.f32.gmra.mrb[0].mxu0 %v2858
      %v2860 = vpop.f32.mrb[0].mxu0
      %v2861 = vadd.f32 %v2727, %v2860
      %v2862 = vpop.f32.mrb[0].mxu0
      %2863 = vmatprep.mubr.f32.mxu0 0.0
      %v2864 = vand.u32 %v2740, 4294901760
      %v2865 = vsub.f32 %v2740, %v2864
      %v2866 = vand.u32 %v2865, 4294901760
      %v2867 = vsub.f32 %v2865, %v2866
      %v2868 = vand.u32 %v2867, 4294901760
      %2869 = vmatmul.mubr.f32.gmra.mrb[0].mxu0 %v2868
      %v2870 = vpop.f32.mrb[0].mxu0
      %v2871 = vadd.f32 %v2727, %v2870
      %v2872 = vpop.f32.mrb[0].mxu0
      %2873 = vmatprep.mubr.f32.mxu0 0.0
      %v2874 = vand.u32 %v2743, 4294901760
      %v2875 = vsub.f32 %v2743, %v2874
      %v2876 = vand.u32 %v2875, 4294901760
      %v2877 = vsub.f32 %v2875, %v2876
      %v2878 = vand.u32 %v2877, 4294901760
      %2879 = vmatmul.mubr.f32.gmra.mrb[0].mxu0 %v2878
      %v2880 = vpop.f32.mrb[0].mxu0
      %v2881 = vadd.f32 %v2727, %v2880
      %v2882 = vpop.f32.mrb[0].mxu0
      %2883 = vmatprep.mubr.f32.mxu0 0.0
      %v2884 = vand.u32 %v2746, 4294901760
      %v2885 = vsub.f32 %v2746, %v2884
      %v2886 = vand.u32 %v2885, 4294901760
      %v2887 = vsub.f32 %v2885, %v2886
      %v2888 = vand.u32 %v2887, 4294901760
      %2889 = vmatmul.mubr.f32.gmra.mrb[0].mxu0 %v2888
      %v2890 = vpop.f32.mrb[0].mxu0
      %v2891 = vadd.f32 %v2727, %v2890
      %v2892 = vpop.f32.mrb[0].mxu0
      %2893 = vmatprep.mubr.f32.mxu0 0.0
      %v2894 = vand.u32 %v2749, 4294901760
      %v2895 = vsub.f32 %v2749, %v2894
      %v2896 = vand.u32 %v2895, 4294901760
      %v2897 = vsub.f32 %v2895, %v2896
      %v2898 = vand.u32 %v2897, 4294901760
      %2899 = vmatmul.mubr.f32.gmra.mrb[0].mxu0 %v2898
      %v2900 = vpop.f32.mrb[0].mxu0
      %v2901 = vadd.f32 %v2727, %v2900
      %v2902 = vpop.f32.mrb[0].mxu0
      %2903 = vmatprep.mubr.f32.mxu0 0.0
      %v2904 = vand.u32 %v2752, 4294901760
      %v2905 = vsub.f32 %v2752, %v2904
      %v2906 = vand.u32 %v2905, 4294901760
      %v2907 = vsub.f32 %v2905, %v2906
      %v2908 = vand.u32 %v2907, 4294901760
      %2909 = vmatmul.mubr.f32.gmra.mrb[0].mxu0 %v2908
      %v2910 = vpop.f32.mrb[0].mxu0
      %v2911 = vadd.f32 %v2727, %v2910
      %v2912 = vpop.f32.mrb[0].mxu0
      %2913 = vmatprep.mubr.f32.mxu0 0.0
      %v2914 = vand.u32 %v2755, 4294901760
      %v2915 = vsub.f32 %v2755, %v2914
      %v2916 = vand.u32 %v2915, 4294901760
      %v2917 = vsub.f32 %v2915, %v2916
      %v2918 = vand.u32 %v2917, 4294901760
      %2919 = vmatmul.mubr.f32.gmra.mrb[0].mxu0 %v2918
      %v2920 = vpop.f32.mrb[0].mxu0
      %v2921 = vadd.f32 %v2727, %v2920
      %v2922 = vpop.f32.mrb[0].mxu0
      %2923 = vdwg.mxu0
      %2924 = vmatprep.subr.mxu0 0.0
      %v2925 = vand.u32 %v2710, 4294901760
      %v2926 = vsub.f32 %v2710, %v2925
      %v2927 = vand.u32 %v2926, 4294901760
      %v2928 = vsub.f32 %v2926, %v2927
      %v2929 = vand.u32 %v2928, 4294901760
      %2930 = vmatpush1.msra.mxu0 %v2929
      %2931 = vmatprep.subr.mxu0 0.0
      %v2932 = vand.u32 %v2711, 4294901760
      %v2933 = vsub.f32 %v2711, %v2932
      %v2934 = vand.u32 %v2933, 4294901760
      %v2935 = vsub.f32 %v2933, %v2934
      %v2936 = vand.u32 %v2935, 4294901760
      %2937 = vmatpush1.msra.mxu0 %v2936
      %2938 = vmatprep.subr.mxu0 0.0
      %v2939 = vand.u32 %v2712, 4294901760
      %v2940 = vsub.f32 %v2712, %v2939
      %v2941 = vand.u32 %v2940, 4294901760
      %v2942 = vsub.f32 %v2940, %v2941
      %v2943 = vand.u32 %v2942, 4294901760
      %2944 = vmatpush1.msra.mxu0 %v2943
      %2945 = vmatprep.subr.mxu0 0.0
      %v2946 = vand.u32 %v2713, 4294901760
      %v2947 = vsub.f32 %v2713, %v2946
      %v2948 = vand.u32 %v2947, 4294901760
      %v2949 = vsub.f32 %v2947, %v2948
      %v2950 = vand.u32 %v2949, 4294901760
      %2951 = vmatpush1.msra.mxu0 %v2950
      %2952 = vmatprep.subr.mxu0 0.0
      %v2953 = vand.u32 %v2714, 4294901760
      %v2954 = vsub.f32 %v2714, %v2953
      %v2955 = vand.u32 %v2954, 4294901760
      %v2956 = vsub.f32 %v2954, %v2955
      %v2957 = vand.u32 %v2956, 4294901760
      %2958 = vmatpush1.msra.mxu0 %v2957
      %2959 = vmatprep.subr.mxu0 0.0
      %v2960 = vand.u32 %v2715, 4294901760
      %v2961 = vsub.f32 %v2715, %v2960
      %v2962 = vand.u32 %v2961, 4294901760
      %v2963 = vsub.f32 %v2961, %v2962
      %v2964 = vand.u32 %v2963, 4294901760
      %2965 = vmatpush1.msra.mxu0 %v2964
      %2966 = vmatprep.subr.mxu0 0.0
      %v2967 = vand.u32 %v2716, 4294901760
      %v2968 = vsub.f32 %v2716, %v2967
      %v2969 = vand.u32 %v2968, 4294901760
      %v2970 = vsub.f32 %v2968, %v2969
      %v2971 = vand.u32 %v2970, 4294901760
      %2972 = vmatpush1.msra.mxu0 %v2971
      %2973 = vmatprep.subr.mxu0 0.0
      %v2974 = vand.u32 %v2717, 4294901760
      %v2975 = vsub.f32 %v2717, %v2974
      %v2976 = vand.u32 %v2975, 4294901760
      %v2977 = vsub.f32 %v2975, %v2976
      %v2978 = vand.u32 %v2977, 4294901760
      %2979 = vmatpush1.msra.mxu0 %v2978
      %2980 = vmatprep.subr.mxu0 0.0
      %v2981 = vand.u32 %v2718, 4294901760
      %v2982 = vsub.f32 %v2718, %v2981
      %v2983 = vand.u32 %v2982, 4294901760
      %v2984 = vsub.f32 %v2982, %v2983
      %v2985 = vand.u32 %v2984, 4294901760
      %2986 = vmatpush1.msra.mxu0 %v2985
      %2987 = vmatprep.subr.mxu0 0.0
      %v2988 = vand.u32 %v2719, 4294901760
      %v2989 = vsub.f32 %v2719, %v2988
      %v2990 = vand.u32 %v2989, 4294901760
      %v2991 = vsub.f32 %v2989, %v2990
      %v2992 = vand.u32 %v2991, 4294901760
      %2993 = vmatpush1.msra.mxu0 %v2992
      %2994 = vmatprep.subr.mxu0 0.0
      %v2995 = vand.u32 %v2720, 4294901760
      %v2996 = vsub.f32 %v2720, %v2995
      %v2997 = vand.u32 %v2996, 4294901760
      %v2998 = vsub.f32 %v2996, %v2997
      %v2999 = vand.u32 %v2998, 4294901760
      %3000 = vmatpush1.msra.mxu0 %v2999
      %3001 = vmatprep.subr.mxu0 0.0
      %v3002 = vand.u32 %v2721, 4294901760
      %v3003 = vsub.f32 %v2721, %v3002
      %v3004 = vand.u32 %v3003, 4294901760
      %v3005 = vsub.f32 %v3003, %v3004
      %v3006 = vand.u32 %v3005, 4294901760
      %3007 = vmatpush1.msra.mxu0 %v3006
      %3008 = vmatprep.subr.mxu0 0.0
      %3009 = vmatpush1.msra.mxu0 0.0
      %3010 = vmatprep.subr.mxu0 0.0
      %3011 = vmatpush1.msra.mxu0 0.0
      %3012 = vmatprep.subr.mxu0 0.0
      %3013 = vmatpush1.msra.mxu0 0.0
      %3014 = vmatprep.subr.mxu0 0.0
      %3015 = vmatpush1.msra.mxu0 0.0
      %3016 = vmatprep.subr.mxu0 0.0
      %3017 = vmatpush1.msra.mxu0 0.0
      %3018 = vmatprep.subr.mxu0 0.0
      %3019 = vmatpush1.msra.mxu0 0.0
      %3020 = vmatprep.subr.mxu0 0.0
      %3021 = vmatpush1.msra.mxu0 0.0
      %3022 = vmatprep.subr.mxu0 0.0
      %3023 = vmatpush1.msra.mxu0 0.0
      %3024 = vmatprep.subr.mxu0 0.0
      %3025 = vmatpush1.msra.mxu0 0.0
      %3026 = vmatprep.subr.mxu0 0.0
      %3027 = vmatpush1.msra.mxu0 0.0
      %3028 = vmatprep.subr.mxu0 0.0
      %3029 = vmatpush1.msra.mxu0 0.0
      %3030 = vmatprep.subr.mxu0 0.0
      %3031 = vmatpush1.msra.mxu0 0.0
      %3032 = vmatprep.subr.mxu0 0.0
      %3033 = vmatpush1.msra.mxu0 0.0
      %3034 = vmatprep.subr.mxu0 0.0
      %3035 = vmatpush1.msra.mxu0 0.0
      %3036 = vmatprep.subr.mxu0 0.0
      %3037 = vmatpush1.msra.mxu0 0.0
      %3038 = vmatprep.subr.mxu0 0.0
      %3039 = vmatpush1.msra.mxu0 0.0
      %3040 = vmatprep.subr.mxu0 0.0
      %3041 = vmatpush1.msra.mxu0 0.0
      %3042 = vmatprep.subr.mxu0 0.0
      %3043 = vmatpush1.msra.mxu0 0.0
      %3044 = vmatprep.subr.mxu0 0.0
      %3045 = vmatpush1.msra.mxu0 0.0
      %3046 = vmatprep.subr.mxu0 0.0
      %3047 = vmatpush1.msra.mxu0 0.0
      %3048 = vmatprep.mubr.f32.mxu0 0.0
      %v3049 = vand.u32 %v2731, 4294901760
      %3050 = vmatmul.mubr.f32.gmra.mrb[0].mxu0 %v3049
      %v3051 = vpop.f32.mrb[0].mxu0
      %v3052 = vadd.f32 %v2841, %v3051
      %v3053 = vpop.f32.mrb[0].mxu0
      %3054 = vmatprep.mubr.f32.mxu0 0.0
      %v3055 = vand.u32 %v2734, 4294901760
      %3056 = vmatmul.mubr.f32.gmra.mrb[0].mxu0 %v3055
      %v3057 = vpop.f32.mrb[0].mxu0
      %v3058 = vadd.f32 %v2851, %v3057
      %v3059 = vpop.f32.mrb[0].mxu0
      %3060 = vmatprep.mubr.f32.mxu0 0.0
      %v3061 = vand.u32 %v2737, 4294901760
      %3062 = vmatmul.mubr.f32.gmra.mrb[0].mxu0 %v3061
      %v3063 = vpop.f32.mrb[0].mxu0
      %v3064 = vadd.f32 %v2861, %v3063
      %v3065 = vpop.f32.mrb[0].mxu0
      %3066 = vmatprep.mubr.f32.mxu0 0.0
      %v3067 = vand.u32 %v2740, 4294901760
      %3068 = vmatmul.mubr.f32.gmra.mrb[0].mxu0 %v3067
      %v3069 = vpop.f32.mrb[0].mxu0
      %v3070 = vadd.f32 %v2871, %v3069
      %v3071 = vpop.f32.mrb[0].mxu0
      %3072 = vmatprep.mubr.f32.mxu0 0.0
      %v3073 = vand.u32 %v2743, 4294901760
      %3074 = vmatmul.mubr.f32.gmra.mrb[0].mxu0 %v3073
      %v3075 = vpop.f32.mrb[0].mxu0
      %v3076 = vadd.f32 %v2881, %v3075
      %v3077 = vpop.f32.mrb[0].mxu0
      %3078 = vmatprep.mubr.f32.mxu0 0.0
      %v3079 = vand.u32 %v2746, 4294901760
      %3080 = vmatmul.mubr.f32.gmra.mrb[0].mxu0 %v3079
      %v3081 = vpop.f32.mrb[0].mxu0
      %v3082 = vadd.f32 %v2891, %v3081
      %v3083 = vpop.f32.mrb[0].mxu0
      %3084 = vmatprep.mubr.f32.mxu0 0.0
      %v3085 = vand.u32 %v2749, 4294901760
      %3086 = vmatmul.mubr.f32.gmra.mrb[0].mxu0 %v3085
      %v3087 = vpop.f32.mrb[0].mxu0
      %v3088 = vadd.f32 %v2901, %v3087
      %v3089 = vpop.f32.mrb[0].mxu0
      %3090 = vmatprep.mubr.f32.mxu0 0.0
      %v3091 = vand.u32 %v2752, 4294901760
      %3092 = vmatmul.mubr.f32.gmra.mrb[0].mxu0 %v3091
      %v3093 = vpop.f32.mrb[0].mxu0
      %v3094 = vadd.f32 %v2911, %v3093
      %v3095 = vpop.f32.mrb[0].mxu0
      %3096 = vmatprep.mubr.f32.mxu0 0.0
      %v3097 = vand.u32 %v2755, 4294901760
      %3098 = vmatmul.mubr.f32.gmra.mrb[0].mxu0 %v3097
      %v3099 = vpop.f32.mrb[0].mxu0
      %v3100 = vadd.f32 %v2921, %v3099
      %v3101 = vpop.f32.mrb[0].mxu0
      %3102 = vdwg.mxu0
      %3103 = vmatprep.subr.mxu0 0.0
      %v3104 = vand.u32 %v2710, 4294901760
      %v3105 = vsub.f32 %v2710, %v3104
      %3106 = vmatpush1.msra.mxu0 %v3105
      %3107 = vmatprep.subr.mxu0 0.0
      %v3108 = vand.u32 %v2711, 4294901760
      %v3109 = vsub.f32 %v2711, %v3108
      %3110 = vmatpush1.msra.mxu0 %v3109
      %3111 = vmatprep.subr.mxu0 0.0
      %v3112 = vand.u32 %v2712, 4294901760
      %v3113 = vsub.f32 %v2712, %v3112
      %3114 = vmatpush1.msra.mxu0 %v3113
      %3115 = vmatprep.subr.mxu0 0.0
      %v3116 = vand.u32 %v2713, 4294901760
      %v3117 = vsub.f32 %v2713, %v3116
      %3118 = vmatpush1.msra.mxu0 %v3117
      %3119 = vmatprep.subr.mxu0 0.0
      %v3120 = vand.u32 %v2714, 4294901760
      %v3121 = vsub.f32 %v2714, %v3120
      %3122 = vmatpush1.msra.mxu0 %v3121
      %3123 = vmatprep.subr.mxu0 0.0
      %v3124 = vand.u32 %v2715, 4294901760
      %v3125 = vsub.f32 %v2715, %v3124
      %3126 = vmatpush1.msra.mxu0 %v3125
      %3127 = vmatprep.subr.mxu0 0.0
      %v3128 = vand.u32 %v2716, 4294901760
      %v3129 = vsub.f32 %v2716, %v3128
      %3130 = vmatpush1.msra.mxu0 %v3129
      %3131 = vmatprep.subr.mxu0 0.0
      %v3132 = vand.u32 %v2717, 4294901760
      %v3133 = vsub.f32 %v2717, %v3132
      %3134 = vmatpush1.msra.mxu0 %v3133
      %3135 = vmatprep.subr.mxu0 0.0
      %v3136 = vand.u32 %v2718, 4294901760
      %v3137 = vsub.f32 %v2718, %v3136
      %3138 = vmatpush1.msra.mxu0 %v3137
      %3139 = vmatprep.subr.mxu0 0.0
      %v3140 = vand.u32 %v2719, 4294901760
      %v3141 = vsub.f32 %v2719, %v3140
      %3142 = vmatpush1.msra.mxu0 %v3141
      %3143 = vmatprep.subr.mxu0 0.0
      %v3144 = vand.u32 %v2720, 4294901760
      %v3145 = vsub.f32 %v2720, %v3144
      %3146 = vmatpush1.msra.mxu0 %v3145
      %3147 = vmatprep.subr.mxu0 0.0
      %v3148 = vand.u32 %v2721, 4294901760
      %v3149 = vsub.f32 %v2721, %v3148
      %3150 = vmatpush1.msra.mxu0 %v3149
      %3151 = vmatprep.subr.mxu0 0.0
      %3152 = vmatpush1.msra.mxu0 0.0
      %3153 = vmatprep.subr.mxu0 0.0
      %3154 = vmatpush1.msra.mxu0 0.0
      %3155 = vmatprep.subr.mxu0 0.0
      %3156 = vmatpush1.msra.mxu0 0.0
      %3157 = vmatprep.subr.mxu0 0.0
      %3158 = vmatpush1.msra.mxu0 0.0
      %3159 = vmatprep.subr.mxu0 0.0
      %3160 = vmatpush1.msra.mxu0 0.0
      %3161 = vmatprep.subr.mxu0 0.0
      %3162 = vmatpush1.msra.mxu0 0.0
      %3163 = vmatprep.subr.mxu0 0.0
      %3164 = vmatpush1.msra.mxu0 0.0
      %3165 = vmatprep.subr.mxu0 0.0
      %3166 = vmatpush1.msra.mxu0 0.0
      %3167 = vmatprep.subr.mxu0 0.0
      %3168 = vmatpush1.msra.mxu0 0.0
      %3169 = vmatprep.subr.mxu0 0.0
      %3170 = vmatpush1.msra.mxu0 0.0
      %3171 = vmatprep.subr.mxu0 0.0
      %3172 = vmatpush1.msra.mxu0 0.0
      %3173 = vmatprep.subr.mxu0 0.0
      %3174 = vmatpush1.msra.mxu0 0.0
      %3175 = vmatprep.subr.mxu0 0.0
      %3176 = vmatpush1.msra.mxu0 0.0
      %3177 = vmatprep.subr.mxu0 0.0
      %3178 = vmatpush1.msra.mxu0 0.0
      %3179 = vmatprep.subr.mxu0 0.0
      %3180 = vmatpush1.msra.mxu0 0.0
      %3181 = vmatprep.subr.mxu0 0.0
      %3182 = vmatpush1.msra.mxu0 0.0
      %3183 = vmatprep.subr.mxu0 0.0
      %3184 = vmatpush1.msra.mxu0 0.0
      %3185 = vmatprep.subr.mxu0 0.0
      %3186 = vmatpush1.msra.mxu0 0.0
      %3187 = vmatprep.subr.mxu0 0.0
      %3188 = vmatpush1.msra.mxu0 0.0
      %3189 = vmatprep.subr.mxu0 0.0
      %3190 = vmatpush1.msra.mxu0 0.0
      %3191 = vmatprep.mubr.f32.mxu0 0.0
      %v3192 = vand.u32 %v2731, 4294901760
      %v3193 = vsub.f32 %v2731, %v3192
      %3194 = vmatmul.mubr.f32.gmra.mrb[0].mxu0 %v3193
      %v3195 = vpop.f32.mrb[0].mxu0
      %v3196 = vadd.f32 %v3052, %v3195
      %v3197 = vpop.f32.mrb[0].mxu0
      %3198 = vmatprep.mubr.f32.mxu0 0.0
      %v3199 = vand.u32 %v2734, 4294901760
      %v3200 = vsub.f32 %v2734, %v3199
      %3201 = vmatmul.mubr.f32.gmra.mrb[0].mxu0 %v3200
      %v3202 = vpop.f32.mrb[0].mxu0
      %v3203 = vadd.f32 %v3058, %v3202
      %v3204 = vpop.f32.mrb[0].mxu0
      %3205 = vmatprep.mubr.f32.mxu0 0.0
      %v3206 = vand.u32 %v2737, 4294901760
      %v3207 = vsub.f32 %v2737, %v3206
      %3208 = vmatmul.mubr.f32.gmra.mrb[0].mxu0 %v3207
      %v3209 = vpop.f32.mrb[0].mxu0
      %v3210 = vadd.f32 %v3064, %v3209
      %v3211 = vpop.f32.mrb[0].mxu0
      %3212 = vmatprep.mubr.f32.mxu0 0.0
      %v3213 = vand.u32 %v2740, 4294901760
      %v3214 = vsub.f32 %v2740, %v3213
      %3215 = vmatmul.mubr.f32.gmra.mrb[0].mxu0 %v3214
      %v3216 = vpop.f32.mrb[0].mxu0
      %v3217 = vadd.f32 %v3070, %v3216
      %v3218 = vpop.f32.mrb[0].mxu0
      %3219 = vmatprep.mubr.f32.mxu0 0.0
      %v3220 = vand.u32 %v2743, 4294901760
      %v3221 = vsub.f32 %v2743, %v3220
      %3222 = vmatmul.mubr.f32.gmra.mrb[0].mxu0 %v3221
      %v3223 = vpop.f32.mrb[0].mxu0
      %v3224 = vadd.f32 %v3076, %v3223
      %v3225 = vpop.f32.mrb[0].mxu0
      %3226 = vmatprep.mubr.f32.mxu0 0.0
      %v3227 = vand.u32 %v2746, 4294901760
      %v3228 = vsub.f32 %v2746, %v3227
      %3229 = vmatmul.mubr.f32.gmra.mrb[0].mxu0 %v3228
      %v3230 = vpop.f32.mrb[0].mxu0
      %v3231 = vadd.f32 %v3082, %v3230
      %v3232 = vpop.f32.mrb[0].mxu0
      %3233 = vmatprep.mubr.f32.mxu0 0.0
      %v3234 = vand.u32 %v2749, 4294901760
      %v3235 = vsub.f32 %v2749, %v3234
      %3236 = vmatmul.mubr.f32.gmra.mrb[0].mxu0 %v3235
      %v3237 = vpop.f32.mrb[0].mxu0
      %v3238 = vadd.f32 %v3088, %v3237
      %v3239 = vpop.f32.mrb[0].mxu0
      %3240 = vmatprep.mubr.f32.mxu0 0.0
      %v3241 = vand.u32 %v2752, 4294901760
      %v3242 = vsub.f32 %v2752, %v3241
      %3243 = vmatmul.mubr.f32.gmra.mrb[0].mxu0 %v3242
      %v3244 = vpop.f32.mrb[0].mxu0
      %v3245 = vadd.f32 %v3094, %v3244
      %v3246 = vpop.f32.mrb[0].mxu0
      %3247 = vmatprep.mubr.f32.mxu0 0.0
      %v3248 = vand.u32 %v2755, 4294901760
      %v3249 = vsub.f32 %v2755, %v3248
      %3250 = vmatmul.mubr.f32.gmra.mrb[0].mxu0 %v3249
      %v3251 = vpop.f32.mrb[0].mxu0
      %v3252 = vadd.f32 %v3100, %v3251
      %v3253 = vpop.f32.mrb[0].mxu0
      %3254 = vdwg.mxu0
      %3255 = vmatprep.subr.mxu0 0.0
      %v3256 = vand.u32 %v2710, 4294901760
      %3257 = vmatpush1.msra.mxu0 %v3256
      %3258 = vmatprep.subr.mxu0 0.0
      %v3259 = vand.u32 %v2711, 4294901760
      %3260 = vmatpush1.msra.mxu0 %v3259
      %3261 = vmatprep.subr.mxu0 0.0
      %v3262 = vand.u32 %v2712, 4294901760
      %3263 = vmatpush1.msra.mxu0 %v3262
      %3264 = vmatprep.subr.mxu0 0.0
      %v3265 = vand.u32 %v2713, 4294901760
      %3266 = vmatpush1.msra.mxu0 %v3265
      %3267 = vmatprep.subr.mxu0 0.0
      %v3268 = vand.u32 %v2714, 4294901760
      %3269 = vmatpush1.msra.mxu0 %v3268
      %3270 = vmatprep.subr.mxu0 0.0
      %v3271 = vand.u32 %v2715, 4294901760
      %3272 = vmatpush1.msra.mxu0 %v3271
      %3273 = vmatprep.subr.mxu0 0.0
      %v3274 = vand.u32 %v2716, 4294901760
      %3275 = vmatpush1.msra.mxu0 %v3274
      %3276 = vmatprep.subr.mxu0 0.0
      %v3277 = vand.u32 %v2717, 4294901760
      %3278 = vmatpush1.msra.mxu0 %v3277
      %3279 = vmatprep.subr.mxu0 0.0
      %v3280 = vand.u32 %v2718, 4294901760
      %3281 = vmatpush1.msra.mxu0 %v3280
      %3282 = vmatprep.subr.mxu0 0.0
      %v3283 = vand.u32 %v2719, 4294901760
      %3284 = vmatpush1.msra.mxu0 %v3283
      %3285 = vmatprep.subr.mxu0 0.0
      %v3286 = vand.u32 %v2720, 4294901760
      %3287 = vmatpush1.msra.mxu0 %v3286
      %3288 = vmatprep.subr.mxu0 0.0
      %v3289 = vand.u32 %v2721, 4294901760
      %3290 = vmatpush1.msra.mxu0 %v3289
      %3291 = vmatprep.subr.mxu0 0.0
      %3292 = vmatpush1.msra.mxu0 0.0
      %3293 = vmatprep.subr.mxu0 0.0
      %3294 = vmatpush1.msra.mxu0 0.0
      %3295 = vmatprep.subr.mxu0 0.0
      %3296 = vmatpush1.msra.mxu0 0.0
      %3297 = vmatprep.subr.mxu0 0.0
      %3298 = vmatpush1.msra.mxu0 0.0
      %3299 = vmatprep.subr.mxu0 0.0
      %3300 = vmatpush1.msra.mxu0 0.0
      %3301 = vmatprep.subr.mxu0 0.0
      %3302 = vmatpush1.msra.mxu0 0.0
      %3303 = vmatprep.subr.mxu0 0.0
      %3304 = vmatpush1.msra.mxu0 0.0
      %3305 = vmatprep.subr.mxu0 0.0
      %3306 = vmatpush1.msra.mxu0 0.0
      %3307 = vmatprep.subr.mxu0 0.0
      %3308 = vmatpush1.msra.mxu0 0.0
      %3309 = vmatprep.subr.mxu0 0.0
      %3310 = vmatpush1.msra.mxu0 0.0
      %3311 = vmatprep.subr.mxu0 0.0
      %3312 = vmatpush1.msra.mxu0 0.0
      %3313 = vmatprep.subr.mxu0 0.0
      %3314 = vmatpush1.msra.mxu0 0.0
      %3315 = vmatprep.subr.mxu0 0.0
      %3316 = vmatpush1.msra.mxu0 0.0
      %3317 = vmatprep.subr.mxu0 0.0
      %3318 = vmatpush1.msra.mxu0 0.0
      %3319 = vmatprep.subr.mxu0 0.0
      %3320 = vmatpush1.msra.mxu0 0.0
      %3321 = vmatprep.subr.mxu0 0.0
      %3322 = vmatpush1.msra.mxu0 0.0
      %3323 = vmatprep.subr.mxu0 0.0
      %3324 = vmatpush1.msra.mxu0 0.0
      %3325 = vmatprep.subr.mxu0 0.0
      %3326 = vmatpush1.msra.mxu0 0.0
      %3327 = vmatprep.subr.mxu0 0.0
      %3328 = vmatpush1.msra.mxu0 0.0
      %3329 = vmatprep.subr.mxu0 0.0
      %3330 = vmatpush1.msra.mxu0 0.0
      %3331 = vmatprep.mubr.f32.mxu0 0.0
      %v3332 = vand.u32 %v2731, 4294901760
      %v3333 = vsub.f32 %v2731, %v3332
      %v3334 = vand.u32 %v3333, 4294901760
      %3335 = vmatmul.mubr.f32.gmra.mrb[0].mxu0 %v3334
      %v3336 = vpop.f32.mrb[0].mxu0
      %v3337 = vadd.f32 %v3196, %v3336
      %v3338 = vpop.f32.mrb[0].mxu0
      %3339 = vmatprep.mubr.f32.mxu0 0.0
      %v3340 = vand.u32 %v2734, 4294901760
      %v3341 = vsub.f32 %v2734, %v3340
      %v3342 = vand.u32 %v3341, 4294901760
      %3343 = vmatmul.mubr.f32.gmra.mrb[0].mxu0 %v3342
      %v3344 = vpop.f32.mrb[0].mxu0
      %v3345 = vadd.f32 %v3203, %v3344
      %v3346 = vpop.f32.mrb[0].mxu0
      %3347 = vmatprep.mubr.f32.mxu0 0.0
      %v3348 = vand.u32 %v2737, 4294901760
      %v3349 = vsub.f32 %v2737, %v3348
      %v3350 = vand.u32 %v3349, 4294901760
      %3351 = vmatmul.mubr.f32.gmra.mrb[0].mxu0 %v3350
      %v3352 = vpop.f32.mrb[0].mxu0
      %v3353 = vadd.f32 %v3210, %v3352
      %v3354 = vpop.f32.mrb[0].mxu0
      %3355 = vmatprep.mubr.f32.mxu0 0.0
      %v3356 = vand.u32 %v2740, 4294901760
      %v3357 = vsub.f32 %v2740, %v3356
      %v3358 = vand.u32 %v3357, 4294901760
      %3359 = vmatmul.mubr.f32.gmra.mrb[0].mxu0 %v3358
      %v3360 = vpop.f32.mrb[0].mxu0
      %v3361 = vadd.f32 %v3217, %v3360
      %v3362 = vpop.f32.mrb[0].mxu0
      %3363 = vmatprep.mubr.f32.mxu0 0.0
      %v3364 = vand.u32 %v2743, 4294901760
      %v3365 = vsub.f32 %v2743, %v3364
      %v3366 = vand.u32 %v3365, 4294901760
      %3367 = vmatmul.mubr.f32.gmra.mrb[0].mxu0 %v3366
      %v3368 = vpop.f32.mrb[0].mxu0
      %v3369 = vadd.f32 %v3224, %v3368
      %v3370 = vpop.f32.mrb[0].mxu0
      %3371 = vmatprep.mubr.f32.mxu0 0.0
      %v3372 = vand.u32 %v2746, 4294901760
      %v3373 = vsub.f32 %v2746, %v3372
      %v3374 = vand.u32 %v3373, 4294901760
      %3375 = vmatmul.mubr.f32.gmra.mrb[0].mxu0 %v3374
      %v3376 = vpop.f32.mrb[0].mxu0
      %v3377 = vadd.f32 %v3231, %v3376
      %v3378 = vpop.f32.mrb[0].mxu0
      %3379 = vmatprep.mubr.f32.mxu0 0.0
      %v3380 = vand.u32 %v2749, 4294901760
      %v3381 = vsub.f32 %v2749, %v3380
      %v3382 = vand.u32 %v3381, 4294901760
      %3383 = vmatmul.mubr.f32.gmra.mrb[0].mxu0 %v3382
      %v3384 = vpop.f32.mrb[0].mxu0
      %v3385 = vadd.f32 %v3238, %v3384
      %v3386 = vpop.f32.mrb[0].mxu0
      %3387 = vmatprep.mubr.f32.mxu0 0.0
      %v3388 = vand.u32 %v2752, 4294901760
      %v3389 = vsub.f32 %v2752, %v3388
      %v3390 = vand.u32 %v3389, 4294901760
      %3391 = vmatmul.mubr.f32.gmra.mrb[0].mxu0 %v3390
      %v3392 = vpop.f32.mrb[0].mxu0
      %v3393 = vadd.f32 %v3245, %v3392
      %v3394 = vpop.f32.mrb[0].mxu0
      %3395 = vmatprep.mubr.f32.mxu0 0.0
      %v3396 = vand.u32 %v2755, 4294901760
      %v3397 = vsub.f32 %v2755, %v3396
      %v3398 = vand.u32 %v3397, 4294901760
      %3399 = vmatmul.mubr.f32.gmra.mrb[0].mxu0 %v3398
      %v3400 = vpop.f32.mrb[0].mxu0
      %v3401 = vadd.f32 %v3252, %v3400
      %v3402 = vpop.f32.mrb[0].mxu0
      %3403 = vdwg.mxu0
      %3404 = vmatprep.subr.mxu0 0.0
      %v3405 = vand.u32 %v2710, 4294901760
      %v3406 = vsub.f32 %v2710, %v3405
      %v3407 = vand.u32 %v3406, 4294901760
      %3408 = vmatpush1.msra.mxu0 %v3407
      %3409 = vmatprep.subr.mxu0 0.0
      %v3410 = vand.u32 %v2711, 4294901760
      %v3411 = vsub.f32 %v2711, %v3410
      %v3412 = vand.u32 %v3411, 4294901760
      %3413 = vmatpush1.msra.mxu0 %v3412
      %3414 = vmatprep.subr.mxu0 0.0
      %v3415 = vand.u32 %v2712, 4294901760
      %v3416 = vsub.f32 %v2712, %v3415
      %v3417 = vand.u32 %v3416, 4294901760
      %3418 = vmatpush1.msra.mxu0 %v3417
      %3419 = vmatprep.subr.mxu0 0.0
      %v3420 = vand.u32 %v2713, 4294901760
      %v3421 = vsub.f32 %v2713, %v3420
      %v3422 = vand.u32 %v3421, 4294901760
      %3423 = vmatpush1.msra.mxu0 %v3422
      %3424 = vmatprep.subr.mxu0 0.0
      %v3425 = vand.u32 %v2714, 4294901760
      %v3426 = vsub.f32 %v2714, %v3425
      %v3427 = vand.u32 %v3426, 4294901760
      %3428 = vmatpush1.msra.mxu0 %v3427
      %3429 = vmatprep.subr.mxu0 0.0
      %v3430 = vand.u32 %v2715, 4294901760
      %v3431 = vsub.f32 %v2715, %v3430
      %v3432 = vand.u32 %v3431, 4294901760
      %3433 = vmatpush1.msra.mxu0 %v3432
      %3434 = vmatprep.subr.mxu0 0.0
      %v3435 = vand.u32 %v2716, 4294901760
      %v3436 = vsub.f32 %v2716, %v3435
      %v3437 = vand.u32 %v3436, 4294901760
      %3438 = vmatpush1.msra.mxu0 %v3437
      %3439 = vmatprep.subr.mxu0 0.0
      %v3440 = vand.u32 %v2717, 4294901760
      %v3441 = vsub.f32 %v2717, %v3440
      %v3442 = vand.u32 %v3441, 4294901760
      %3443 = vmatpush1.msra.mxu0 %v3442
      %3444 = vmatprep.subr.mxu0 0.0
      %v3445 = vand.u32 %v2718, 4294901760
      %v3446 = vsub.f32 %v2718, %v3445
      %v3447 = vand.u32 %v3446, 4294901760
      %3448 = vmatpush1.msra.mxu0 %v3447
      %3449 = vmatprep.subr.mxu0 0.0
      %v3450 = vand.u32 %v2719, 4294901760
      %v3451 = vsub.f32 %v2719, %v3450
      %v3452 = vand.u32 %v3451, 4294901760
      %3453 = vmatpush1.msra.mxu0 %v3452
      %3454 = vmatprep.subr.mxu0 0.0
      %v3455 = vand.u32 %v2720, 4294901760
      %v3456 = vsub.f32 %v2720, %v3455
      %v3457 = vand.u32 %v3456, 4294901760
      %3458 = vmatpush1.msra.mxu0 %v3457
      %3459 = vmatprep.subr.mxu0 0.0
      %v3460 = vand.u32 %v2721, 4294901760
      %v3461 = vsub.f32 %v2721, %v3460
      %v3462 = vand.u32 %v3461, 4294901760
      %3463 = vmatpush1.msra.mxu0 %v3462
      %3464 = vmatprep.subr.mxu0 0.0
      %3465 = vmatpush1.msra.mxu0 0.0
      %3466 = vmatprep.subr.mxu0 0.0
      %3467 = vmatpush1.msra.mxu0 0.0
      %3468 = vmatprep.subr.mxu0 0.0
      %3469 = vmatpush1.msra.mxu0 0.0
      %3470 = vmatprep.subr.mxu0 0.0
      %3471 = vmatpush1.msra.mxu0 0.0
      %3472 = vmatprep.subr.mxu0 0.0
      %3473 = vmatpush1.msra.mxu0 0.0
      %3474 = vmatprep.subr.mxu0 0.0
      %3475 = vmatpush1.msra.mxu0 0.0
      %3476 = vmatprep.subr.mxu0 0.0
      %3477 = vmatpush1.msra.mxu0 0.0
      %3478 = vmatprep.subr.mxu0 0.0
      %3479 = vmatpush1.msra.mxu0 0.0
      %3480 = vmatprep.subr.mxu0 0.0
      %3481 = vmatpush1.msra.mxu0 0.0
      %3482 = vmatprep.subr.mxu0 0.0
      %3483 = vmatpush1.msra.mxu0 0.0
      %3484 = vmatprep.subr.mxu0 0.0
      %3485 = vmatpush1.msra.mxu0 0.0
      %3486 = vmatprep.subr.mxu0 0.0
      %3487 = vmatpush1.msra.mxu0 0.0
      %3488 = vmatprep.subr.mxu0 0.0
      %3489 = vmatpush1.msra.mxu0 0.0
      %3490 = vmatprep.subr.mxu0 0.0
      %3491 = vmatpush1.msra.mxu0 0.0
      %3492 = vmatprep.subr.mxu0 0.0
      %3493 = vmatpush1.msra.mxu0 0.0
      %3494 = vmatprep.subr.mxu0 0.0
      %3495 = vmatpush1.msra.mxu0 0.0
      %3496 = vmatprep.subr.mxu0 0.0
      %3497 = vmatpush1.msra.mxu0 0.0
      %3498 = vmatprep.subr.mxu0 0.0
      %3499 = vmatpush1.msra.mxu0 0.0
      %3500 = vmatprep.subr.mxu0 0.0
      %3501 = vmatpush1.msra.mxu0 0.0
      %3502 = vmatprep.subr.mxu0 0.0
      %3503 = vmatpush1.msra.mxu0 0.0
      %3504 = vmatprep.mubr.f32.mxu0 0.0
      %v3505 = vand.u32 %v2731, 4294901760
      %3506 = vmatmul.mubr.f32.gmra.mrb[0].mxu0 %v3505
      %v3507 = vpop.f32.mrb[0].mxu0
      %v3508 = vadd.f32 %v3337, %v3507
      %v3509 = vpop.f32.mrb[0].mxu0
      %3510 = vmatprep.mubr.f32.mxu0 0.0
      %v3511 = vand.u32 %v2734, 4294901760
      %3512 = vmatmul.mubr.f32.gmra.mrb[0].mxu0 %v3511
      %v3513 = vpop.f32.mrb[0].mxu0
      %v3514 = vadd.f32 %v3345, %v3513
      %v3515 = vpop.f32.mrb[0].mxu0
      %3516 = vmatprep.mubr.f32.mxu0 0.0
      %v3517 = vand.u32 %v2737, 4294901760
      %3518 = vmatmul.mubr.f32.gmra.mrb[0].mxu0 %v3517
      %v3519 = vpop.f32.mrb[0].mxu0
      %v3520 = vadd.f32 %v3353, %v3519
      %v3521 = vpop.f32.mrb[0].mxu0
      %3522 = vmatprep.mubr.f32.mxu0 0.0
      %v3523 = vand.u32 %v2740, 4294901760
      %3524 = vmatmul.mubr.f32.gmra.mrb[0].mxu0 %v3523
      %v3525 = vpop.f32.mrb[0].mxu0
      %v3526 = vadd.f32 %v3361, %v3525
      %v3527 = vpop.f32.mrb[0].mxu0
      %3528 = vmatprep.mubr.f32.mxu0 0.0
      %v3529 = vand.u32 %v2743, 4294901760
      %3530 = vmatmul.mubr.f32.gmra.mrb[0].mxu0 %v3529
      %v3531 = vpop.f32.mrb[0].mxu0
      %v3532 = vadd.f32 %v3369, %v3531
      %v3533 = vpop.f32.mrb[0].mxu0
      %3534 = vmatprep.mubr.f32.mxu0 0.0
      %v3535 = vand.u32 %v2746, 4294901760
      %3536 = vmatmul.mubr.f32.gmra.mrb[0].mxu0 %v3535
      %v3537 = vpop.f32.mrb[0].mxu0
      %v3538 = vadd.f32 %v3377, %v3537
      %v3539 = vpop.f32.mrb[0].mxu0
      %3540 = vmatprep.mubr.f32.mxu0 0.0
      %v3541 = vand.u32 %v2749, 4294901760
      %3542 = vmatmul.mubr.f32.gmra.mrb[0].mxu0 %v3541
      %v3543 = vpop.f32.mrb[0].mxu0
      %v3544 = vadd.f32 %v3385, %v3543
      %v3545 = vpop.f32.mrb[0].mxu0
      %3546 = vmatprep.mubr.f32.mxu0 0.0
      %v3547 = vand.u32 %v2752, 4294901760
      %3548 = vmatmul.mubr.f32.gmra.mrb[0].mxu0 %v3547
      %v3549 = vpop.f32.mrb[0].mxu0
      %v3550 = vadd.f32 %v3393, %v3549
      %v3551 = vpop.f32.mrb[0].mxu0
      %3552 = vmatprep.mubr.f32.mxu0 0.0
      %v3553 = vand.u32 %v2755, 4294901760
      %3554 = vmatmul.mubr.f32.gmra.mrb[0].mxu0 %v3553
      %v3555 = vpop.f32.mrb[0].mxu0
      %v3556 = vadd.f32 %v3401, %v3555
      %v3557 = vpop.f32.mrb[0].mxu0
      %3558 = vdwg.mxu0
      %3559 = vmatprep.subr.mxu0 0.0
      %v3560 = vand.u32 %v2710, 4294901760
      %3561 = vmatpush1.msra.mxu0 %v3560
      %3562 = vmatprep.subr.mxu0 0.0
      %v3563 = vand.u32 %v2711, 4294901760
      %3564 = vmatpush1.msra.mxu0 %v3563
      %3565 = vmatprep.subr.mxu0 0.0
      %v3566 = vand.u32 %v2712, 4294901760
      %3567 = vmatpush1.msra.mxu0 %v3566
      %3568 = vmatprep.subr.mxu0 0.0
      %v3569 = vand.u32 %v2713, 4294901760
      %3570 = vmatpush1.msra.mxu0 %v3569
      %3571 = vmatprep.subr.mxu0 0.0
      %v3572 = vand.u32 %v2714, 4294901760
      %3573 = vmatpush1.msra.mxu0 %v3572
      %3574 = vmatprep.subr.mxu0 0.0
      %v3575 = vand.u32 %v2715, 4294901760
      %3576 = vmatpush1.msra.mxu0 %v3575
      %3577 = vmatprep.subr.mxu0 0.0
      %v3578 = vand.u32 %v2716, 4294901760
      %3579 = vmatpush1.msra.mxu0 %v3578
      %3580 = vmatprep.subr.mxu0 0.0
      %v3581 = vand.u32 %v2717, 4294901760
      %3582 = vmatpush1.msra.mxu0 %v3581
      %3583 = vmatprep.subr.mxu0 0.0
      %v3584 = vand.u32 %v2718, 4294901760
      %3585 = vmatpush1.msra.mxu0 %v3584
      %3586 = vmatprep.subr.mxu0 0.0
      %v3587 = vand.u32 %v2719, 4294901760
      %3588 = vmatpush1.msra.mxu0 %v3587
      %3589 = vmatprep.subr.mxu0 0.0
      %v3590 = vand.u32 %v2720, 4294901760
      %3591 = vmatpush1.msra.mxu0 %v3590
      %3592 = vmatprep.subr.mxu0 0.0
      %v3593 = vand.u32 %v2721, 4294901760
      %3594 = vmatpush1.msra.mxu0 %v3593
      %3595 = vmatprep.subr.mxu0 0.0
      %3596 = vmatpush1.msra.mxu0 0.0
      %3597 = vmatprep.subr.mxu0 0.0
      %3598 = vmatpush1.msra.mxu0 0.0
      %3599 = vmatprep.subr.mxu0 0.0
      %3600 = vmatpush1.msra.mxu0 0.0
      %3601 = vmatprep.subr.mxu0 0.0
      %3602 = vmatpush1.msra.mxu0 0.0
      %3603 = vmatprep.subr.mxu0 0.0
      %3604 = vmatpush1.msra.mxu0 0.0
      %3605 = vmatprep.subr.mxu0 0.0
      %3606 = vmatpush1.msra.mxu0 0.0
      %3607 = vmatprep.subr.mxu0 0.0
      %3608 = vmatpush1.msra.mxu0 0.0
      %3609 = vmatprep.subr.mxu0 0.0
      %3610 = vmatpush1.msra.mxu0 0.0
      %3611 = vmatprep.subr.mxu0 0.0
      %3612 = vmatpush1.msra.mxu0 0.0
      %3613 = vmatprep.subr.mxu0 0.0
      %3614 = vmatpush1.msra.mxu0 0.0
      %3615 = vmatprep.subr.mxu0 0.0
      %3616 = vmatpush1.msra.mxu0 0.0
      %3617 = vmatprep.subr.mxu0 0.0
      %3618 = vmatpush1.msra.mxu0 0.0
      %3619 = vmatprep.subr.mxu0 0.0
      %3620 = vmatpush1.msra.mxu0 0.0
      %3621 = vmatprep.subr.mxu0 0.0
      %3622 = vmatpush1.msra.mxu0 0.0
      %3623 = vmatprep.subr.mxu0 0.0
      %3624 = vmatpush1.msra.mxu0 0.0
      %3625 = vmatprep.subr.mxu0 0.0
      %3626 = vmatpush1.msra.mxu0 0.0
      %3627 = vmatprep.subr.mxu0 0.0
      %3628 = vmatpush1.msra.mxu0 0.0
      %3629 = vmatprep.subr.mxu0 0.0
      %3630 = vmatpush1.msra.mxu0 0.0
      %3631 = vmatprep.subr.mxu0 0.0
      %3632 = vmatpush1.msra.mxu0 0.0
      %3633 = vmatprep.subr.mxu0 0.0
      %3634 = vmatpush1.msra.mxu0 0.0
      %3635 = vmatprep.mubr.f32.mxu0 0.0
      %v3636 = vand.u32 %v2731, 4294901760
      %3637 = vmatmul.mubr.f32.gmra.mrb[0].mxu0 %v3636
      %v3638 = vpop.f32.mrb[0].mxu0
      %v3639 = vadd.f32 %v3508, %v3638
      %v3640 = vpop.f32.mrb[0].mxu0
      %3641 = vmatprep.mubr.f32.mxu0 0.0
      %v3642 = vand.u32 %v2734, 4294901760
      %3643 = vmatmul.mubr.f32.gmra.mrb[0].mxu0 %v3642
      %v3644 = vpop.f32.mrb[0].mxu0
      %v3645 = vadd.f32 %v3514, %v3644
      %v3646 = vpop.f32.mrb[0].mxu0
      %3647 = vmatprep.mubr.f32.mxu0 0.0
      %v3648 = vand.u32 %v2737, 4294901760
      %3649 = vmatmul.mubr.f32.gmra.mrb[0].mxu0 %v3648
      %v3650 = vpop.f32.mrb[0].mxu0
      %v3651 = vadd.f32 %v3520, %v3650
      %v3652 = vpop.f32.mrb[0].mxu0
      %3653 = vmatprep.mubr.f32.mxu0 0.0
      %v3654 = vand.u32 %v2740, 4294901760
      %3655 = vmatmul.mubr.f32.gmra.mrb[0].mxu0 %v3654
      %v3656 = vpop.f32.mrb[0].mxu0
      %v3657 = vadd.f32 %v3526, %v3656
      %v3658 = vpop.f32.mrb[0].mxu0
      %3659 = vmatprep.mubr.f32.mxu0 0.0
      %v3660 = vand.u32 %v2743, 4294901760
      %3661 = vmatmul.mubr.f32.gmra.mrb[0].mxu0 %v3660
      %v3662 = vpop.f32.mrb[0].mxu0
      %v3663 = vadd.f32 %v3532, %v3662
      %v3664 = vpop.f32.mrb[0].mxu0
      %3665 = vmatprep.mubr.f32.mxu0 0.0
      %v3666 = vand.u32 %v2746, 4294901760
      %3667 = vmatmul.mubr.f32.gmra.mrb[0].mxu0 %v3666
      %v3668 = vpop.f32.mrb[0].mxu0
      %v3669 = vadd.f32 %v3538, %v3668
      %v3670 = vpop.f32.mrb[0].mxu0
      %3671 = vmatprep.mubr.f32.mxu0 0.0
      %v3672 = vand.u32 %v2749, 4294901760
      %3673 = vmatmul.mubr.f32.gmra.mrb[0].mxu0 %v3672
      %v3674 = vpop.f32.mrb[0].mxu0
      %v3675 = vadd.f32 %v3544, %v3674
      %v3676 = vpop.f32.mrb[0].mxu0
      %3677 = vmatprep.mubr.f32.mxu0 0.0
      %v3678 = vand.u32 %v2752, 4294901760
      %3679 = vmatmul.mubr.f32.gmra.mrb[0].mxu0 %v3678
      %v3680 = vpop.f32.mrb[0].mxu0
      %v3681 = vadd.f32 %v3550, %v3680
      %v3682 = vpop.f32.mrb[0].mxu0
      %3683 = vmatprep.mubr.f32.mxu0 0.0
      %v3684 = vand.u32 %v2755, 4294901760
      %3685 = vmatmul.mubr.f32.gmra.mrb[0].mxu0 %v3684
      %v3686 = vpop.f32.mrb[0].mxu0
      %v3687 = vadd.f32 %v3556, %v3686
      %v3688 = vpop.f32.mrb[0].mxu0
      %3689 = vdwg.mxu0
      %v3690 = vmax.f32 %v3639, 0.0
      %v3691 = vmax.f32 %v3645, 0.0
      %v3692 = vmax.f32 %v3651, 0.0
      %v3693 = vmax.f32 %v3657, 0.0
      %v3694 = vmax.f32 %v3663, 0.0
      %v3695 = vmax.f32 %v3669, 0.0
      %v3696 = vmax.f32 %v3675, 0.0
      %v3697 = vmax.f32 %v3681, 0.0
      %v3698 = vmax.f32 %v3687, 0.0
      %v3699 = vld [vmem:[%s3] sm:$0xff]
      %vm3700 = vcmask 588800
      %v3702 = vsel %vm3700, %v3699, 0
      %3704 = vmatprep.subr.mxu0 0.0
      %v3705 = vand.u32 %v3690, 4294901760
      %3706 = vmatpush1.msra.mxu0 %v3705
      %3707 = vmatprep.subr.mxu0 0.0
      %v3708 = vand.u32 %v3691, 4294901760
      %3709 = vmatpush1.msra.mxu0 %v3708
      %3710 = vmatprep.subr.mxu0 0.0
      %v3711 = vand.u32 %v3692, 4294901760
      %3712 = vmatpush1.msra.mxu0 %v3711
      %3713 = vmatprep.subr.mxu0 0.0
      %v3714 = vand.u32 %v3693, 4294901760
      %3715 = vmatpush1.msra.mxu0 %v3714
      %3716 = vmatprep.subr.mxu0 0.0
      %v3717 = vand.u32 %v3694, 4294901760
      %3718 = vmatpush1.msra.mxu0 %v3717
      %3719 = vmatprep.subr.mxu0 0.0
      %v3720 = vand.u32 %v3695, 4294901760
      %3721 = vmatpush1.msra.mxu0 %v3720
      %3722 = vmatprep.subr.mxu0 0.0
      %v3723 = vand.u32 %v3696, 4294901760
      %3724 = vmatpush1.msra.mxu0 %v3723
      %3725 = vmatprep.subr.mxu0 0.0
      %v3726 = vand.u32 %v3697, 4294901760
      %3727 = vmatpush1.msra.mxu0 %v3726
      %3728 = vmatprep.subr.mxu0 0.0
      %v3729 = vand.u32 %v3698, 4294901760
      %3730 = vmatpush1.msra.mxu0 %v3729
      %3731 = vmatprep.subr.mxu0 0.0
      %3732 = vmatpush1.msra.mxu0 0.0
      %3733 = vmatprep.subr.mxu0 0.0
      %3734 = vmatpush1.msra.mxu0 0.0
      %3735 = vmatprep.subr.mxu0 0.0
      %3736 = vmatpush1.msra.mxu0 0.0
      %3737 = vmatprep.subr.mxu0 0.0
      %3738 = vmatpush1.msra.mxu0 0.0
      %3739 = vmatprep.subr.mxu0 0.0
      %3740 = vmatpush1.msra.mxu0 0.0
      %3741 = vmatprep.subr.mxu0 0.0
      %3742 = vmatpush1.msra.mxu0 0.0
      %3743 = vmatprep.subr.mxu0 0.0
      %3744 = vmatpush1.msra.mxu0 0.0
      %3745 = vmatprep.subr.mxu0 0.0
      %3746 = vmatpush1.msra.mxu0 0.0
      %3747 = vmatprep.subr.mxu0 0.0
      %3748 = vmatpush1.msra.mxu0 0.0
      %3749 = vmatprep.subr.mxu0 0.0
      %3750 = vmatpush1.msra.mxu0 0.0
      %3751 = vmatprep.subr.mxu0 0.0
      %3752 = vmatpush1.msra.mxu0 0.0
      %3753 = vmatprep.subr.mxu0 0.0
      %3754 = vmatpush1.msra.mxu0 0.0
      %3755 = vmatprep.subr.mxu0 0.0
      %3756 = vmatpush1.msra.mxu0 0.0
      %3757 = vmatprep.subr.mxu0 0.0
      %3758 = vmatpush1.msra.mxu0 0.0
      %3759 = vmatprep.subr.mxu0 0.0
      %3760 = vmatpush1.msra.mxu0 0.0
      %3761 = vmatprep.subr.mxu0 0.0
      %3762 = vmatpush1.msra.mxu0 0.0
      %3763 = vmatprep.subr.mxu0 0.0
      %3764 = vmatpush1.msra.mxu0 0.0
      %3765 = vmatprep.subr.mxu0 0.0
      %3766 = vmatpush1.msra.mxu0 0.0
      %3767 = vmatprep.subr.mxu0 0.0
      %3768 = vmatpush1.msra.mxu0 0.0
      %3769 = vmatprep.subr.mxu0 0.0
      %3770 = vmatpush1.msra.mxu0 0.0
      %3771 = vmatprep.subr.mxu0 0.0
      %3772 = vmatpush1.msra.mxu0 0.0
      %3773 = vmatprep.subr.mxu0 0.0
      %3774 = vmatpush1.msra.mxu0 0.0
      %3775 = vmatprep.subr.mxu0 0.0
      %3776 = vmatpush1.msra.mxu0 0.0
      %3777 = vmatprep.mubr.f32.mxu0 0.0
      %v3778 = vand.u32 %v3702, 4294901760
      %v3779 = vsub.f32 %v3702, %v3778
      %v3780 = vand.u32 %v3779, 4294901760
      %v3781 = vsub.f32 %v3779, %v3780
      %v3782 = vand.u32 %v3781, 4294901760
      %3783 = vmatmul.mubr.f32.gmra.mrb[0].mxu0 %v3782
      %v3784 = vpop.f32.mrb[0].mxu0
      %v3785 = vadd.f32 0.0, %v3784
      %v3786 = vpop.f32.mrb[0].mxu0
      %3787 = vdwg.mxu0
      %3788 = vmatprep.subr.mxu0 0.0
      %v3789 = vand.u32 %v3690, 4294901760
      %v3790 = vsub.f32 %v3690, %v3789
      %v3791 = vand.u32 %v3790, 4294901760
      %v3792 = vsub.f32 %v3790, %v3791
      %v3793 = vand.u32 %v3792, 4294901760
      %3794 = vmatpush1.msra.mxu0 %v3793
      %3795 = vmatprep.subr.mxu0 0.0
      %v3796 = vand.u32 %v3691, 4294901760
      %v3797 = vsub.f32 %v3691, %v3796
      %v3798 = vand.u32 %v3797, 4294901760
      %v3799 = vsub.f32 %v3797, %v3798
      %v3800 = vand.u32 %v3799, 4294901760
      %3801 = vmatpush1.msra.mxu0 %v3800
      %3802 = vmatprep.subr.mxu0 0.0
      %v3803 = vand.u32 %v3692, 4294901760
      %v3804 = vsub.f32 %v3692, %v3803
      %v3805 = vand.u32 %v3804, 4294901760
      %v3806 = vsub.f32 %v3804, %v3805
      %v3807 = vand.u32 %v3806, 4294901760
      %3808 = vmatpush1.msra.mxu0 %v3807
      %3809 = vmatprep.subr.mxu0 0.0
      %v3810 = vand.u32 %v3693, 4294901760
      %v3811 = vsub.f32 %v3693, %v3810
      %v3812 = vand.u32 %v3811, 4294901760
      %v3813 = vsub.f32 %v3811, %v3812
      %v3814 = vand.u32 %v3813, 4294901760
      %3815 = vmatpush1.msra.mxu0 %v3814
      %3816 = vmatprep.subr.mxu0 0.0
      %v3817 = vand.u32 %v3694, 4294901760
      %v3818 = vsub.f32 %v3694, %v3817
      %v3819 = vand.u32 %v3818, 4294901760
      %v3820 = vsub.f32 %v3818, %v3819
      %v3821 = vand.u32 %v3820, 4294901760
      %3822 = vmatpush1.msra.mxu0 %v3821
      %3823 = vmatprep.subr.mxu0 0.0
      %v3824 = vand.u32 %v3695, 4294901760
      %v3825 = vsub.f32 %v3695, %v3824
      %v3826 = vand.u32 %v3825, 4294901760
      %v3827 = vsub.f32 %v3825, %v3826
      %v3828 = vand.u32 %v3827, 4294901760
      %3829 = vmatpush1.msra.mxu0 %v3828
      %3830 = vmatprep.subr.mxu0 0.0
      %v3831 = vand.u32 %v3696, 4294901760
      %v3832 = vsub.f32 %v3696, %v3831
      %v3833 = vand.u32 %v3832, 4294901760
      %v3834 = vsub.f32 %v3832, %v3833
      %v3835 = vand.u32 %v3834, 4294901760
      %3836 = vmatpush1.msra.mxu0 %v3835
      %3837 = vmatprep.subr.mxu0 0.0
      %v3838 = vand.u32 %v3697, 4294901760
      %v3839 = vsub.f32 %v3697, %v3838
      %v3840 = vand.u32 %v3839, 4294901760
      %v3841 = vsub.f32 %v3839, %v3840
      %v3842 = vand.u32 %v3841, 4294901760
      %3843 = vmatpush1.msra.mxu0 %v3842
      %3844 = vmatprep.subr.mxu0 0.0
      %v3845 = vand.u32 %v3698, 4294901760
      %v3846 = vsub.f32 %v3698, %v3845
      %v3847 = vand.u32 %v3846, 4294901760
      %v3848 = vsub.f32 %v3846, %v3847
      %v3849 = vand.u32 %v3848, 4294901760
      %3850 = vmatpush1.msra.mxu0 %v3849
      %3851 = vmatprep.subr.mxu0 0.0
      %3852 = vmatpush1.msra.mxu0 0.0
      %3853 = vmatprep.subr.mxu0 0.0
      %3854 = vmatpush1.msra.mxu0 0.0
      %3855 = vmatprep.subr.mxu0 0.0
      %3856 = vmatpush1.msra.mxu0 0.0
      %3857 = vmatprep.subr.mxu0 0.0
      %3858 = vmatpush1.msra.mxu0 0.0
      %3859 = vmatprep.subr.mxu0 0.0
      %3860 = vmatpush1.msra.mxu0 0.0
      %3861 = vmatprep.subr.mxu0 0.0
      %3862 = vmatpush1.msra.mxu0 0.0
      %3863 = vmatprep.subr.mxu0 0.0
      %3864 = vmatpush1.msra.mxu0 0.0
      %3865 = vmatprep.subr.mxu0 0.0
      %3866 = vmatpush1.msra.mxu0 0.0
      %3867 = vmatprep.subr.mxu0 0.0
      %3868 = vmatpush1.msra.mxu0 0.0
      %3869 = vmatprep.subr.mxu0 0.0
      %3870 = vmatpush1.msra.mxu0 0.0
      %3871 = vmatprep.subr.mxu0 0.0
      %3872 = vmatpush1.msra.mxu0 0.0
      %3873 = vmatprep.subr.mxu0 0.0
      %3874 = vmatpush1.msra.mxu0 0.0
      %3875 = vmatprep.subr.mxu0 0.0
      %3876 = vmatpush1.msra.mxu0 0.0
      %3877 = vmatprep.subr.mxu0 0.0
      %3878 = vmatpush1.msra.mxu0 0.0
      %3879 = vmatprep.subr.mxu0 0.0
      %3880 = vmatpush1.msra.mxu0 0.0
      %3881 = vmatprep.subr.mxu0 0.0
      %3882 = vmatpush1.msra.mxu0 0.0
      %3883 = vmatprep.subr.mxu0 0.0
      %3884 = vmatpush1.msra.mxu0 0.0
      %3885 = vmatprep.subr.mxu0 0.0
      %3886 = vmatpush1.msra.mxu0 0.0
      %3887 = vmatprep.subr.mxu0 0.0
      %3888 = vmatpush1.msra.mxu0 0.0
      %3889 = vmatprep.subr.mxu0 0.0
      %3890 = vmatpush1.msra.mxu0 0.0
      %3891 = vmatprep.subr.mxu0 0.0
      %3892 = vmatpush1.msra.mxu0 0.0
      %3893 = vmatprep.subr.mxu0 0.0
      %3894 = vmatpush1.msra.mxu0 0.0
      %3895 = vmatprep.subr.mxu0 0.0
      %3896 = vmatpush1.msra.mxu0 0.0
      %3897 = vmatprep.mubr.f32.mxu0 0.0
      %v3898 = vand.u32 %v3702, 4294901760
      %3899 = vmatmul.mubr.f32.gmra.mrb[0].mxu0 %v3898
      %v3900 = vpop.f32.mrb[0].mxu0
      %v3901 = vadd.f32 %v3785, %v3900
      %v3902 = vpop.f32.mrb[0].mxu0
      %3903 = vdwg.mxu0
      %3904 = vmatprep.subr.mxu0 0.0
      %v3905 = vand.u32 %v3690, 4294901760
      %v3906 = vsub.f32 %v3690, %v3905
      %3907 = vmatpush1.msra.mxu0 %v3906
      %3908 = vmatprep.subr.mxu0 0.0
      %v3909 = vand.u32 %v3691, 4294901760
      %v3910 = vsub.f32 %v3691, %v3909
      %3911 = vmatpush1.msra.mxu0 %v3910
      %3912 = vmatprep.subr.mxu0 0.0
      %v3913 = vand.u32 %v3692, 4294901760
      %v3914 = vsub.f32 %v3692, %v3913
      %3915 = vmatpush1.msra.mxu0 %v3914
      %3916 = vmatprep.subr.mxu0 0.0
      %v3917 = vand.u32 %v3693, 4294901760
      %v3918 = vsub.f32 %v3693, %v3917
      %3919 = vmatpush1.msra.mxu0 %v3918
      %3920 = vmatprep.subr.mxu0 0.0
      %v3921 = vand.u32 %v3694, 4294901760
      %v3922 = vsub.f32 %v3694, %v3921
      %3923 = vmatpush1.msra.mxu0 %v3922
      %3924 = vmatprep.subr.mxu0 0.0
      %v3925 = vand.u32 %v3695, 4294901760
      %v3926 = vsub.f32 %v3695, %v3925
      %3927 = vmatpush1.msra.mxu0 %v3926
      %3928 = vmatprep.subr.mxu0 0.0
      %v3929 = vand.u32 %v3696, 4294901760
      %v3930 = vsub.f32 %v3696, %v3929
      %3931 = vmatpush1.msra.mxu0 %v3930
      %3932 = vmatprep.subr.mxu0 0.0
      %v3933 = vand.u32 %v3697, 4294901760
      %v3934 = vsub.f32 %v3697, %v3933
      %3935 = vmatpush1.msra.mxu0 %v3934
      %3936 = vmatprep.subr.mxu0 0.0
      %v3937 = vand.u32 %v3698, 4294901760
      %v3938 = vsub.f32 %v3698, %v3937
      %3939 = vmatpush1.msra.mxu0 %v3938
      %3940 = vmatprep.subr.mxu0 0.0
      %3941 = vmatpush1.msra.mxu0 0.0
      %3942 = vmatprep.subr.mxu0 0.0
      %3943 = vmatpush1.msra.mxu0 0.0
      %3944 = vmatprep.subr.mxu0 0.0
      %3945 = vmatpush1.msra.mxu0 0.0
      %3946 = vmatprep.subr.mxu0 0.0
      %3947 = vmatpush1.msra.mxu0 0.0
      %3948 = vmatprep.subr.mxu0 0.0
      %3949 = vmatpush1.msra.mxu0 0.0
      %3950 = vmatprep.subr.mxu0 0.0
      %3951 = vmatpush1.msra.mxu0 0.0
      %3952 = vmatprep.subr.mxu0 0.0
      %3953 = vmatpush1.msra.mxu0 0.0
      %3954 = vmatprep.subr.mxu0 0.0
      %3955 = vmatpush1.msra.mxu0 0.0
      %3956 = vmatprep.subr.mxu0 0.0
      %3957 = vmatpush1.msra.mxu0 0.0
      %3958 = vmatprep.subr.mxu0 0.0
      %3959 = vmatpush1.msra.mxu0 0.0
      %3960 = vmatprep.subr.mxu0 0.0
      %3961 = vmatpush1.msra.mxu0 0.0
      %3962 = vmatprep.subr.mxu0 0.0
      %3963 = vmatpush1.msra.mxu0 0.0
      %3964 = vmatprep.subr.mxu0 0.0
      %3965 = vmatpush1.msra.mxu0 0.0
      %3966 = vmatprep.subr.mxu0 0.0
      %3967 = vmatpush1.msra.mxu0 0.0
      %3968 = vmatprep.subr.mxu0 0.0
      %3969 = vmatpush1.msra.mxu0 0.0
      %3970 = vmatprep.subr.mxu0 0.0
      %3971 = vmatpush1.msra.mxu0 0.0
      %3972 = vmatprep.subr.mxu0 0.0
      %3973 = vmatpush1.msra.mxu0 0.0
      %3974 = vmatprep.subr.mxu0 0.0
      %3975 = vmatpush1.msra.mxu0 0.0
      %3976 = vmatprep.subr.mxu0 0.0
      %3977 = vmatpush1.msra.mxu0 0.0
      %3978 = vmatprep.subr.mxu0 0.0
      %3979 = vmatpush1.msra.mxu0 0.0
      %3980 = vmatprep.subr.mxu0 0.0
      %3981 = vmatpush1.msra.mxu0 0.0
      %3982 = vmatprep.subr.mxu0 0.0
      %3983 = vmatpush1.msra.mxu0 0.0
      %3984 = vmatprep.subr.mxu0 0.0
      %3985 = vmatpush1.msra.mxu0 0.0
      %3986 = vmatprep.mubr.f32.mxu0 0.0
      %v3987 = vand.u32 %v3702, 4294901760
      %v3988 = vsub.f32 %v3702, %v3987
      %3989 = vmatmul.mubr.f32.gmra.mrb[0].mxu0 %v3988
      %v3990 = vpop.f32.mrb[0].mxu0
      %v3991 = vadd.f32 %v3901, %v3990
      %v3992 = vpop.f32.mrb[0].mxu0
      %3993 = vdwg.mxu0
      %3994 = vmatprep.subr.mxu0 0.0
      %v3995 = vand.u32 %v3690, 4294901760
      %3996 = vmatpush1.msra.mxu0 %v3995
      %3997 = vmatprep.subr.mxu0 0.0
      %v3998 = vand.u32 %v3691, 4294901760
      %3999 = vmatpush1.msra.mxu0 %v3998
      %4000 = vmatprep.subr.mxu0 0.0
      %v4001 = vand.u32 %v3692, 4294901760
      %4002 = vmatpush1.msra.mxu0 %v4001
      %4003 = vmatprep.subr.mxu0 0.0
      %v4004 = vand.u32 %v3693, 4294901760
      %4005 = vmatpush1.msra.mxu0 %v4004
      %4006 = vmatprep.subr.mxu0 0.0
      %v4007 = vand.u32 %v3694, 4294901760
      %4008 = vmatpush1.msra.mxu0 %v4007
      %4009 = vmatprep.subr.mxu0 0.0
      %v4010 = vand.u32 %v3695, 4294901760
      %4011 = vmatpush1.msra.mxu0 %v4010
      %4012 = vmatprep.subr.mxu0 0.0
      %v4013 = vand.u32 %v3696, 4294901760
      %4014 = vmatpush1.msra.mxu0 %v4013
      %4015 = vmatprep.subr.mxu0 0.0
      %v4016 = vand.u32 %v3697, 4294901760
      %4017 = vmatpush1.msra.mxu0 %v4016
      %4018 = vmatprep.subr.mxu0 0.0
      %v4019 = vand.u32 %v3698, 4294901760
      %4020 = vmatpush1.msra.mxu0 %v4019
      %4021 = vmatprep.subr.mxu0 0.0
      %4022 = vmatpush1.msra.mxu0 0.0
      %4023 = vmatprep.subr.mxu0 0.0
      %4024 = vmatpush1.msra.mxu0 0.0
      %4025 = vmatprep.subr.mxu0 0.0
      %4026 = vmatpush1.msra.mxu0 0.0
      %4027 = vmatprep.subr.mxu0 0.0
      %4028 = vmatpush1.msra.mxu0 0.0
      %4029 = vmatprep.subr.mxu0 0.0
      %4030 = vmatpush1.msra.mxu0 0.0
      %4031 = vmatprep.subr.mxu0 0.0
      %4032 = vmatpush1.msra.mxu0 0.0
      %4033 = vmatprep.subr.mxu0 0.0
      %4034 = vmatpush1.msra.mxu0 0.0
      %4035 = vmatprep.subr.mxu0 0.0
      %4036 = vmatpush1.msra.mxu0 0.0
      %4037 = vmatprep.subr.mxu0 0.0
      %4038 = vmatpush1.msra.mxu0 0.0
      %4039 = vmatprep.subr.mxu0 0.0
      %4040 = vmatpush1.msra.mxu0 0.0
      %4041 = vmatprep.subr.mxu0 0.0
      %4042 = vmatpush1.msra.mxu0 0.0
      %4043 = vmatprep.subr.mxu0 0.0
      %4044 = vmatpush1.msra.mxu0 0.0
      %4045 = vmatprep.subr.mxu0 0.0
      %4046 = vmatpush1.msra.mxu0 0.0
      %4047 = vmatprep.subr.mxu0 0.0
      %4048 = vmatpush1.msra.mxu0 0.0
      %4049 = vmatprep.subr.mxu0 0.0
      %4050 = vmatpush1.msra.mxu0 0.0
      %4051 = vmatprep.subr.mxu0 0.0
      %4052 = vmatpush1.msra.mxu0 0.0
      %4053 = vmatprep.subr.mxu0 0.0
      %4054 = vmatpush1.msra.mxu0 0.0
      %4055 = vmatprep.subr.mxu0 0.0
      %4056 = vmatpush1.msra.mxu0 0.0
      %4057 = vmatprep.subr.mxu0 0.0
      %4058 = vmatpush1.msra.mxu0 0.0
      %4059 = vmatprep.subr.mxu0 0.0
      %4060 = vmatpush1.msra.mxu0 0.0
      %4061 = vmatprep.subr.mxu0 0.0
      %4062 = vmatpush1.msra.mxu0 0.0
      %4063 = vmatprep.subr.mxu0 0.0
      %4064 = vmatpush1.msra.mxu0 0.0
      %4065 = vmatprep.subr.mxu0 0.0
      %4066 = vmatpush1.msra.mxu0 0.0
      %4067 = vmatprep.mubr.f32.mxu0 0.0
      %v4068 = vand.u32 %v3702, 4294901760
      %v4069 = vsub.f32 %v3702, %v4068
      %v4070 = vand.u32 %v4069, 4294901760
      %4071 = vmatmul.mubr.f32.gmra.mrb[0].mxu0 %v4070
      %v4072 = vpop.f32.mrb[0].mxu0
      %v4073 = vadd.f32 %v3991, %v4072
      %v4074 = vpop.f32.mrb[0].mxu0
      %4075 = vdwg.mxu0
      %4076 = vmatprep.subr.mxu0 0.0
      %v4077 = vand.u32 %v3690, 4294901760
      %v4078 = vsub.f32 %v3690, %v4077
      %v4079 = vand.u32 %v4078, 4294901760
      %4080 = vmatpush1.msra.mxu0 %v4079
      %4081 = vmatprep.subr.mxu0 0.0
      %v4082 = vand.u32 %v3691, 4294901760
      %v4083 = vsub.f32 %v3691, %v4082
      %v4084 = vand.u32 %v4083, 4294901760
      %4085 = vmatpush1.msra.mxu0 %v4084
      %4086 = vmatprep.subr.mxu0 0.0
      %v4087 = vand.u32 %v3692, 4294901760
      %v4088 = vsub.f32 %v3692, %v4087
      %v4089 = vand.u32 %v4088, 4294901760
      %4090 = vmatpush1.msra.mxu0 %v4089
      %4091 = vmatprep.subr.mxu0 0.0
      %v4092 = vand.u32 %v3693, 4294901760
      %v4093 = vsub.f32 %v3693, %v4092
      %v4094 = vand.u32 %v4093, 4294901760
      %4095 = vmatpush1.msra.mxu0 %v4094
      %4096 = vmatprep.subr.mxu0 0.0
      %v4097 = vand.u32 %v3694, 4294901760
      %v4098 = vsub.f32 %v3694, %v4097
      %v4099 = vand.u32 %v4098, 4294901760
      %4100 = vmatpush1.msra.mxu0 %v4099
      %4101 = vmatprep.subr.mxu0 0.0
      %v4102 = vand.u32 %v3695, 4294901760
      %v4103 = vsub.f32 %v3695, %v4102
      %v4104 = vand.u32 %v4103, 4294901760
      %4105 = vmatpush1.msra.mxu0 %v4104
      %4106 = vmatprep.subr.mxu0 0.0
      %v4107 = vand.u32 %v3696, 4294901760
      %v4108 = vsub.f32 %v3696, %v4107
      %v4109 = vand.u32 %v4108, 4294901760
      %4110 = vmatpush1.msra.mxu0 %v4109
      %4111 = vmatprep.subr.mxu0 0.0
      %v4112 = vand.u32 %v3697, 4294901760
      %v4113 = vsub.f32 %v3697, %v4112
      %v4114 = vand.u32 %v4113, 4294901760
      %4115 = vmatpush1.msra.mxu0 %v4114
      %4116 = vmatprep.subr.mxu0 0.0
      %v4117 = vand.u32 %v3698, 4294901760
      %v4118 = vsub.f32 %v3698, %v4117
      %v4119 = vand.u32 %v4118, 4294901760
      %4120 = vmatpush1.msra.mxu0 %v4119
      %4121 = vmatprep.subr.mxu0 0.0
      %4122 = vmatpush1.msra.mxu0 0.0
      %4123 = vmatprep.subr.mxu0 0.0
      %4124 = vmatpush1.msra.mxu0 0.0
      %4125 = vmatprep.subr.mxu0 0.0
      %4126 = vmatpush1.msra.mxu0 0.0
      %4127 = vmatprep.subr.mxu0 0.0
      %4128 = vmatpush1.msra.mxu0 0.0
      %4129 = vmatprep.subr.mxu0 0.0
      %4130 = vmatpush1.msra.mxu0 0.0
      %4131 = vmatprep.subr.mxu0 0.0
      %4132 = vmatpush1.msra.mxu0 0.0
      %4133 = vmatprep.subr.mxu0 0.0
      %4134 = vmatpush1.msra.mxu0 0.0
      %4135 = vmatprep.subr.mxu0 0.0
      %4136 = vmatpush1.msra.mxu0 0.0
      %4137 = vmatprep.subr.mxu0 0.0
      %4138 = vmatpush1.msra.mxu0 0.0
      %4139 = vmatprep.subr.mxu0 0.0
      %4140 = vmatpush1.msra.mxu0 0.0
      %4141 = vmatprep.subr.mxu0 0.0
      %4142 = vmatpush1.msra.mxu0 0.0
      %4143 = vmatprep.subr.mxu0 0.0
      %4144 = vmatpush1.msra.mxu0 0.0
      %4145 = vmatprep.subr.mxu0 0.0
      %4146 = vmatpush1.msra.mxu0 0.0
      %4147 = vmatprep.subr.mxu0 0.0
      %4148 = vmatpush1.msra.mxu0 0.0
      %4149 = vmatprep.subr.mxu0 0.0
      %4150 = vmatpush1.msra.mxu0 0.0
      %4151 = vmatprep.subr.mxu0 0.0
      %4152 = vmatpush1.msra.mxu0 0.0
      %4153 = vmatprep.subr.mxu0 0.0
      %4154 = vmatpush1.msra.mxu0 0.0
      %4155 = vmatprep.subr.mxu0 0.0
      %4156 = vmatpush1.msra.mxu0 0.0
      %4157 = vmatprep.subr.mxu0 0.0
      %4158 = vmatpush1.msra.mxu0 0.0
      %4159 = vmatprep.subr.mxu0 0.0
      %4160 = vmatpush1.msra.mxu0 0.0
      %4161 = vmatprep.subr.mxu0 0.0
      %4162 = vmatpush1.msra.mxu0 0.0
      %4163 = vmatprep.subr.mxu0 0.0
      %4164 = vmatpush1.msra.mxu0 0.0
      %4165 = vmatprep.subr.mxu0 0.0
      %4166 = vmatpush1.msra.mxu0 0.0
      %4167 = vmatprep.mubr.f32.mxu0 0.0
      %v4168 = vand.u32 %v3702, 4294901760
      %4169 = vmatmul.mubr.f32.gmra.mrb[0].mxu0 %v4168
      %v4170 = vpop.f32.mrb[0].mxu0
      %v4171 = vadd.f32 %v4073, %v4170
      %v4172 = vpop.f32.mrb[0].mxu0
      %4173 = vdwg.mxu0
      %4174 = vmatprep.subr.mxu0 0.0
      %v4175 = vand.u32 %v3690, 4294901760
      %4176 = vmatpush1.msra.mxu0 %v4175
      %4177 = vmatprep.subr.mxu0 0.0
      %v4178 = vand.u32 %v3691, 4294901760
      %4179 = vmatpush1.msra.mxu0 %v4178
      %4180 = vmatprep.subr.mxu0 0.0
      %v4181 = vand.u32 %v3692, 4294901760
      %4182 = vmatpush1.msra.mxu0 %v4181
      %4183 = vmatprep.subr.mxu0 0.0
      %v4184 = vand.u32 %v3693, 4294901760
      %4185 = vmatpush1.msra.mxu0 %v4184
      %4186 = vmatprep.subr.mxu0 0.0
      %v4187 = vand.u32 %v3694, 4294901760
      %4188 = vmatpush1.msra.mxu0 %v4187
      %4189 = vmatprep.subr.mxu0 0.0
      %v4190 = vand.u32 %v3695, 4294901760
      %4191 = vmatpush1.msra.mxu0 %v4190
      %4192 = vmatprep.subr.mxu0 0.0
      %v4193 = vand.u32 %v3696, 4294901760
      %4194 = vmatpush1.msra.mxu0 %v4193
      %4195 = vmatprep.subr.mxu0 0.0
      %v4196 = vand.u32 %v3697, 4294901760
      %4197 = vmatpush1.msra.mxu0 %v4196
      %4198 = vmatprep.subr.mxu0 0.0
      %v4199 = vand.u32 %v3698, 4294901760
      %4200 = vmatpush1.msra.mxu0 %v4199
      %4201 = vmatprep.subr.mxu0 0.0
      %4202 = vmatpush1.msra.mxu0 0.0
      %4203 = vmatprep.subr.mxu0 0.0
      %4204 = vmatpush1.msra.mxu0 0.0
      %4205 = vmatprep.subr.mxu0 0.0
      %4206 = vmatpush1.msra.mxu0 0.0
      %4207 = vmatprep.subr.mxu0 0.0
      %4208 = vmatpush1.msra.mxu0 0.0
      %4209 = vmatprep.subr.mxu0 0.0
      %4210 = vmatpush1.msra.mxu0 0.0
      %4211 = vmatprep.subr.mxu0 0.0
      %4212 = vmatpush1.msra.mxu0 0.0
      %4213 = vmatprep.subr.mxu0 0.0
      %4214 = vmatpush1.msra.mxu0 0.0
      %4215 = vmatprep.subr.mxu0 0.0
      %4216 = vmatpush1.msra.mxu0 0.0
      %4217 = vmatprep.subr.mxu0 0.0
      %4218 = vmatpush1.msra.mxu0 0.0
      %4219 = vmatprep.subr.mxu0 0.0
      %4220 = vmatpush1.msra.mxu0 0.0
      %4221 = vmatprep.subr.mxu0 0.0
      %4222 = vmatpush1.msra.mxu0 0.0
      %4223 = vmatprep.subr.mxu0 0.0
      %4224 = vmatpush1.msra.mxu0 0.0
      %4225 = vmatprep.subr.mxu0 0.0
      %4226 = vmatpush1.msra.mxu0 0.0
      %4227 = vmatprep.subr.mxu0 0.0
      %4228 = vmatpush1.msra.mxu0 0.0
      %4229 = vmatprep.subr.mxu0 0.0
      %4230 = vmatpush1.msra.mxu0 0.0
      %4231 = vmatprep.subr.mxu0 0.0
      %4232 = vmatpush1.msra.mxu0 0.0
      %4233 = vmatprep.subr.mxu0 0.0
      %4234 = vmatpush1.msra.mxu0 0.0
      %4235 = vmatprep.subr.mxu0 0.0
      %4236 = vmatpush1.msra.mxu0 0.0
      %4237 = vmatprep.subr.mxu0 0.0
      %4238 = vmatpush1.msra.mxu0 0.0
      %4239 = vmatprep.subr.mxu0 0.0
      %4240 = vmatpush1.msra.mxu0 0.0
      %4241 = vmatprep.subr.mxu0 0.0
      %4242 = vmatpush1.msra.mxu0 0.0
      %4243 = vmatprep.subr.mxu0 0.0
      %4244 = vmatpush1.msra.mxu0 0.0
      %4245 = vmatprep.subr.mxu0 0.0
      %4246 = vmatpush1.msra.mxu0 0.0
      %4247 = vmatprep.mubr.f32.mxu0 0.0
      %v4248 = vand.u32 %v3702, 4294901760
      %4249 = vmatmul.mubr.f32.gmra.mrb[0].mxu0 %v4248
      %v4250 = vpop.f32.mrb[0].mxu0
      %v4251 = vadd.f32 %v4171, %v4250
      %v4252 = vpop.f32.mrb[0].mxu0
      %4253 = vdwg.mxu0
      %v4255 = vrot.slane %v4251, 1
      %4256 = vrot.lane.b32.xlu0 %v4255, 64
      %v4257 = vpop.permute.xlu0 %4256
      %v4259 = vrot.slane %v4251, 2
      %v4261 = vrot.slane %v4251, 3
      %4262 = vrot.lane.b32.xlu0 %v4261, 64
      %v4263 = vpop.permute.xlu0 %4262
      %v4265 = vrot.slane %v4251, 4
      %v4267 = vrot.slane %v4251, 5
      %4268 = vrot.lane.b32.xlu0 %v4267, 64
      %v4269 = vpop.permute.xlu0 %4268
      %v4271 = vrot.slane %v4251, 6
      %v4273 = vrot.slane %v4251, 7
      %4274 = vrot.lane.b32.xlu0 %v4273, 64
      %v4275 = vpop.permute.xlu0 %4274
      %v4277 = vsel %vm2700, %v4251, %v4257
      %v4278 = vsel %vm2700, %v4259, %v4263
      %v4279 = vsel %vm2700, %v4265, %v4269
      %v4280 = vsel %vm2700, %v4271, %v4275
      %v4281 = vld [vmem:[%s10] sm:$0xff]
      %v4282 = vld [vmem:[%s10 + $0x8] sm:$0xff]
      %v4283 = vld [vmem:[%s10 + $0x10] sm:$0xff]
      %v4284 = vld [vmem:[%s10 + $0x18] sm:$0xff]
      %v4285 = vld [vmem:[%s10 + $0x20] sm:$0xff]
      %v4286 = vld [vmem:[%s10 + $0x28] sm:$0xff]
      %v4287 = vld [vmem:[%s10 + $0x30] sm:$0xff]
      %v4288 = vld [vmem:[%s10 + $0x38] sm:$0xff]
      %v4289 = vld [vmem:[%s10 + $0x40] sm:$0xff]
      %v4290 = vld [vmem:[%s10 + $0x48] sm:$0xff]
      %v4291 = vld [vmem:[%s10 + $0x50] sm:$0xff]
      %v4292 = vld [vmem:[%s10 + $0x58] sm:$0xff]
      %v4293 = vld [vmem:[%s10 + $0x60] sm:$0xff]
      %v4294 = vld [vmem:[%s10 + $0x68] sm:$0xff]
      %v4295 = vld [vmem:[%s10 + $0x70] sm:$0xff]
      %v4296 = vld [vmem:[%s10 + $0x78] sm:$0xff]
      %v4297 = vld [vmem:[%s10 + $0x80] sm:$0xff]
      %v4298 = vld [vmem:[%s10 + $0x88] sm:$0xff]
      %v4299 = vld [vmem:[%s10 + $0x90] sm:$0xff]
      %v4300 = vld [vmem:[%s10 + $0x98] sm:$0xff]
      %v4301 = vld [vmem:[%s10 + $0xa0] sm:$0xff]
      %v4302 = vld [vmem:[%s10 + $0xa8] sm:$0xff]
      %v4303 = vld [vmem:[%s10 + $0xb0] sm:$0xff]
      %v4304 = vld [vmem:[%s10 + $0xb8] sm:$0xff]
      %v4305 = vld [vmem:[%s10 + $0xc0] sm:$0xff]
      %v4306 = vld [vmem:[%s10 + $0xc8] sm:$0xff]
      %v4307 = vld [vmem:[%s10 + $0xd0] sm:$0xff]
      %v4308 = vld [vmem:[%s10 + $0xd8] sm:$0xff]
      %v4309 = vld [vmem:[%s10 + $0xe0] sm:$0xff]
      %v4310 = vld [vmem:[%s10 + $0xe8] sm:$0xff]
      %v4311 = vld [vmem:[%s10 + $0xf0] sm:$0xff]
      %v4312 = vld [vmem:[%s10 + $0xf8] sm:$0xff]
      %v4313 = vld [vmem:[%s10 + $0x100] sm:$0xff]
      %v4314 = vld [vmem:[%s10 + $0x108] sm:$0xff]
      %v4315 = vld [vmem:[%s10 + $0x110] sm:$0xff]
      %v4316 = vld [vmem:[%s10 + $0x118] sm:$0xff]
      %v4317 = vld [vmem:[%s10 + $0x120] sm:$0xff]
      %v4318 = vld [vmem:[%s10 + $0x128] sm:$0xff]
      %v4319 = vld [vmem:[%s10 + $0x130] sm:$0xff]
      %v4320 = vld [vmem:[%s10 + $0x138] sm:$0xff]
      %v4321 = vld [vmem:[%s10 + $0x140] sm:$0xff]
      %v4322 = vld [vmem:[%s10 + $0x148] sm:$0xff]
      %v4323 = vld [vmem:[%s10 + $0x150] sm:$0xff]
      %v4324 = vld [vmem:[%s10 + $0x158] sm:$0xff]
      %v4325 = vld [vmem:[%s10 + $0x160] sm:$0xff]
      %v4326 = vld [vmem:[%s10 + $0x168] sm:$0xff]
      %v4327 = vld [vmem:[%s10 + $0x170] sm:$0xff]
      %v4328 = vld [vmem:[%s10 + $0x178] sm:$0xff]
      %v4329 = vld [vmem:[%s10 + $0x180] sm:$0xff]
      %v4330 = vld [vmem:[%s10 + $0x188] sm:$0xff]
      %v4331 = vld [vmem:[%s10 + $0x190] sm:$0xff]
      %v4332 = vld [vmem:[%s10 + $0x198] sm:$0xff]
      %v4333 = vld [vmem:[%s10 + $0x1a0] sm:$0xff]
      %v4334 = vld [vmem:[%s10 + $0x1a8] sm:$0xff]
      %v4335 = vld [vmem:[%s10 + $0x1b0] sm:$0xff]
      %v4336 = vld [vmem:[%s10 + $0x1b8] sm:$0xff]
      %v4337 = vld [vmem:[%s10 + $0x1c0] sm:$0xff]
      %v4338 = vld [vmem:[%s10 + $0x1c8] sm:$0xff]
      %v4339 = vld [vmem:[%s10 + $0x1d0] sm:$0xff]
      %v4340 = vld [vmem:[%s10 + $0x1d8] sm:$0xff]
      %v4341 = vld [vmem:[%s10 + $0x1e0] sm:$0xff]
      %v4342 = vld [vmem:[%s10 + $0x1e8] sm:$0xff]
      %v4343 = vld [vmem:[%s10 + $0x1f0] sm:$0xff]
      %v4344 = vld [vmem:[%s10 + $0x1f8] sm:$0xff]
      %v4345 = vld [vmem:[%s10 + $0x200] sm:$0xff]
      %v4346 = vld [vmem:[%s10 + $0x208] sm:$0xff]
      %v4347 = vld [vmem:[%s10 + $0x210] sm:$0xff]
      %v4348 = vld [vmem:[%s10 + $0x218] sm:$0xff]
      %v4349 = vld [vmem:[%s10 + $0x220] sm:$0xff]
      %v4350 = vld [vmem:[%s10 + $0x228] sm:$0xff]
      %v4351 = vld [vmem:[%s10 + $0x230] sm:$0xff]
      %v4352 = vld [vmem:[%s10 + $0x238] sm:$0xff]
      %v4353 = vld [vmem:[%s10 + $0x240] sm:$0xff]
      %v4354 = vld [vmem:[%s10 + $0x248] sm:$0xff]
      %v4355 = vld [vmem:[%s10 + $0x250] sm:$0xff]
      %v4356 = vld [vmem:[%s10 + $0x258] sm:$0xff]
      %v4357 = vld [vmem:[%s10 + $0x260] sm:$0xff]
      %v4358 = vld [vmem:[%s10 + $0x268] sm:$0xff]
      %v4359 = vld [vmem:[%s10 + $0x270] sm:$0xff]
      %v4360 = vld [vmem:[%s10 + $0x278] sm:$0xff]
      %v4361 = vld [vmem:[%s10 + $0x280] sm:$0xff]
      %v4362 = vld [vmem:[%s10 + $0x288] sm:$0xff]
      %v4363 = vld [vmem:[%s10 + $0x290] sm:$0xff]
      %v4364 = vld [vmem:[%s10 + $0x298] sm:$0xff]
      %v4365 = vld [vmem:[%s10 + $0x2a0] sm:$0xff]
      %v4366 = vld [vmem:[%s10 + $0x2a8] sm:$0xff]
      %v4367 = vld [vmem:[%s10 + $0x2b0] sm:$0xff]
      %v4368 = vld [vmem:[%s10 + $0x2b8] sm:$0xff]
      %v4369 = vld [vmem:[%s10 + $0x2c0] sm:$0xff]
      %v4370 = vld [vmem:[%s10 + $0x2c8] sm:$0xff]
      %v4371 = vld [vmem:[%s10 + $0x2d0] sm:$0xff]
      %v4372 = vld [vmem:[%s10 + $0x2d8] sm:$0xff]
      %v4373 = vld [vmem:[%s10 + $0x2e0] sm:$0xff]
      %v4374 = vld [vmem:[%s10 + $0x2e8] sm:$0xff]
      %v4375 = vld [vmem:[%s10 + $0x2f0] sm:$0xff]
      %v4376 = vld [vmem:[%s10 + $0x2f8] sm:$0xff]
      %v4377 = vld [vmem:[%s10 + $0x300] sm:$0xff]
      %v4378 = vld [vmem:[%s10 + $0x308] sm:$0xff]
      %v4379 = vld [vmem:[%s10 + $0x310] sm:$0xff]
      %v4380 = vld [vmem:[%s10 + $0x318] sm:$0xff]
      %v4381 = vld [vmem:[%s10 + $0x320] sm:$0xff]
      %v4382 = vld [vmem:[%s10 + $0x328] sm:$0xff]
      %v4383 = vld [vmem:[%s10 + $0x330] sm:$0xff]
      %v4384 = vld [vmem:[%s10 + $0x338] sm:$0xff]
      %v4385 = vld [vmem:[%s10 + $0x340] sm:$0xff]
      %v4386 = vld [vmem:[%s10 + $0x348] sm:$0xff]
      %v4387 = vld [vmem:[%s10 + $0x350] sm:$0xff]
      %v4388 = vld [vmem:[%s10 + $0x358] sm:$0xff]
      %v4389 = vld [vmem:[%s10 + $0x360] sm:$0xff]
      %v4390 = vld [vmem:[%s10 + $0x368] sm:$0xff]
      %v4391 = vld [vmem:[%s10 + $0x370] sm:$0xff]
      %v4392 = vld [vmem:[%s10 + $0x378] sm:$0xff]
      %v4393 = vld [vmem:[%s10 + $0x380] sm:$0xff]
      %v4394 = vld [vmem:[%s10 + $0x388] sm:$0xff]
      %v4395 = vld [vmem:[%s10 + $0x390] sm:$0xff]
      %v4396 = vld [vmem:[%s10 + $0x398] sm:$0xff]
      %v4397 = vld [vmem:[%s10 + $0x3a0] sm:$0xff]
      %v4398 = vld [vmem:[%s10 + $0x3a8] sm:$0xff]
      %v4399 = vld [vmem:[%s10 + $0x3b0] sm:$0xff]
      %v4400 = vld [vmem:[%s10 + $0x3b8] sm:$0xff]
      %v4401 = vld [vmem:[%s10 + $0x3c0] sm:$0xff]
      %v4402 = vld [vmem:[%s10 + $0x3c8] sm:$0xff]
      %v4403 = vld [vmem:[%s10 + $0x3d0] sm:$0xff]
      %v4404 = vld [vmem:[%s10 + $0x3d8] sm:$0xff]
      %v4405 = vld [vmem:[%s10 + $0x3e0] sm:$0xff]
      %v4406 = vld [vmem:[%s10 + $0x3e8] sm:$0xff]
      %v4407 = vld [vmem:[%s10 + $0x3f0] sm:$0xff]
      %v4408 = vld [vmem:[%s10 + $0x3f8] sm:$0xff]
      %v4409 = vld [vmem:[%s11] sm:$0x3]
      %v4411 = vlaneseq
      %v4412 = vshrl.u32 %v4411, 7
      %v4413 = vsub.s32 0, %v4412
      %v4414 = vrot.slane %v4409, %v4413
      %v4415 = vlaneseq
      %v4416 = vshrl.u32 %v4415, 7
      %v4417 = vsub.s32 1, %v4416
      %v4418 = vrot.slane %v4409, %v4417
      %v4421 = vand.u32 %v4282, 4294901760
      %4422 = vmatprep.subr.mxu0 %v4421
      %v4423 = vand.u32 %v4281, 4294901760
      %4424 = vmatpush1.msra.mxu0 %v4423
      %v4425 = vand.u32 %v4284, 4294901760
      %4426 = vmatprep.subr.mxu0 %v4425
      %v4427 = vand.u32 %v4283, 4294901760
      %4428 = vmatpush1.msra.mxu0 %v4427
      %v4429 = vand.u32 %v4286, 4294901760
      %4430 = vmatprep.subr.mxu0 %v4429
      %v4431 = vand.u32 %v4285, 4294901760
      %4432 = vmatpush1.msra.mxu0 %v4431
      %v4433 = vand.u32 %v4288, 4294901760
      %4434 = vmatprep.subr.mxu0 %v4433
      %v4435 = vand.u32 %v4287, 4294901760
      %4436 = vmatpush1.msra.mxu0 %v4435
      %v4437 = vand.u32 %v4290, 4294901760
      %4438 = vmatprep.subr.mxu0 %v4437
      %v4439 = vand.u32 %v4289, 4294901760
      %4440 = vmatpush1.msra.mxu0 %v4439
      %v4441 = vand.u32 %v4292, 4294901760
      %4442 = vmatprep.subr.mxu0 %v4441
      %v4443 = vand.u32 %v4291, 4294901760
      %4444 = vmatpush1.msra.mxu0 %v4443
      %v4445 = vand.u32 %v4294, 4294901760
      %4446 = vmatprep.subr.mxu0 %v4445
      %v4447 = vand.u32 %v4293, 4294901760
      %4448 = vmatpush1.msra.mxu0 %v4447
      %v4449 = vand.u32 %v4296, 4294901760
      %4450 = vmatprep.subr.mxu0 %v4449
      %v4451 = vand.u32 %v4295, 4294901760
      %4452 = vmatpush1.msra.mxu0 %v4451
      %v4453 = vand.u32 %v4298, 4294901760
      %4454 = vmatprep.subr.mxu0 %v4453
      %v4455 = vand.u32 %v4297, 4294901760
      %4456 = vmatpush1.msra.mxu0 %v4455
      %v4457 = vand.u32 %v4300, 4294901760
      %4458 = vmatprep.subr.mxu0 %v4457
      %v4459 = vand.u32 %v4299, 4294901760
      %4460 = vmatpush1.msra.mxu0 %v4459
      %v4461 = vand.u32 %v4302, 4294901760
      %4462 = vmatprep.subr.mxu0 %v4461
      %v4463 = vand.u32 %v4301, 4294901760
      %4464 = vmatpush1.msra.mxu0 %v4463
      %v4465 = vand.u32 %v4304, 4294901760
      %4466 = vmatprep.subr.mxu0 %v4465
      %v4467 = vand.u32 %v4303, 4294901760
      %4468 = vmatpush1.msra.mxu0 %v4467
      %v4469 = vand.u32 %v4306, 4294901760
      %4470 = vmatprep.subr.mxu0 %v4469
      %v4471 = vand.u32 %v4305, 4294901760
      %4472 = vmatpush1.msra.mxu0 %v4471
      %v4473 = vand.u32 %v4308, 4294901760
      %4474 = vmatprep.subr.mxu0 %v4473
      %v4475 = vand.u32 %v4307, 4294901760
      %4476 = vmatpush1.msra.mxu0 %v4475
      %v4477 = vand.u32 %v4310, 4294901760
      %4478 = vmatprep.subr.mxu0 %v4477
      %v4479 = vand.u32 %v4309, 4294901760
      %4480 = vmatpush1.msra.mxu0 %v4479
      %v4481 = vand.u32 %v4312, 4294901760
      %4482 = vmatprep.subr.mxu0 %v4481
      %v4483 = vand.u32 %v4311, 4294901760
      %4484 = vmatpush1.msra.mxu0 %v4483
      %v4485 = vand.u32 %v4314, 4294901760
      %4486 = vmatprep.subr.mxu0 %v4485
      %v4487 = vand.u32 %v4313, 4294901760
      %4488 = vmatpush1.msra.mxu0 %v4487
      %v4489 = vand.u32 %v4316, 4294901760
      %4490 = vmatprep.subr.mxu0 %v4489
      %v4491 = vand.u32 %v4315, 4294901760
      %4492 = vmatpush1.msra.mxu0 %v4491
      %v4493 = vand.u32 %v4318, 4294901760
      %4494 = vmatprep.subr.mxu0 %v4493
      %v4495 = vand.u32 %v4317, 4294901760
      %4496 = vmatpush1.msra.mxu0 %v4495
      %v4497 = vand.u32 %v4320, 4294901760
      %4498 = vmatprep.subr.mxu0 %v4497
      %v4499 = vand.u32 %v4319, 4294901760
      %4500 = vmatpush1.msra.mxu0 %v4499
      %v4501 = vand.u32 %v4322, 4294901760
      %4502 = vmatprep.subr.mxu0 %v4501
      %v4503 = vand.u32 %v4321, 4294901760
      %4504 = vmatpush1.msra.mxu0 %v4503
      %v4505 = vand.u32 %v4324, 4294901760
      %4506 = vmatprep.subr.mxu0 %v4505
      %v4507 = vand.u32 %v4323, 4294901760
      %4508 = vmatpush1.msra.mxu0 %v4507
      %v4509 = vand.u32 %v4326, 4294901760
      %4510 = vmatprep.subr.mxu0 %v4509
      %v4511 = vand.u32 %v4325, 4294901760
      %4512 = vmatpush1.msra.mxu0 %v4511
      %v4513 = vand.u32 %v4328, 4294901760
      %4514 = vmatprep.subr.mxu0 %v4513
      %v4515 = vand.u32 %v4327, 4294901760
      %4516 = vmatpush1.msra.mxu0 %v4515
      %v4517 = vand.u32 %v4330, 4294901760
      %4518 = vmatprep.subr.mxu0 %v4517
      %v4519 = vand.u32 %v4329, 4294901760
      %4520 = vmatpush1.msra.mxu0 %v4519
      %v4521 = vand.u32 %v4332, 4294901760
      %4522 = vmatprep.subr.mxu0 %v4521
      %v4523 = vand.u32 %v4331, 4294901760
      %4524 = vmatpush1.msra.mxu0 %v4523
      %v4525 = vand.u32 %v4334, 4294901760
      %4526 = vmatprep.subr.mxu0 %v4525
      %v4527 = vand.u32 %v4333, 4294901760
      %4528 = vmatpush1.msra.mxu0 %v4527
      %v4529 = vand.u32 %v4336, 4294901760
      %4530 = vmatprep.subr.mxu0 %v4529
      %v4531 = vand.u32 %v4335, 4294901760
      %4532 = vmatpush1.msra.mxu0 %v4531
      %v4533 = vand.u32 %v4338, 4294901760
      %4534 = vmatprep.subr.mxu0 %v4533
      %v4535 = vand.u32 %v4337, 4294901760
      %4536 = vmatpush1.msra.mxu0 %v4535
      %v4537 = vand.u32 %v4340, 4294901760
      %4538 = vmatprep.subr.mxu0 %v4537
      %v4539 = vand.u32 %v4339, 4294901760
      %4540 = vmatpush1.msra.mxu0 %v4539
      %v4541 = vand.u32 %v4342, 4294901760
      %4542 = vmatprep.subr.mxu0 %v4541
      %v4543 = vand.u32 %v4341, 4294901760
      %4544 = vmatpush1.msra.mxu0 %v4543
      %v4545 = vand.u32 %v4344, 4294901760
      %4546 = vmatprep.subr.mxu0 %v4545
      %v4547 = vand.u32 %v4343, 4294901760
      %4548 = vmatpush1.msra.mxu0 %v4547
      %v4549 = vand.u32 %v4278, 4294901760
      %v4550 = vsub.f32 %v4278, %v4549
      %v4551 = vand.u32 %v4550, 4294901760
      %v4552 = vsub.f32 %v4550, %v4551
      %v4553 = vand.u32 %v4552, 4294901760
      %4554 = vmatprep.mubr.f32.mxu0 %v4553
      %v4555 = vand.u32 %v4277, 4294901760
      %v4556 = vsub.f32 %v4277, %v4555
      %v4557 = vand.u32 %v4556, 4294901760
      %v4558 = vsub.f32 %v4556, %v4557
      %v4559 = vand.u32 %v4558, 4294901760
      %4560 = vmatmul.mubr.f32.gmra.mrb[0].mxu0 %v4559
      %v4561 = vpop.f32.mrb[0].mxu0
      %v4562 = vadd.f32 %v4414, %v4561
      %v4563 = vpop.f32.mrb[0].mxu0
      %v4564 = vadd.f32 %v4418, %v4563
      %4565 = vdwg.mxu0
      %v4566 = vand.u32 %v4282, 4294901760
      %v4567 = vsub.f32 %v4282, %v4566
      %v4568 = vand.u32 %v4567, 4294901760
      %v4569 = vsub.f32 %v4567, %v4568
      %v4570 = vand.u32 %v4569, 4294901760
      %4571 = vmatprep.subr.mxu0 %v4570
      %v4572 = vand.u32 %v4281, 4294901760
      %v4573 = vsub.f32 %v4281, %v4572
      %v4574 = vand.u32 %v4573, 4294901760
      %v4575 = vsub.f32 %v4573, %v4574
      %v4576 = vand.u32 %v4575, 4294901760
      %4577 = vmatpush1.msra.mxu0 %v4576
      %v4578 = vand.u32 %v4284, 4294901760
      %v4579 = vsub.f32 %v4284, %v4578
      %v4580 = vand.u32 %v4579, 4294901760
      %v4581 = vsub.f32 %v4579, %v4580
      %v4582 = vand.u32 %v4581, 4294901760
      %4583 = vmatprep.subr.mxu0 %v4582
      %v4584 = vand.u32 %v4283, 4294901760
      %v4585 = vsub.f32 %v4283, %v4584
      %v4586 = vand.u32 %v4585, 4294901760
      %v4587 = vsub.f32 %v4585, %v4586
      %v4588 = vand.u32 %v4587, 4294901760
      %4589 = vmatpush1.msra.mxu0 %v4588
      %v4590 = vand.u32 %v4286, 4294901760
      %v4591 = vsub.f32 %v4286, %v4590
      %v4592 = vand.u32 %v4591, 4294901760
      %v4593 = vsub.f32 %v4591, %v4592
      %v4594 = vand.u32 %v4593, 4294901760
      %4595 = vmatprep.subr.mxu0 %v4594
      %v4596 = vand.u32 %v4285, 4294901760
      %v4597 = vsub.f32 %v4285, %v4596
      %v4598 = vand.u32 %v4597, 4294901760
      %v4599 = vsub.f32 %v4597, %v4598
      %v4600 = vand.u32 %v4599, 4294901760
      %4601 = vmatpush1.msra.mxu0 %v4600
      %v4602 = vand.u32 %v4288, 4294901760
      %v4603 = vsub.f32 %v4288, %v4602
      %v4604 = vand.u32 %v4603, 4294901760
      %v4605 = vsub.f32 %v4603, %v4604
      %v4606 = vand.u32 %v4605, 4294901760
      %4607 = vmatprep.subr.mxu0 %v4606
      %v4608 = vand.u32 %v4287, 4294901760
      %v4609 = vsub.f32 %v4287, %v4608
      %v4610 = vand.u32 %v4609, 4294901760
      %v4611 = vsub.f32 %v4609, %v4610
      %v4612 = vand.u32 %v4611, 4294901760
      %4613 = vmatpush1.msra.mxu0 %v4612
      %v4614 = vand.u32 %v4290, 4294901760
      %v4615 = vsub.f32 %v4290, %v4614
      %v4616 = vand.u32 %v4615, 4294901760
      %v4617 = vsub.f32 %v4615, %v4616
      %v4618 = vand.u32 %v4617, 4294901760
      %4619 = vmatprep.subr.mxu0 %v4618
      %v4620 = vand.u32 %v4289, 4294901760
      %v4621 = vsub.f32 %v4289, %v4620
      %v4622 = vand.u32 %v4621, 4294901760
      %v4623 = vsub.f32 %v4621, %v4622
      %v4624 = vand.u32 %v4623, 4294901760
      %4625 = vmatpush1.msra.mxu0 %v4624
      %v4626 = vand.u32 %v4292, 4294901760
      %v4627 = vsub.f32 %v4292, %v4626
      %v4628 = vand.u32 %v4627, 4294901760
      %v4629 = vsub.f32 %v4627, %v4628
      %v4630 = vand.u32 %v4629, 4294901760
      %4631 = vmatprep.subr.mxu0 %v4630
      %v4632 = vand.u32 %v4291, 4294901760
      %v4633 = vsub.f32 %v4291, %v4632
      %v4634 = vand.u32 %v4633, 4294901760
      %v4635 = vsub.f32 %v4633, %v4634
      %v4636 = vand.u32 %v4635, 4294901760
      %4637 = vmatpush1.msra.mxu0 %v4636
      %v4638 = vand.u32 %v4294, 4294901760
      %v4639 = vsub.f32 %v4294, %v4638
      %v4640 = vand.u32 %v4639, 4294901760
      %v4641 = vsub.f32 %v4639, %v4640
      %v4642 = vand.u32 %v4641, 4294901760
      %4643 = vmatprep.subr.mxu0 %v4642
      %v4644 = vand.u32 %v4293, 4294901760
      %v4645 = vsub.f32 %v4293, %v4644
      %v4646 = vand.u32 %v4645, 4294901760
      %v4647 = vsub.f32 %v4645, %v4646
      %v4648 = vand.u32 %v4647, 4294901760
      %4649 = vmatpush1.msra.mxu0 %v4648
      %v4650 = vand.u32 %v4296, 4294901760
      %v4651 = vsub.f32 %v4296, %v4650
      %v4652 = vand.u32 %v4651, 4294901760
      %v4653 = vsub.f32 %v4651, %v4652
      %v4654 = vand.u32 %v4653, 4294901760
      %4655 = vmatprep.subr.mxu0 %v4654
      %v4656 = vand.u32 %v4295, 4294901760
      %v4657 = vsub.f32 %v4295, %v4656
      %v4658 = vand.u32 %v4657, 4294901760
      %v4659 = vsub.f32 %v4657, %v4658
      %v4660 = vand.u32 %v4659, 4294901760
      %4661 = vmatpush1.msra.mxu0 %v4660
      %v4662 = vand.u32 %v4298, 4294901760
      %v4663 = vsub.f32 %v4298, %v4662
      %v4664 = vand.u32 %v4663, 4294901760
      %v4665 = vsub.f32 %v4663, %v4664
      %v4666 = vand.u32 %v4665, 4294901760
      %4667 = vmatprep.subr.mxu0 %v4666
      %v4668 = vand.u32 %v4297, 4294901760
      %v4669 = vsub.f32 %v4297, %v4668
      %v4670 = vand.u32 %v4669, 4294901760
      %v4671 = vsub.f32 %v4669, %v4670
      %v4672 = vand.u32 %v4671, 4294901760
      %4673 = vmatpush1.msra.mxu0 %v4672
      %v4674 = vand.u32 %v4300, 4294901760
      %v4675 = vsub.f32 %v4300, %v4674
      %v4676 = vand.u32 %v4675, 4294901760
      %v4677 = vsub.f32 %v4675, %v4676
      %v4678 = vand.u32 %v4677, 4294901760
      %4679 = vmatprep.subr.mxu0 %v4678
      %v4680 = vand.u32 %v4299, 4294901760
      %v4681 = vsub.f32 %v4299, %v4680
      %v4682 = vand.u32 %v4681, 4294901760
      %v4683 = vsub.f32 %v4681, %v4682
      %v4684 = vand.u32 %v4683, 4294901760
      %4685 = vmatpush1.msra.mxu0 %v4684
      %v4686 = vand.u32 %v4302, 4294901760
      %v4687 = vsub.f32 %v4302, %v4686
      %v4688 = vand.u32 %v4687, 4294901760
      %v4689 = vsub.f32 %v4687, %v4688
      %v4690 = vand.u32 %v4689, 4294901760
      %4691 = vmatprep.subr.mxu0 %v4690
      %v4692 = vand.u32 %v4301, 4294901760
      %v4693 = vsub.f32 %v4301, %v4692
      %v4694 = vand.u32 %v4693, 4294901760
      %v4695 = vsub.f32 %v4693, %v4694
      %v4696 = vand.u32 %v4695, 4294901760
      %4697 = vmatpush1.msra.mxu0 %v4696
      %v4698 = vand.u32 %v4304, 4294901760
      %v4699 = vsub.f32 %v4304, %v4698
      %v4700 = vand.u32 %v4699, 4294901760
      %v4701 = vsub.f32 %v4699, %v4700
      %v4702 = vand.u32 %v4701, 4294901760
      %4703 = vmatprep.subr.mxu0 %v4702
      %v4704 = vand.u32 %v4303, 4294901760
      %v4705 = vsub.f32 %v4303, %v4704
      %v4706 = vand.u32 %v4705, 4294901760
      %v4707 = vsub.f32 %v4705, %v4706
      %v4708 = vand.u32 %v4707, 4294901760
      %4709 = vmatpush1.msra.mxu0 %v4708
      %v4710 = vand.u32 %v4306, 4294901760
      %v4711 = vsub.f32 %v4306, %v4710
      %v4712 = vand.u32 %v4711, 4294901760
      %v4713 = vsub.f32 %v4711, %v4712
      %v4714 = vand.u32 %v4713, 4294901760
      %4715 = vmatprep.subr.mxu0 %v4714
      %v4716 = vand.u32 %v4305, 4294901760
      %v4717 = vsub.f32 %v4305, %v4716
      %v4718 = vand.u32 %v4717, 4294901760
      %v4719 = vsub.f32 %v4717, %v4718
      %v4720 = vand.u32 %v4719, 4294901760
      %4721 = vmatpush1.msra.mxu0 %v4720
      %v4722 = vand.u32 %v4308, 4294901760
      %v4723 = vsub.f32 %v4308, %v4722
      %v4724 = vand.u32 %v4723, 4294901760
      %v4725 = vsub.f32 %v4723, %v4724
      %v4726 = vand.u32 %v4725, 4294901760
      %4727 = vmatprep.subr.mxu0 %v4726
      %v4728 = vand.u32 %v4307, 4294901760
      %v4729 = vsub.f32 %v4307, %v4728
      %v4730 = vand.u32 %v4729, 4294901760
      %v4731 = vsub.f32 %v4729, %v4730
      %v4732 = vand.u32 %v4731, 4294901760
      %4733 = vmatpush1.msra.mxu0 %v4732
      %v4734 = vand.u32 %v4310, 4294901760
      %v4735 = vsub.f32 %v4310, %v4734
      %v4736 = vand.u32 %v4735, 4294901760
      %v4737 = vsub.f32 %v4735, %v4736
      %v4738 = vand.u32 %v4737, 4294901760
      %4739 = vmatprep.subr.mxu0 %v4738
      %v4740 = vand.u32 %v4309, 4294901760
      %v4741 = vsub.f32 %v4309, %v4740
      %v4742 = vand.u32 %v4741, 4294901760
      %v4743 = vsub.f32 %v4741, %v4742
      %v4744 = vand.u32 %v4743, 4294901760
      %4745 = vmatpush1.msra.mxu0 %v4744
      %v4746 = vand.u32 %v4312, 4294901760
      %v4747 = vsub.f32 %v4312, %v4746
      %v4748 = vand.u32 %v4747, 4294901760
      %v4749 = vsub.f32 %v4747, %v4748
      %v4750 = vand.u32 %v4749, 4294901760
      %4751 = vmatprep.subr.mxu0 %v4750
      %v4752 = vand.u32 %v4311, 4294901760
      %v4753 = vsub.f32 %v4311, %v4752
      %v4754 = vand.u32 %v4753, 4294901760
      %v4755 = vsub.f32 %v4753, %v4754
      %v4756 = vand.u32 %v4755, 4294901760
      %4757 = vmatpush1.msra.mxu0 %v4756
      %v4758 = vand.u32 %v4314, 4294901760
      %v4759 = vsub.f32 %v4314, %v4758
      %v4760 = vand.u32 %v4759, 4294901760
      %v4761 = vsub.f32 %v4759, %v4760
      %v4762 = vand.u32 %v4761, 4294901760
      %4763 = vmatprep.subr.mxu0 %v4762
      %v4764 = vand.u32 %v4313, 4294901760
      %v4765 = vsub.f32 %v4313, %v4764
      %v4766 = vand.u32 %v4765, 4294901760
      %v4767 = vsub.f32 %v4765, %v4766
      %v4768 = vand.u32 %v4767, 4294901760
      %4769 = vmatpush1.msra.mxu0 %v4768
      %v4770 = vand.u32 %v4316, 4294901760
      %v4771 = vsub.f32 %v4316, %v4770
      %v4772 = vand.u32 %v4771, 4294901760
      %v4773 = vsub.f32 %v4771, %v4772
      %v4774 = vand.u32 %v4773, 4294901760
      %4775 = vmatprep.subr.mxu0 %v4774
      %v4776 = vand.u32 %v4315, 4294901760
      %v4777 = vsub.f32 %v4315, %v4776
      %v4778 = vand.u32 %v4777, 4294901760
      %v4779 = vsub.f32 %v4777, %v4778
      %v4780 = vand.u32 %v4779, 4294901760
      %4781 = vmatpush1.msra.mxu0 %v4780
      %v4782 = vand.u32 %v4318, 4294901760
      %v4783 = vsub.f32 %v4318, %v4782
      %v4784 = vand.u32 %v4783, 4294901760
      %v4785 = vsub.f32 %v4783, %v4784
      %v4786 = vand.u32 %v4785, 4294901760
      %4787 = vmatprep.subr.mxu0 %v4786
      %v4788 = vand.u32 %v4317, 4294901760
      %v4789 = vsub.f32 %v4317, %v4788
      %v4790 = vand.u32 %v4789, 4294901760
      %v4791 = vsub.f32 %v4789, %v4790
      %v4792 = vand.u32 %v4791, 4294901760
      %4793 = vmatpush1.msra.mxu0 %v4792
      %v4794 = vand.u32 %v4320, 4294901760
      %v4795 = vsub.f32 %v4320, %v4794
      %v4796 = vand.u32 %v4795, 4294901760
      %v4797 = vsub.f32 %v4795, %v4796
      %v4798 = vand.u32 %v4797, 4294901760
      %4799 = vmatprep.subr.mxu0 %v4798
      %v4800 = vand.u32 %v4319, 4294901760
      %v4801 = vsub.f32 %v4319, %v4800
      %v4802 = vand.u32 %v4801, 4294901760
      %v4803 = vsub.f32 %v4801, %v4802
      %v4804 = vand.u32 %v4803, 4294901760
      %4805 = vmatpush1.msra.mxu0 %v4804
      %v4806 = vand.u32 %v4322, 4294901760
      %v4807 = vsub.f32 %v4322, %v4806
      %v4808 = vand.u32 %v4807, 4294901760
      %v4809 = vsub.f32 %v4807, %v4808
      %v4810 = vand.u32 %v4809, 4294901760
      %4811 = vmatprep.subr.mxu0 %v4810
      %v4812 = vand.u32 %v4321, 4294901760
      %v4813 = vsub.f32 %v4321, %v4812
      %v4814 = vand.u32 %v4813, 4294901760
      %v4815 = vsub.f32 %v4813, %v4814
      %v4816 = vand.u32 %v4815, 4294901760
      %4817 = vmatpush1.msra.mxu0 %v4816
      %v4818 = vand.u32 %v4324, 4294901760
      %v4819 = vsub.f32 %v4324, %v4818
      %v4820 = vand.u32 %v4819, 4294901760
      %v4821 = vsub.f32 %v4819, %v4820
      %v4822 = vand.u32 %v4821, 4294901760
      %4823 = vmatprep.subr.mxu0 %v4822
      %v4824 = vand.u32 %v4323, 4294901760
      %v4825 = vsub.f32 %v4323, %v4824
      %v4826 = vand.u32 %v4825, 4294901760
      %v4827 = vsub.f32 %v4825, %v4826
      %v4828 = vand.u32 %v4827, 4294901760
      %4829 = vmatpush1.msra.mxu0 %v4828
      %v4830 = vand.u32 %v4326, 4294901760
      %v4831 = vsub.f32 %v4326, %v4830
      %v4832 = vand.u32 %v4831, 4294901760
      %v4833 = vsub.f32 %v4831, %v4832
      %v4834 = vand.u32 %v4833, 4294901760
      %4835 = vmatprep.subr.mxu0 %v4834
      %v4836 = vand.u32 %v4325, 4294901760
      %v4837 = vsub.f32 %v4325, %v4836
      %v4838 = vand.u32 %v4837, 4294901760
      %v4839 = vsub.f32 %v4837, %v4838
      %v4840 = vand.u32 %v4839, 4294901760
      %4841 = vmatpush1.msra.mxu0 %v4840
      %v4842 = vand.u32 %v4328, 4294901760
      %v4843 = vsub.f32 %v4328, %v4842
      %v4844 = vand.u32 %v4843, 4294901760
      %v4845 = vsub.f32 %v4843, %v4844
      %v4846 = vand.u32 %v4845, 4294901760
      %4847 = vmatprep.subr.mxu0 %v4846
      %v4848 = vand.u32 %v4327, 4294901760
      %v4849 = vsub.f32 %v4327, %v4848
      %v4850 = vand.u32 %v4849, 4294901760
      %v4851 = vsub.f32 %v4849, %v4850
      %v4852 = vand.u32 %v4851, 4294901760
      %4853 = vmatpush1.msra.mxu0 %v4852
      %v4854 = vand.u32 %v4330, 4294901760
      %v4855 = vsub.f32 %v4330, %v4854
      %v4856 = vand.u32 %v4855, 4294901760
      %v4857 = vsub.f32 %v4855, %v4856
      %v4858 = vand.u32 %v4857, 4294901760
      %4859 = vmatprep.subr.mxu0 %v4858
      %v4860 = vand.u32 %v4329, 4294901760
      %v4861 = vsub.f32 %v4329, %v4860
      %v4862 = vand.u32 %v4861, 4294901760
      %v4863 = vsub.f32 %v4861, %v4862
      %v4864 = vand.u32 %v4863, 4294901760
      %4865 = vmatpush1.msra.mxu0 %v4864
      %v4866 = vand.u32 %v4332, 4294901760
      %v4867 = vsub.f32 %v4332, %v4866
      %v4868 = vand.u32 %v4867, 4294901760
      %v4869 = vsub.f32 %v4867, %v4868
      %v4870 = vand.u32 %v4869, 4294901760
      %4871 = vmatprep.subr.mxu0 %v4870
      %v4872 = vand.u32 %v4331, 4294901760
      %v4873 = vsub.f32 %v4331, %v4872
      %v4874 = vand.u32 %v4873, 4294901760
      %v4875 = vsub.f32 %v4873, %v4874
      %v4876 = vand.u32 %v4875, 4294901760
      %4877 = vmatpush1.msra.mxu0 %v4876
      %v4878 = vand.u32 %v4334, 4294901760
      %v4879 = vsub.f32 %v4334, %v4878
      %v4880 = vand.u32 %v4879, 4294901760
      %v4881 = vsub.f32 %v4879, %v4880
      %v4882 = vand.u32 %v4881, 4294901760
      %4883 = vmatprep.subr.mxu0 %v4882
      %v4884 = vand.u32 %v4333, 4294901760
      %v4885 = vsub.f32 %v4333, %v4884
      %v4886 = vand.u32 %v4885, 4294901760
      %v4887 = vsub.f32 %v4885, %v4886
      %v4888 = vand.u32 %v4887, 4294901760
      %4889 = vmatpush1.msra.mxu0 %v4888
      %v4890 = vand.u32 %v4336, 4294901760
      %v4891 = vsub.f32 %v4336, %v4890
      %v4892 = vand.u32 %v4891, 4294901760
      %v4893 = vsub.f32 %v4891, %v4892
      %v4894 = vand.u32 %v4893, 4294901760
      %4895 = vmatprep.subr.mxu0 %v4894
      %v4896 = vand.u32 %v4335, 4294901760
      %v4897 = vsub.f32 %v4335, %v4896
      %v4898 = vand.u32 %v4897, 4294901760
      %v4899 = vsub.f32 %v4897, %v4898
      %v4900 = vand.u32 %v4899, 4294901760
      %4901 = vmatpush1.msra.mxu0 %v4900
      %v4902 = vand.u32 %v4338, 4294901760
      %v4903 = vsub.f32 %v4338, %v4902
      %v4904 = vand.u32 %v4903, 4294901760
      %v4905 = vsub.f32 %v4903, %v4904
      %v4906 = vand.u32 %v4905, 4294901760
      %4907 = vmatprep.subr.mxu0 %v4906
      %v4908 = vand.u32 %v4337, 4294901760
      %v4909 = vsub.f32 %v4337, %v4908
      %v4910 = vand.u32 %v4909, 4294901760
      %v4911 = vsub.f32 %v4909, %v4910
      %v4912 = vand.u32 %v4911, 4294901760
      %4913 = vmatpush1.msra.mxu0 %v4912
      %v4914 = vand.u32 %v4340, 4294901760
      %v4915 = vsub.f32 %v4340, %v4914
      %v4916 = vand.u32 %v4915, 4294901760
      %v4917 = vsub.f32 %v4915, %v4916
      %v4918 = vand.u32 %v4917, 4294901760
      %4919 = vmatprep.subr.mxu0 %v4918
      %v4920 = vand.u32 %v4339, 4294901760
      %v4921 = vsub.f32 %v4339, %v4920
      %v4922 = vand.u32 %v4921, 4294901760
      %v4923 = vsub.f32 %v4921, %v4922
      %v4924 = vand.u32 %v4923, 4294901760
      %4925 = vmatpush1.msra.mxu0 %v4924
      %v4926 = vand.u32 %v4342, 4294901760
      %v4927 = vsub.f32 %v4342, %v4926
      %v4928 = vand.u32 %v4927, 4294901760
      %v4929 = vsub.f32 %v4927, %v4928
      %v4930 = vand.u32 %v4929, 4294901760
      %4931 = vmatprep.subr.mxu0 %v4930
      %v4932 = vand.u32 %v4341, 4294901760
      %v4933 = vsub.f32 %v4341, %v4932
      %v4934 = vand.u32 %v4933, 4294901760
      %v4935 = vsub.f32 %v4933, %v4934
      %v4936 = vand.u32 %v4935, 4294901760
      %4937 = vmatpush1.msra.mxu0 %v4936
      %v4938 = vand.u32 %v4344, 4294901760
      %v4939 = vsub.f32 %v4344, %v4938
      %v4940 = vand.u32 %v4939, 4294901760
      %v4941 = vsub.f32 %v4939, %v4940
      %v4942 = vand.u32 %v4941, 4294901760
      %4943 = vmatprep.subr.mxu0 %v4942
      %v4944 = vand.u32 %v4343, 4294901760
      %v4945 = vsub.f32 %v4343, %v4944
      %v4946 = vand.u32 %v4945, 4294901760
      %v4947 = vsub.f32 %v4945, %v4946
      %v4948 = vand.u32 %v4947, 4294901760
      %4949 = vmatpush1.msra.mxu0 %v4948
      %v4950 = vand.u32 %v4278, 4294901760
      %4951 = vmatprep.mubr.f32.mxu0 %v4950
      %v4952 = vand.u32 %v4277, 4294901760
      %4953 = vmatmul.mubr.f32.gmra.mrb[0].mxu0 %v4952
      %v4954 = vpop.f32.mrb[0].mxu0
      %v4955 = vadd.f32 %v4562, %v4954
      %v4956 = vpop.f32.mrb[0].mxu0
      %v4957 = vadd.f32 %v4564, %v4956
      %4958 = vdwg.mxu0
      %v4959 = vand.u32 %v4282, 4294901760
      %v4960 = vsub.f32 %v4282, %v4959
      %4961 = vmatprep.subr.mxu0 %v4960
      %v4962 = vand.u32 %v4281, 4294901760
      %v4963 = vsub.f32 %v4281, %v4962
      %4964 = vmatpush1.msra.mxu0 %v4963
      %v4965 = vand.u32 %v4284, 4294901760
      %v4966 = vsub.f32 %v4284, %v4965
      %4967 = vmatprep.subr.mxu0 %v4966
      %v4968 = vand.u32 %v4283, 4294901760
      %v4969 = vsub.f32 %v4283, %v4968
      %4970 = vmatpush1.msra.mxu0 %v4969
      %v4971 = vand.u32 %v4286, 4294901760
      %v4972 = vsub.f32 %v4286, %v4971
      %4973 = vmatprep.subr.mxu0 %v4972
      %v4974 = vand.u32 %v4285, 4294901760
      %v4975 = vsub.f32 %v4285, %v4974
      %4976 = vmatpush1.msra.mxu0 %v4975
      %v4977 = vand.u32 %v4288, 4294901760
      %v4978 = vsub.f32 %v4288, %v4977
      %4979 = vmatprep.subr.mxu0 %v4978
      %v4980 = vand.u32 %v4287, 4294901760
      %v4981 = vsub.f32 %v4287, %v4980
      %4982 = vmatpush1.msra.mxu0 %v4981
      %v4983 = vand.u32 %v4290, 4294901760
      %v4984 = vsub.f32 %v4290, %v4983
      %4985 = vmatprep.subr.mxu0 %v4984
      %v4986 = vand.u32 %v4289, 4294901760
      %v4987 = vsub.f32 %v4289, %v4986
      %4988 = vmatpush1.msra.mxu0 %v4987
      %v4989 = vand.u32 %v4292, 4294901760
      %v4990 = vsub.f32 %v4292, %v4989
      %4991 = vmatprep.subr.mxu0 %v4990
      %v4992 = vand.u32 %v4291, 4294901760
      %v4993 = vsub.f32 %v4291, %v4992
      %4994 = vmatpush1.msra.mxu0 %v4993
      %v4995 = vand.u32 %v4294, 4294901760
      %v4996 = vsub.f32 %v4294, %v4995
      %4997 = vmatprep.subr.mxu0 %v4996
      %v4998 = vand.u32 %v4293, 4294901760
      %v4999 = vsub.f32 %v4293, %v4998
      %5000 = vmatpush1.msra.mxu0 %v4999
      %v5001 = vand.u32 %v4296, 4294901760
      %v5002 = vsub.f32 %v4296, %v5001
      %5003 = vmatprep.subr.mxu0 %v5002
      %v5004 = vand.u32 %v4295, 4294901760
      %v5005 = vsub.f32 %v4295, %v5004
      %5006 = vmatpush1.msra.mxu0 %v5005
      %v5007 = vand.u32 %v4298, 4294901760
      %v5008 = vsub.f32 %v4298, %v5007
      %5009 = vmatprep.subr.mxu0 %v5008
      %v5010 = vand.u32 %v4297, 4294901760
      %v5011 = vsub.f32 %v4297, %v5010
      %5012 = vmatpush1.msra.mxu0 %v5011
      %v5013 = vand.u32 %v4300, 4294901760
      %v5014 = vsub.f32 %v4300, %v5013
      %5015 = vmatprep.subr.mxu0 %v5014
      %v5016 = vand.u32 %v4299, 4294901760
      %v5017 = vsub.f32 %v4299, %v5016
      %5018 = vmatpush1.msra.mxu0 %v5017
      %v5019 = vand.u32 %v4302, 4294901760
      %v5020 = vsub.f32 %v4302, %v5019
      %5021 = vmatprep.subr.mxu0 %v5020
      %v5022 = vand.u32 %v4301, 4294901760
      %v5023 = vsub.f32 %v4301, %v5022
      %5024 = vmatpush1.msra.mxu0 %v5023
      %v5025 = vand.u32 %v4304, 4294901760
      %v5026 = vsub.f32 %v4304, %v5025
      %5027 = vmatprep.subr.mxu0 %v5026
      %v5028 = vand.u32 %v4303, 4294901760
      %v5029 = vsub.f32 %v4303, %v5028
      %5030 = vmatpush1.msra.mxu0 %v5029
      %v5031 = vand.u32 %v4306, 4294901760
      %v5032 = vsub.f32 %v4306, %v5031
      %5033 = vmatprep.subr.mxu0 %v5032
      %v5034 = vand.u32 %v4305, 4294901760
      %v5035 = vsub.f32 %v4305, %v5034
      %5036 = vmatpush1.msra.mxu0 %v5035
      %v5037 = vand.u32 %v4308, 4294901760
      %v5038 = vsub.f32 %v4308, %v5037
      %5039 = vmatprep.subr.mxu0 %v5038
      %v5040 = vand.u32 %v4307, 4294901760
      %v5041 = vsub.f32 %v4307, %v5040
      %5042 = vmatpush1.msra.mxu0 %v5041
      %v5043 = vand.u32 %v4310, 4294901760
      %v5044 = vsub.f32 %v4310, %v5043
      %5045 = vmatprep.subr.mxu0 %v5044
      %v5046 = vand.u32 %v4309, 4294901760
      %v5047 = vsub.f32 %v4309, %v5046
      %5048 = vmatpush1.msra.mxu0 %v5047
      %v5049 = vand.u32 %v4312, 4294901760
      %v5050 = vsub.f32 %v4312, %v5049
      %5051 = vmatprep.subr.mxu0 %v5050
      %v5052 = vand.u32 %v4311, 4294901760
      %v5053 = vsub.f32 %v4311, %v5052
      %5054 = vmatpush1.msra.mxu0 %v5053
      %v5055 = vand.u32 %v4314, 4294901760
      %v5056 = vsub.f32 %v4314, %v5055
      %5057 = vmatprep.subr.mxu0 %v5056
      %v5058 = vand.u32 %v4313, 4294901760
      %v5059 = vsub.f32 %v4313, %v5058
      %5060 = vmatpush1.msra.mxu0 %v5059
      %v5061 = vand.u32 %v4316, 4294901760
      %v5062 = vsub.f32 %v4316, %v5061
      %5063 = vmatprep.subr.mxu0 %v5062
      %v5064 = vand.u32 %v4315, 4294901760
      %v5065 = vsub.f32 %v4315, %v5064
      %5066 = vmatpush1.msra.mxu0 %v5065
      %v5067 = vand.u32 %v4318, 4294901760
      %v5068 = vsub.f32 %v4318, %v5067
      %5069 = vmatprep.subr.mxu0 %v5068
      %v5070 = vand.u32 %v4317, 4294901760
      %v5071 = vsub.f32 %v4317, %v5070
      %5072 = vmatpush1.msra.mxu0 %v5071
      %v5073 = vand.u32 %v4320, 4294901760
      %v5074 = vsub.f32 %v4320, %v5073
      %5075 = vmatprep.subr.mxu0 %v5074
      %v5076 = vand.u32 %v4319, 4294901760
      %v5077 = vsub.f32 %v4319, %v5076
      %5078 = vmatpush1.msra.mxu0 %v5077
      %v5079 = vand.u32 %v4322, 4294901760
      %v5080 = vsub.f32 %v4322, %v5079
      %5081 = vmatprep.subr.mxu0 %v5080
      %v5082 = vand.u32 %v4321, 4294901760
      %v5083 = vsub.f32 %v4321, %v5082
      %5084 = vmatpush1.msra.mxu0 %v5083
      %v5085 = vand.u32 %v4324, 4294901760
      %v5086 = vsub.f32 %v4324, %v5085
      %5087 = vmatprep.subr.mxu0 %v5086
      %v5088 = vand.u32 %v4323, 4294901760
      %v5089 = vsub.f32 %v4323, %v5088
      %5090 = vmatpush1.msra.mxu0 %v5089
      %v5091 = vand.u32 %v4326, 4294901760
      %v5092 = vsub.f32 %v4326, %v5091
      %5093 = vmatprep.subr.mxu0 %v5092
      %v5094 = vand.u32 %v4325, 4294901760
      %v5095 = vsub.f32 %v4325, %v5094
      %5096 = vmatpush1.msra.mxu0 %v5095
      %v5097 = vand.u32 %v4328, 4294901760
      %v5098 = vsub.f32 %v4328, %v5097
      %5099 = vmatprep.subr.mxu0 %v5098
      %v5100 = vand.u32 %v4327, 4294901760
      %v5101 = vsub.f32 %v4327, %v5100
      %5102 = vmatpush1.msra.mxu0 %v5101
      %v5103 = vand.u32 %v4330, 4294901760
      %v5104 = vsub.f32 %v4330, %v5103
      %5105 = vmatprep.subr.mxu0 %v5104
      %v5106 = vand.u32 %v4329, 4294901760
      %v5107 = vsub.f32 %v4329, %v5106
      %5108 = vmatpush1.msra.mxu0 %v5107
      %v5109 = vand.u32 %v4332, 4294901760
      %v5110 = vsub.f32 %v4332, %v5109
      %5111 = vmatprep.subr.mxu0 %v5110
      %v5112 = vand.u32 %v4331, 4294901760
      %v5113 = vsub.f32 %v4331, %v5112
      %5114 = vmatpush1.msra.mxu0 %v5113
      %v5115 = vand.u32 %v4334, 4294901760
      %v5116 = vsub.f32 %v4334, %v5115
      %5117 = vmatprep.subr.mxu0 %v5116
      %v5118 = vand.u32 %v4333, 4294901760
      %v5119 = vsub.f32 %v4333, %v5118
      %5120 = vmatpush1.msra.mxu0 %v5119
      %v5121 = vand.u32 %v4336, 4294901760
      %v5122 = vsub.f32 %v4336, %v5121
      %5123 = vmatprep.subr.mxu0 %v5122
      %v5124 = vand.u32 %v4335, 4294901760
      %v5125 = vsub.f32 %v4335, %v5124
      %5126 = vmatpush1.msra.mxu0 %v5125
      %v5127 = vand.u32 %v4338, 4294901760
      %v5128 = vsub.f32 %v4338, %v5127
      %5129 = vmatprep.subr.mxu0 %v5128
      %v5130 = vand.u32 %v4337, 4294901760
      %v5131 = vsub.f32 %v4337, %v5130
      %5132 = vmatpush1.msra.mxu0 %v5131
      %v5133 = vand.u32 %v4340, 4294901760
      %v5134 = vsub.f32 %v4340, %v5133
      %5135 = vmatprep.subr.mxu0 %v5134
      %v5136 = vand.u32 %v4339, 4294901760
      %v5137 = vsub.f32 %v4339, %v5136
      %5138 = vmatpush1.msra.mxu0 %v5137
      %v5139 = vand.u32 %v4342, 4294901760
      %v5140 = vsub.f32 %v4342, %v5139
      %5141 = vmatprep.subr.mxu0 %v5140
      %v5142 = vand.u32 %v4341, 4294901760
      %v5143 = vsub.f32 %v4341, %v5142
      %5144 = vmatpush1.msra.mxu0 %v5143
      %v5145 = vand.u32 %v4344, 4294901760
      %v5146 = vsub.f32 %v4344, %v5145
      %5147 = vmatprep.subr.mxu0 %v5146
      %v5148 = vand.u32 %v4343, 4294901760
      %v5149 = vsub.f32 %v4343, %v5148
      %5150 = vmatpush1.msra.mxu0 %v5149
      %v5151 = vand.u32 %v4278, 4294901760
      %v5152 = vsub.f32 %v4278, %v5151
      %5153 = vmatprep.mubr.f32.mxu0 %v5152
      %v5154 = vand.u32 %v4277, 4294901760
      %v5155 = vsub.f32 %v4277, %v5154
      %5156 = vmatmul.mubr.f32.gmra.mrb[0].mxu0 %v5155
      %v5157 = vpop.f32.mrb[0].mxu0
      %v5158 = vadd.f32 %v4955, %v5157
      %v5159 = vpop.f32.mrb[0].mxu0
      %v5160 = vadd.f32 %v4957, %v5159
      %5161 = vdwg.mxu0
      %v5162 = vand.u32 %v4282, 4294901760
      %5163 = vmatprep.subr.mxu0 %v5162
      %v5164 = vand.u32 %v4281, 4294901760
      %5165 = vmatpush1.msra.mxu0 %v5164
      %v5166 = vand.u32 %v4284, 4294901760
      %5167 = vmatprep.subr.mxu0 %v5166
      %v5168 = vand.u32 %v4283, 4294901760
      %5169 = vmatpush1.msra.mxu0 %v5168
      %v5170 = vand.u32 %v4286, 4294901760
      %5171 = vmatprep.subr.mxu0 %v5170
      %v5172 = vand.u32 %v4285, 4294901760
      %5173 = vmatpush1.msra.mxu0 %v5172
      %v5174 = vand.u32 %v4288, 4294901760
      %5175 = vmatprep.subr.mxu0 %v5174
      %v5176 = vand.u32 %v4287, 4294901760
      %5177 = vmatpush1.msra.mxu0 %v5176
      %v5178 = vand.u32 %v4290, 4294901760
      %5179 = vmatprep.subr.mxu0 %v5178
      %v5180 = vand.u32 %v4289, 4294901760
      %5181 = vmatpush1.msra.mxu0 %v5180
      %v5182 = vand.u32 %v4292, 4294901760
      %5183 = vmatprep.subr.mxu0 %v5182
      %v5184 = vand.u32 %v4291, 4294901760
      %5185 = vmatpush1.msra.mxu0 %v5184
      %v5186 = vand.u32 %v4294, 4294901760
      %5187 = vmatprep.subr.mxu0 %v5186
      %v5188 = vand.u32 %v4293, 4294901760
      %5189 = vmatpush1.msra.mxu0 %v5188
      %v5190 = vand.u32 %v4296, 4294901760
      %5191 = vmatprep.subr.mxu0 %v5190
      %v5192 = vand.u32 %v4295, 4294901760
      %5193 = vmatpush1.msra.mxu0 %v5192
      %v5194 = vand.u32 %v4298, 4294901760
      %5195 = vmatprep.subr.mxu0 %v5194
      %v5196 = vand.u32 %v4297, 4294901760
      %5197 = vmatpush1.msra.mxu0 %v5196
      %v5198 = vand.u32 %v4300, 4294901760
      %5199 = vmatprep.subr.mxu0 %v5198
      %v5200 = vand.u32 %v4299, 4294901760
      %5201 = vmatpush1.msra.mxu0 %v5200
      %v5202 = vand.u32 %v4302, 4294901760
      %5203 = vmatprep.subr.mxu0 %v5202
      %v5204 = vand.u32 %v4301, 4294901760
      %5205 = vmatpush1.msra.mxu0 %v5204
      %v5206 = vand.u32 %v4304, 4294901760
      %5207 = vmatprep.subr.mxu0 %v5206
      %v5208 = vand.u32 %v4303, 4294901760
      %5209 = vmatpush1.msra.mxu0 %v5208
      %v5210 = vand.u32 %v4306, 4294901760
      %5211 = vmatprep.subr.mxu0 %v5210
      %v5212 = vand.u32 %v4305, 4294901760
      %5213 = vmatpush1.msra.mxu0 %v5212
      %v5214 = vand.u32 %v4308, 4294901760
      %5215 = vmatprep.subr.mxu0 %v5214
      %v5216 = vand.u32 %v4307, 4294901760
      %5217 = vmatpush1.msra.mxu0 %v5216
      %v5218 = vand.u32 %v4310, 4294901760
      %5219 = vmatprep.subr.mxu0 %v5218
      %v5220 = vand.u32 %v4309, 4294901760
      %5221 = vmatpush1.msra.mxu0 %v5220
      %v5222 = vand.u32 %v4312, 4294901760
      %5223 = vmatprep.subr.mxu0 %v5222
      %v5224 = vand.u32 %v4311, 4294901760
      %5225 = vmatpush1.msra.mxu0 %v5224
      %v5226 = vand.u32 %v4314, 4294901760
      %5227 = vmatprep.subr.mxu0 %v5226
      %v5228 = vand.u32 %v4313, 4294901760
      %5229 = vmatpush1.msra.mxu0 %v5228
      %v5230 = vand.u32 %v4316, 4294901760
      %5231 = vmatprep.subr.mxu0 %v5230
      %v5232 = vand.u32 %v4315, 4294901760
      %5233 = vmatpush1.msra.mxu0 %v5232
      %v5234 = vand.u32 %v4318, 4294901760
      %5235 = vmatprep.subr.mxu0 %v5234
      %v5236 = vand.u32 %v4317, 4294901760
      %5237 = vmatpush1.msra.mxu0 %v5236
      %v5238 = vand.u32 %v4320, 4294901760
      %5239 = vmatprep.subr.mxu0 %v5238
      %v5240 = vand.u32 %v4319, 4294901760
      %5241 = vmatpush1.msra.mxu0 %v5240
      %v5242 = vand.u32 %v4322, 4294901760
      %5243 = vmatprep.subr.mxu0 %v5242
      %v5244 = vand.u32 %v4321, 4294901760
      %5245 = vmatpush1.msra.mxu0 %v5244
      %v5246 = vand.u32 %v4324, 4294901760
      %5247 = vmatprep.subr.mxu0 %v5246
      %v5248 = vand.u32 %v4323, 4294901760
      %5249 = vmatpush1.msra.mxu0 %v5248
      %v5250 = vand.u32 %v4326, 4294901760
      %5251 = vmatprep.subr.mxu0 %v5250
      %v5252 = vand.u32 %v4325, 4294901760
      %5253 = vmatpush1.msra.mxu0 %v5252
      %v5254 = vand.u32 %v4328, 4294901760
      %5255 = vmatprep.subr.mxu0 %v5254
      %v5256 = vand.u32 %v4327, 4294901760
      %5257 = vmatpush1.msra.mxu0 %v5256
      %v5258 = vand.u32 %v4330, 4294901760
      %5259 = vmatprep.subr.mxu0 %v5258
      %v5260 = vand.u32 %v4329, 4294901760
      %5261 = vmatpush1.msra.mxu0 %v5260
      %v5262 = vand.u32 %v4332, 4294901760
      %5263 = vmatprep.subr.mxu0 %v5262
      %v5264 = vand.u32 %v4331, 4294901760
      %5265 = vmatpush1.msra.mxu0 %v5264
      %v5266 = vand.u32 %v4334, 4294901760
      %5267 = vmatprep.subr.mxu0 %v5266
      %v5268 = vand.u32 %v4333, 4294901760
      %5269 = vmatpush1.msra.mxu0 %v5268
      %v5270 = vand.u32 %v4336, 4294901760
      %5271 = vmatprep.subr.mxu0 %v5270
      %v5272 = vand.u32 %v4335, 4294901760
      %5273 = vmatpush1.msra.mxu0 %v5272
      %v5274 = vand.u32 %v4338, 4294901760
      %5275 = vmatprep.subr.mxu0 %v5274
      %v5276 = vand.u32 %v4337, 4294901760
      %5277 = vmatpush1.msra.mxu0 %v5276
      %v5278 = vand.u32 %v4340, 4294901760
      %5279 = vmatprep.subr.mxu0 %v5278
      %v5280 = vand.u32 %v4339, 4294901760
      %5281 = vmatpush1.msra.mxu0 %v5280
      %v5282 = vand.u32 %v4342, 4294901760
      %5283 = vmatprep.subr.mxu0 %v5282
      %v5284 = vand.u32 %v4341, 4294901760
      %5285 = vmatpush1.msra.mxu0 %v5284
      %v5286 = vand.u32 %v4344, 4294901760
      %5287 = vmatprep.subr.mxu0 %v5286
      %v5288 = vand.u32 %v4343, 4294901760
      %5289 = vmatpush1.msra.mxu0 %v5288
      %v5290 = vand.u32 %v4278, 4294901760
      %v5291 = vsub.f32 %v4278, %v5290
      %v5292 = vand.u32 %v5291, 4294901760
      %5293 = vmatprep.mubr.f32.mxu0 %v5292
      %v5294 = vand.u32 %v4277, 4294901760
      %v5295 = vsub.f32 %v4277, %v5294
      %v5296 = vand.u32 %v5295, 4294901760
      %5297 = vmatmul.mubr.f32.gmra.mrb[0].mxu0 %v5296
      %v5298 = vpop.f32.mrb[0].mxu0
      %v5299 = vadd.f32 %v5158, %v5298
      %v5300 = vpop.f32.mrb[0].mxu0
      %v5301 = vadd.f32 %v5160, %v5300
      %5302 = vdwg.mxu0
      %v5303 = vand.u32 %v4282, 4294901760
      %v5304 = vsub.f32 %v4282, %v5303
      %v5305 = vand.u32 %v5304, 4294901760
      %5306 = vmatprep.subr.mxu0 %v5305
      %v5307 = vand.u32 %v4281, 4294901760
      %v5308 = vsub.f32 %v4281, %v5307
      %v5309 = vand.u32 %v5308, 4294901760
      %5310 = vmatpush1.msra.mxu0 %v5309
      %v5311 = vand.u32 %v4284, 4294901760
      %v5312 = vsub.f32 %v4284, %v5311
      %v5313 = vand.u32 %v5312, 4294901760
      %5314 = vmatprep.subr.mxu0 %v5313
      %v5315 = vand.u32 %v4283, 4294901760
      %v5316 = vsub.f32 %v4283, %v5315
      %v5317 = vand.u32 %v5316, 4294901760
      %5318 = vmatpush1.msra.mxu0 %v5317
      %v5319 = vand.u32 %v4286, 4294901760
      %v5320 = vsub.f32 %v4286, %v5319
      %v5321 = vand.u32 %v5320, 4294901760
      %5322 = vmatprep.subr.mxu0 %v5321
      %v5323 = vand.u32 %v4285, 4294901760
      %v5324 = vsub.f32 %v4285, %v5323
      %v5325 = vand.u32 %v5324, 4294901760
      %5326 = vmatpush1.msra.mxu0 %v5325
      %v5327 = vand.u32 %v4288, 4294901760
      %v5328 = vsub.f32 %v4288, %v5327
      %v5329 = vand.u32 %v5328, 4294901760
      %5330 = vmatprep.subr.mxu0 %v5329
      %v5331 = vand.u32 %v4287, 4294901760
      %v5332 = vsub.f32 %v4287, %v5331
      %v5333 = vand.u32 %v5332, 4294901760
      %5334 = vmatpush1.msra.mxu0 %v5333
      %v5335 = vand.u32 %v4290, 4294901760
      %v5336 = vsub.f32 %v4290, %v5335
      %v5337 = vand.u32 %v5336, 4294901760
      %5338 = vmatprep.subr.mxu0 %v5337
      %v5339 = vand.u32 %v4289, 4294901760
      %v5340 = vsub.f32 %v4289, %v5339
      %v5341 = vand.u32 %v5340, 4294901760
      %5342 = vmatpush1.msra.mxu0 %v5341
      %v5343 = vand.u32 %v4292, 4294901760
      %v5344 = vsub.f32 %v4292, %v5343
      %v5345 = vand.u32 %v5344, 4294901760
      %5346 = vmatprep.subr.mxu0 %v5345
      %v5347 = vand.u32 %v4291, 4294901760
      %v5348 = vsub.f32 %v4291, %v5347
      %v5349 = vand.u32 %v5348, 4294901760
      %5350 = vmatpush1.msra.mxu0 %v5349
      %v5351 = vand.u32 %v4294, 4294901760
      %v5352 = vsub.f32 %v4294, %v5351
      %v5353 = vand.u32 %v5352, 4294901760
      %5354 = vmatprep.subr.mxu0 %v5353
      %v5355 = vand.u32 %v4293, 4294901760
      %v5356 = vsub.f32 %v4293, %v5355
      %v5357 = vand.u32 %v5356, 4294901760
      %5358 = vmatpush1.msra.mxu0 %v5357
      %v5359 = vand.u32 %v4296, 4294901760
      %v5360 = vsub.f32 %v4296, %v5359
      %v5361 = vand.u32 %v5360, 4294901760
      %5362 = vmatprep.subr.mxu0 %v5361
      %v5363 = vand.u32 %v4295, 4294901760
      %v5364 = vsub.f32 %v4295, %v5363
      %v5365 = vand.u32 %v5364, 4294901760
      %5366 = vmatpush1.msra.mxu0 %v5365
      %v5367 = vand.u32 %v4298, 4294901760
      %v5368 = vsub.f32 %v4298, %v5367
      %v5369 = vand.u32 %v5368, 4294901760
      %5370 = vmatprep.subr.mxu0 %v5369
      %v5371 = vand.u32 %v4297, 4294901760
      %v5372 = vsub.f32 %v4297, %v5371
      %v5373 = vand.u32 %v5372, 4294901760
      %5374 = vmatpush1.msra.mxu0 %v5373
      %v5375 = vand.u32 %v4300, 4294901760
      %v5376 = vsub.f32 %v4300, %v5375
      %v5377 = vand.u32 %v5376, 4294901760
      %5378 = vmatprep.subr.mxu0 %v5377
      %v5379 = vand.u32 %v4299, 4294901760
      %v5380 = vsub.f32 %v4299, %v5379
      %v5381 = vand.u32 %v5380, 4294901760
      %5382 = vmatpush1.msra.mxu0 %v5381
      %v5383 = vand.u32 %v4302, 4294901760
      %v5384 = vsub.f32 %v4302, %v5383
      %v5385 = vand.u32 %v5384, 4294901760
      %5386 = vmatprep.subr.mxu0 %v5385
      %v5387 = vand.u32 %v4301, 4294901760
      %v5388 = vsub.f32 %v4301, %v5387
      %v5389 = vand.u32 %v5388, 4294901760
      %5390 = vmatpush1.msra.mxu0 %v5389
      %v5391 = vand.u32 %v4304, 4294901760
      %v5392 = vsub.f32 %v4304, %v5391
      %v5393 = vand.u32 %v5392, 4294901760
      %5394 = vmatprep.subr.mxu0 %v5393
      %v5395 = vand.u32 %v4303, 4294901760
      %v5396 = vsub.f32 %v4303, %v5395
      %v5397 = vand.u32 %v5396, 4294901760
      %5398 = vmatpush1.msra.mxu0 %v5397
      %v5399 = vand.u32 %v4306, 4294901760
      %v5400 = vsub.f32 %v4306, %v5399
      %v5401 = vand.u32 %v5400, 4294901760
      %5402 = vmatprep.subr.mxu0 %v5401
      %v5403 = vand.u32 %v4305, 4294901760
      %v5404 = vsub.f32 %v4305, %v5403
      %v5405 = vand.u32 %v5404, 4294901760
      %5406 = vmatpush1.msra.mxu0 %v5405
      %v5407 = vand.u32 %v4308, 4294901760
      %v5408 = vsub.f32 %v4308, %v5407
      %v5409 = vand.u32 %v5408, 4294901760
      %5410 = vmatprep.subr.mxu0 %v5409
      %v5411 = vand.u32 %v4307, 4294901760
      %v5412 = vsub.f32 %v4307, %v5411
      %v5413 = vand.u32 %v5412, 4294901760
      %5414 = vmatpush1.msra.mxu0 %v5413
      %v5415 = vand.u32 %v4310, 4294901760
      %v5416 = vsub.f32 %v4310, %v5415
      %v5417 = vand.u32 %v5416, 4294901760
      %5418 = vmatprep.subr.mxu0 %v5417
      %v5419 = vand.u32 %v4309, 4294901760
      %v5420 = vsub.f32 %v4309, %v5419
      %v5421 = vand.u32 %v5420, 4294901760
      %5422 = vmatpush1.msra.mxu0 %v5421
      %v5423 = vand.u32 %v4312, 4294901760
      %v5424 = vsub.f32 %v4312, %v5423
      %v5425 = vand.u32 %v5424, 4294901760
      %5426 = vmatprep.subr.mxu0 %v5425
      %v5427 = vand.u32 %v4311, 4294901760
      %v5428 = vsub.f32 %v4311, %v5427
      %v5429 = vand.u32 %v5428, 4294901760
      %5430 = vmatpush1.msra.mxu0 %v5429
      %v5431 = vand.u32 %v4314, 4294901760
      %v5432 = vsub.f32 %v4314, %v5431
      %v5433 = vand.u32 %v5432, 4294901760
      %5434 = vmatprep.subr.mxu0 %v5433
      %v5435 = vand.u32 %v4313, 4294901760
      %v5436 = vsub.f32 %v4313, %v5435
      %v5437 = vand.u32 %v5436, 4294901760
      %5438 = vmatpush1.msra.mxu0 %v5437
      %v5439 = vand.u32 %v4316, 4294901760
      %v5440 = vsub.f32 %v4316, %v5439
      %v5441 = vand.u32 %v5440, 4294901760
      %5442 = vmatprep.subr.mxu0 %v5441
      %v5443 = vand.u32 %v4315, 4294901760
      %v5444 = vsub.f32 %v4315, %v5443
      %v5445 = vand.u32 %v5444, 4294901760
      %5446 = vmatpush1.msra.mxu0 %v5445
      %v5447 = vand.u32 %v4318, 4294901760
      %v5448 = vsub.f32 %v4318, %v5447
      %v5449 = vand.u32 %v5448, 4294901760
      %5450 = vmatprep.subr.mxu0 %v5449
      %v5451 = vand.u32 %v4317, 4294901760
      %v5452 = vsub.f32 %v4317, %v5451
      %v5453 = vand.u32 %v5452, 4294901760
      %5454 = vmatpush1.msra.mxu0 %v5453
      %v5455 = vand.u32 %v4320, 4294901760
      %v5456 = vsub.f32 %v4320, %v5455
      %v5457 = vand.u32 %v5456, 4294901760
      %5458 = vmatprep.subr.mxu0 %v5457
      %v5459 = vand.u32 %v4319, 4294901760
      %v5460 = vsub.f32 %v4319, %v5459
      %v5461 = vand.u32 %v5460, 4294901760
      %5462 = vmatpush1.msra.mxu0 %v5461
      %v5463 = vand.u32 %v4322, 4294901760
      %v5464 = vsub.f32 %v4322, %v5463
      %v5465 = vand.u32 %v5464, 4294901760
      %5466 = vmatprep.subr.mxu0 %v5465
      %v5467 = vand.u32 %v4321, 4294901760
      %v5468 = vsub.f32 %v4321, %v5467
      %v5469 = vand.u32 %v5468, 4294901760
      %5470 = vmatpush1.msra.mxu0 %v5469
      %v5471 = vand.u32 %v4324, 4294901760
      %v5472 = vsub.f32 %v4324, %v5471
      %v5473 = vand.u32 %v5472, 4294901760
      %5474 = vmatprep.subr.mxu0 %v5473
      %v5475 = vand.u32 %v4323, 4294901760
      %v5476 = vsub.f32 %v4323, %v5475
      %v5477 = vand.u32 %v5476, 4294901760
      %5478 = vmatpush1.msra.mxu0 %v5477
      %v5479 = vand.u32 %v4326, 4294901760
      %v5480 = vsub.f32 %v4326, %v5479
      %v5481 = vand.u32 %v5480, 4294901760
      %5482 = vmatprep.subr.mxu0 %v5481
      %v5483 = vand.u32 %v4325, 4294901760
      %v5484 = vsub.f32 %v4325, %v5483
      %v5485 = vand.u32 %v5484, 4294901760
      %5486 = vmatpush1.msra.mxu0 %v5485
      %v5487 = vand.u32 %v4328, 4294901760
      %v5488 = vsub.f32 %v4328, %v5487
      %v5489 = vand.u32 %v5488, 4294901760
      %5490 = vmatprep.subr.mxu0 %v5489
      %v5491 = vand.u32 %v4327, 4294901760
      %v5492 = vsub.f32 %v4327, %v5491
      %v5493 = vand.u32 %v5492, 4294901760
      %5494 = vmatpush1.msra.mxu0 %v5493
      %v5495 = vand.u32 %v4330, 4294901760
      %v5496 = vsub.f32 %v4330, %v5495
      %v5497 = vand.u32 %v5496, 4294901760
      %5498 = vmatprep.subr.mxu0 %v5497
      %v5499 = vand.u32 %v4329, 4294901760
      %v5500 = vsub.f32 %v4329, %v5499
      %v5501 = vand.u32 %v5500, 4294901760
      %5502 = vmatpush1.msra.mxu0 %v5501
      %v5503 = vand.u32 %v4332, 4294901760
      %v5504 = vsub.f32 %v4332, %v5503
      %v5505 = vand.u32 %v5504, 4294901760
      %5506 = vmatprep.subr.mxu0 %v5505
      %v5507 = vand.u32 %v4331, 4294901760
      %v5508 = vsub.f32 %v4331, %v5507
      %v5509 = vand.u32 %v5508, 4294901760
      %5510 = vmatpush1.msra.mxu0 %v5509
      %v5511 = vand.u32 %v4334, 4294901760
      %v5512 = vsub.f32 %v4334, %v5511
      %v5513 = vand.u32 %v5512, 4294901760
      %5514 = vmatprep.subr.mxu0 %v5513
      %v5515 = vand.u32 %v4333, 4294901760
      %v5516 = vsub.f32 %v4333, %v5515
      %v5517 = vand.u32 %v5516, 4294901760
      %5518 = vmatpush1.msra.mxu0 %v5517
      %v5519 = vand.u32 %v4336, 4294901760
      %v5520 = vsub.f32 %v4336, %v5519
      %v5521 = vand.u32 %v5520, 4294901760
      %5522 = vmatprep.subr.mxu0 %v5521
      %v5523 = vand.u32 %v4335, 4294901760
      %v5524 = vsub.f32 %v4335, %v5523
      %v5525 = vand.u32 %v5524, 4294901760
      %5526 = vmatpush1.msra.mxu0 %v5525
      %v5527 = vand.u32 %v4338, 4294901760
      %v5528 = vsub.f32 %v4338, %v5527
      %v5529 = vand.u32 %v5528, 4294901760
      %5530 = vmatprep.subr.mxu0 %v5529
      %v5531 = vand.u32 %v4337, 4294901760
      %v5532 = vsub.f32 %v4337, %v5531
      %v5533 = vand.u32 %v5532, 4294901760
      %5534 = vmatpush1.msra.mxu0 %v5533
      %v5535 = vand.u32 %v4340, 4294901760
      %v5536 = vsub.f32 %v4340, %v5535
      %v5537 = vand.u32 %v5536, 4294901760
      %5538 = vmatprep.subr.mxu0 %v5537
      %v5539 = vand.u32 %v4339, 4294901760
      %v5540 = vsub.f32 %v4339, %v5539
      %v5541 = vand.u32 %v5540, 4294901760
      %5542 = vmatpush1.msra.mxu0 %v5541
      %v5543 = vand.u32 %v4342, 4294901760
      %v5544 = vsub.f32 %v4342, %v5543
      %v5545 = vand.u32 %v5544, 4294901760
      %5546 = vmatprep.subr.mxu0 %v5545
      %v5547 = vand.u32 %v4341, 4294901760
      %v5548 = vsub.f32 %v4341, %v5547
      %v5549 = vand.u32 %v5548, 4294901760
      %5550 = vmatpush1.msra.mxu0 %v5549
      %v5551 = vand.u32 %v4344, 4294901760
      %v5552 = vsub.f32 %v4344, %v5551
      %v5553 = vand.u32 %v5552, 4294901760
      %5554 = vmatprep.subr.mxu0 %v5553
      %v5555 = vand.u32 %v4343, 4294901760
      %v5556 = vsub.f32 %v4343, %v5555
      %v5557 = vand.u32 %v5556, 4294901760
      %5558 = vmatpush1.msra.mxu0 %v5557
      %v5559 = vand.u32 %v4278, 4294901760
      %5560 = vmatprep.mubr.f32.mxu0 %v5559
      %v5561 = vand.u32 %v4277, 4294901760
      %5562 = vmatmul.mubr.f32.gmra.mrb[0].mxu0 %v5561
      %v5563 = vpop.f32.mrb[0].mxu0
      %v5564 = vadd.f32 %v5299, %v5563
      %v5565 = vpop.f32.mrb[0].mxu0
      %v5566 = vadd.f32 %v5301, %v5565
      %5567 = vdwg.mxu0
      %v5568 = vand.u32 %v4282, 4294901760
      %5569 = vmatprep.subr.mxu0 %v5568
      %v5570 = vand.u32 %v4281, 4294901760
      %5571 = vmatpush1.msra.mxu0 %v5570
      %v5572 = vand.u32 %v4284, 4294901760
      %5573 = vmatprep.subr.mxu0 %v5572
      %v5574 = vand.u32 %v4283, 4294901760
      %5575 = vmatpush1.msra.mxu0 %v5574
      %v5576 = vand.u32 %v4286, 4294901760
      %5577 = vmatprep.subr.mxu0 %v5576
      %v5578 = vand.u32 %v4285, 4294901760
      %5579 = vmatpush1.msra.mxu0 %v5578
      %v5580 = vand.u32 %v4288, 4294901760
      %5581 = vmatprep.subr.mxu0 %v5580
      %v5582 = vand.u32 %v4287, 4294901760
      %5583 = vmatpush1.msra.mxu0 %v5582
      %v5584 = vand.u32 %v4290, 4294901760
      %5585 = vmatprep.subr.mxu0 %v5584
      %v5586 = vand.u32 %v4289, 4294901760
      %5587 = vmatpush1.msra.mxu0 %v5586
      %v5588 = vand.u32 %v4292, 4294901760
      %5589 = vmatprep.subr.mxu0 %v5588
      %v5590 = vand.u32 %v4291, 4294901760
      %5591 = vmatpush1.msra.mxu0 %v5590
      %v5592 = vand.u32 %v4294, 4294901760
      %5593 = vmatprep.subr.mxu0 %v5592
      %v5594 = vand.u32 %v4293, 4294901760
      %5595 = vmatpush1.msra.mxu0 %v5594
      %v5596 = vand.u32 %v4296, 4294901760
      %5597 = vmatprep.subr.mxu0 %v5596
      %v5598 = vand.u32 %v4295, 4294901760
      %5599 = vmatpush1.msra.mxu0 %v5598
      %v5600 = vand.u32 %v4298, 4294901760
      %5601 = vmatprep.subr.mxu0 %v5600
      %v5602 = vand.u32 %v4297, 4294901760
      %5603 = vmatpush1.msra.mxu0 %v5602
      %v5604 = vand.u32 %v4300, 4294901760
      %5605 = vmatprep.subr.mxu0 %v5604
      %v5606 = vand.u32 %v4299, 4294901760
      %5607 = vmatpush1.msra.mxu0 %v5606
      %v5608 = vand.u32 %v4302, 4294901760
      %5609 = vmatprep.subr.mxu0 %v5608
      %v5610 = vand.u32 %v4301, 4294901760
      %5611 = vmatpush1.msra.mxu0 %v5610
      %v5612 = vand.u32 %v4304, 4294901760
      %5613 = vmatprep.subr.mxu0 %v5612
      %v5614 = vand.u32 %v4303, 4294901760
      %5615 = vmatpush1.msra.mxu0 %v5614
      %v5616 = vand.u32 %v4306, 4294901760
      %5617 = vmatprep.subr.mxu0 %v5616
      %v5618 = vand.u32 %v4305, 4294901760
      %5619 = vmatpush1.msra.mxu0 %v5618
      %v5620 = vand.u32 %v4308, 4294901760
      %5621 = vmatprep.subr.mxu0 %v5620
      %v5622 = vand.u32 %v4307, 4294901760
      %5623 = vmatpush1.msra.mxu0 %v5622
      %v5624 = vand.u32 %v4310, 4294901760
      %5625 = vmatprep.subr.mxu0 %v5624
      %v5626 = vand.u32 %v4309, 4294901760
      %5627 = vmatpush1.msra.mxu0 %v5626
      %v5628 = vand.u32 %v4312, 4294901760
      %5629 = vmatprep.subr.mxu0 %v5628
      %v5630 = vand.u32 %v4311, 4294901760
      %5631 = vmatpush1.msra.mxu0 %v5630
      %v5632 = vand.u32 %v4314, 4294901760
      %5633 = vmatprep.subr.mxu0 %v5632
      %v5634 = vand.u32 %v4313, 4294901760
      %5635 = vmatpush1.msra.mxu0 %v5634
      %v5636 = vand.u32 %v4316, 4294901760
      %5637 = vmatprep.subr.mxu0 %v5636
      %v5638 = vand.u32 %v4315, 4294901760
      %5639 = vmatpush1.msra.mxu0 %v5638
      %v5640 = vand.u32 %v4318, 4294901760
      %5641 = vmatprep.subr.mxu0 %v5640
      %v5642 = vand.u32 %v4317, 4294901760
      %5643 = vmatpush1.msra.mxu0 %v5642
      %v5644 = vand.u32 %v4320, 4294901760
      %5645 = vmatprep.subr.mxu0 %v5644
      %v5646 = vand.u32 %v4319, 4294901760
      %5647 = vmatpush1.msra.mxu0 %v5646
      %v5648 = vand.u32 %v4322, 4294901760
      %5649 = vmatprep.subr.mxu0 %v5648
      %v5650 = vand.u32 %v4321, 4294901760
      %5651 = vmatpush1.msra.mxu0 %v5650
      %v5652 = vand.u32 %v4324, 4294901760
      %5653 = vmatprep.subr.mxu0 %v5652
      %v5654 = vand.u32 %v4323, 4294901760
      %5655 = vmatpush1.msra.mxu0 %v5654
      %v5656 = vand.u32 %v4326, 4294901760
      %5657 = vmatprep.subr.mxu0 %v5656
      %v5658 = vand.u32 %v4325, 4294901760
      %5659 = vmatpush1.msra.mxu0 %v5658
      %v5660 = vand.u32 %v4328, 4294901760
      %5661 = vmatprep.subr.mxu0 %v5660
      %v5662 = vand.u32 %v4327, 4294901760
      %5663 = vmatpush1.msra.mxu0 %v5662
      %v5664 = vand.u32 %v4330, 4294901760
      %5665 = vmatprep.subr.mxu0 %v5664
      %v5666 = vand.u32 %v4329, 4294901760
      %5667 = vmatpush1.msra.mxu0 %v5666
      %v5668 = vand.u32 %v4332, 4294901760
      %5669 = vmatprep.subr.mxu0 %v5668
      %v5670 = vand.u32 %v4331, 4294901760
      %5671 = vmatpush1.msra.mxu0 %v5670
      %v5672 = vand.u32 %v4334, 4294901760
      %5673 = vmatprep.subr.mxu0 %v5672
      %v5674 = vand.u32 %v4333, 4294901760
      %5675 = vmatpush1.msra.mxu0 %v5674
      %v5676 = vand.u32 %v4336, 4294901760
      %5677 = vmatprep.subr.mxu0 %v5676
      %v5678 = vand.u32 %v4335, 4294901760
      %5679 = vmatpush1.msra.mxu0 %v5678
      %v5680 = vand.u32 %v4338, 4294901760
      %5681 = vmatprep.subr.mxu0 %v5680
      %v5682 = vand.u32 %v4337, 4294901760
      %5683 = vmatpush1.msra.mxu0 %v5682
      %v5684 = vand.u32 %v4340, 4294901760
      %5685 = vmatprep.subr.mxu0 %v5684
      %v5686 = vand.u32 %v4339, 4294901760
      %5687 = vmatpush1.msra.mxu0 %v5686
      %v5688 = vand.u32 %v4342, 4294901760
      %5689 = vmatprep.subr.mxu0 %v5688
      %v5690 = vand.u32 %v4341, 4294901760
      %5691 = vmatpush1.msra.mxu0 %v5690
      %v5692 = vand.u32 %v4344, 4294901760
      %5693 = vmatprep.subr.mxu0 %v5692
      %v5694 = vand.u32 %v4343, 4294901760
      %5695 = vmatpush1.msra.mxu0 %v5694
      %v5696 = vand.u32 %v4278, 4294901760
      %5697 = vmatprep.mubr.f32.mxu0 %v5696
      %v5698 = vand.u32 %v4277, 4294901760
      %5699 = vmatmul.mubr.f32.gmra.mrb[0].mxu0 %v5698
      %v5700 = vpop.f32.mrb[0].mxu0
      %v5701 = vadd.f32 %v5564, %v5700
      %v5702 = vpop.f32.mrb[0].mxu0
      %v5703 = vadd.f32 %v5566, %v5702
      %5704 = vdwg.mxu0
      %v5705 = vand.u32 %v4346, 4294901760
      %5706 = vmatprep.subr.mxu0 %v5705
      %v5707 = vand.u32 %v4345, 4294901760
      %5708 = vmatpush1.msra.mxu0 %v5707
      %v5709 = vand.u32 %v4348, 4294901760
      %5710 = vmatprep.subr.mxu0 %v5709
      %v5711 = vand.u32 %v4347, 4294901760
      %5712 = vmatpush1.msra.mxu0 %v5711
      %v5713 = vand.u32 %v4350, 4294901760
      %5714 = vmatprep.subr.mxu0 %v5713
      %v5715 = vand.u32 %v4349, 4294901760
      %5716 = vmatpush1.msra.mxu0 %v5715
      %v5717 = vand.u32 %v4352, 4294901760
      %5718 = vmatprep.subr.mxu0 %v5717
      %v5719 = vand.u32 %v4351, 4294901760
      %5720 = vmatpush1.msra.mxu0 %v5719
      %v5721 = vand.u32 %v4354, 4294901760
      %5722 = vmatprep.subr.mxu0 %v5721
      %v5723 = vand.u32 %v4353, 4294901760
      %5724 = vmatpush1.msra.mxu0 %v5723
      %v5725 = vand.u32 %v4356, 4294901760
      %5726 = vmatprep.subr.mxu0 %v5725
      %v5727 = vand.u32 %v4355, 4294901760
      %5728 = vmatpush1.msra.mxu0 %v5727
      %v5729 = vand.u32 %v4358, 4294901760
      %5730 = vmatprep.subr.mxu0 %v5729
      %v5731 = vand.u32 %v4357, 4294901760
      %5732 = vmatpush1.msra.mxu0 %v5731
      %v5733 = vand.u32 %v4360, 4294901760
      %5734 = vmatprep.subr.mxu0 %v5733
      %v5735 = vand.u32 %v4359, 4294901760
      %5736 = vmatpush1.msra.mxu0 %v5735
      %v5737 = vand.u32 %v4362, 4294901760
      %5738 = vmatprep.subr.mxu0 %v5737
      %v5739 = vand.u32 %v4361, 4294901760
      %5740 = vmatpush1.msra.mxu0 %v5739
      %v5741 = vand.u32 %v4364, 4294901760
      %5742 = vmatprep.subr.mxu0 %v5741
      %v5743 = vand.u32 %v4363, 4294901760
      %5744 = vmatpush1.msra.mxu0 %v5743
      %v5745 = vand.u32 %v4366, 4294901760
      %5746 = vmatprep.subr.mxu0 %v5745
      %v5747 = vand.u32 %v4365, 4294901760
      %5748 = vmatpush1.msra.mxu0 %v5747
      %v5749 = vand.u32 %v4368, 4294901760
      %5750 = vmatprep.subr.mxu0 %v5749
      %v5751 = vand.u32 %v4367, 4294901760
      %5752 = vmatpush1.msra.mxu0 %v5751
      %v5753 = vand.u32 %v4370, 4294901760
      %5754 = vmatprep.subr.mxu0 %v5753
      %v5755 = vand.u32 %v4369, 4294901760
      %5756 = vmatpush1.msra.mxu0 %v5755
      %v5757 = vand.u32 %v4372, 4294901760
      %5758 = vmatprep.subr.mxu0 %v5757
      %v5759 = vand.u32 %v4371, 4294901760
      %5760 = vmatpush1.msra.mxu0 %v5759
      %v5761 = vand.u32 %v4374, 4294901760
      %5762 = vmatprep.subr.mxu0 %v5761
      %v5763 = vand.u32 %v4373, 4294901760
      %5764 = vmatpush1.msra.mxu0 %v5763
      %v5765 = vand.u32 %v4376, 4294901760
      %5766 = vmatprep.subr.mxu0 %v5765
      %v5767 = vand.u32 %v4375, 4294901760
      %5768 = vmatpush1.msra.mxu0 %v5767
      %v5769 = vand.u32 %v4378, 4294901760
      %5770 = vmatprep.subr.mxu0 %v5769
      %v5771 = vand.u32 %v4377, 4294901760
      %5772 = vmatpush1.msra.mxu0 %v5771
      %v5773 = vand.u32 %v4380, 4294901760
      %5774 = vmatprep.subr.mxu0 %v5773
      %v5775 = vand.u32 %v4379, 4294901760
      %5776 = vmatpush1.msra.mxu0 %v5775
      %v5777 = vand.u32 %v4382, 4294901760
      %5778 = vmatprep.subr.mxu0 %v5777
      %v5779 = vand.u32 %v4381, 4294901760
      %5780 = vmatpush1.msra.mxu0 %v5779
      %v5781 = vand.u32 %v4384, 4294901760
      %5782 = vmatprep.subr.mxu0 %v5781
      %v5783 = vand.u32 %v4383, 4294901760
      %5784 = vmatpush1.msra.mxu0 %v5783
      %v5785 = vand.u32 %v4386, 4294901760
      %5786 = vmatprep.subr.mxu0 %v5785
      %v5787 = vand.u32 %v4385, 4294901760
      %5788 = vmatpush1.msra.mxu0 %v5787
      %v5789 = vand.u32 %v4388, 4294901760
      %5790 = vmatprep.subr.mxu0 %v5789
      %v5791 = vand.u32 %v4387, 4294901760
      %5792 = vmatpush1.msra.mxu0 %v5791
      %v5793 = vand.u32 %v4390, 4294901760
      %5794 = vmatprep.subr.mxu0 %v5793
      %v5795 = vand.u32 %v4389, 4294901760
      %5796 = vmatpush1.msra.mxu0 %v5795
      %v5797 = vand.u32 %v4392, 4294901760
      %5798 = vmatprep.subr.mxu0 %v5797
      %v5799 = vand.u32 %v4391, 4294901760
      %5800 = vmatpush1.msra.mxu0 %v5799
      %v5801 = vand.u32 %v4394, 4294901760
      %5802 = vmatprep.subr.mxu0 %v5801
      %v5803 = vand.u32 %v4393, 4294901760
      %5804 = vmatpush1.msra.mxu0 %v5803
      %v5805 = vand.u32 %v4396, 4294901760
      %5806 = vmatprep.subr.mxu0 %v5805
      %v5807 = vand.u32 %v4395, 4294901760
      %5808 = vmatpush1.msra.mxu0 %v5807
      %v5809 = vand.u32 %v4398, 4294901760
      %5810 = vmatprep.subr.mxu0 %v5809
      %v5811 = vand.u32 %v4397, 4294901760
      %5812 = vmatpush1.msra.mxu0 %v5811
      %v5813 = vand.u32 %v4400, 4294901760
      %5814 = vmatprep.subr.mxu0 %v5813
      %v5815 = vand.u32 %v4399, 4294901760
      %5816 = vmatpush1.msra.mxu0 %v5815
      %v5817 = vand.u32 %v4402, 4294901760
      %5818 = vmatprep.subr.mxu0 %v5817
      %v5819 = vand.u32 %v4401, 4294901760
      %5820 = vmatpush1.msra.mxu0 %v5819
      %v5821 = vand.u32 %v4404, 4294901760
      %5822 = vmatprep.subr.mxu0 %v5821
      %v5823 = vand.u32 %v4403, 4294901760
      %5824 = vmatpush1.msra.mxu0 %v5823
      %v5825 = vand.u32 %v4406, 4294901760
      %5826 = vmatprep.subr.mxu0 %v5825
      %v5827 = vand.u32 %v4405, 4294901760
      %5828 = vmatpush1.msra.mxu0 %v5827
      %v5829 = vand.u32 %v4408, 4294901760
      %5830 = vmatprep.subr.mxu0 %v5829
      %v5831 = vand.u32 %v4407, 4294901760
      %5832 = vmatpush1.msra.mxu0 %v5831
      %v5833 = vand.u32 %v4280, 4294901760
      %v5834 = vsub.f32 %v4280, %v5833
      %v5835 = vand.u32 %v5834, 4294901760
      %v5836 = vsub.f32 %v5834, %v5835
      %v5837 = vand.u32 %v5836, 4294901760
      %5838 = vmatprep.mubr.f32.mxu0 %v5837
      %v5839 = vand.u32 %v4279, 4294901760
      %v5840 = vsub.f32 %v4279, %v5839
      %v5841 = vand.u32 %v5840, 4294901760
      %v5842 = vsub.f32 %v5840, %v5841
      %v5843 = vand.u32 %v5842, 4294901760
      %5844 = vmatmul.mubr.f32.gmra.mrb[0].mxu0 %v5843
      %v5845 = vpop.f32.mrb[0].mxu0
      %v5846 = vadd.f32 %v5701, %v5845
      %v5847 = vpop.f32.mrb[0].mxu0
      %v5848 = vadd.f32 %v5703, %v5847
      %5849 = vdwg.mxu0
      %v5850 = vand.u32 %v4346, 4294901760
      %v5851 = vsub.f32 %v4346, %v5850
      %v5852 = vand.u32 %v5851, 4294901760
      %v5853 = vsub.f32 %v5851, %v5852
      %v5854 = vand.u32 %v5853, 4294901760
      %5855 = vmatprep.subr.mxu0 %v5854
      %v5856 = vand.u32 %v4345, 4294901760
      %v5857 = vsub.f32 %v4345, %v5856
      %v5858 = vand.u32 %v5857, 4294901760
      %v5859 = vsub.f32 %v5857, %v5858
      %v5860 = vand.u32 %v5859, 4294901760
      %5861 = vmatpush1.msra.mxu0 %v5860
      %v5862 = vand.u32 %v4348, 4294901760
      %v5863 = vsub.f32 %v4348, %v5862
      %v5864 = vand.u32 %v5863, 4294901760
      %v5865 = vsub.f32 %v5863, %v5864
      %v5866 = vand.u32 %v5865, 4294901760
      %5867 = vmatprep.subr.mxu0 %v5866
      %v5868 = vand.u32 %v4347, 4294901760
      %v5869 = vsub.f32 %v4347, %v5868
      %v5870 = vand.u32 %v5869, 4294901760
      %v5871 = vsub.f32 %v5869, %v5870
      %v5872 = vand.u32 %v5871, 4294901760
      %5873 = vmatpush1.msra.mxu0 %v5872
      %v5874 = vand.u32 %v4350, 4294901760
      %v5875 = vsub.f32 %v4350, %v5874
      %v5876 = vand.u32 %v5875, 4294901760
      %v5877 = vsub.f32 %v5875, %v5876
      %v5878 = vand.u32 %v5877, 4294901760
      %5879 = vmatprep.subr.mxu0 %v5878
      %v5880 = vand.u32 %v4349, 4294901760
      %v5881 = vsub.f32 %v4349, %v5880
      %v5882 = vand.u32 %v5881, 4294901760
      %v5883 = vsub.f32 %v5881, %v5882
      %v5884 = vand.u32 %v5883, 4294901760
      %5885 = vmatpush1.msra.mxu0 %v5884
      %v5886 = vand.u32 %v4352, 4294901760
      %v5887 = vsub.f32 %v4352, %v5886
      %v5888 = vand.u32 %v5887, 4294901760
      %v5889 = vsub.f32 %v5887, %v5888
      %v5890 = vand.u32 %v5889, 4294901760
      %5891 = vmatprep.subr.mxu0 %v5890
      %v5892 = vand.u32 %v4351, 4294901760
      %v5893 = vsub.f32 %v4351, %v5892
      %v5894 = vand.u32 %v5893, 4294901760
      %v5895 = vsub.f32 %v5893, %v5894
      %v5896 = vand.u32 %v5895, 4294901760
      %5897 = vmatpush1.msra.mxu0 %v5896
      %v5898 = vand.u32 %v4354, 4294901760
      %v5899 = vsub.f32 %v4354, %v5898
      %v5900 = vand.u32 %v5899, 4294901760
      %v5901 = vsub.f32 %v5899, %v5900
      %v5902 = vand.u32 %v5901, 4294901760
      %5903 = vmatprep.subr.mxu0 %v5902
      %v5904 = vand.u32 %v4353, 4294901760
      %v5905 = vsub.f32 %v4353, %v5904
      %v5906 = vand.u32 %v5905, 4294901760
      %v5907 = vsub.f32 %v5905, %v5906
      %v5908 = vand.u32 %v5907, 4294901760
      %5909 = vmatpush1.msra.mxu0 %v5908
      %v5910 = vand.u32 %v4356, 4294901760
      %v5911 = vsub.f32 %v4356, %v5910
      %v5912 = vand.u32 %v5911, 4294901760
      %v5913 = vsub.f32 %v5911, %v5912
      %v5914 = vand.u32 %v5913, 4294901760
      %5915 = vmatprep.subr.mxu0 %v5914
      %v5916 = vand.u32 %v4355, 4294901760
      %v5917 = vsub.f32 %v4355, %v5916
      %v5918 = vand.u32 %v5917, 4294901760
      %v5919 = vsub.f32 %v5917, %v5918
      %v5920 = vand.u32 %v5919, 4294901760
      %5921 = vmatpush1.msra.mxu0 %v5920
      %v5922 = vand.u32 %v4358, 4294901760
      %v5923 = vsub.f32 %v4358, %v5922
      %v5924 = vand.u32 %v5923, 4294901760
      %v5925 = vsub.f32 %v5923, %v5924
      %v5926 = vand.u32 %v5925, 4294901760
      %5927 = vmatprep.subr.mxu0 %v5926
      %v5928 = vand.u32 %v4357, 4294901760
      %v5929 = vsub.f32 %v4357, %v5928
      %v5930 = vand.u32 %v5929, 4294901760
      %v5931 = vsub.f32 %v5929, %v5930
      %v5932 = vand.u32 %v5931, 4294901760
      %5933 = vmatpush1.msra.mxu0 %v5932
      %v5934 = vand.u32 %v4360, 4294901760
      %v5935 = vsub.f32 %v4360, %v5934
      %v5936 = vand.u32 %v5935, 4294901760
      %v5937 = vsub.f32 %v5935, %v5936
      %v5938 = vand.u32 %v5937, 4294901760
      %5939 = vmatprep.subr.mxu0 %v5938
      %v5940 = vand.u32 %v4359, 4294901760
      %v5941 = vsub.f32 %v4359, %v5940
      %v5942 = vand.u32 %v5941, 4294901760
      %v5943 = vsub.f32 %v5941, %v5942
      %v5944 = vand.u32 %v5943, 4294901760
      %5945 = vmatpush1.msra.mxu0 %v5944
      %v5946 = vand.u32 %v4362, 4294901760
      %v5947 = vsub.f32 %v4362, %v5946
      %v5948 = vand.u32 %v5947, 4294901760
      %v5949 = vsub.f32 %v5947, %v5948
      %v5950 = vand.u32 %v5949, 4294901760
      %5951 = vmatprep.subr.mxu0 %v5950
      %v5952 = vand.u32 %v4361, 4294901760
      %v5953 = vsub.f32 %v4361, %v5952
      %v5954 = vand.u32 %v5953, 4294901760
      %v5955 = vsub.f32 %v5953, %v5954
      %v5956 = vand.u32 %v5955, 4294901760
      %5957 = vmatpush1.msra.mxu0 %v5956
      %v5958 = vand.u32 %v4364, 4294901760
      %v5959 = vsub.f32 %v4364, %v5958
      %v5960 = vand.u32 %v5959, 4294901760
      %v5961 = vsub.f32 %v5959, %v5960
      %v5962 = vand.u32 %v5961, 4294901760
      %5963 = vmatprep.subr.mxu0 %v5962
      %v5964 = vand.u32 %v4363, 4294901760
      %v5965 = vsub.f32 %v4363, %v5964
      %v5966 = vand.u32 %v5965, 4294901760
      %v5967 = vsub.f32 %v5965, %v5966
      %v5968 = vand.u32 %v5967, 4294901760
      %5969 = vmatpush1.msra.mxu0 %v5968
      %v5970 = vand.u32 %v4366, 4294901760
      %v5971 = vsub.f32 %v4366, %v5970
      %v5972 = vand.u32 %v5971, 4294901760
      %v5973 = vsub.f32 %v5971, %v5972
      %v5974 = vand.u32 %v5973, 4294901760
      %5975 = vmatprep.subr.mxu0 %v5974
      %v5976 = vand.u32 %v4365, 4294901760
      %v5977 = vsub.f32 %v4365, %v5976
      %v5978 = vand.u32 %v5977, 4294901760
      %v5979 = vsub.f32 %v5977, %v5978
      %v5980 = vand.u32 %v5979, 4294901760
      %5981 = vmatpush1.msra.mxu0 %v5980
      %v5982 = vand.u32 %v4368, 4294901760
      %v5983 = vsub.f32 %v4368, %v5982
      %v5984 = vand.u32 %v5983, 4294901760
      %v5985 = vsub.f32 %v5983, %v5984
      %v5986 = vand.u32 %v5985, 4294901760
      %5987 = vmatprep.subr.mxu0 %v5986
      %v5988 = vand.u32 %v4367, 4294901760
      %v5989 = vsub.f32 %v4367, %v5988
      %v5990 = vand.u32 %v5989, 4294901760
      %v5991 = vsub.f32 %v5989, %v5990
      %v5992 = vand.u32 %v5991, 4294901760
      %5993 = vmatpush1.msra.mxu0 %v5992
      %v5994 = vand.u32 %v4370, 4294901760
      %v5995 = vsub.f32 %v4370, %v5994
      %v5996 = vand.u32 %v5995, 4294901760
      %v5997 = vsub.f32 %v5995, %v5996
      %v5998 = vand.u32 %v5997, 4294901760
      %5999 = vmatprep.subr.mxu0 %v5998
      %v6000 = vand.u32 %v4369, 4294901760
      %v6001 = vsub.f32 %v4369, %v6000
      %v6002 = vand.u32 %v6001, 4294901760
      %v6003 = vsub.f32 %v6001, %v6002
      %v6004 = vand.u32 %v6003, 4294901760
      %6005 = vmatpush1.msra.mxu0 %v6004
      %v6006 = vand.u32 %v4372, 4294901760
      %v6007 = vsub.f32 %v4372, %v6006
      %v6008 = vand.u32 %v6007, 4294901760
      %v6009 = vsub.f32 %v6007, %v6008
      %v6010 = vand.u32 %v6009, 4294901760
      %6011 = vmatprep.subr.mxu0 %v6010
      %v6012 = vand.u32 %v4371, 4294901760
      %v6013 = vsub.f32 %v4371, %v6012
      %v6014 = vand.u32 %v6013, 4294901760
      %v6015 = vsub.f32 %v6013, %v6014
      %v6016 = vand.u32 %v6015, 4294901760
      %6017 = vmatpush1.msra.mxu0 %v6016
      %v6018 = vand.u32 %v4374, 4294901760
      %v6019 = vsub.f32 %v4374, %v6018
      %v6020 = vand.u32 %v6019, 4294901760
      %v6021 = vsub.f32 %v6019, %v6020
      %v6022 = vand.u32 %v6021, 4294901760
      %6023 = vmatprep.subr.mxu0 %v6022
      %v6024 = vand.u32 %v4373, 4294901760
      %v6025 = vsub.f32 %v4373, %v6024
      %v6026 = vand.u32 %v6025, 4294901760
      %v6027 = vsub.f32 %v6025, %v6026
      %v6028 = vand.u32 %v6027, 4294901760
      %6029 = vmatpush1.msra.mxu0 %v6028
      %v6030 = vand.u32 %v4376, 4294901760
      %v6031 = vsub.f32 %v4376, %v6030
      %v6032 = vand.u32 %v6031, 4294901760
      %v6033 = vsub.f32 %v6031, %v6032
      %v6034 = vand.u32 %v6033, 4294901760
      %6035 = vmatprep.subr.mxu0 %v6034
      %v6036 = vand.u32 %v4375, 4294901760
      %v6037 = vsub.f32 %v4375, %v6036
      %v6038 = vand.u32 %v6037, 4294901760
      %v6039 = vsub.f32 %v6037, %v6038
      %v6040 = vand.u32 %v6039, 4294901760
      %6041 = vmatpush1.msra.mxu0 %v6040
      %v6042 = vand.u32 %v4378, 4294901760
      %v6043 = vsub.f32 %v4378, %v6042
      %v6044 = vand.u32 %v6043, 4294901760
      %v6045 = vsub.f32 %v6043, %v6044
      %v6046 = vand.u32 %v6045, 4294901760
      %6047 = vmatprep.subr.mxu0 %v6046
      %v6048 = vand.u32 %v4377, 4294901760
      %v6049 = vsub.f32 %v4377, %v6048
      %v6050 = vand.u32 %v6049, 4294901760
      %v6051 = vsub.f32 %v6049, %v6050
      %v6052 = vand.u32 %v6051, 4294901760
      %6053 = vmatpush1.msra.mxu0 %v6052
      %v6054 = vand.u32 %v4380, 4294901760
      %v6055 = vsub.f32 %v4380, %v6054
      %v6056 = vand.u32 %v6055, 4294901760
      %v6057 = vsub.f32 %v6055, %v6056
      %v6058 = vand.u32 %v6057, 4294901760
      %6059 = vmatprep.subr.mxu0 %v6058
      %v6060 = vand.u32 %v4379, 4294901760
      %v6061 = vsub.f32 %v4379, %v6060
      %v6062 = vand.u32 %v6061, 4294901760
      %v6063 = vsub.f32 %v6061, %v6062
      %v6064 = vand.u32 %v6063, 4294901760
      %6065 = vmatpush1.msra.mxu0 %v6064
      %v6066 = vand.u32 %v4382, 4294901760
      %v6067 = vsub.f32 %v4382, %v6066
      %v6068 = vand.u32 %v6067, 4294901760
      %v6069 = vsub.f32 %v6067, %v6068
      %v6070 = vand.u32 %v6069, 4294901760
      %6071 = vmatprep.subr.mxu0 %v6070
      %v6072 = vand.u32 %v4381, 4294901760
      %v6073 = vsub.f32 %v4381, %v6072
      %v6074 = vand.u32 %v6073, 4294901760
      %v6075 = vsub.f32 %v6073, %v6074
      %v6076 = vand.u32 %v6075, 4294901760
      %6077 = vmatpush1.msra.mxu0 %v6076
      %v6078 = vand.u32 %v4384, 4294901760
      %v6079 = vsub.f32 %v4384, %v6078
      %v6080 = vand.u32 %v6079, 4294901760
      %v6081 = vsub.f32 %v6079, %v6080
      %v6082 = vand.u32 %v6081, 4294901760
      %6083 = vmatprep.subr.mxu0 %v6082
      %v6084 = vand.u32 %v4383, 4294901760
      %v6085 = vsub.f32 %v4383, %v6084
      %v6086 = vand.u32 %v6085, 4294901760
      %v6087 = vsub.f32 %v6085, %v6086
      %v6088 = vand.u32 %v6087, 4294901760
      %6089 = vmatpush1.msra.mxu0 %v6088
      %v6090 = vand.u32 %v4386, 4294901760
      %v6091 = vsub.f32 %v4386, %v6090
      %v6092 = vand.u32 %v6091, 4294901760
      %v6093 = vsub.f32 %v6091, %v6092
      %v6094 = vand.u32 %v6093, 4294901760
      %6095 = vmatprep.subr.mxu0 %v6094
      %v6096 = vand.u32 %v4385, 4294901760
      %v6097 = vsub.f32 %v4385, %v6096
      %v6098 = vand.u32 %v6097, 4294901760
      %v6099 = vsub.f32 %v6097, %v6098
      %v6100 = vand.u32 %v6099, 4294901760
      %6101 = vmatpush1.msra.mxu0 %v6100
      %v6102 = vand.u32 %v4388, 4294901760
      %v6103 = vsub.f32 %v4388, %v6102
      %v6104 = vand.u32 %v6103, 4294901760
      %v6105 = vsub.f32 %v6103, %v6104
      %v6106 = vand.u32 %v6105, 4294901760
      %6107 = vmatprep.subr.mxu0 %v6106
      %v6108 = vand.u32 %v4387, 4294901760
      %v6109 = vsub.f32 %v4387, %v6108
      %v6110 = vand.u32 %v6109, 4294901760
      %v6111 = vsub.f32 %v6109, %v6110
      %v6112 = vand.u32 %v6111, 4294901760
      %6113 = vmatpush1.msra.mxu0 %v6112
      %v6114 = vand.u32 %v4390, 4294901760
      %v6115 = vsub.f32 %v4390, %v6114
      %v6116 = vand.u32 %v6115, 4294901760
      %v6117 = vsub.f32 %v6115, %v6116
      %v6118 = vand.u32 %v6117, 4294901760
      %6119 = vmatprep.subr.mxu0 %v6118
      %v6120 = vand.u32 %v4389, 4294901760
      %v6121 = vsub.f32 %v4389, %v6120
      %v6122 = vand.u32 %v6121, 4294901760
      %v6123 = vsub.f32 %v6121, %v6122
      %v6124 = vand.u32 %v6123, 4294901760
      %6125 = vmatpush1.msra.mxu0 %v6124
      %v6126 = vand.u32 %v4392, 4294901760
      %v6127 = vsub.f32 %v4392, %v6126
      %v6128 = vand.u32 %v6127, 4294901760
      %v6129 = vsub.f32 %v6127, %v6128
      %v6130 = vand.u32 %v6129, 4294901760
      %6131 = vmatprep.subr.mxu0 %v6130
      %v6132 = vand.u32 %v4391, 4294901760
      %v6133 = vsub.f32 %v4391, %v6132
      %v6134 = vand.u32 %v6133, 4294901760
      %v6135 = vsub.f32 %v6133, %v6134
      %v6136 = vand.u32 %v6135, 4294901760
      %6137 = vmatpush1.msra.mxu0 %v6136
      %v6138 = vand.u32 %v4394, 4294901760
      %v6139 = vsub.f32 %v4394, %v6138
      %v6140 = vand.u32 %v6139, 4294901760
      %v6141 = vsub.f32 %v6139, %v6140
      %v6142 = vand.u32 %v6141, 4294901760
      %6143 = vmatprep.subr.mxu0 %v6142
      %v6144 = vand.u32 %v4393, 4294901760
      %v6145 = vsub.f32 %v4393, %v6144
      %v6146 = vand.u32 %v6145, 4294901760
      %v6147 = vsub.f32 %v6145, %v6146
      %v6148 = vand.u32 %v6147, 4294901760
      %6149 = vmatpush1.msra.mxu0 %v6148
      %v6150 = vand.u32 %v4396, 4294901760
      %v6151 = vsub.f32 %v4396, %v6150
      %v6152 = vand.u32 %v6151, 4294901760
      %v6153 = vsub.f32 %v6151, %v6152
      %v6154 = vand.u32 %v6153, 4294901760
      %6155 = vmatprep.subr.mxu0 %v6154
      %v6156 = vand.u32 %v4395, 4294901760
      %v6157 = vsub.f32 %v4395, %v6156
      %v6158 = vand.u32 %v6157, 4294901760
      %v6159 = vsub.f32 %v6157, %v6158
      %v6160 = vand.u32 %v6159, 4294901760
      %6161 = vmatpush1.msra.mxu0 %v6160
      %v6162 = vand.u32 %v4398, 4294901760
      %v6163 = vsub.f32 %v4398, %v6162
      %v6164 = vand.u32 %v6163, 4294901760
      %v6165 = vsub.f32 %v6163, %v6164
      %v6166 = vand.u32 %v6165, 4294901760
      %6167 = vmatprep.subr.mxu0 %v6166
      %v6168 = vand.u32 %v4397, 4294901760
      %v6169 = vsub.f32 %v4397, %v6168
      %v6170 = vand.u32 %v6169, 4294901760
      %v6171 = vsub.f32 %v6169, %v6170
      %v6172 = vand.u32 %v6171, 4294901760
      %6173 = vmatpush1.msra.mxu0 %v6172
      %v6174 = vand.u32 %v4400, 4294901760
      %v6175 = vsub.f32 %v4400, %v6174
      %v6176 = vand.u32 %v6175, 4294901760
      %v6177 = vsub.f32 %v6175, %v6176
      %v6178 = vand.u32 %v6177, 4294901760
      %6179 = vmatprep.subr.mxu0 %v6178
      %v6180 = vand.u32 %v4399, 4294901760
      %v6181 = vsub.f32 %v4399, %v6180
      %v6182 = vand.u32 %v6181, 4294901760
      %v6183 = vsub.f32 %v6181, %v6182
      %v6184 = vand.u32 %v6183, 4294901760
      %6185 = vmatpush1.msra.mxu0 %v6184
      %v6186 = vand.u32 %v4402, 4294901760
      %v6187 = vsub.f32 %v4402, %v6186
      %v6188 = vand.u32 %v6187, 4294901760
      %v6189 = vsub.f32 %v6187, %v6188
      %v6190 = vand.u32 %v6189, 4294901760
      %6191 = vmatprep.subr.mxu0 %v6190
      %v6192 = vand.u32 %v4401, 4294901760
      %v6193 = vsub.f32 %v4401, %v6192
      %v6194 = vand.u32 %v6193, 4294901760
      %v6195 = vsub.f32 %v6193, %v6194
      %v6196 = vand.u32 %v6195, 4294901760
      %6197 = vmatpush1.msra.mxu0 %v6196
      %v6198 = vand.u32 %v4404, 4294901760
      %v6199 = vsub.f32 %v4404, %v6198
      %v6200 = vand.u32 %v6199, 4294901760
      %v6201 = vsub.f32 %v6199, %v6200
      %v6202 = vand.u32 %v6201, 4294901760
      %6203 = vmatprep.subr.mxu0 %v6202
      %v6204 = vand.u32 %v4403, 4294901760
      %v6205 = vsub.f32 %v4403, %v6204
      %v6206 = vand.u32 %v6205, 4294901760
      %v6207 = vsub.f32 %v6205, %v6206
      %v6208 = vand.u32 %v6207, 4294901760
      %6209 = vmatpush1.msra.mxu0 %v6208
      %v6210 = vand.u32 %v4406, 4294901760
      %v6211 = vsub.f32 %v4406, %v6210
      %v6212 = vand.u32 %v6211, 4294901760
      %v6213 = vsub.f32 %v6211, %v6212
      %v6214 = vand.u32 %v6213, 4294901760
      %6215 = vmatprep.subr.mxu0 %v6214
      %v6216 = vand.u32 %v4405, 4294901760
      %v6217 = vsub.f32 %v4405, %v6216
      %v6218 = vand.u32 %v6217, 4294901760
      %v6219 = vsub.f32 %v6217, %v6218
      %v6220 = vand.u32 %v6219, 4294901760
      %6221 = vmatpush1.msra.mxu0 %v6220
      %v6222 = vand.u32 %v4408, 4294901760
      %v6223 = vsub.f32 %v4408, %v6222
      %v6224 = vand.u32 %v6223, 4294901760
      %v6225 = vsub.f32 %v6223, %v6224
      %v6226 = vand.u32 %v6225, 4294901760
      %6227 = vmatprep.subr.mxu0 %v6226
      %v6228 = vand.u32 %v4407, 4294901760
      %v6229 = vsub.f32 %v4407, %v6228
      %v6230 = vand.u32 %v6229, 4294901760
      %v6231 = vsub.f32 %v6229, %v6230
      %v6232 = vand.u32 %v6231, 4294901760
      %6233 = vmatpush1.msra.mxu0 %v6232
      %v6234 = vand.u32 %v4280, 4294901760
      %6235 = vmatprep.mubr.f32.mxu0 %v6234
      %v6236 = vand.u32 %v4279, 4294901760
      %6237 = vmatmul.mubr.f32.gmra.mrb[0].mxu0 %v6236
      %v6238 = vpop.f32.mrb[0].mxu0
      %v6239 = vadd.f32 %v5846, %v6238
      %v6240 = vpop.f32.mrb[0].mxu0
      %v6241 = vadd.f32 %v5848, %v6240
      %6242 = vdwg.mxu0
      %v6243 = vand.u32 %v4346, 4294901760
      %v6244 = vsub.f32 %v4346, %v6243
      %6245 = vmatprep.subr.mxu0 %v6244
      %v6246 = vand.u32 %v4345, 4294901760
      %v6247 = vsub.f32 %v4345, %v6246
      %6248 = vmatpush1.msra.mxu0 %v6247
      %v6249 = vand.u32 %v4348, 4294901760
      %v6250 = vsub.f32 %v4348, %v6249
      %6251 = vmatprep.subr.mxu0 %v6250
      %v6252 = vand.u32 %v4347, 4294901760
      %v6253 = vsub.f32 %v4347, %v6252
      %6254 = vmatpush1.msra.mxu0 %v6253
      %v6255 = vand.u32 %v4350, 4294901760
      %v6256 = vsub.f32 %v4350, %v6255
      %6257 = vmatprep.subr.mxu0 %v6256
      %v6258 = vand.u32 %v4349, 4294901760
      %v6259 = vsub.f32 %v4349, %v6258
      %6260 = vmatpush1.msra.mxu0 %v6259
      %v6261 = vand.u32 %v4352, 4294901760
      %v6262 = vsub.f32 %v4352, %v6261
      %6263 = vmatprep.subr.mxu0 %v6262
      %v6264 = vand.u32 %v4351, 4294901760
      %v6265 = vsub.f32 %v4351, %v6264
      %6266 = vmatpush1.msra.mxu0 %v6265
      %v6267 = vand.u32 %v4354, 4294901760
      %v6268 = vsub.f32 %v4354, %v6267
      %6269 = vmatprep.subr.mxu0 %v6268
      %v6270 = vand.u32 %v4353, 4294901760
      %v6271 = vsub.f32 %v4353, %v6270
      %6272 = vmatpush1.msra.mxu0 %v6271
      %v6273 = vand.u32 %v4356, 4294901760
      %v6274 = vsub.f32 %v4356, %v6273
      %6275 = vmatprep.subr.mxu0 %v6274
      %v6276 = vand.u32 %v4355, 4294901760
      %v6277 = vsub.f32 %v4355, %v6276
      %6278 = vmatpush1.msra.mxu0 %v6277
      %v6279 = vand.u32 %v4358, 4294901760
      %v6280 = vsub.f32 %v4358, %v6279
      %6281 = vmatprep.subr.mxu0 %v6280
      %v6282 = vand.u32 %v4357, 4294901760
      %v6283 = vsub.f32 %v4357, %v6282
      %6284 = vmatpush1.msra.mxu0 %v6283
      %v6285 = vand.u32 %v4360, 4294901760
      %v6286 = vsub.f32 %v4360, %v6285
      %6287 = vmatprep.subr.mxu0 %v6286
      %v6288 = vand.u32 %v4359, 4294901760
      %v6289 = vsub.f32 %v4359, %v6288
      %6290 = vmatpush1.msra.mxu0 %v6289
      %v6291 = vand.u32 %v4362, 4294901760
      %v6292 = vsub.f32 %v4362, %v6291
      %6293 = vmatprep.subr.mxu0 %v6292
      %v6294 = vand.u32 %v4361, 4294901760
      %v6295 = vsub.f32 %v4361, %v6294
      %6296 = vmatpush1.msra.mxu0 %v6295
      %v6297 = vand.u32 %v4364, 4294901760
      %v6298 = vsub.f32 %v4364, %v6297
      %6299 = vmatprep.subr.mxu0 %v6298
      %v6300 = vand.u32 %v4363, 4294901760
      %v6301 = vsub.f32 %v4363, %v6300
      %6302 = vmatpush1.msra.mxu0 %v6301
      %v6303 = vand.u32 %v4366, 4294901760
      %v6304 = vsub.f32 %v4366, %v6303
      %6305 = vmatprep.subr.mxu0 %v6304
      %v6306 = vand.u32 %v4365, 4294901760
      %v6307 = vsub.f32 %v4365, %v6306
      %6308 = vmatpush1.msra.mxu0 %v6307
      %v6309 = vand.u32 %v4368, 4294901760
      %v6310 = vsub.f32 %v4368, %v6309
      %6311 = vmatprep.subr.mxu0 %v6310
      %v6312 = vand.u32 %v4367, 4294901760
      %v6313 = vsub.f32 %v4367, %v6312
      %6314 = vmatpush1.msra.mxu0 %v6313
      %v6315 = vand.u32 %v4370, 4294901760
      %v6316 = vsub.f32 %v4370, %v6315
      %6317 = vmatprep.subr.mxu0 %v6316
      %v6318 = vand.u32 %v4369, 4294901760
      %v6319 = vsub.f32 %v4369, %v6318
      %6320 = vmatpush1.msra.mxu0 %v6319
      %v6321 = vand.u32 %v4372, 4294901760
      %v6322 = vsub.f32 %v4372, %v6321
      %6323 = vmatprep.subr.mxu0 %v6322
      %v6324 = vand.u32 %v4371, 4294901760
      %v6325 = vsub.f32 %v4371, %v6324
      %6326 = vmatpush1.msra.mxu0 %v6325
      %v6327 = vand.u32 %v4374, 4294901760
      %v6328 = vsub.f32 %v4374, %v6327
      %6329 = vmatprep.subr.mxu0 %v6328
      %v6330 = vand.u32 %v4373, 4294901760
      %v6331 = vsub.f32 %v4373, %v6330
      %6332 = vmatpush1.msra.mxu0 %v6331
      %v6333 = vand.u32 %v4376, 4294901760
      %v6334 = vsub.f32 %v4376, %v6333
      %6335 = vmatprep.subr.mxu0 %v6334
      %v6336 = vand.u32 %v4375, 4294901760
      %v6337 = vsub.f32 %v4375, %v6336
      %6338 = vmatpush1.msra.mxu0 %v6337
      %v6339 = vand.u32 %v4378, 4294901760
      %v6340 = vsub.f32 %v4378, %v6339
      %6341 = vmatprep.subr.mxu0 %v6340
      %v6342 = vand.u32 %v4377, 4294901760
      %v6343 = vsub.f32 %v4377, %v6342
      %6344 = vmatpush1.msra.mxu0 %v6343
      %v6345 = vand.u32 %v4380, 4294901760
      %v6346 = vsub.f32 %v4380, %v6345
      %6347 = vmatprep.subr.mxu0 %v6346
      %v6348 = vand.u32 %v4379, 4294901760
      %v6349 = vsub.f32 %v4379, %v6348
      %6350 = vmatpush1.msra.mxu0 %v6349
      %v6351 = vand.u32 %v4382, 4294901760
      %v6352 = vsub.f32 %v4382, %v6351
      %6353 = vmatprep.subr.mxu0 %v6352
      %v6354 = vand.u32 %v4381, 4294901760
      %v6355 = vsub.f32 %v4381, %v6354
      %6356 = vmatpush1.msra.mxu0 %v6355
      %v6357 = vand.u32 %v4384, 4294901760
      %v6358 = vsub.f32 %v4384, %v6357
      %6359 = vmatprep.subr.mxu0 %v6358
      %v6360 = vand.u32 %v4383, 4294901760
      %v6361 = vsub.f32 %v4383, %v6360
      %6362 = vmatpush1.msra.mxu0 %v6361
      %v6363 = vand.u32 %v4386, 4294901760
      %v6364 = vsub.f32 %v4386, %v6363
      %6365 = vmatprep.subr.mxu0 %v6364
      %v6366 = vand.u32 %v4385, 4294901760
      %v6367 = vsub.f32 %v4385, %v6366
      %6368 = vmatpush1.msra.mxu0 %v6367
      %v6369 = vand.u32 %v4388, 4294901760
      %v6370 = vsub.f32 %v4388, %v6369
      %6371 = vmatprep.subr.mxu0 %v6370
      %v6372 = vand.u32 %v4387, 4294901760
      %v6373 = vsub.f32 %v4387, %v6372
      %6374 = vmatpush1.msra.mxu0 %v6373
      %v6375 = vand.u32 %v4390, 4294901760
      %v6376 = vsub.f32 %v4390, %v6375
      %6377 = vmatprep.subr.mxu0 %v6376
      %v6378 = vand.u32 %v4389, 4294901760
      %v6379 = vsub.f32 %v4389, %v6378
      %6380 = vmatpush1.msra.mxu0 %v6379
      %v6381 = vand.u32 %v4392, 4294901760
      %v6382 = vsub.f32 %v4392, %v6381
      %6383 = vmatprep.subr.mxu0 %v6382
      %v6384 = vand.u32 %v4391, 4294901760
      %v6385 = vsub.f32 %v4391, %v6384
      %6386 = vmatpush1.msra.mxu0 %v6385
      %v6387 = vand.u32 %v4394, 4294901760
      %v6388 = vsub.f32 %v4394, %v6387
      %6389 = vmatprep.subr.mxu0 %v6388
      %v6390 = vand.u32 %v4393, 4294901760
      %v6391 = vsub.f32 %v4393, %v6390
      %6392 = vmatpush1.msra.mxu0 %v6391
      %v6393 = vand.u32 %v4396, 4294901760
      %v6394 = vsub.f32 %v4396, %v6393
      %6395 = vmatprep.subr.mxu0 %v6394
      %v6396 = vand.u32 %v4395, 4294901760
      %v6397 = vsub.f32 %v4395, %v6396
      %6398 = vmatpush1.msra.mxu0 %v6397
      %v6399 = vand.u32 %v4398, 4294901760
      %v6400 = vsub.f32 %v4398, %v6399
      %6401 = vmatprep.subr.mxu0 %v6400
      %v6402 = vand.u32 %v4397, 4294901760
      %v6403 = vsub.f32 %v4397, %v6402
      %6404 = vmatpush1.msra.mxu0 %v6403
      %v6405 = vand.u32 %v4400, 4294901760
      %v6406 = vsub.f32 %v4400, %v6405
      %6407 = vmatprep.subr.mxu0 %v6406
      %v6408 = vand.u32 %v4399, 4294901760
      %v6409 = vsub.f32 %v4399, %v6408
      %6410 = vmatpush1.msra.mxu0 %v6409
      %v6411 = vand.u32 %v4402, 4294901760
      %v6412 = vsub.f32 %v4402, %v6411
      %6413 = vmatprep.subr.mxu0 %v6412
      %v6414 = vand.u32 %v4401, 4294901760
      %v6415 = vsub.f32 %v4401, %v6414
      %6416 = vmatpush1.msra.mxu0 %v6415
      %v6417 = vand.u32 %v4404, 4294901760
      %v6418 = vsub.f32 %v4404, %v6417
      %6419 = vmatprep.subr.mxu0 %v6418
      %v6420 = vand.u32 %v4403, 4294901760
      %v6421 = vsub.f32 %v4403, %v6420
      %6422 = vmatpush1.msra.mxu0 %v6421
      %v6423 = vand.u32 %v4406, 4294901760
      %v6424 = vsub.f32 %v4406, %v6423
      %6425 = vmatprep.subr.mxu0 %v6424
      %v6426 = vand.u32 %v4405, 4294901760
      %v6427 = vsub.f32 %v4405, %v6426
      %6428 = vmatpush1.msra.mxu0 %v6427
      %v6429 = vand.u32 %v4408, 4294901760
      %v6430 = vsub.f32 %v4408, %v6429
      %6431 = vmatprep.subr.mxu0 %v6430
      %v6432 = vand.u32 %v4407, 4294901760
      %v6433 = vsub.f32 %v4407, %v6432
      %6434 = vmatpush1.msra.mxu0 %v6433
      %v6435 = vand.u32 %v4280, 4294901760
      %v6436 = vsub.f32 %v4280, %v6435
      %6437 = vmatprep.mubr.f32.mxu0 %v6436
      %v6438 = vand.u32 %v4279, 4294901760
      %v6439 = vsub.f32 %v4279, %v6438
      %6440 = vmatmul.mubr.f32.gmra.mrb[0].mxu0 %v6439
      %v6441 = vpop.f32.mrb[0].mxu0
      %v6442 = vadd.f32 %v6239, %v6441
      %v6443 = vpop.f32.mrb[0].mxu0
      %v6444 = vadd.f32 %v6241, %v6443
      %6445 = vdwg.mxu0
      %v6446 = vand.u32 %v4346, 4294901760
      %6447 = vmatprep.subr.mxu0 %v6446
      %v6448 = vand.u32 %v4345, 4294901760
      %6449 = vmatpush1.msra.mxu0 %v6448
      %v6450 = vand.u32 %v4348, 4294901760
      %6451 = vmatprep.subr.mxu0 %v6450
      %v6452 = vand.u32 %v4347, 4294901760
      %6453 = vmatpush1.msra.mxu0 %v6452
      %v6454 = vand.u32 %v4350, 4294901760
      %6455 = vmatprep.subr.mxu0 %v6454
      %v6456 = vand.u32 %v4349, 4294901760
      %6457 = vmatpush1.msra.mxu0 %v6456
      %v6458 = vand.u32 %v4352, 4294901760
      %6459 = vmatprep.subr.mxu0 %v6458
      %v6460 = vand.u32 %v4351, 4294901760
      %6461 = vmatpush1.msra.mxu0 %v6460
      %v6462 = vand.u32 %v4354, 4294901760
      %6463 = vmatprep.subr.mxu0 %v6462
      %v6464 = vand.u32 %v4353, 4294901760
      %6465 = vmatpush1.msra.mxu0 %v6464
      %v6466 = vand.u32 %v4356, 4294901760
      %6467 = vmatprep.subr.mxu0 %v6466
      %v6468 = vand.u32 %v4355, 4294901760
      %6469 = vmatpush1.msra.mxu0 %v6468
      %v6470 = vand.u32 %v4358, 4294901760
      %6471 = vmatprep.subr.mxu0 %v6470
      %v6472 = vand.u32 %v4357, 4294901760
      %6473 = vmatpush1.msra.mxu0 %v6472
      %v6474 = vand.u32 %v4360, 4294901760
      %6475 = vmatprep.subr.mxu0 %v6474
      %v6476 = vand.u32 %v4359, 4294901760
      %6477 = vmatpush1.msra.mxu0 %v6476
      %v6478 = vand.u32 %v4362, 4294901760
      %6479 = vmatprep.subr.mxu0 %v6478
      %v6480 = vand.u32 %v4361, 4294901760
      %6481 = vmatpush1.msra.mxu0 %v6480
      %v6482 = vand.u32 %v4364, 4294901760
      %6483 = vmatprep.subr.mxu0 %v6482
      %v6484 = vand.u32 %v4363, 4294901760
      %6485 = vmatpush1.msra.mxu0 %v6484
      %v6486 = vand.u32 %v4366, 4294901760
      %6487 = vmatprep.subr.mxu0 %v6486
      %v6488 = vand.u32 %v4365, 4294901760
      %6489 = vmatpush1.msra.mxu0 %v6488
      %v6490 = vand.u32 %v4368, 4294901760
      %6491 = vmatprep.subr.mxu0 %v6490
      %v6492 = vand.u32 %v4367, 4294901760
      %6493 = vmatpush1.msra.mxu0 %v6492
      %v6494 = vand.u32 %v4370, 4294901760
      %6495 = vmatprep.subr.mxu0 %v6494
      %v6496 = vand.u32 %v4369, 4294901760
      %6497 = vmatpush1.msra.mxu0 %v6496
      %v6498 = vand.u32 %v4372, 4294901760
      %6499 = vmatprep.subr.mxu0 %v6498
      %v6500 = vand.u32 %v4371, 4294901760
      %6501 = vmatpush1.msra.mxu0 %v6500
      %v6502 = vand.u32 %v4374, 4294901760
      %6503 = vmatprep.subr.mxu0 %v6502
      %v6504 = vand.u32 %v4373, 4294901760
      %6505 = vmatpush1.msra.mxu0 %v6504
      %v6506 = vand.u32 %v4376, 4294901760
      %6507 = vmatprep.subr.mxu0 %v6506
      %v6508 = vand.u32 %v4375, 4294901760
      %6509 = vmatpush1.msra.mxu0 %v6508
      %v6510 = vand.u32 %v4378, 4294901760
      %6511 = vmatprep.subr.mxu0 %v6510
      %v6512 = vand.u32 %v4377, 4294901760
      %6513 = vmatpush1.msra.mxu0 %v6512
      %v6514 = vand.u32 %v4380, 4294901760
      %6515 = vmatprep.subr.mxu0 %v6514
      %v6516 = vand.u32 %v4379, 4294901760
      %6517 = vmatpush1.msra.mxu0 %v6516
      %v6518 = vand.u32 %v4382, 4294901760
      %6519 = vmatprep.subr.mxu0 %v6518
      %v6520 = vand.u32 %v4381, 4294901760
      %6521 = vmatpush1.msra.mxu0 %v6520
      %v6522 = vand.u32 %v4384, 4294901760
      %6523 = vmatprep.subr.mxu0 %v6522
      %v6524 = vand.u32 %v4383, 4294901760
      %6525 = vmatpush1.msra.mxu0 %v6524
      %v6526 = vand.u32 %v4386, 4294901760
      %6527 = vmatprep.subr.mxu0 %v6526
      %v6528 = vand.u32 %v4385, 4294901760
      %6529 = vmatpush1.msra.mxu0 %v6528
      %v6530 = vand.u32 %v4388, 4294901760
      %6531 = vmatprep.subr.mxu0 %v6530
      %v6532 = vand.u32 %v4387, 4294901760
      %6533 = vmatpush1.msra.mxu0 %v6532
      %v6534 = vand.u32 %v4390, 4294901760
      %6535 = vmatprep.subr.mxu0 %v6534
      %v6536 = vand.u32 %v4389, 4294901760
      %6537 = vmatpush1.msra.mxu0 %v6536
      %v6538 = vand.u32 %v4392, 4294901760
      %6539 = vmatprep.subr.mxu0 %v6538
      %v6540 = vand.u32 %v4391, 4294901760
      %6541 = vmatpush1.msra.mxu0 %v6540
      %v6542 = vand.u32 %v4394, 4294901760
      %6543 = vmatprep.subr.mxu0 %v6542
      %v6544 = vand.u32 %v4393, 4294901760
      %6545 = vmatpush1.msra.mxu0 %v6544
      %v6546 = vand.u32 %v4396, 4294901760
      %6547 = vmatprep.subr.mxu0 %v6546
      %v6548 = vand.u32 %v4395, 4294901760
      %6549 = vmatpush1.msra.mxu0 %v6548
      %v6550 = vand.u32 %v4398, 4294901760
      %6551 = vmatprep.subr.mxu0 %v6550
      %v6552 = vand.u32 %v4397, 4294901760
      %6553 = vmatpush1.msra.mxu0 %v6552
      %v6554 = vand.u32 %v4400, 4294901760
      %6555 = vmatprep.subr.mxu0 %v6554
      %v6556 = vand.u32 %v4399, 4294901760
      %6557 = vmatpush1.msra.mxu0 %v6556
      %v6558 = vand.u32 %v4402, 4294901760
      %6559 = vmatprep.subr.mxu0 %v6558
      %v6560 = vand.u32 %v4401, 4294901760
      %6561 = vmatpush1.msra.mxu0 %v6560
      %v6562 = vand.u32 %v4404, 4294901760
      %6563 = vmatprep.subr.mxu0 %v6562
      %v6564 = vand.u32 %v4403, 4294901760
      %6565 = vmatpush1.msra.mxu0 %v6564
      %v6566 = vand.u32 %v4406, 4294901760
      %6567 = vmatprep.subr.mxu0 %v6566
      %v6568 = vand.u32 %v4405, 4294901760
      %6569 = vmatpush1.msra.mxu0 %v6568
      %v6570 = vand.u32 %v4408, 4294901760
      %6571 = vmatprep.subr.mxu0 %v6570
      %v6572 = vand.u32 %v4407, 4294901760
      %6573 = vmatpush1.msra.mxu0 %v6572
      %v6574 = vand.u32 %v4280, 4294901760
      %v6575 = vsub.f32 %v4280, %v6574
      %v6576 = vand.u32 %v6575, 4294901760
      %6577 = vmatprep.mubr.f32.mxu0 %v6576
      %v6578 = vand.u32 %v4279, 4294901760
      %v6579 = vsub.f32 %v4279, %v6578
      %v6580 = vand.u32 %v6579, 4294901760
      %6581 = vmatmul.mubr.f32.gmra.mrb[0].mxu0 %v6580
      %v6582 = vpop.f32.mrb[0].mxu0
      %v6583 = vadd.f32 %v6442, %v6582
      %v6584 = vpop.f32.mrb[0].mxu0
      %v6585 = vadd.f32 %v6444, %v6584
      %6586 = vdwg.mxu0
      %v6587 = vand.u32 %v4346, 4294901760
      %v6588 = vsub.f32 %v4346, %v6587
      %v6589 = vand.u32 %v6588, 4294901760
      %6590 = vmatprep.subr.mxu0 %v6589
      %v6591 = vand.u32 %v4345, 4294901760
      %v6592 = vsub.f32 %v4345, %v6591
      %v6593 = vand.u32 %v6592, 4294901760
      %6594 = vmatpush1.msra.mxu0 %v6593
      %v6595 = vand.u32 %v4348, 4294901760
      %v6596 = vsub.f32 %v4348, %v6595
      %v6597 = vand.u32 %v6596, 4294901760
      %6598 = vmatprep.subr.mxu0 %v6597
      %v6599 = vand.u32 %v4347, 4294901760
      %v6600 = vsub.f32 %v4347, %v6599
      %v6601 = vand.u32 %v6600, 4294901760
      %6602 = vmatpush1.msra.mxu0 %v6601
      %v6603 = vand.u32 %v4350, 4294901760
      %v6604 = vsub.f32 %v4350, %v6603
      %v6605 = vand.u32 %v6604, 4294901760
      %6606 = vmatprep.subr.mxu0 %v6605
      %v6607 = vand.u32 %v4349, 4294901760
      %v6608 = vsub.f32 %v4349, %v6607
      %v6609 = vand.u32 %v6608, 4294901760
      %6610 = vmatpush1.msra.mxu0 %v6609
      %v6611 = vand.u32 %v4352, 4294901760
      %v6612 = vsub.f32 %v4352, %v6611
      %v6613 = vand.u32 %v6612, 4294901760
      %6614 = vmatprep.subr.mxu0 %v6613
      %v6615 = vand.u32 %v4351, 4294901760
      %v6616 = vsub.f32 %v4351, %v6615
      %v6617 = vand.u32 %v6616, 4294901760
      %6618 = vmatpush1.msra.mxu0 %v6617
      %v6619 = vand.u32 %v4354, 4294901760
      %v6620 = vsub.f32 %v4354, %v6619
      %v6621 = vand.u32 %v6620, 4294901760
      %6622 = vmatprep.subr.mxu0 %v6621
      %v6623 = vand.u32 %v4353, 4294901760
      %v6624 = vsub.f32 %v4353, %v6623
      %v6625 = vand.u32 %v6624, 4294901760
      %6626 = vmatpush1.msra.mxu0 %v6625
      %v6627 = vand.u32 %v4356, 4294901760
      %v6628 = vsub.f32 %v4356, %v6627
      %v6629 = vand.u32 %v6628, 4294901760
      %6630 = vmatprep.subr.mxu0 %v6629
      %v6631 = vand.u32 %v4355, 4294901760
      %v6632 = vsub.f32 %v4355, %v6631
      %v6633 = vand.u32 %v6632, 4294901760
      %6634 = vmatpush1.msra.mxu0 %v6633
      %v6635 = vand.u32 %v4358, 4294901760
      %v6636 = vsub.f32 %v4358, %v6635
      %v6637 = vand.u32 %v6636, 4294901760
      %6638 = vmatprep.subr.mxu0 %v6637
      %v6639 = vand.u32 %v4357, 4294901760
      %v6640 = vsub.f32 %v4357, %v6639
      %v6641 = vand.u32 %v6640, 4294901760
      %6642 = vmatpush1.msra.mxu0 %v6641
      %v6643 = vand.u32 %v4360, 4294901760
      %v6644 = vsub.f32 %v4360, %v6643
      %v6645 = vand.u32 %v6644, 4294901760
      %6646 = vmatprep.subr.mxu0 %v6645
      %v6647 = vand.u32 %v4359, 4294901760
      %v6648 = vsub.f32 %v4359, %v6647
      %v6649 = vand.u32 %v6648, 4294901760
      %6650 = vmatpush1.msra.mxu0 %v6649
      %v6651 = vand.u32 %v4362, 4294901760
      %v6652 = vsub.f32 %v4362, %v6651
      %v6653 = vand.u32 %v6652, 4294901760
      %6654 = vmatprep.subr.mxu0 %v6653
      %v6655 = vand.u32 %v4361, 4294901760
      %v6656 = vsub.f32 %v4361, %v6655
      %v6657 = vand.u32 %v6656, 4294901760
      %6658 = vmatpush1.msra.mxu0 %v6657
      %v6659 = vand.u32 %v4364, 4294901760
      %v6660 = vsub.f32 %v4364, %v6659
      %v6661 = vand.u32 %v6660, 4294901760
      %6662 = vmatprep.subr.mxu0 %v6661
      %v6663 = vand.u32 %v4363, 4294901760
      %v6664 = vsub.f32 %v4363, %v6663
      %v6665 = vand.u32 %v6664, 4294901760
      %6666 = vmatpush1.msra.mxu0 %v6665
      %v6667 = vand.u32 %v4366, 4294901760
      %v6668 = vsub.f32 %v4366, %v6667
      %v6669 = vand.u32 %v6668, 4294901760
      %6670 = vmatprep.subr.mxu0 %v6669
      %v6671 = vand.u32 %v4365, 4294901760
      %v6672 = vsub.f32 %v4365, %v6671
      %v6673 = vand.u32 %v6672, 4294901760
      %6674 = vmatpush1.msra.mxu0 %v6673
      %v6675 = vand.u32 %v4368, 4294901760
      %v6676 = vsub.f32 %v4368, %v6675
      %v6677 = vand.u32 %v6676, 4294901760
      %6678 = vmatprep.subr.mxu0 %v6677
      %v6679 = vand.u32 %v4367, 4294901760
      %v6680 = vsub.f32 %v4367, %v6679
      %v6681 = vand.u32 %v6680, 4294901760
      %6682 = vmatpush1.msra.mxu0 %v6681
      %v6683 = vand.u32 %v4370, 4294901760
      %v6684 = vsub.f32 %v4370, %v6683
      %v6685 = vand.u32 %v6684, 4294901760
      %6686 = vmatprep.subr.mxu0 %v6685
      %v6687 = vand.u32 %v4369, 4294901760
      %v6688 = vsub.f32 %v4369, %v6687
      %v6689 = vand.u32 %v6688, 4294901760
      %6690 = vmatpush1.msra.mxu0 %v6689
      %v6691 = vand.u32 %v4372, 4294901760
      %v6692 = vsub.f32 %v4372, %v6691
      %v6693 = vand.u32 %v6692, 4294901760
      %6694 = vmatprep.subr.mxu0 %v6693
      %v6695 = vand.u32 %v4371, 4294901760
      %v6696 = vsub.f32 %v4371, %v6695
      %v6697 = vand.u32 %v6696, 4294901760
      %6698 = vmatpush1.msra.mxu0 %v6697
      %v6699 = vand.u32 %v4374, 4294901760
      %v6700 = vsub.f32 %v4374, %v6699
      %v6701 = vand.u32 %v6700, 4294901760
      %6702 = vmatprep.subr.mxu0 %v6701
      %v6703 = vand.u32 %v4373, 4294901760
      %v6704 = vsub.f32 %v4373, %v6703
      %v6705 = vand.u32 %v6704, 4294901760
      %6706 = vmatpush1.msra.mxu0 %v6705
      %v6707 = vand.u32 %v4376, 4294901760
      %v6708 = vsub.f32 %v4376, %v6707
      %v6709 = vand.u32 %v6708, 4294901760
      %6710 = vmatprep.subr.mxu0 %v6709
      %v6711 = vand.u32 %v4375, 4294901760
      %v6712 = vsub.f32 %v4375, %v6711
      %v6713 = vand.u32 %v6712, 4294901760
      %6714 = vmatpush1.msra.mxu0 %v6713
      %v6715 = vand.u32 %v4378, 4294901760
      %v6716 = vsub.f32 %v4378, %v6715
      %v6717 = vand.u32 %v6716, 4294901760
      %6718 = vmatprep.subr.mxu0 %v6717
      %v6719 = vand.u32 %v4377, 4294901760
      %v6720 = vsub.f32 %v4377, %v6719
      %v6721 = vand.u32 %v6720, 4294901760
      %6722 = vmatpush1.msra.mxu0 %v6721
      %v6723 = vand.u32 %v4380, 4294901760
      %v6724 = vsub.f32 %v4380, %v6723
      %v6725 = vand.u32 %v6724, 4294901760
      %6726 = vmatprep.subr.mxu0 %v6725
      %v6727 = vand.u32 %v4379, 4294901760
      %v6728 = vsub.f32 %v4379, %v6727
      %v6729 = vand.u32 %v6728, 4294901760
      %6730 = vmatpush1.msra.mxu0 %v6729
      %v6731 = vand.u32 %v4382, 4294901760
      %v6732 = vsub.f32 %v4382, %v6731
      %v6733 = vand.u32 %v6732, 4294901760
      %6734 = vmatprep.subr.mxu0 %v6733
      %v6735 = vand.u32 %v4381, 4294901760
      %v6736 = vsub.f32 %v4381, %v6735
      %v6737 = vand.u32 %v6736, 4294901760
      %6738 = vmatpush1.msra.mxu0 %v6737
      %v6739 = vand.u32 %v4384, 4294901760
      %v6740 = vsub.f32 %v4384, %v6739
      %v6741 = vand.u32 %v6740, 4294901760
      %6742 = vmatprep.subr.mxu0 %v6741
      %v6743 = vand.u32 %v4383, 4294901760
      %v6744 = vsub.f32 %v4383, %v6743
      %v6745 = vand.u32 %v6744, 4294901760
      %6746 = vmatpush1.msra.mxu0 %v6745
      %v6747 = vand.u32 %v4386, 4294901760
      %v6748 = vsub.f32 %v4386, %v6747
      %v6749 = vand.u32 %v6748, 4294901760
      %6750 = vmatprep.subr.mxu0 %v6749
      %v6751 = vand.u32 %v4385, 4294901760
      %v6752 = vsub.f32 %v4385, %v6751
      %v6753 = vand.u32 %v6752, 4294901760
      %6754 = vmatpush1.msra.mxu0 %v6753
      %v6755 = vand.u32 %v4388, 4294901760
      %v6756 = vsub.f32 %v4388, %v6755
      %v6757 = vand.u32 %v6756, 4294901760
      %6758 = vmatprep.subr.mxu0 %v6757
      %v6759 = vand.u32 %v4387, 4294901760
      %v6760 = vsub.f32 %v4387, %v6759
      %v6761 = vand.u32 %v6760, 4294901760
      %6762 = vmatpush1.msra.mxu0 %v6761
      %v6763 = vand.u32 %v4390, 4294901760
      %v6764 = vsub.f32 %v4390, %v6763
      %v6765 = vand.u32 %v6764, 4294901760
      %6766 = vmatprep.subr.mxu0 %v6765
      %v6767 = vand.u32 %v4389, 4294901760
      %v6768 = vsub.f32 %v4389, %v6767
      %v6769 = vand.u32 %v6768, 4294901760
      %6770 = vmatpush1.msra.mxu0 %v6769
      %v6771 = vand.u32 %v4392, 4294901760
      %v6772 = vsub.f32 %v4392, %v6771
      %v6773 = vand.u32 %v6772, 4294901760
      %6774 = vmatprep.subr.mxu0 %v6773
      %v6775 = vand.u32 %v4391, 4294901760
      %v6776 = vsub.f32 %v4391, %v6775
      %v6777 = vand.u32 %v6776, 4294901760
      %6778 = vmatpush1.msra.mxu0 %v6777
      %v6779 = vand.u32 %v4394, 4294901760
      %v6780 = vsub.f32 %v4394, %v6779
      %v6781 = vand.u32 %v6780, 4294901760
      %6782 = vmatprep.subr.mxu0 %v6781
      %v6783 = vand.u32 %v4393, 4294901760
      %v6784 = vsub.f32 %v4393, %v6783
      %v6785 = vand.u32 %v6784, 4294901760
      %6786 = vmatpush1.msra.mxu0 %v6785
      %v6787 = vand.u32 %v4396, 4294901760
      %v6788 = vsub.f32 %v4396, %v6787
      %v6789 = vand.u32 %v6788, 4294901760
      %6790 = vmatprep.subr.mxu0 %v6789
      %v6791 = vand.u32 %v4395, 4294901760
      %v6792 = vsub.f32 %v4395, %v6791
      %v6793 = vand.u32 %v6792, 4294901760
      %6794 = vmatpush1.msra.mxu0 %v6793
      %v6795 = vand.u32 %v4398, 4294901760
      %v6796 = vsub.f32 %v4398, %v6795
      %v6797 = vand.u32 %v6796, 4294901760
      %6798 = vmatprep.subr.mxu0 %v6797
      %v6799 = vand.u32 %v4397, 4294901760
      %v6800 = vsub.f32 %v4397, %v6799
      %v6801 = vand.u32 %v6800, 4294901760
      %6802 = vmatpush1.msra.mxu0 %v6801
      %v6803 = vand.u32 %v4400, 4294901760
      %v6804 = vsub.f32 %v4400, %v6803
      %v6805 = vand.u32 %v6804, 4294901760
      %6806 = vmatprep.subr.mxu0 %v6805
      %v6807 = vand.u32 %v4399, 4294901760
      %v6808 = vsub.f32 %v4399, %v6807
      %v6809 = vand.u32 %v6808, 4294901760
      %6810 = vmatpush1.msra.mxu0 %v6809
      %v6811 = vand.u32 %v4402, 4294901760
      %v6812 = vsub.f32 %v4402, %v6811
      %v6813 = vand.u32 %v6812, 4294901760
      %6814 = vmatprep.subr.mxu0 %v6813
      %v6815 = vand.u32 %v4401, 4294901760
      %v6816 = vsub.f32 %v4401, %v6815
      %v6817 = vand.u32 %v6816, 4294901760
      %6818 = vmatpush1.msra.mxu0 %v6817
      %v6819 = vand.u32 %v4404, 4294901760
      %v6820 = vsub.f32 %v4404, %v6819
      %v6821 = vand.u32 %v6820, 4294901760
      %6822 = vmatprep.subr.mxu0 %v6821
      %v6823 = vand.u32 %v4403, 4294901760
      %v6824 = vsub.f32 %v4403, %v6823
      %v6825 = vand.u32 %v6824, 4294901760
      %6826 = vmatpush1.msra.mxu0 %v6825
      %v6827 = vand.u32 %v4406, 4294901760
      %v6828 = vsub.f32 %v4406, %v6827
      %v6829 = vand.u32 %v6828, 4294901760
      %6830 = vmatprep.subr.mxu0 %v6829
      %v6831 = vand.u32 %v4405, 4294901760
      %v6832 = vsub.f32 %v4405, %v6831
      %v6833 = vand.u32 %v6832, 4294901760
      %6834 = vmatpush1.msra.mxu0 %v6833
      %v6835 = vand.u32 %v4408, 4294901760
      %v6836 = vsub.f32 %v4408, %v6835
      %v6837 = vand.u32 %v6836, 4294901760
      %6838 = vmatprep.subr.mxu0 %v6837
      %v6839 = vand.u32 %v4407, 4294901760
      %v6840 = vsub.f32 %v4407, %v6839
      %v6841 = vand.u32 %v6840, 4294901760
      %6842 = vmatpush1.msra.mxu0 %v6841
      %v6843 = vand.u32 %v4280, 4294901760
      %6844 = vmatprep.mubr.f32.mxu0 %v6843
      %v6845 = vand.u32 %v4279, 4294901760
      %6846 = vmatmul.mubr.f32.gmra.mrb[0].mxu0 %v6845
      %v6847 = vpop.f32.mrb[0].mxu0
      %v6848 = vadd.f32 %v6583, %v6847
      %v6849 = vpop.f32.mrb[0].mxu0
      %v6850 = vadd.f32 %v6585, %v6849
      %6851 = vdwg.mxu0
      %v6852 = vand.u32 %v4346, 4294901760
      %6853 = vmatprep.subr.mxu0 %v6852
      %v6854 = vand.u32 %v4345, 4294901760
      %6855 = vmatpush1.msra.mxu0 %v6854
      %v6856 = vand.u32 %v4348, 4294901760
      %6857 = vmatprep.subr.mxu0 %v6856
      %v6858 = vand.u32 %v4347, 4294901760
      %6859 = vmatpush1.msra.mxu0 %v6858
      %v6860 = vand.u32 %v4350, 4294901760
      %6861 = vmatprep.subr.mxu0 %v6860
      %v6862 = vand.u32 %v4349, 4294901760
      %6863 = vmatpush1.msra.mxu0 %v6862
      %v6864 = vand.u32 %v4352, 4294901760
      %6865 = vmatprep.subr.mxu0 %v6864
      %v6866 = vand.u32 %v4351, 4294901760
      %6867 = vmatpush1.msra.mxu0 %v6866
      %v6868 = vand.u32 %v4354, 4294901760
      %6869 = vmatprep.subr.mxu0 %v6868
      %v6870 = vand.u32 %v4353, 4294901760
      %6871 = vmatpush1.msra.mxu0 %v6870
      %v6872 = vand.u32 %v4356, 4294901760
      %6873 = vmatprep.subr.mxu0 %v6872
      %v6874 = vand.u32 %v4355, 4294901760
      %6875 = vmatpush1.msra.mxu0 %v6874
      %v6876 = vand.u32 %v4358, 4294901760
      %6877 = vmatprep.subr.mxu0 %v6876
      %v6878 = vand.u32 %v4357, 4294901760
      %6879 = vmatpush1.msra.mxu0 %v6878
      %v6880 = vand.u32 %v4360, 4294901760
      %6881 = vmatprep.subr.mxu0 %v6880
      %v6882 = vand.u32 %v4359, 4294901760
      %6883 = vmatpush1.msra.mxu0 %v6882
      %v6884 = vand.u32 %v4362, 4294901760
      %6885 = vmatprep.subr.mxu0 %v6884
      %v6886 = vand.u32 %v4361, 4294901760
      %6887 = vmatpush1.msra.mxu0 %v6886
      %v6888 = vand.u32 %v4364, 4294901760
      %6889 = vmatprep.subr.mxu0 %v6888
      %v6890 = vand.u32 %v4363, 4294901760
      %6891 = vmatpush1.msra.mxu0 %v6890
      %v6892 = vand.u32 %v4366, 4294901760
      %6893 = vmatprep.subr.mxu0 %v6892
      %v6894 = vand.u32 %v4365, 4294901760
      %6895 = vmatpush1.msra.mxu0 %v6894
      %v6896 = vand.u32 %v4368, 4294901760
      %6897 = vmatprep.subr.mxu0 %v6896
      %v6898 = vand.u32 %v4367, 4294901760
      %6899 = vmatpush1.msra.mxu0 %v6898
      %v6900 = vand.u32 %v4370, 4294901760
      %6901 = vmatprep.subr.mxu0 %v6900
      %v6902 = vand.u32 %v4369, 4294901760
      %6903 = vmatpush1.msra.mxu0 %v6902
      %v6904 = vand.u32 %v4372, 4294901760
      %6905 = vmatprep.subr.mxu0 %v6904
      %v6906 = vand.u32 %v4371, 4294901760
      %6907 = vmatpush1.msra.mxu0 %v6906
      %v6908 = vand.u32 %v4374, 4294901760
      %6909 = vmatprep.subr.mxu0 %v6908
      %v6910 = vand.u32 %v4373, 4294901760
      %6911 = vmatpush1.msra.mxu0 %v6910
      %v6912 = vand.u32 %v4376, 4294901760
      %6913 = vmatprep.subr.mxu0 %v6912
      %v6914 = vand.u32 %v4375, 4294901760
      %6915 = vmatpush1.msra.mxu0 %v6914
      %v6916 = vand.u32 %v4378, 4294901760
      %6917 = vmatprep.subr.mxu0 %v6916
      %v6918 = vand.u32 %v4377, 4294901760
      %6919 = vmatpush1.msra.mxu0 %v6918
      %v6920 = vand.u32 %v4380, 4294901760
      %6921 = vmatprep.subr.mxu0 %v6920
      %v6922 = vand.u32 %v4379, 4294901760
      %6923 = vmatpush1.msra.mxu0 %v6922
      %v6924 = vand.u32 %v4382, 4294901760
      %6925 = vmatprep.subr.mxu0 %v6924
      %v6926 = vand.u32 %v4381, 4294901760
      %6927 = vmatpush1.msra.mxu0 %v6926
      %v6928 = vand.u32 %v4384, 4294901760
      %6929 = vmatprep.subr.mxu0 %v6928
      %v6930 = vand.u32 %v4383, 4294901760
      %6931 = vmatpush1.msra.mxu0 %v6930
      %v6932 = vand.u32 %v4386, 4294901760
      %6933 = vmatprep.subr.mxu0 %v6932
      %v6934 = vand.u32 %v4385, 4294901760
      %6935 = vmatpush1.msra.mxu0 %v6934
      %v6936 = vand.u32 %v4388, 4294901760
      %6937 = vmatprep.subr.mxu0 %v6936
      %v6938 = vand.u32 %v4387, 4294901760
      %6939 = vmatpush1.msra.mxu0 %v6938
      %v6940 = vand.u32 %v4390, 4294901760
      %6941 = vmatprep.subr.mxu0 %v6940
      %v6942 = vand.u32 %v4389, 4294901760
      %6943 = vmatpush1.msra.mxu0 %v6942
      %v6944 = vand.u32 %v4392, 4294901760
      %6945 = vmatprep.subr.mxu0 %v6944
      %v6946 = vand.u32 %v4391, 4294901760
      %6947 = vmatpush1.msra.mxu0 %v6946
      %v6948 = vand.u32 %v4394, 4294901760
      %6949 = vmatprep.subr.mxu0 %v6948
      %v6950 = vand.u32 %v4393, 4294901760
      %6951 = vmatpush1.msra.mxu0 %v6950
      %v6952 = vand.u32 %v4396, 4294901760
      %6953 = vmatprep.subr.mxu0 %v6952
      %v6954 = vand.u32 %v4395, 4294901760
      %6955 = vmatpush1.msra.mxu0 %v6954
      %v6956 = vand.u32 %v4398, 4294901760
      %6957 = vmatprep.subr.mxu0 %v6956
      %v6958 = vand.u32 %v4397, 4294901760
      %6959 = vmatpush1.msra.mxu0 %v6958
      %v6960 = vand.u32 %v4400, 4294901760
      %6961 = vmatprep.subr.mxu0 %v6960
      %v6962 = vand.u32 %v4399, 4294901760
      %6963 = vmatpush1.msra.mxu0 %v6962
      %v6964 = vand.u32 %v4402, 4294901760
      %6965 = vmatprep.subr.mxu0 %v6964
      %v6966 = vand.u32 %v4401, 4294901760
      %6967 = vmatpush1.msra.mxu0 %v6966
      %v6968 = vand.u32 %v4404, 4294901760
      %6969 = vmatprep.subr.mxu0 %v6968
      %v6970 = vand.u32 %v4403, 4294901760
      %6971 = vmatpush1.msra.mxu0 %v6970
      %v6972 = vand.u32 %v4406, 4294901760
      %6973 = vmatprep.subr.mxu0 %v6972
      %v6974 = vand.u32 %v4405, 4294901760
      %6975 = vmatpush1.msra.mxu0 %v6974
      %v6976 = vand.u32 %v4408, 4294901760
      %6977 = vmatprep.subr.mxu0 %v6976
      %v6978 = vand.u32 %v4407, 4294901760
      %6979 = vmatpush1.msra.mxu0 %v6978
      %v6980 = vand.u32 %v4280, 4294901760
      %6981 = vmatprep.mubr.f32.mxu0 %v6980
      %v6982 = vand.u32 %v4279, 4294901760
      %6983 = vmatmul.mubr.f32.gmra.mrb[0].mxu0 %v6982
      %v6984 = vpop.f32.mrb[0].mxu0
      %v6985 = vadd.f32 %v6848, %v6984
      %v6986 = vpop.f32.mrb[0].mxu0
      %v6987 = vadd.f32 %v6850, %v6986
      %6988 = vdwg.mxu0
      %v6989 = vmax.f32 %v6985, 0.0
      %v6990 = vmax.f32 %v6987, 0.0
      %v6991 = vld [vmem:[%s12] sm:$0xff]
      %v6992 = vld [vmem:[%s12 + $0x8] sm:$0xff]
      %v6993 = vld [vmem:[%s12 + $0x10] sm:$0xff]
      %v6994 = vld [vmem:[%s12 + $0x18] sm:$0xff]
      %v6995 = vld [vmem:[%s12 + $0x20] sm:$0xff]
      %v6996 = vld [vmem:[%s12 + $0x28] sm:$0xff]
      %v6997 = vld [vmem:[%s12 + $0x30] sm:$0xff]
      %v6998 = vld [vmem:[%s12 + $0x38] sm:$0xff]
      %v6999 = vld [vmem:[%s12 + $0x40] sm:$0xff]
      %v7000 = vld [vmem:[%s12 + $0x48] sm:$0xff]
      %v7001 = vld [vmem:[%s12 + $0x50] sm:$0xff]
      %v7002 = vld [vmem:[%s12 + $0x58] sm:$0xff]
      %v7003 = vld [vmem:[%s12 + $0x60] sm:$0xff]
      %v7004 = vld [vmem:[%s12 + $0x68] sm:$0xff]
      %v7005 = vld [vmem:[%s12 + $0x70] sm:$0xff]
      %v7006 = vld [vmem:[%s12 + $0x78] sm:$0xff]
      %v7007 = vld [vmem:[%s12 + $0x80] sm:$0xff]
      %v7008 = vld [vmem:[%s12 + $0x88] sm:$0xff]
      %v7009 = vld [vmem:[%s12 + $0x90] sm:$0xff]
      %v7010 = vld [vmem:[%s12 + $0x98] sm:$0xff]
      %v7011 = vld [vmem:[%s12 + $0xa0] sm:$0xff]
      %v7012 = vld [vmem:[%s12 + $0xa8] sm:$0xff]
      %v7013 = vld [vmem:[%s12 + $0xb0] sm:$0xff]
      %v7014 = vld [vmem:[%s12 + $0xb8] sm:$0xff]
      %v7015 = vld [vmem:[%s12 + $0xc0] sm:$0xff]
      %v7016 = vld [vmem:[%s12 + $0xc8] sm:$0xff]
      %v7017 = vld [vmem:[%s12 + $0xd0] sm:$0xff]
      %v7018 = vld [vmem:[%s12 + $0xd8] sm:$0xff]
      %v7019 = vld [vmem:[%s12 + $0xe0] sm:$0xff]
      %v7020 = vld [vmem:[%s12 + $0xe8] sm:$0xff]
      %v7021 = vld [vmem:[%s12 + $0xf0] sm:$0xff]
      %v7022 = vld [vmem:[%s12 + $0xf8] sm:$0xff]
      %v7023 = vld [vmem:[%s13] sm:$0x1]
      %7024 = vmatprep.subr.mxu0 0.0
      %v7025 = vand.u32 %v6991, 4294901760
      %7026 = vmatpush1.msra.mxu0 %v7025
      %7027 = vmatprep.subr.mxu0 0.0
      %v7028 = vand.u32 %v6992, 4294901760
      %7029 = vmatpush1.msra.mxu0 %v7028
      %7030 = vmatprep.subr.mxu0 0.0
      %v7031 = vand.u32 %v6993, 4294901760
      %7032 = vmatpush1.msra.mxu0 %v7031
      %7033 = vmatprep.subr.mxu0 0.0
      %v7034 = vand.u32 %v6994, 4294901760
      %7035 = vmatpush1.msra.mxu0 %v7034
      %7036 = vmatprep.subr.mxu0 0.0
      %v7037 = vand.u32 %v6995, 4294901760
      %7038 = vmatpush1.msra.mxu0 %v7037
      %7039 = vmatprep.subr.mxu0 0.0
      %v7040 = vand.u32 %v6996, 4294901760
      %7041 = vmatpush1.msra.mxu0 %v7040
      %7042 = vmatprep.subr.mxu0 0.0
      %v7043 = vand.u32 %v6997, 4294901760
      %7044 = vmatpush1.msra.mxu0 %v7043
      %7045 = vmatprep.subr.mxu0 0.0
      %v7046 = vand.u32 %v6998, 4294901760
      %7047 = vmatpush1.msra.mxu0 %v7046
      %7048 = vmatprep.subr.mxu0 0.0
      %v7049 = vand.u32 %v6999, 4294901760
      %7050 = vmatpush1.msra.mxu0 %v7049
      %7051 = vmatprep.subr.mxu0 0.0
      %v7052 = vand.u32 %v7000, 4294901760
      %7053 = vmatpush1.msra.mxu0 %v7052
      %7054 = vmatprep.subr.mxu0 0.0
      %v7055 = vand.u32 %v7001, 4294901760
      %7056 = vmatpush1.msra.mxu0 %v7055
      %7057 = vmatprep.subr.mxu0 0.0
      %v7058 = vand.u32 %v7002, 4294901760
      %7059 = vmatpush1.msra.mxu0 %v7058
      %7060 = vmatprep.subr.mxu0 0.0
      %v7061 = vand.u32 %v7003, 4294901760
      %7062 = vmatpush1.msra.mxu0 %v7061
      %7063 = vmatprep.subr.mxu0 0.0
      %v7064 = vand.u32 %v7004, 4294901760
      %7065 = vmatpush1.msra.mxu0 %v7064
      %7066 = vmatprep.subr.mxu0 0.0
      %v7067 = vand.u32 %v7005, 4294901760
      %7068 = vmatpush1.msra.mxu0 %v7067
      %7069 = vmatprep.subr.mxu0 0.0
      %v7070 = vand.u32 %v7006, 4294901760
      %7071 = vmatpush1.msra.mxu0 %v7070
      %7072 = vmatprep.subr.mxu0 0.0
      %v7073 = vand.u32 %v7007, 4294901760
      %7074 = vmatpush1.msra.mxu0 %v7073
      %7075 = vmatprep.subr.mxu0 0.0
      %v7076 = vand.u32 %v7008, 4294901760
      %7077 = vmatpush1.msra.mxu0 %v7076
      %7078 = vmatprep.subr.mxu0 0.0
      %v7079 = vand.u32 %v7009, 4294901760
      %7080 = vmatpush1.msra.mxu0 %v7079
      %7081 = vmatprep.subr.mxu0 0.0
      %v7082 = vand.u32 %v7010, 4294901760
      %7083 = vmatpush1.msra.mxu0 %v7082
      %7084 = vmatprep.subr.mxu0 0.0
      %v7085 = vand.u32 %v7011, 4294901760
      %7086 = vmatpush1.msra.mxu0 %v7085
      %7087 = vmatprep.subr.mxu0 0.0
      %v7088 = vand.u32 %v7012, 4294901760
      %7089 = vmatpush1.msra.mxu0 %v7088
      %7090 = vmatprep.subr.mxu0 0.0
      %v7091 = vand.u32 %v7013, 4294901760
      %7092 = vmatpush1.msra.mxu0 %v7091
      %7093 = vmatprep.subr.mxu0 0.0
      %v7094 = vand.u32 %v7014, 4294901760
      %7095 = vmatpush1.msra.mxu0 %v7094
      %7096 = vmatprep.subr.mxu0 0.0
      %v7097 = vand.u32 %v7015, 4294901760
      %7098 = vmatpush1.msra.mxu0 %v7097
      %7099 = vmatprep.subr.mxu0 0.0
      %v7100 = vand.u32 %v7016, 4294901760
      %7101 = vmatpush1.msra.mxu0 %v7100
      %7102 = vmatprep.subr.mxu0 0.0
      %v7103 = vand.u32 %v7017, 4294901760
      %7104 = vmatpush1.msra.mxu0 %v7103
      %7105 = vmatprep.subr.mxu0 0.0
      %v7106 = vand.u32 %v7018, 4294901760
      %7107 = vmatpush1.msra.mxu0 %v7106
      %7108 = vmatprep.subr.mxu0 0.0
      %v7109 = vand.u32 %v7019, 4294901760
      %7110 = vmatpush1.msra.mxu0 %v7109
      %7111 = vmatprep.subr.mxu0 0.0
      %v7112 = vand.u32 %v7020, 4294901760
      %7113 = vmatpush1.msra.mxu0 %v7112
      %7114 = vmatprep.subr.mxu0 0.0
      %v7115 = vand.u32 %v7021, 4294901760
      %7116 = vmatpush1.msra.mxu0 %v7115
      %7117 = vmatprep.subr.mxu0 0.0
      %v7118 = vand.u32 %v7022, 4294901760
      %7119 = vmatpush1.msra.mxu0 %v7118
      %v7120 = vand.u32 %v6990, 4294901760
      %v7121 = vsub.f32 %v6990, %v7120
      %v7122 = vand.u32 %v7121, 4294901760
      %v7123 = vsub.f32 %v7121, %v7122
      %v7124 = vand.u32 %v7123, 4294901760
      %7125 = vmatprep.mubr.f32.mxu0 %v7124
      %v7126 = vand.u32 %v6989, 4294901760
      %v7127 = vsub.f32 %v6989, %v7126
      %v7128 = vand.u32 %v7127, 4294901760
      %v7129 = vsub.f32 %v7127, %v7128
      %v7130 = vand.u32 %v7129, 4294901760
      %7131 = vmatmul.mubr.f32.gmra.mrb[0].mxu0 %v7130
      %v7132 = vpop.f32.mrb[0].mxu0
      %v7133 = vadd.f32 %v7023, %v7132
      %v7134 = vpop.f32.mrb[0].mxu0
      %7135 = vdwg.mxu0
      %7136 = vmatprep.subr.mxu0 0.0
      %v7137 = vand.u32 %v6991, 4294901760
      %v7138 = vsub.f32 %v6991, %v7137
      %v7139 = vand.u32 %v7138, 4294901760
      %v7140 = vsub.f32 %v7138, %v7139
      %v7141 = vand.u32 %v7140, 4294901760
      %7142 = vmatpush1.msra.mxu0 %v7141
      %7143 = vmatprep.subr.mxu0 0.0
      %v7144 = vand.u32 %v6992, 4294901760
      %v7145 = vsub.f32 %v6992, %v7144
      %v7146 = vand.u32 %v7145, 4294901760
      %v7147 = vsub.f32 %v7145, %v7146
      %v7148 = vand.u32 %v7147, 4294901760
      %7149 = vmatpush1.msra.mxu0 %v7148
      %7150 = vmatprep.subr.mxu0 0.0
      %v7151 = vand.u32 %v6993, 4294901760
      %v7152 = vsub.f32 %v6993, %v7151
      %v7153 = vand.u32 %v7152, 4294901760
      %v7154 = vsub.f32 %v7152, %v7153
      %v7155 = vand.u32 %v7154, 4294901760
      %7156 = vmatpush1.msra.mxu0 %v7155
      %7157 = vmatprep.subr.mxu0 0.0
      %v7158 = vand.u32 %v6994, 4294901760
      %v7159 = vsub.f32 %v6994, %v7158
      %v7160 = vand.u32 %v7159, 4294901760
      %v7161 = vsub.f32 %v7159, %v7160
      %v7162 = vand.u32 %v7161, 4294901760
      %7163 = vmatpush1.msra.mxu0 %v7162
      %7164 = vmatprep.subr.mxu0 0.0
      %v7165 = vand.u32 %v6995, 4294901760
      %v7166 = vsub.f32 %v6995, %v7165
      %v7167 = vand.u32 %v7166, 4294901760
      %v7168 = vsub.f32 %v7166, %v7167
      %v7169 = vand.u32 %v7168, 4294901760
      %7170 = vmatpush1.msra.mxu0 %v7169
      %7171 = vmatprep.subr.mxu0 0.0
      %v7172 = vand.u32 %v6996, 4294901760
      %v7173 = vsub.f32 %v6996, %v7172
      %v7174 = vand.u32 %v7173, 4294901760
      %v7175 = vsub.f32 %v7173, %v7174
      %v7176 = vand.u32 %v7175, 4294901760
      %7177 = vmatpush1.msra.mxu0 %v7176
      %7178 = vmatprep.subr.mxu0 0.0
      %v7179 = vand.u32 %v6997, 4294901760
      %v7180 = vsub.f32 %v6997, %v7179
      %v7181 = vand.u32 %v7180, 4294901760
      %v7182 = vsub.f32 %v7180, %v7181
      %v7183 = vand.u32 %v7182, 4294901760
      %7184 = vmatpush1.msra.mxu0 %v7183
      %7185 = vmatprep.subr.mxu0 0.0
      %v7186 = vand.u32 %v6998, 4294901760
      %v7187 = vsub.f32 %v6998, %v7186
      %v7188 = vand.u32 %v7187, 4294901760
      %v7189 = vsub.f32 %v7187, %v7188
      %v7190 = vand.u32 %v7189, 4294901760
      %7191 = vmatpush1.msra.mxu0 %v7190
      %7192 = vmatprep.subr.mxu0 0.0
      %v7193 = vand.u32 %v6999, 4294901760
      %v7194 = vsub.f32 %v6999, %v7193
      %v7195 = vand.u32 %v7194, 4294901760
      %v7196 = vsub.f32 %v7194, %v7195
      %v7197 = vand.u32 %v7196, 4294901760
      %7198 = vmatpush1.msra.mxu0 %v7197
      %7199 = vmatprep.subr.mxu0 0.0
      %v7200 = vand.u32 %v7000, 4294901760
      %v7201 = vsub.f32 %v7000, %v7200
      %v7202 = vand.u32 %v7201, 4294901760
      %v7203 = vsub.f32 %v7201, %v7202
      %v7204 = vand.u32 %v7203, 4294901760
      %7205 = vmatpush1.msra.mxu0 %v7204
      %7206 = vmatprep.subr.mxu0 0.0
      %v7207 = vand.u32 %v7001, 4294901760
      %v7208 = vsub.f32 %v7001, %v7207
      %v7209 = vand.u32 %v7208, 4294901760
      %v7210 = vsub.f32 %v7208, %v7209
      %v7211 = vand.u32 %v7210, 4294901760
      %7212 = vmatpush1.msra.mxu0 %v7211
      %7213 = vmatprep.subr.mxu0 0.0
      %v7214 = vand.u32 %v7002, 4294901760
      %v7215 = vsub.f32 %v7002, %v7214
      %v7216 = vand.u32 %v7215, 4294901760
      %v7217 = vsub.f32 %v7215, %v7216
      %v7218 = vand.u32 %v7217, 4294901760
      %7219 = vmatpush1.msra.mxu0 %v7218
      %7220 = vmatprep.subr.mxu0 0.0
      %v7221 = vand.u32 %v7003, 4294901760
      %v7222 = vsub.f32 %v7003, %v7221
      %v7223 = vand.u32 %v7222, 4294901760
      %v7224 = vsub.f32 %v7222, %v7223
      %v7225 = vand.u32 %v7224, 4294901760
      %7226 = vmatpush1.msra.mxu0 %v7225
      %7227 = vmatprep.subr.mxu0 0.0
      %v7228 = vand.u32 %v7004, 4294901760
      %v7229 = vsub.f32 %v7004, %v7228
      %v7230 = vand.u32 %v7229, 4294901760
      %v7231 = vsub.f32 %v7229, %v7230
      %v7232 = vand.u32 %v7231, 4294901760
      %7233 = vmatpush1.msra.mxu0 %v7232
      %7234 = vmatprep.subr.mxu0 0.0
      %v7235 = vand.u32 %v7005, 4294901760
      %v7236 = vsub.f32 %v7005, %v7235
      %v7237 = vand.u32 %v7236, 4294901760
      %v7238 = vsub.f32 %v7236, %v7237
      %v7239 = vand.u32 %v7238, 4294901760
      %7240 = vmatpush1.msra.mxu0 %v7239
      %7241 = vmatprep.subr.mxu0 0.0
      %v7242 = vand.u32 %v7006, 4294901760
      %v7243 = vsub.f32 %v7006, %v7242
      %v7244 = vand.u32 %v7243, 4294901760
      %v7245 = vsub.f32 %v7243, %v7244
      %v7246 = vand.u32 %v7245, 4294901760
      %7247 = vmatpush1.msra.mxu0 %v7246
      %7248 = vmatprep.subr.mxu0 0.0
      %v7249 = vand.u32 %v7007, 4294901760
      %v7250 = vsub.f32 %v7007, %v7249
      %v7251 = vand.u32 %v7250, 4294901760
      %v7252 = vsub.f32 %v7250, %v7251
      %v7253 = vand.u32 %v7252, 4294901760
      %7254 = vmatpush1.msra.mxu0 %v7253
      %7255 = vmatprep.subr.mxu0 0.0
      %v7256 = vand.u32 %v7008, 4294901760
      %v7257 = vsub.f32 %v7008, %v7256
      %v7258 = vand.u32 %v7257, 4294901760
      %v7259 = vsub.f32 %v7257, %v7258
      %v7260 = vand.u32 %v7259, 4294901760
      %7261 = vmatpush1.msra.mxu0 %v7260
      %7262 = vmatprep.subr.mxu0 0.0
      %v7263 = vand.u32 %v7009, 4294901760
      %v7264 = vsub.f32 %v7009, %v7263
      %v7265 = vand.u32 %v7264, 4294901760
      %v7266 = vsub.f32 %v7264, %v7265
      %v7267 = vand.u32 %v7266, 4294901760
      %7268 = vmatpush1.msra.mxu0 %v7267
      %7269 = vmatprep.subr.mxu0 0.0
      %v7270 = vand.u32 %v7010, 4294901760
      %v7271 = vsub.f32 %v7010, %v7270
      %v7272 = vand.u32 %v7271, 4294901760
      %v7273 = vsub.f32 %v7271, %v7272
      %v7274 = vand.u32 %v7273, 4294901760
      %7275 = vmatpush1.msra.mxu0 %v7274
      %7276 = vmatprep.subr.mxu0 0.0
      %v7277 = vand.u32 %v7011, 4294901760
      %v7278 = vsub.f32 %v7011, %v7277
      %v7279 = vand.u32 %v7278, 4294901760
      %v7280 = vsub.f32 %v7278, %v7279
      %v7281 = vand.u32 %v7280, 4294901760
      %7282 = vmatpush1.msra.mxu0 %v7281
      %7283 = vmatprep.subr.mxu0 0.0
      %v7284 = vand.u32 %v7012, 4294901760
      %v7285 = vsub.f32 %v7012, %v7284
      %v7286 = vand.u32 %v7285, 4294901760
      %v7287 = vsub.f32 %v7285, %v7286
      %v7288 = vand.u32 %v7287, 4294901760
      %7289 = vmatpush1.msra.mxu0 %v7288
      %7290 = vmatprep.subr.mxu0 0.0
      %v7291 = vand.u32 %v7013, 4294901760
      %v7292 = vsub.f32 %v7013, %v7291
      %v7293 = vand.u32 %v7292, 4294901760
      %v7294 = vsub.f32 %v7292, %v7293
      %v7295 = vand.u32 %v7294, 4294901760
      %7296 = vmatpush1.msra.mxu0 %v7295
      %7297 = vmatprep.subr.mxu0 0.0
      %v7298 = vand.u32 %v7014, 4294901760
      %v7299 = vsub.f32 %v7014, %v7298
      %v7300 = vand.u32 %v7299, 4294901760
      %v7301 = vsub.f32 %v7299, %v7300
      %v7302 = vand.u32 %v7301, 4294901760
      %7303 = vmatpush1.msra.mxu0 %v7302
      %7304 = vmatprep.subr.mxu0 0.0
      %v7305 = vand.u32 %v7015, 4294901760
      %v7306 = vsub.f32 %v7015, %v7305
      %v7307 = vand.u32 %v7306, 4294901760
      %v7308 = vsub.f32 %v7306, %v7307
      %v7309 = vand.u32 %v7308, 4294901760
      %7310 = vmatpush1.msra.mxu0 %v7309
      %7311 = vmatprep.subr.mxu0 0.0
      %v7312 = vand.u32 %v7016, 4294901760
      %v7313 = vsub.f32 %v7016, %v7312
      %v7314 = vand.u32 %v7313, 4294901760
      %v7315 = vsub.f32 %v7313, %v7314
      %v7316 = vand.u32 %v7315, 4294901760
      %7317 = vmatpush1.msra.mxu0 %v7316
      %7318 = vmatprep.subr.mxu0 0.0
      %v7319 = vand.u32 %v7017, 4294901760
      %v7320 = vsub.f32 %v7017, %v7319
      %v7321 = vand.u32 %v7320, 4294901760
      %v7322 = vsub.f32 %v7320, %v7321
      %v7323 = vand.u32 %v7322, 4294901760
      %7324 = vmatpush1.msra.mxu0 %v7323
      %7325 = vmatprep.subr.mxu0 0.0
      %v7326 = vand.u32 %v7018, 4294901760
      %v7327 = vsub.f32 %v7018, %v7326
      %v7328 = vand.u32 %v7327, 4294901760
      %v7329 = vsub.f32 %v7327, %v7328
      %v7330 = vand.u32 %v7329, 4294901760
      %7331 = vmatpush1.msra.mxu0 %v7330
      %7332 = vmatprep.subr.mxu0 0.0
      %v7333 = vand.u32 %v7019, 4294901760
      %v7334 = vsub.f32 %v7019, %v7333
      %v7335 = vand.u32 %v7334, 4294901760
      %v7336 = vsub.f32 %v7334, %v7335
      %v7337 = vand.u32 %v7336, 4294901760
      %7338 = vmatpush1.msra.mxu0 %v7337
      %7339 = vmatprep.subr.mxu0 0.0
      %v7340 = vand.u32 %v7020, 4294901760
      %v7341 = vsub.f32 %v7020, %v7340
      %v7342 = vand.u32 %v7341, 4294901760
      %v7343 = vsub.f32 %v7341, %v7342
      %v7344 = vand.u32 %v7343, 4294901760
      %7345 = vmatpush1.msra.mxu0 %v7344
      %7346 = vmatprep.subr.mxu0 0.0
      %v7347 = vand.u32 %v7021, 4294901760
      %v7348 = vsub.f32 %v7021, %v7347
      %v7349 = vand.u32 %v7348, 4294901760
      %v7350 = vsub.f32 %v7348, %v7349
      %v7351 = vand.u32 %v7350, 4294901760
      %7352 = vmatpush1.msra.mxu0 %v7351
      %7353 = vmatprep.subr.mxu0 0.0
      %v7354 = vand.u32 %v7022, 4294901760
      %v7355 = vsub.f32 %v7022, %v7354
      %v7356 = vand.u32 %v7355, 4294901760
      %v7357 = vsub.f32 %v7355, %v7356
      %v7358 = vand.u32 %v7357, 4294901760
      %7359 = vmatpush1.msra.mxu0 %v7358
      %v7360 = vand.u32 %v6990, 4294901760
      %7361 = vmatprep.mubr.f32.mxu0 %v7360
      %v7362 = vand.u32 %v6989, 4294901760
      %7363 = vmatmul.mubr.f32.gmra.mrb[0].mxu0 %v7362
      %v7364 = vpop.f32.mrb[0].mxu0
      %v7365 = vadd.f32 %v7133, %v7364
      %v7366 = vpop.f32.mrb[0].mxu0
      %7367 = vdwg.mxu0
      %7368 = vmatprep.subr.mxu0 0.0
      %v7369 = vand.u32 %v6991, 4294901760
      %v7370 = vsub.f32 %v6991, %v7369
      %7371 = vmatpush1.msra.mxu0 %v7370
      %7372 = vmatprep.subr.mxu0 0.0
      %v7373 = vand.u32 %v6992, 4294901760
      %v7374 = vsub.f32 %v6992, %v7373
      %7375 = vmatpush1.msra.mxu0 %v7374
      %7376 = vmatprep.subr.mxu0 0.0
      %v7377 = vand.u32 %v6993, 4294901760
      %v7378 = vsub.f32 %v6993, %v7377
      %7379 = vmatpush1.msra.mxu0 %v7378
      %7380 = vmatprep.subr.mxu0 0.0
      %v7381 = vand.u32 %v6994, 4294901760
      %v7382 = vsub.f32 %v6994, %v7381
      %7383 = vmatpush1.msra.mxu0 %v7382
      %7384 = vmatprep.subr.mxu0 0.0
      %v7385 = vand.u32 %v6995, 4294901760
      %v7386 = vsub.f32 %v6995, %v7385
      %7387 = vmatpush1.msra.mxu0 %v7386
      %7388 = vmatprep.subr.mxu0 0.0
      %v7389 = vand.u32 %v6996, 4294901760
      %v7390 = vsub.f32 %v6996, %v7389
      %7391 = vmatpush1.msra.mxu0 %v7390
      %7392 = vmatprep.subr.mxu0 0.0
      %v7393 = vand.u32 %v6997, 4294901760
      %v7394 = vsub.f32 %v6997, %v7393
      %7395 = vmatpush1.msra.mxu0 %v7394
      %7396 = vmatprep.subr.mxu0 0.0
      %v7397 = vand.u32 %v6998, 4294901760
      %v7398 = vsub.f32 %v6998, %v7397
      %7399 = vmatpush1.msra.mxu0 %v7398
      %7400 = vmatprep.subr.mxu0 0.0
      %v7401 = vand.u32 %v6999, 4294901760
      %v7402 = vsub.f32 %v6999, %v7401
      %7403 = vmatpush1.msra.mxu0 %v7402
      %7404 = vmatprep.subr.mxu0 0.0
      %v7405 = vand.u32 %v7000, 4294901760
      %v7406 = vsub.f32 %v7000, %v7405
      %7407 = vmatpush1.msra.mxu0 %v7406
      %7408 = vmatprep.subr.mxu0 0.0
      %v7409 = vand.u32 %v7001, 4294901760
      %v7410 = vsub.f32 %v7001, %v7409
      %7411 = vmatpush1.msra.mxu0 %v7410
      %7412 = vmatprep.subr.mxu0 0.0
      %v7413 = vand.u32 %v7002, 4294901760
      %v7414 = vsub.f32 %v7002, %v7413
      %7415 = vmatpush1.msra.mxu0 %v7414
      %7416 = vmatprep.subr.mxu0 0.0
      %v7417 = vand.u32 %v7003, 4294901760
      %v7418 = vsub.f32 %v7003, %v7417
      %7419 = vmatpush1.msra.mxu0 %v7418
      %7420 = vmatprep.subr.mxu0 0.0
      %v7421 = vand.u32 %v7004, 4294901760
      %v7422 = vsub.f32 %v7004, %v7421
      %7423 = vmatpush1.msra.mxu0 %v7422
      %7424 = vmatprep.subr.mxu0 0.0
      %v7425 = vand.u32 %v7005, 4294901760
      %v7426 = vsub.f32 %v7005, %v7425
      %7427 = vmatpush1.msra.mxu0 %v7426
      %7428 = vmatprep.subr.mxu0 0.0
      %v7429 = vand.u32 %v7006, 4294901760
      %v7430 = vsub.f32 %v7006, %v7429
      %7431 = vmatpush1.msra.mxu0 %v7430
      %7432 = vmatprep.subr.mxu0 0.0
      %v7433 = vand.u32 %v7007, 4294901760
      %v7434 = vsub.f32 %v7007, %v7433
      %7435 = vmatpush1.msra.mxu0 %v7434
      %7436 = vmatprep.subr.mxu0 0.0
      %v7437 = vand.u32 %v7008, 4294901760
      %v7438 = vsub.f32 %v7008, %v7437
      %7439 = vmatpush1.msra.mxu0 %v7438
      %7440 = vmatprep.subr.mxu0 0.0
      %v7441 = vand.u32 %v7009, 4294901760
      %v7442 = vsub.f32 %v7009, %v7441
      %7443 = vmatpush1.msra.mxu0 %v7442
      %7444 = vmatprep.subr.mxu0 0.0
      %v7445 = vand.u32 %v7010, 4294901760
      %v7446 = vsub.f32 %v7010, %v7445
      %7447 = vmatpush1.msra.mxu0 %v7446
      %7448 = vmatprep.subr.mxu0 0.0
      %v7449 = vand.u32 %v7011, 4294901760
      %v7450 = vsub.f32 %v7011, %v7449
      %7451 = vmatpush1.msra.mxu0 %v7450
      %7452 = vmatprep.subr.mxu0 0.0
      %v7453 = vand.u32 %v7012, 4294901760
      %v7454 = vsub.f32 %v7012, %v7453
      %7455 = vmatpush1.msra.mxu0 %v7454
      %7456 = vmatprep.subr.mxu0 0.0
      %v7457 = vand.u32 %v7013, 4294901760
      %v7458 = vsub.f32 %v7013, %v7457
      %7459 = vmatpush1.msra.mxu0 %v7458
      %7460 = vmatprep.subr.mxu0 0.0
      %v7461 = vand.u32 %v7014, 4294901760
      %v7462 = vsub.f32 %v7014, %v7461
      %7463 = vmatpush1.msra.mxu0 %v7462
      %7464 = vmatprep.subr.mxu0 0.0
      %v7465 = vand.u32 %v7015, 4294901760
      %v7466 = vsub.f32 %v7015, %v7465
      %7467 = vmatpush1.msra.mxu0 %v7466
      %7468 = vmatprep.subr.mxu0 0.0
      %v7469 = vand.u32 %v7016, 4294901760
      %v7470 = vsub.f32 %v7016, %v7469
      %7471 = vmatpush1.msra.mxu0 %v7470
      %7472 = vmatprep.subr.mxu0 0.0
      %v7473 = vand.u32 %v7017, 4294901760
      %v7474 = vsub.f32 %v7017, %v7473
      %7475 = vmatpush1.msra.mxu0 %v7474
      %7476 = vmatprep.subr.mxu0 0.0
      %v7477 = vand.u32 %v7018, 4294901760
      %v7478 = vsub.f32 %v7018, %v7477
      %7479 = vmatpush1.msra.mxu0 %v7478
      %7480 = vmatprep.subr.mxu0 0.0
      %v7481 = vand.u32 %v7019, 4294901760
      %v7482 = vsub.f32 %v7019, %v7481
      %7483 = vmatpush1.msra.mxu0 %v7482
      %7484 = vmatprep.subr.mxu0 0.0
      %v7485 = vand.u32 %v7020, 4294901760
      %v7486 = vsub.f32 %v7020, %v7485
      %7487 = vmatpush1.msra.mxu0 %v7486
      %7488 = vmatprep.subr.mxu0 0.0
      %v7489 = vand.u32 %v7021, 4294901760
      %v7490 = vsub.f32 %v7021, %v7489
      %7491 = vmatpush1.msra.mxu0 %v7490
      %7492 = vmatprep.subr.mxu0 0.0
      %v7493 = vand.u32 %v7022, 4294901760
      %v7494 = vsub.f32 %v7022, %v7493
      %7495 = vmatpush1.msra.mxu0 %v7494
      %v7496 = vand.u32 %v6990, 4294901760
      %v7497 = vsub.f32 %v6990, %v7496
      %7498 = vmatprep.mubr.f32.mxu0 %v7497
      %v7499 = vand.u32 %v6989, 4294901760
      %v7500 = vsub.f32 %v6989, %v7499
      %7501 = vmatmul.mubr.f32.gmra.mrb[0].mxu0 %v7500
      %v7502 = vpop.f32.mrb[0].mxu0
      %v7503 = vadd.f32 %v7365, %v7502
      %v7504 = vpop.f32.mrb[0].mxu0
      %7505 = vdwg.mxu0
      %7506 = vmatprep.subr.mxu0 0.0
      %v7507 = vand.u32 %v6991, 4294901760
      %7508 = vmatpush1.msra.mxu0 %v7507
      %7509 = vmatprep.subr.mxu0 0.0
      %v7510 = vand.u32 %v6992, 4294901760
      %7511 = vmatpush1.msra.mxu0 %v7510
      %7512 = vmatprep.subr.mxu0 0.0
      %v7513 = vand.u32 %v6993, 4294901760
      %7514 = vmatpush1.msra.mxu0 %v7513
      %7515 = vmatprep.subr.mxu0 0.0
      %v7516 = vand.u32 %v6994, 4294901760
      %7517 = vmatpush1.msra.mxu0 %v7516
      %7518 = vmatprep.subr.mxu0 0.0
      %v7519 = vand.u32 %v6995, 4294901760
      %7520 = vmatpush1.msra.mxu0 %v7519
      %7521 = vmatprep.subr.mxu0 0.0
      %v7522 = vand.u32 %v6996, 4294901760
      %7523 = vmatpush1.msra.mxu0 %v7522
      %7524 = vmatprep.subr.mxu0 0.0
      %v7525 = vand.u32 %v6997, 4294901760
      %7526 = vmatpush1.msra.mxu0 %v7525
      %7527 = vmatprep.subr.mxu0 0.0
      %v7528 = vand.u32 %v6998, 4294901760
      %7529 = vmatpush1.msra.mxu0 %v7528
      %7530 = vmatprep.subr.mxu0 0.0
      %v7531 = vand.u32 %v6999, 4294901760
      %7532 = vmatpush1.msra.mxu0 %v7531
      %7533 = vmatprep.subr.mxu0 0.0
      %v7534 = vand.u32 %v7000, 4294901760
      %7535 = vmatpush1.msra.mxu0 %v7534
      %7536 = vmatprep.subr.mxu0 0.0
      %v7537 = vand.u32 %v7001, 4294901760
      %7538 = vmatpush1.msra.mxu0 %v7537
      %7539 = vmatprep.subr.mxu0 0.0
      %v7540 = vand.u32 %v7002, 4294901760
      %7541 = vmatpush1.msra.mxu0 %v7540
      %7542 = vmatprep.subr.mxu0 0.0
      %v7543 = vand.u32 %v7003, 4294901760
      %7544 = vmatpush1.msra.mxu0 %v7543
      %7545 = vmatprep.subr.mxu0 0.0
      %v7546 = vand.u32 %v7004, 4294901760
      %7547 = vmatpush1.msra.mxu0 %v7546
      %7548 = vmatprep.subr.mxu0 0.0
      %v7549 = vand.u32 %v7005, 4294901760
      %7550 = vmatpush1.msra.mxu0 %v7549
      %7551 = vmatprep.subr.mxu0 0.0
      %v7552 = vand.u32 %v7006, 4294901760
      %7553 = vmatpush1.msra.mxu0 %v7552
      %7554 = vmatprep.subr.mxu0 0.0
      %v7555 = vand.u32 %v7007, 4294901760
      %7556 = vmatpush1.msra.mxu0 %v7555
      %7557 = vmatprep.subr.mxu0 0.0
      %v7558 = vand.u32 %v7008, 4294901760
      %7559 = vmatpush1.msra.mxu0 %v7558
      %7560 = vmatprep.subr.mxu0 0.0
      %v7561 = vand.u32 %v7009, 4294901760
      %7562 = vmatpush1.msra.mxu0 %v7561
      %7563 = vmatprep.subr.mxu0 0.0
      %v7564 = vand.u32 %v7010, 4294901760
      %7565 = vmatpush1.msra.mxu0 %v7564
      %7566 = vmatprep.subr.mxu0 0.0
      %v7567 = vand.u32 %v7011, 4294901760
      %7568 = vmatpush1.msra.mxu0 %v7567
      %7569 = vmatprep.subr.mxu0 0.0
      %v7570 = vand.u32 %v7012, 4294901760
      %7571 = vmatpush1.msra.mxu0 %v7570
      %7572 = vmatprep.subr.mxu0 0.0
      %v7573 = vand.u32 %v7013, 4294901760
      %7574 = vmatpush1.msra.mxu0 %v7573
      %7575 = vmatprep.subr.mxu0 0.0
      %v7576 = vand.u32 %v7014, 4294901760
      %7577 = vmatpush1.msra.mxu0 %v7576
      %7578 = vmatprep.subr.mxu0 0.0
      %v7579 = vand.u32 %v7015, 4294901760
      %7580 = vmatpush1.msra.mxu0 %v7579
      %7581 = vmatprep.subr.mxu0 0.0
      %v7582 = vand.u32 %v7016, 4294901760
      %7583 = vmatpush1.msra.mxu0 %v7582
      %7584 = vmatprep.subr.mxu0 0.0
      %v7585 = vand.u32 %v7017, 4294901760
      %7586 = vmatpush1.msra.mxu0 %v7585
      %7587 = vmatprep.subr.mxu0 0.0
      %v7588 = vand.u32 %v7018, 4294901760
      %7589 = vmatpush1.msra.mxu0 %v7588
      %7590 = vmatprep.subr.mxu0 0.0
      %v7591 = vand.u32 %v7019, 4294901760
      %7592 = vmatpush1.msra.mxu0 %v7591
      %7593 = vmatprep.subr.mxu0 0.0
      %v7594 = vand.u32 %v7020, 4294901760
      %7595 = vmatpush1.msra.mxu0 %v7594
      %7596 = vmatprep.subr.mxu0 0.0
      %v7597 = vand.u32 %v7021, 4294901760
      %7598 = vmatpush1.msra.mxu0 %v7597
      %7599 = vmatprep.subr.mxu0 0.0
      %v7600 = vand.u32 %v7022, 4294901760
      %7601 = vmatpush1.msra.mxu0 %v7600
      %v7602 = vand.u32 %v6990, 4294901760
      %v7603 = vsub.f32 %v6990, %v7602
      %v7604 = vand.u32 %v7603, 4294901760
      %7605 = vmatprep.mubr.f32.mxu0 %v7604
      %v7606 = vand.u32 %v6989, 4294901760
      %v7607 = vsub.f32 %v6989, %v7606
      %v7608 = vand.u32 %v7607, 4294901760
      %7609 = vmatmul.mubr.f32.gmra.mrb[0].mxu0 %v7608
      %v7610 = vpop.f32.mrb[0].mxu0
      %v7611 = vadd.f32 %v7503, %v7610
      %v7612 = vpop.f32.mrb[0].mxu0
      %7613 = vdwg.mxu0
      %7614 = vmatprep.subr.mxu0 0.0
      %v7615 = vand.u32 %v6991, 4294901760
      %v7616 = vsub.f32 %v6991, %v7615
      %v7617 = vand.u32 %v7616, 4294901760
      %7618 = vmatpush1.msra.mxu0 %v7617
      %7619 = vmatprep.subr.mxu0 0.0
      %v7620 = vand.u32 %v6992, 4294901760
      %v7621 = vsub.f32 %v6992, %v7620
      %v7622 = vand.u32 %v7621, 4294901760
      %7623 = vmatpush1.msra.mxu0 %v7622
      %7624 = vmatprep.subr.mxu0 0.0
      %v7625 = vand.u32 %v6993, 4294901760
      %v7626 = vsub.f32 %v6993, %v7625
      %v7627 = vand.u32 %v7626, 4294901760
      %7628 = vmatpush1.msra.mxu0 %v7627
      %7629 = vmatprep.subr.mxu0 0.0
      %v7630 = vand.u32 %v6994, 4294901760
      %v7631 = vsub.f32 %v6994, %v7630
      %v7632 = vand.u32 %v7631, 4294901760
      %7633 = vmatpush1.msra.mxu0 %v7632
      %7634 = vmatprep.subr.mxu0 0.0
      %v7635 = vand.u32 %v6995, 4294901760
      %v7636 = vsub.f32 %v6995, %v7635
      %v7637 = vand.u32 %v7636, 4294901760
      %7638 = vmatpush1.msra.mxu0 %v7637
      %7639 = vmatprep.subr.mxu0 0.0
      %v7640 = vand.u32 %v6996, 4294901760
      %v7641 = vsub.f32 %v6996, %v7640
      %v7642 = vand.u32 %v7641, 4294901760
      %7643 = vmatpush1.msra.mxu0 %v7642
      %7644 = vmatprep.subr.mxu0 0.0
      %v7645 = vand.u32 %v6997, 4294901760
      %v7646 = vsub.f32 %v6997, %v7645
      %v7647 = vand.u32 %v7646, 4294901760
      %7648 = vmatpush1.msra.mxu0 %v7647
      %7649 = vmatprep.subr.mxu0 0.0
      %v7650 = vand.u32 %v6998, 4294901760
      %v7651 = vsub.f32 %v6998, %v7650
      %v7652 = vand.u32 %v7651, 4294901760
      %7653 = vmatpush1.msra.mxu0 %v7652
      %7654 = vmatprep.subr.mxu0 0.0
      %v7655 = vand.u32 %v6999, 4294901760
      %v7656 = vsub.f32 %v6999, %v7655
      %v7657 = vand.u32 %v7656, 4294901760
      %7658 = vmatpush1.msra.mxu0 %v7657
      %7659 = vmatprep.subr.mxu0 0.0
      %v7660 = vand.u32 %v7000, 4294901760
      %v7661 = vsub.f32 %v7000, %v7660
      %v7662 = vand.u32 %v7661, 4294901760
      %7663 = vmatpush1.msra.mxu0 %v7662
      %7664 = vmatprep.subr.mxu0 0.0
      %v7665 = vand.u32 %v7001, 4294901760
      %v7666 = vsub.f32 %v7001, %v7665
      %v7667 = vand.u32 %v7666, 4294901760
      %7668 = vmatpush1.msra.mxu0 %v7667
      %7669 = vmatprep.subr.mxu0 0.0
      %v7670 = vand.u32 %v7002, 4294901760
      %v7671 = vsub.f32 %v7002, %v7670
      %v7672 = vand.u32 %v7671, 4294901760
      %7673 = vmatpush1.msra.mxu0 %v7672
      %7674 = vmatprep.subr.mxu0 0.0
      %v7675 = vand.u32 %v7003, 4294901760
      %v7676 = vsub.f32 %v7003, %v7675
      %v7677 = vand.u32 %v7676, 4294901760
      %7678 = vmatpush1.msra.mxu0 %v7677
      %7679 = vmatprep.subr.mxu0 0.0
      %v7680 = vand.u32 %v7004, 4294901760
      %v7681 = vsub.f32 %v7004, %v7680
      %v7682 = vand.u32 %v7681, 4294901760
      %7683 = vmatpush1.msra.mxu0 %v7682
      %7684 = vmatprep.subr.mxu0 0.0
      %v7685 = vand.u32 %v7005, 4294901760
      %v7686 = vsub.f32 %v7005, %v7685
      %v7687 = vand.u32 %v7686, 4294901760
      %7688 = vmatpush1.msra.mxu0 %v7687
      %7689 = vmatprep.subr.mxu0 0.0
      %v7690 = vand.u32 %v7006, 4294901760
      %v7691 = vsub.f32 %v7006, %v7690
      %v7692 = vand.u32 %v7691, 4294901760
      %7693 = vmatpush1.msra.mxu0 %v7692
      %7694 = vmatprep.subr.mxu0 0.0
      %v7695 = vand.u32 %v7007, 4294901760
      %v7696 = vsub.f32 %v7007, %v7695
      %v7697 = vand.u32 %v7696, 4294901760
      %7698 = vmatpush1.msra.mxu0 %v7697
      %7699 = vmatprep.subr.mxu0 0.0
      %v7700 = vand.u32 %v7008, 4294901760
      %v7701 = vsub.f32 %v7008, %v7700
      %v7702 = vand.u32 %v7701, 4294901760
      %7703 = vmatpush1.msra.mxu0 %v7702
      %7704 = vmatprep.subr.mxu0 0.0
      %v7705 = vand.u32 %v7009, 4294901760
      %v7706 = vsub.f32 %v7009, %v7705
      %v7707 = vand.u32 %v7706, 4294901760
      %7708 = vmatpush1.msra.mxu0 %v7707
      %7709 = vmatprep.subr.mxu0 0.0
      %v7710 = vand.u32 %v7010, 4294901760
      %v7711 = vsub.f32 %v7010, %v7710
      %v7712 = vand.u32 %v7711, 4294901760
      %7713 = vmatpush1.msra.mxu0 %v7712
      %7714 = vmatprep.subr.mxu0 0.0
      %v7715 = vand.u32 %v7011, 4294901760
      %v7716 = vsub.f32 %v7011, %v7715
      %v7717 = vand.u32 %v7716, 4294901760
      %7718 = vmatpush1.msra.mxu0 %v7717
      %7719 = vmatprep.subr.mxu0 0.0
      %v7720 = vand.u32 %v7012, 4294901760
      %v7721 = vsub.f32 %v7012, %v7720
      %v7722 = vand.u32 %v7721, 4294901760
      %7723 = vmatpush1.msra.mxu0 %v7722
      %7724 = vmatprep.subr.mxu0 0.0
      %v7725 = vand.u32 %v7013, 4294901760
      %v7726 = vsub.f32 %v7013, %v7725
      %v7727 = vand.u32 %v7726, 4294901760
      %7728 = vmatpush1.msra.mxu0 %v7727
      %7729 = vmatprep.subr.mxu0 0.0
      %v7730 = vand.u32 %v7014, 4294901760
      %v7731 = vsub.f32 %v7014, %v7730
      %v7732 = vand.u32 %v7731, 4294901760
      %7733 = vmatpush1.msra.mxu0 %v7732
      %7734 = vmatprep.subr.mxu0 0.0
      %v7735 = vand.u32 %v7015, 4294901760
      %v7736 = vsub.f32 %v7015, %v7735
      %v7737 = vand.u32 %v7736, 4294901760
      %7738 = vmatpush1.msra.mxu0 %v7737
      %7739 = vmatprep.subr.mxu0 0.0
      %v7740 = vand.u32 %v7016, 4294901760
      %v7741 = vsub.f32 %v7016, %v7740
      %v7742 = vand.u32 %v7741, 4294901760
      %7743 = vmatpush1.msra.mxu0 %v7742
      %7744 = vmatprep.subr.mxu0 0.0
      %v7745 = vand.u32 %v7017, 4294901760
      %v7746 = vsub.f32 %v7017, %v7745
      %v7747 = vand.u32 %v7746, 4294901760
      %7748 = vmatpush1.msra.mxu0 %v7747
      %7749 = vmatprep.subr.mxu0 0.0
      %v7750 = vand.u32 %v7018, 4294901760
      %v7751 = vsub.f32 %v7018, %v7750
      %v7752 = vand.u32 %v7751, 4294901760
      %7753 = vmatpush1.msra.mxu0 %v7752
      %7754 = vmatprep.subr.mxu0 0.0
      %v7755 = vand.u32 %v7019, 4294901760
      %v7756 = vsub.f32 %v7019, %v7755
      %v7757 = vand.u32 %v7756, 4294901760
      %7758 = vmatpush1.msra.mxu0 %v7757
      %7759 = vmatprep.subr.mxu0 0.0
      %v7760 = vand.u32 %v7020, 4294901760
      %v7761 = vsub.f32 %v7020, %v7760
      %v7762 = vand.u32 %v7761, 4294901760
      %7763 = vmatpush1.msra.mxu0 %v7762
      %7764 = vmatprep.subr.mxu0 0.0
      %v7765 = vand.u32 %v7021, 4294901760
      %v7766 = vsub.f32 %v7021, %v7765
      %v7767 = vand.u32 %v7766, 4294901760
      %7768 = vmatpush1.msra.mxu0 %v7767
      %7769 = vmatprep.subr.mxu0 0.0
      %v7770 = vand.u32 %v7022, 4294901760
      %v7771 = vsub.f32 %v7022, %v7770
      %v7772 = vand.u32 %v7771, 4294901760
      %7773 = vmatpush1.msra.mxu0 %v7772
      %v7774 = vand.u32 %v6990, 4294901760
      %7775 = vmatprep.mubr.f32.mxu0 %v7774
      %v7776 = vand.u32 %v6989, 4294901760
      %7777 = vmatmul.mubr.f32.gmra.mrb[0].mxu0 %v7776
      %v7778 = vpop.f32.mrb[0].mxu0
      %v7779 = vadd.f32 %v7611, %v7778
      %v7780 = vpop.f32.mrb[0].mxu0
      %7781 = vdwg.mxu0
      %7782 = vmatprep.subr.mxu0 0.0
      %v7783 = vand.u32 %v6991, 4294901760
      %7784 = vmatpush1.msra.mxu0 %v7783
      %7785 = vmatprep.subr.mxu0 0.0
      %v7786 = vand.u32 %v6992, 4294901760
      %7787 = vmatpush1.msra.mxu0 %v7786
      %7788 = vmatprep.subr.mxu0 0.0
      %v7789 = vand.u32 %v6993, 4294901760
      %7790 = vmatpush1.msra.mxu0 %v7789
      %7791 = vmatprep.subr.mxu0 0.0
      %v7792 = vand.u32 %v6994, 4294901760
      %7793 = vmatpush1.msra.mxu0 %v7792
      %7794 = vmatprep.subr.mxu0 0.0
      %v7795 = vand.u32 %v6995, 4294901760
      %7796 = vmatpush1.msra.mxu0 %v7795
      %7797 = vmatprep.subr.mxu0 0.0
      %v7798 = vand.u32 %v6996, 4294901760
      %7799 = vmatpush1.msra.mxu0 %v7798
      %7800 = vmatprep.subr.mxu0 0.0
      %v7801 = vand.u32 %v6997, 4294901760
      %7802 = vmatpush1.msra.mxu0 %v7801
      %7803 = vmatprep.subr.mxu0 0.0
      %v7804 = vand.u32 %v6998, 4294901760
      %7805 = vmatpush1.msra.mxu0 %v7804
      %7806 = vmatprep.subr.mxu0 0.0
      %v7807 = vand.u32 %v6999, 4294901760
      %7808 = vmatpush1.msra.mxu0 %v7807
      %7809 = vmatprep.subr.mxu0 0.0
      %v7810 = vand.u32 %v7000, 4294901760
      %7811 = vmatpush1.msra.mxu0 %v7810
      %7812 = vmatprep.subr.mxu0 0.0
      %v7813 = vand.u32 %v7001, 4294901760
      %7814 = vmatpush1.msra.mxu0 %v7813
      %7815 = vmatprep.subr.mxu0 0.0
      %v7816 = vand.u32 %v7002, 4294901760
      %7817 = vmatpush1.msra.mxu0 %v7816
      %7818 = vmatprep.subr.mxu0 0.0
      %v7819 = vand.u32 %v7003, 4294901760
      %7820 = vmatpush1.msra.mxu0 %v7819
      %7821 = vmatprep.subr.mxu0 0.0
      %v7822 = vand.u32 %v7004, 4294901760
      %7823 = vmatpush1.msra.mxu0 %v7822
      %7824 = vmatprep.subr.mxu0 0.0
      %v7825 = vand.u32 %v7005, 4294901760
      %7826 = vmatpush1.msra.mxu0 %v7825
      %7827 = vmatprep.subr.mxu0 0.0
      %v7828 = vand.u32 %v7006, 4294901760
      %7829 = vmatpush1.msra.mxu0 %v7828
      %7830 = vmatprep.subr.mxu0 0.0
      %v7831 = vand.u32 %v7007, 4294901760
      %7832 = vmatpush1.msra.mxu0 %v7831
      %7833 = vmatprep.subr.mxu0 0.0
      %v7834 = vand.u32 %v7008, 4294901760
      %7835 = vmatpush1.msra.mxu0 %v7834
      %7836 = vmatprep.subr.mxu0 0.0
      %v7837 = vand.u32 %v7009, 4294901760
      %7838 = vmatpush1.msra.mxu0 %v7837
      %7839 = vmatprep.subr.mxu0 0.0
      %v7840 = vand.u32 %v7010, 4294901760
      %7841 = vmatpush1.msra.mxu0 %v7840
      %7842 = vmatprep.subr.mxu0 0.0
      %v7843 = vand.u32 %v7011, 4294901760
      %7844 = vmatpush1.msra.mxu0 %v7843
      %7845 = vmatprep.subr.mxu0 0.0
      %v7846 = vand.u32 %v7012, 4294901760
      %7847 = vmatpush1.msra.mxu0 %v7846
      %7848 = vmatprep.subr.mxu0 0.0
      %v7849 = vand.u32 %v7013, 4294901760
      %7850 = vmatpush1.msra.mxu0 %v7849
      %7851 = vmatprep.subr.mxu0 0.0
      %v7852 = vand.u32 %v7014, 4294901760
      %7853 = vmatpush1.msra.mxu0 %v7852
      %7854 = vmatprep.subr.mxu0 0.0
      %v7855 = vand.u32 %v7015, 4294901760
      %7856 = vmatpush1.msra.mxu0 %v7855
      %7857 = vmatprep.subr.mxu0 0.0
      %v7858 = vand.u32 %v7016, 4294901760
      %7859 = vmatpush1.msra.mxu0 %v7858
      %7860 = vmatprep.subr.mxu0 0.0
      %v7861 = vand.u32 %v7017, 4294901760
      %7862 = vmatpush1.msra.mxu0 %v7861
      %7863 = vmatprep.subr.mxu0 0.0
      %v7864 = vand.u32 %v7018, 4294901760
      %7865 = vmatpush1.msra.mxu0 %v7864
      %7866 = vmatprep.subr.mxu0 0.0
      %v7867 = vand.u32 %v7019, 4294901760
      %7868 = vmatpush1.msra.mxu0 %v7867
      %7869 = vmatprep.subr.mxu0 0.0
      %v7870 = vand.u32 %v7020, 4294901760
      %7871 = vmatpush1.msra.mxu0 %v7870
      %7872 = vmatprep.subr.mxu0 0.0
      %v7873 = vand.u32 %v7021, 4294901760
      %7874 = vmatpush1.msra.mxu0 %v7873
      %7875 = vmatprep.subr.mxu0 0.0
      %v7876 = vand.u32 %v7022, 4294901760
      %7877 = vmatpush1.msra.mxu0 %v7876
      %v7878 = vand.u32 %v6990, 4294901760
      %7879 = vmatprep.mubr.f32.mxu0 %v7878
      %v7880 = vand.u32 %v6989, 4294901760
      %7881 = vmatmul.mubr.f32.gmra.mrb[0].mxu0 %v7880
      %v7882 = vpop.f32.mrb[0].mxu0
      %v7883 = vadd.f32 %v7779, %v7882
      %v7884 = vpop.f32.mrb[0].mxu0
      %7885 = vdwg.mxu0
      %vm7886 = vcmask 1040384
      %v7887 = vsel %vm7886, %v7883, -inf
      %7888 = vmax.xlane.f32.xlu0 %v7887
      %v7889 = vpop.xlane.xlu0 %7888
      %v7890 = vsub.f32 %v7883, %v7889
      %v7891 = vmul.f32 %v7890, 1.442695
      %v7892 = vpow.pop %v7891
      %v7893 = vsel %vm7886, %v7892, 0.0
      %7894 = vadd.xlane.f32.xlu0 %v7893
      %v7895 = vpop.xlane.xlu0 %7894
      %v7896 = vlog2.pop %v7895
      %v7897 = vmul.f32 %v7896, 0.6931472
      %v7898 = vsub.f32 %v7890, %v7897
      %v7899 = vlaneseq
      %v7900 = vshrl.u32 %v7899, 7
      %v7901 = vsub.s32 0, %v7900
      %v7902 = vrot.slane %v7898, %v7901
      %7903 = vst [vmem:[%s465] sm:$0xff] %v7902
      %p7904 = scmp.lt.s32.totalorder %s25, 1
      %s7905 = scalar_select %p7904, %s25, 1
      %s7906 = smul.addr %s7905, 8
      %s7907 = scalar_lea.vmem %s14, %s7906
      // Predicated region
      $region77: #{cnn_forward.1} parent=75 // pred_check
        %p7908 = pneg %p342
      $region78: #{cnn_forward.1} parent=75 // pred_check_branch
        %7910 = sbr.rel (%p7908) target = $region80
      $region79: #{cnn_forward.1} parent=75 // pred_region
        _
      $region80: #{cnn_forward.1} parent=75 // pred_fallthru
        _
    $region76: #{cnn_forward.1} parent=5 // pred_fallthru
      _
    %p7911 = scmp.le.s32.totalorder 2, %s20
    // Predicated region
    $region81: #{cnn_forward.1} parent=5 // pred_check
      %p7912 = pneg %p7911
    $region82: #{cnn_forward.1} parent=5 // pred_check_branch
      %7914 = sbr.rel (%p7912) target = $region84
    $region83: #{cnn_forward.1} parent=5 // pred_region
      %s7915 = ssub.s32 %s20, 2
      // Predicated region
      $region85: #{cnn_forward.1} parent=83 // pred_check
        %p7916 = pneg %p348
      $region86: #{cnn_forward.1} parent=83 // pred_check_branch
        %7918 = sbr.rel (%p7916) target = $region88
      $region87: #{cnn_forward.1} parent=83 // pred_region
        %p7919 = scmp.lt.s32.totalorder %s26, 1
        %s7920 = scalar_select %p7919, %s26, 1
        %s7921 = smul.addr %s7920, 8
        %s7922 = scalar_lea.vmem %s14, %s7921
      $region88: #{cnn_forward.1} parent=83 // pred_fallthru
        _
    $region84: #{cnn_forward.1} parent=5 // pred_fallthru
      _
  $region6: #{cnn_forward.1} parent=0 // loop_footer
    %s24 = sadd.s32 1, %s20
  $region7: #{cnn_forward.1} parent=0 // loop_footer_branch
    %19 = sbr.rel target = $region3
  $region8: #{cnn_forward.1} parent=0 // loop_exit
    _

</llo_original>
